<compile_context>
chip_gen: v6e
topology: v6e:2x2x1
jax: 0.10.0
libtpu: 0.0.40
codegen_flags: <defaults>
</compile_context>

<pallas_src>
import functools

import numpy as np
import jax
import jax.numpy as jnp
from jax.experimental import pallas as pl
from jax.experimental.pallas import tpu as pltpu

LRELU_SLOPE = 0.2
BN_EPS = 1e-5
LANE = 128
VMEM_LIMIT = 32 * 1024 * 1024          # explicit scoped-VMEM budget (fits v5e..v7x)
W_CHUNK_BYTES = 8 * 1024 * 1024        # max bf16 weight chunk (double-buffered -> 16 MiB)


def _round_up(x, m):
    return ((x + m - 1) // m) * m


def _pick_k_chunk(kp, coutp, budget=W_CHUNK_BYTES):
    """Largest K chunk (multiple of 128, divides kp) whose weight slab fits the budget."""
    ck = kp
    while ck * coutp * 2 > budget and ck % 256 == 0:
        ck //= 2
    return ck


def _pick_m_tile(m):
    """Pad M to a multiple of the tile; >=2 'parallel' M tiles whenever possible (v7x)."""
    mp = _round_up(max(m, 8), 8)
    if mp == 8:
        return 8, 8
    tm = max(8, min(256, (mp // 2 // 8) * 8))
    return _round_up(mp, tm), tm


# ---------------------------------------------------------------------------
# Pallas kernels
# ---------------------------------------------------------------------------
def _conv_block_kernel(x_ref, w_ref, scale_ref, shift_ref, o_ref, acc_ref):
    """One (tm, ck) @ (ck, Coutp) step of a ConvBlock matmul + fused BN/LeakyReLU.

    x_ref   : (tm, ck)     bf16  im2col rows (batch folded into M)
    w_ref   : (ck, Coutp)  bf16  weight K-chunk (batch-stationary)
    scale   : (1, Coutp)   f32   folded eval-BN scale
    shift   : (1, Coutp)   f32   folded eval-BN shift + conv bias
    o_ref   : (tm, Coutp)  bf16  activation rows
    acc_ref : (tm, Coutp)  f32   accumulator across the K-chunk ("arbitrary") grid axis
    """
    k = pl.program_id(1)
    part = jnp.dot(x_ref[...], w_ref[...], preferred_element_type=jnp.float32)

    @pl.when(k == 0)
    def _():
        acc_ref[...] = part

    @pl.when(k > 0)
    def _():
        acc_ref[...] += part

    @pl.when(k == pl.num_programs(1) - 1)
    def _():
        y = acc_ref[...] * scale_ref[...] + shift_ref[...]
        o_ref[...] = jnp.maximum(y, LRELU_SLOPE * y).astype(o_ref.dtype)


def _final_block_kernel(x_ref, w_ref, scale_ref, shift_ref, pw_ref, pb_ref,
                        pool_ref, cw_ref, cb_ref, patch_ref, cat_ref, acc_ref):
    """Last ConvBlock fused with the patch head (1x1 conv) and the category head.

    Extra inputs:
      pw_ref   : (Coutp, 128)  f32  1x1-conv weight (column 0 real, rest zero)
      pb_ref   : (1, 128)      f32  patch bias in lane 0
      pool_ref : (Np, Mp)      f32  per-image mean-pool mask (1/(Hf*Wf) on own rows)
      cw_ref   : (Coutp, Catp) f32  category Linear weight
      cb_ref   : (1, Catp)     f32  category Linear bias
    Outputs:
      patch_ref: (Mp, 128)     f32  interior patch logits (column 0)
      cat_ref  : (Np, Catp)    f32  category logits
    """
    k = pl.program_id(0)
    part = jnp.dot(x_ref[...], w_ref[...], preferred_element_type=jnp.float32)

    @pl.when(k == 0)
    def _():
        acc_ref[...] = part

    @pl.when(k > 0)
    def _():
        acc_ref[...] += part

    @pl.when(k == pl.num_programs(0) - 1)
    def _():
        y = acc_ref[...] * scale_ref[...] + shift_ref[...]
        feat = jnp.maximum(y, LRELU_SLOPE * y)                     # (Mp, Coutp) f32
        # Patch head: per-pixel 1x1 conv, lane-dense 128-wide output slab.
        patch_ref[...] = jnp.dot(feat, pw_ref[...],
                                 preferred_element_type=jnp.float32) + pb_ref[...]
        # Category head: per-image masked mean pool (mask @ feat) + Linear.
        pooled = jnp.dot(pool_ref[...], feat, preferred_element_type=jnp.float32)
        cat_ref[...] = jnp.dot(pooled, cw_ref[...],
                               preferred_element_type=jnp.float32) + cb_ref[...]


# ---------------------------------------------------------------------------
# pallas_call wrappers
# ---------------------------------------------------------------------------
def conv_block_apply(rows, w, scale, shift, *, mp, tm, kp, ck, coutp):
    nm, nk = mp // tm, kp // ck
    return pl.pallas_call(
        _conv_block_kernel,
        out_shape=jax.ShapeDtypeStruct((mp, coutp), jnp.bfloat16),
        grid=(nm, nk),
        in_specs=[
            pl.BlockSpec((tm, ck), lambda i, k: (i, k)),
            pl.BlockSpec((ck, coutp), lambda i, k: (k, 0)),
            pl.BlockSpec((1, coutp), lambda i, k: (0, 0)),
            pl.BlockSpec((1, coutp), lambda i, k: (0, 0)),
        ],
        out_specs=pl.BlockSpec((tm, coutp), lambda i, k: (i, 0)),
        scratch_shapes=[pltpu.VMEM((tm, coutp), jnp.float32)],
        compiler_params=pltpu.CompilerParams(
            dimension_semantics=("parallel", "arbitrary"),
            vmem_limit_bytes=VMEM_LIMIT),
    )(rows, w, scale, shift)


def final_block_apply(rows, w, scale, shift, pw, pb, pool, cw, cb, *,
                      mp, kp, ck, coutp, npd, catp):
    nk = kp // ck
    return pl.pallas_call(
        _final_block_kernel,
        out_shape=(
            jax.ShapeDtypeStruct((mp, LANE), jnp.float32),    # patch logits (col 0)
            jax.ShapeDtypeStruct((npd, catp), jnp.float32),   # category logits
        ),
        grid=(nk,),
        in_specs=[
            pl.BlockSpec((mp, ck), lambda k: (0, k)),
            pl.BlockSpec((ck, coutp), lambda k: (k, 0)),
            pl.BlockSpec((1, coutp), lambda k: (0, 0)),
            pl.BlockSpec((1, coutp), lambda k: (0, 0)),
            pl.BlockSpec((coutp, LANE), lambda k: (0, 0)),
            pl.BlockSpec((1, LANE), lambda k: (0, 0)),
            pl.BlockSpec((npd, mp), lambda k: (0, 0)),
            pl.BlockSpec((coutp, catp), lambda k: (0, 0)),
            pl.BlockSpec((1, catp), lambda k: (0, 0)),
        ],
        out_specs=(
            pl.BlockSpec((mp, LANE), lambda k: (0, 0)),
            pl.BlockSpec((npd, catp), lambda k: (0, 0)),
        ),
        scratch_shapes=[pltpu.VMEM((mp, coutp), jnp.float32)],
        compiler_params=pltpu.CompilerParams(
            dimension_semantics=("arbitrary",),
            vmem_limit_bytes=VMEM_LIMIT),
    )(rows, w, scale, shift, pw, pb, pool, cw, cb)


# ---------------------------------------------------------------------------
# XLA layout glue (pad / strided-slice / concat / reshape) — no compute
# ---------------------------------------------------------------------------
def _im2col(x_nhwc):
    """4x4 / stride-2 / pad-1 conv patches, row-major flattened: (N*Ho*Wo, 16*Cin)."""
    n, h, w, c = x_nhwc.shape
    assert h % 2 == 0 and w % 2 == 0
    ho, wo = h // 2, w // 2
    xp = jnp.pad(x_nhwc, ((0, 0), (1, 1), (1, 1), (0, 0)))
    taps = [xp[:, kh:kh + 2 * ho:2, kw:kw + 2 * wo:2, :]
            for kh in range(4) for kw in range(4)]
    patches = jnp.concatenate(taps, axis=-1)                  # (n, ho, wo, 16c)
    return patches.reshape(n * ho * wo, 16 * c), ho, wo


def _pad_rows(rows, mp, kp):
    m, kd = rows.shape
    return jnp.pad(rows, ((0, mp - m), (0, kp - kd))).astype(jnp.bfloat16)


# ---------------------------------------------------------------------------
# Parameters
# ---------------------------------------------------------------------------
def init_params(key, category_num, img_dim=2, disc_dim=64):
    """Raw PyTorch-equivalent parameters (conv HWIO weights, bias, eval-BN stats)."""
    dims = [img_dim, disc_dim, disc_dim * 2, disc_dim * 4, disc_dim * 8]
    blocks = []
    for li in range(4):
        key, k1, k2, k3, k4, k5, k6 = jax.random.split(key, 7)
        cin, cout = dims[li], dims[li + 1]
        w = jax.random.normal(k1, (4, 4, cin, cout), jnp.float32) * (16 * cin) ** -0.5
        b = jax.random.normal(k2, (cout,), jnp.float32) * 0.01
        use_bn = li != 0
        gamma = 1.0 + 0.1 * jax.random.normal(k3, (cout,), jnp.float32)
        beta = 0.1 * jax.random.normal(k4, (cout,), jnp.float32)
        rmean = 0.1 * jax.random.normal(k5, (cout,), jnp.float32)
        rvar = 1.0 + 0.1 * jax.random.uniform(k6, (cout,), jnp.float32)
        blocks.append(dict(w=w, b=b, gamma=gamma, beta=beta,
                           rmean=rmean, rvar=rvar, use_bn=use_bn))
    key, k1, k2, k3, k4 = jax.random.split(key, 5)
    c = dims[-1]
    return dict(
        blocks=blocks,
        patch_w=jax.random.normal(k1, (c, 1), jnp.float32) * c ** -0.5,
        patch_b=jax.random.normal(k2, (1,), jnp.float32) * 0.01,
        cat_w=jax.random.normal(k3, (c, category_num), jnp.float32) * c ** -0.5,
        cat_b=jax.random.normal(k4, (category_num,), jnp.float32) * 0.01,
    )


def pack_params(raw, category_num):
    """Fold BN+bias, flatten conv weights to (16*Cin, Cout), pad K/lanes, cast bf16."""
    packed = {"blocks": []}
    for blk in raw["blocks"]:
        kh, kw, cin, cout = blk["w"].shape
        kflat = kh * kw * cin
        kp = _round_up(kflat, LANE)
        coutp = _round_up(cout, LANE)
        if blk["use_bn"]:
            s = blk["gamma"] * jax.lax.rsqrt(blk["rvar"] + BN_EPS)
            t = blk["beta"] - blk["rmean"] * s
        else:
            s = jnp.ones((cout,), jnp.float32)
            t = jnp.zeros((cout,), jnp.float32)
        shift = t + blk["b"] * s                       # conv bias folded into BN shift
        # K ordering matches _im2col: K = (kh*4 + kw)*cin + c
        w2 = blk["w"].reshape(kflat, cout)
        w2 = jnp.pad(w2, ((0, kp - kflat), (0, coutp - cout))).astype(jnp.bfloat16)
        packed["blocks"].append(dict(
            w=w2,
            scale=jnp.pad(s, (0, coutp - cout), constant_values=1.0).reshape(1, coutp),
            shift=jnp.pad(shift, (0, coutp - cout)).reshape(1, coutp),
            cin=cin, cout=cout, kp=kp, coutp=coutp))
    c = raw["cat_w"].shape[0]
    cp = packed["blocks"][-1]["coutp"]
    catp = _round_up(category_num, LANE)
    packed["patch_w"] = jnp.zeros((cp, LANE), jnp.float32).at[:c, 0].set(raw["patch_w"][:, 0])
    packed["patch_b"] = jnp.zeros((1, LANE), jnp.float32).at[0, 0].set(raw["patch_b"][0])
    packed["cat_w"] = jnp.pad(raw["cat_w"], ((0, cp - c), (0, catp - category_num)))
    packed["cat_b"] = jnp.pad(raw["cat_b"], (0, catp - category_num)).reshape(1, catp)
    packed["category_num"] = category_num
    return packed


# ---------------------------------------------------------------------------
# Forward pass
# ---------------------------------------------------------------------------
def discriminator_forward(packed, x_nchw):
    x = jnp.transpose(x_nchw, (0, 2, 3, 1)).astype(jnp.float32)      # NCHW -> NHWC
    n = x.shape[0]

    # ConvBlocks 0..2: one weights-stationary matmul per block.
    for blk in packed["blocks"][:-1]:
        rows, ho, wo = _im2col(x)
        m = rows.shape[0]
        mp, tm = _pick_m_tile(m)
        rows = _pad_rows(rows, mp, blk["kp"])
        ck = _pick_k_chunk(blk["kp"], blk["coutp"])
        y_rows = conv_block_apply(rows, blk["w"], blk["scale"], blk["shift"],
                                  mp=mp, tm=tm, kp=blk["kp"], ck=ck,
                                  coutp=blk["coutp"])
        x = y_rows[:m, :blk["cout"]].reshape(n, ho, wo, blk["cout"])

    # Last ConvBlock fused with the patch + category heads.
    blk = packed["blocks"][-1]
    rows, hf, wf = _im2col(x)
    m = rows.shape[0]
    mp = _round_up(max(m, 8), 8)
    rows = _pad_rows(rows, mp, blk["kp"])
    ck = _pick_k_chunk(blk["kp"], blk["coutp"])
    npd = max(8, _round_up(n, 8))
    catp = packed["cat_w"].shape[1]

    pool_np = np.zeros((npd, mp), np.float32)
    for img in range(n):
        pool_np[img, img * hf * wf:(img + 1) * hf * wf] = 1.0 / (hf * wf)
    pool = jnp.asarray(pool_np)

    patch_rows, cat_rows = final_block_apply(
        rows, blk["w"], blk["scale"], blk["shift"],
        packed["patch_w"], packed["patch_b"], pool, packed["cat_w"], packed["cat_b"],
        mp=mp, kp=blk["kp"], ck=ck, coutp=blk["coutp"], npd=npd, catp=catp)

    # patch_out is a 1x1 conv with padding=1: border pixels only see the zero padding,
    # so their logit equals the bias; interior comes from the kernel.
    pb = packed["patch_b"][0, 0]
    logit_map = patch_rows[:m, 0].reshape(n, hf, wf)
    patch_logit = jnp.full((n, hf + 2, wf + 2), pb, dtype=jnp.float32)
    patch_logit = patch_logit.at[:, 1:-1, 1:-1].set(logit_map)[:, None, :, :]
    patch_sig = jax.nn.sigmoid(patch_logit)
    category_score = cat_rows[:n, :packed["category_num"]]
    return patch_sig, patch_logit, category_score


# ---------------------------------------------------------------------------
# Pure-JAX f32 reference (PyTorch eval semantics) for validation
# ---------------------------------------------------------------------------
def reference_forward(raw, x_nchw):
    x = x_nchw.astype(jnp.float32)
    for blk in raw["blocks"]:
        y = jax.lax.conv_general_dilated(
            x, blk["w"], window_strides=(2, 2), padding=((1, 1), (1, 1)),
            dimension_numbers=("NCHW", "HWIO", "NCHW"))
        y = y + blk["b"][None, :, None, None]
        if blk["use_bn"]:
            s = blk["gamma"] * jax.lax.rsqrt(blk["rvar"] + BN_EPS)
            t = blk["beta"] - blk["rmean"] * s
            y = y * s[None, :, None, None] + t[None, :, None, None]
        x = jnp.where(y >= 0, y, LRELU_SLOPE * y)
    feats = x                                                     # (N, C, Hf, Wf)
    pw = raw["patch_w"].reshape(1, 1, -1, 1)
    patch = jax.lax.conv_general_dilated(
        feats, pw, window_strides=(1, 1), padding=((1, 1), (1, 1)),
        dimension_numbers=("NCHW", "HWIO", "NCHW"))
    patch = patch + raw["patch_b"][None, :, None, None]
    pooled = jnp.mean(feats, axis=(2, 3))
    cat = pooled @ raw["cat_w"] + raw["cat_b"]
    return jax.nn.sigmoid(patch), patch, cat


if __name__ == "__main__":
    key = jax.random.PRNGKey(0)
    kx, kparam = jax.random.split(key)

    category_num = 10
    disc_dim = 64     # PyTorch default is 128; 64 keeps the test small while still
                      # exercising lane padding (block 0: 64->128) and K up to 4096.
    raw = init_params(kparam, category_num, img_dim=2, disc_dim=disc_dim)
    packed = pack_params(raw, category_num)

    # PyTorch-style NCHW input: batch=2, img_dim=2 (source + target), 32x32.
    x = jax.random.normal(kx, (2, 2, 32, 32), jnp.float32)

    fwd = jax.jit(functools.partial(discriminator_forward, packed))
    patch_sig, patch_logit, category_score = fwd(x)
    jax.block_until_ready((patch_sig, patch_logit, category_score))

    assert patch_sig.shape == (2, 1, 4, 4)
    assert patch_logit.shape == (2, 1, 4, 4)
    assert category_score.shape == (2, category_num)
    assert bool(jnp.all((patch_sig >= 0.0) & (patch_sig <= 1.0)))

    # Numerical check vs. the f32 reference (bf16 MXU inputs -> loose tolerance).
    ref_sig, ref_logit, ref_cat = jax.jit(functools.partial(reference_forward, raw))(x)

    def close(a, b, tol=5e-2):
        scale = float(jnp.maximum(1.0, jnp.max(jnp.abs(b))))
        return float(jnp.max(jnp.abs(a - b))) <= tol * scale

    assert close(patch_logit, ref_logit)
    assert close(patch_sig, ref_sig)
    assert close(category_score, ref_cat)

    print("KERNEL_OK")
</pallas_src>

<mosaic_0001>
module attributes {stable_mosaic.version = 11 : i64} {
  func.func @_conv_block_kernel(%arg0: i32, %arg1: i32, %arg2: memref<256x128xbf16, #tpu.memory_space<vmem>>, %arg3: memref<128x128xbf16, #tpu.memory_space<vmem>>, %arg4: memref<1x128xf32, #tpu.memory_space<vmem>>, %arg5: memref<1x128xf32, #tpu.memory_space<vmem>>, %arg6: memref<256x128xbf16, #tpu.memory_space<vmem>>, %arg7: memref<256x128xf32, #tpu.memory_space<vmem>>) attributes {dimension_semantics = [#tpu.dimension_semantics<parallel>, #tpu.dimension_semantics<arbitrary>], iteration_bounds = array<i64: 2, 1>, scalar_prefetch = 0 : i64, scratch_operands = 1 : i64, tpu.core_type = #tpu.core_type<tc>, window_params = [{transform_indices = @transform_0, window_bounds = array<i64: 256, 128>}, {transform_indices = @transform_1, window_bounds = array<i64: 128, 128>}, {pipeline_mode = #tpu.pipeline_mode<synchronous>, transform_indices = @transform_2, window_bounds = array<i64: 1, 128>}, {pipeline_mode = #tpu.pipeline_mode<synchronous>, transform_indices = @transform_3, window_bounds = array<i64: 1, 128>}, {transform_indices = @transform_4, window_bounds = array<i64: 256, 128>}]} {
    %c0 = arith.constant 0 : index
    %c0_0 = arith.constant 0 : index
    %0 = vector.load %arg2[%c0, %c0_0] : memref<256x128xbf16, #tpu.memory_space<vmem>>, vector<256x128xbf16>
    %c0_1 = arith.constant 0 : index
    %c0_2 = arith.constant 0 : index
    %1 = vector.load %arg3[%c0_1, %c0_2] : memref<128x128xbf16, #tpu.memory_space<vmem>>, vector<128x128xbf16>
    %cst = arith.constant dense<0.000000e+00> : vector<256x128xf32>
    %2 = tpu.matmul %0, %1, %cst {dimension_numbers = #tpu.dot_dimension_numbers<[1], [0], [0], [1], [0, 0, 1, 1], [], []>} : vector<256x128xbf16>, vector<128x128xbf16>, vector<256x128xf32> -> vector<256x128xf32>
    %c0_i32 = arith.constant 0 : i32
    %3 = arith.cmpi eq, %arg1, %c0_i32 : i32
    %4 = arith.extui %3 : i1 to i32
    %c0_i32_3 = arith.constant 0 : i32
    %5 = arith.cmpi ne, %4, %c0_i32_3 : i32
    scf.if %5 {
      %c0_8 = arith.constant 0 : index
      %c0_9 = arith.constant 0 : index
      %12 = vector.load %arg7[%c0_8, %c0_9] : memref<256x128xf32, #tpu.memory_space<vmem>>, vector<256x128xf32>
      tpu.vector_store %arg7[%c0_8, %c0_9], %2 {strides = array<i32>} : memref<256x128xf32, #tpu.memory_space<vmem>>, vector<256x128xf32>,
    } else {
    }
    %c0_i32_4 = arith.constant 0 : i32
    %6 = arith.cmpi sgt, %arg1, %c0_i32_4 : i32
    %7 = arith.extui %6 : i1 to i32
    %c0_i32_5 = arith.constant 0 : i32
    %8 = arith.cmpi ne, %7, %c0_i32_5 : i32
    scf.if %8 {
      %c0_8 = arith.constant 0 : index
      %c0_9 = arith.constant 0 : index
      %12 = vector.load %arg7[%c0_8, %c0_9] : memref<256x128xf32, #tpu.memory_space<vmem>>, vector<256x128xf32>
      %13 = arith.addf %12, %2 : vector<256x128xf32>
      %c0_10 = arith.constant 0 : index
      %c0_11 = arith.constant 0 : index
      %14 = vector.load %arg7[%c0_10, %c0_11] : memref<256x128xf32, #tpu.memory_space<vmem>>, vector<256x128xf32>
      tpu.vector_store %arg7[%c0_10, %c0_11], %13 {strides = array<i32>} : memref<256x128xf32, #tpu.memory_space<vmem>>, vector<256x128xf32>,
    } else {
    }
    %c0_i32_6 = arith.constant 0 : i32
    %9 = arith.cmpi eq, %arg1, %c0_i32_6 : i32
    %10 = arith.extui %9 : i1 to i32
    %c0_i32_7 = arith.constant 0 : i32
    %11 = arith.cmpi ne, %10, %c0_i32_7 : i32
    scf.if %11 {
      %c0_8 = arith.constant 0 : index
      %c0_9 = arith.constant 0 : index
      %12 = vector.load %arg7[%c0_8, %c0_9] : memref<256x128xf32, #tpu.memory_space<vmem>>, vector<256x128xf32>
      %c0_10 = arith.constant 0 : index
      %c0_11 = arith.constant 0 : index
      %13 = vector.load %arg4[%c0_10, %c0_11] : memref<1x128xf32, #tpu.memory_space<vmem>>, vector<1x128xf32>
      %14 = vector.broadcast %13 : vector<1x128xf32> to vector<256x128xf32>
      %15 = arith.mulf %12, %14 : vector<256x128xf32>
      %c0_12 = arith.constant 0 : index
      %c0_13 = arith.constant 0 : index
      %16 = vector.load %arg5[%c0_12, %c0_13] : memref<1x128xf32, #tpu.memory_space<vmem>>, vector<1x128xf32>
      %17 = vector.broadcast %16 : vector<1x128xf32> to vector<256x128xf32>
      %18 = arith.addf %15, %17 : vector<256x128xf32>
      %cst_14 = arith.constant 2.000000e-01 : f32
      %19 = vector.broadcast %cst_14 : f32 to vector<256x128xf32>
      %20 = arith.mulf %19, %18 : vector<256x128xf32>
      %21 = arith.maximumf %18, %20 : vector<256x128xf32>
      %22 = arith.truncf %21 : vector<256x128xf32> to vector<256x128xbf16>
      %c0_15 = arith.constant 0 : index
      %c0_16 = arith.constant 0 : index
      %23 = vector.load %arg6[%c0_15, %c0_16] : memref<256x128xbf16, #tpu.memory_space<vmem>>, vector<256x128xbf16>
      tpu.vector_store %arg6[%c0_15, %c0_16], %22 {strides = array<i32>} : memref<256x128xbf16, #tpu.memory_space<vmem>>, vector<256x128xbf16>,
    } else {
    }
    return
  }
  func.func @transform_0(%arg0: i32, %arg1: i32) -> (i32, i32) {
    %c0_i32 = arith.constant 0 : i32
    return %arg0, %arg1 : i32, i32
  }
  func.func @transform_1(%arg0: i32, %arg1: i32) -> (i32, i32) {
    %c0_i32 = arith.constant 0 : i32
    %c0_i32_0 = arith.constant 0 : i32
    return %arg1, %c0_i32 : i32, i32
  }
  func.func @transform_2(%arg0: i32, %arg1: i32) -> (i32, i32) {
    %c0_i32 = arith.constant 0 : i32
    %c0_i32_0 = arith.constant 0 : i32
    %c0_i32_1 = arith.constant 0 : i32
    return %c0_i32, %c0_i32_0 : i32, i32
  }
  func.func @transform_3(%arg0: i32, %arg1: i32) -> (i32, i32) {
    %c0_i32 = arith.constant 0 : i32
    %c0_i32_0 = arith.constant 0 : i32
    %c0_i32_1 = arith.constant 0 : i32
    return %c0_i32, %c0_i32_0 : i32, i32
  }
  func.func @transform_4(%arg0: i32, %arg1: i32) -> (i32, i32) {
    %c0_i32 = arith.constant 0 : i32
    %c0_i32_0 = arith.constant 0 : i32
    return %arg0, %c0_i32 : i32, i32
  }
}

module attributes {stable_mosaic.version = 11 : i64} {
  func.func @_conv_block_kernel(%arg0: i32, %arg1: i32, %arg2: memref<64x1024xbf16, #tpu.memory_space<vmem>>, %arg3: memref<1024x128xbf16, #tpu.memory_space<vmem>>, %arg4: memref<1x128xf32, #tpu.memory_space<vmem>>, %arg5: memref<1x128xf32, #tpu.memory_space<vmem>>, %arg6: memref<64x128xbf16, #tpu.memory_space<vmem>>, %arg7: memref<64x128xf32, #tpu.memory_space<vmem>>) attributes {dimension_semantics = [#tpu.dimension_semantics<parallel>, #tpu.dimension_semantics<arbitrary>], iteration_bounds = array<i64: 2, 1>, scalar_prefetch = 0 : i64, scratch_operands = 1 : i64, tpu.core_type = #tpu.core_type<tc>, window_params = [{transform_indices = @transform_0, window_bounds = array<i64: 64, 1024>}, {transform_indices = @transform_1, window_bounds = array<i64: 1024, 128>}, {pipeline_mode = #tpu.pipeline_mode<synchronous>, transform_indices = @transform_2, window_bounds = array<i64: 1, 128>}, {pipeline_mode = #tpu.pipeline_mode<synchronous>, transform_indices = @transform_3, window_bounds = array<i64: 1, 128>}, {transform_indices = @transform_4, window_bounds = array<i64: 64, 128>}]} {
    %c0 = arith.constant 0 : index
    %c0_0 = arith.constant 0 : index
    %0 = vector.load %arg2[%c0, %c0_0] : memref<64x1024xbf16, #tpu.memory_space<vmem>>, vector<64x1024xbf16>
    %c0_1 = arith.constant 0 : index
    %c0_2 = arith.constant 0 : index
    %1 = vector.load %arg3[%c0_1, %c0_2] : memref<1024x128xbf16, #tpu.memory_space<vmem>>, vector<1024x128xbf16>
    %cst = arith.constant dense<0.000000e+00> : vector<64x128xf32>
    %2 = tpu.matmul %0, %1, %cst {dimension_numbers = #tpu.dot_dimension_numbers<[1], [0], [0], [1], [0, 0, 1, 1], [], []>} : vector<64x1024xbf16>, vector<1024x128xbf16>, vector<64x128xf32> -> vector<64x128xf32>
    %c0_i32 = arith.constant 0 : i32
    %3 = arith.cmpi eq, %arg1, %c0_i32 : i32
    %4 = arith.extui %3 : i1 to i32
    %c0_i32_3 = arith.constant 0 : i32
    %5 = arith.cmpi ne, %4, %c0_i32_3 : i32
    scf.if %5 {
      %c0_8 = arith.constant 0 : index
      %c0_9 = arith.constant 0 : index
      %12 = vector.load %arg7[%c0_8, %c0_9] : memref<64x128xf32, #tpu.memory_space<vmem>>, vector<64x128xf32>
      tpu.vector_store %arg7[%c0_8, %c0_9], %2 {strides = array<i32>} : memref<64x128xf32, #tpu.memory_space<vmem>>, vector<64x128xf32>,
    } else {
    }
    %c0_i32_4 = arith.constant 0 : i32
    %6 = arith.cmpi sgt, %arg1, %c0_i32_4 : i32
    %7 = arith.extui %6 : i1 to i32
    %c0_i32_5 = arith.constant 0 : i32
    %8 = arith.cmpi ne, %7, %c0_i32_5 : i32
    scf.if %8 {
      %c0_8 = arith.constant 0 : index
      %c0_9 = arith.constant 0 : index
      %12 = vector.load %arg7[%c0_8, %c0_9] : memref<64x128xf32, #tpu.memory_space<vmem>>, vector<64x128xf32>
      %13 = arith.addf %12, %2 : vector<64x128xf32>
      %c0_10 = arith.constant 0 : index
      %c0_11 = arith.constant 0 : index
      %14 = vector.load %arg7[%c0_10, %c0_11] : memref<64x128xf32, #tpu.memory_space<vmem>>, vector<64x128xf32>
      tpu.vector_store %arg7[%c0_10, %c0_11], %13 {strides = array<i32>} : memref<64x128xf32, #tpu.memory_space<vmem>>, vector<64x128xf32>,
    } else {
    }
    %c0_i32_6 = arith.constant 0 : i32
    %9 = arith.cmpi eq, %arg1, %c0_i32_6 : i32
    %10 = arith.extui %9 : i1 to i32
    %c0_i32_7 = arith.constant 0 : i32
    %11 = arith.cmpi ne, %10, %c0_i32_7 : i32
    scf.if %11 {
      %c0_8 = arith.constant 0 : index
      %c0_9 = arith.constant 0 : index
      %12 = vector.load %arg7[%c0_8, %c0_9] : memref<64x128xf32, #tpu.memory_space<vmem>>, vector<64x128xf32>
      %c0_10 = arith.constant 0 : index
      %c0_11 = arith.constant 0 : index
      %13 = vector.load %arg4[%c0_10, %c0_11] : memref<1x128xf32, #tpu.memory_space<vmem>>, vector<1x128xf32>
      %14 = vector.broadcast %13 : vector<1x128xf32> to vector<64x128xf32>
      %15 = arith.mulf %12, %14 : vector<64x128xf32>
      %c0_12 = arith.constant 0 : index
      %c0_13 = arith.constant 0 : index
      %16 = vector.load %arg5[%c0_12, %c0_13] : memref<1x128xf32, #tpu.memory_space<vmem>>, vector<1x128xf32>
      %17 = vector.broadcast %16 : vector<1x128xf32> to vector<64x128xf32>
      %18 = arith.addf %15, %17 : vector<64x128xf32>
      %cst_14 = arith.constant 2.000000e-01 : f32
      %19 = vector.broadcast %cst_14 : f32 to vector<64x128xf32>
      %20 = arith.mulf %19, %18 : vector<64x128xf32>
      %21 = arith.maximumf %18, %20 : vector<64x128xf32>
      %22 = arith.truncf %21 : vector<64x128xf32> to vector<64x128xbf16>
      %c0_15 = arith.constant 0 : index
      %c0_16 = arith.constant 0 : index
      %23 = vector.load %arg6[%c0_15, %c0_16] : memref<64x128xbf16, #tpu.memory_space<vmem>>, vector<64x128xbf16>
      tpu.vector_store %arg6[%c0_15, %c0_16], %22 {strides = array<i32>} : memref<64x128xbf16, #tpu.memory_space<vmem>>, vector<64x128xbf16>,
    } else {
    }
    return
  }
  func.func @transform_0(%arg0: i32, %arg1: i32) -> (i32, i32) {
    %c0_i32 = arith.constant 0 : i32
    return %arg0, %arg1 : i32, i32
  }
  func.func @transform_1(%arg0: i32, %arg1: i32) -> (i32, i32) {
    %c0_i32 = arith.constant 0 : i32
    %c0_i32_0 = arith.constant 0 : i32
    return %arg1, %c0_i32 : i32, i32
  }
  func.func @transform_2(%arg0: i32, %arg1: i32) -> (i32, i32) {
    %c0_i32 = arith.constant 0 : i32
    %c0_i32_0 = arith.constant 0 : i32
    %c0_i32_1 = arith.constant 0 : i32
    return %c0_i32, %c0_i32_0 : i32, i32
  }
  func.func @transform_3(%arg0: i32, %arg1: i32) -> (i32, i32) {
    %c0_i32 = arith.constant 0 : i32
    %c0_i32_0 = arith.constant 0 : i32
    %c0_i32_1 = arith.constant 0 : i32
    return %c0_i32, %c0_i32_0 : i32, i32
  }
  func.func @transform_4(%arg0: i32, %arg1: i32) -> (i32, i32) {
    %c0_i32 = arith.constant 0 : i32
    %c0_i32_0 = arith.constant 0 : i32
    return %arg0, %c0_i32 : i32, i32
  }
}

module attributes {stable_mosaic.version = 11 : i64} {
  func.func @_conv_block_kernel(%arg0: i32, %arg1: i32, %arg2: memref<16x2048xbf16, #tpu.memory_space<vmem>>, %arg3: memref<2048x256xbf16, #tpu.memory_space<vmem>>, %arg4: memref<1x256xf32, #tpu.memory_space<vmem>>, %arg5: memref<1x256xf32, #tpu.memory_space<vmem>>, %arg6: memref<16x256xbf16, #tpu.memory_space<vmem>>, %arg7: memref<16x256xf32, #tpu.memory_space<vmem>>) attributes {dimension_semantics = [#tpu.dimension_semantics<parallel>, #tpu.dimension_semantics<arbitrary>], iteration_bounds = array<i64: 2, 1>, scalar_prefetch = 0 : i64, scratch_operands = 1 : i64, tpu.core_type = #tpu.core_type<tc>, window_params = [{transform_indices = @transform_0, window_bounds = array<i64: 16, 2048>}, {transform_indices = @transform_1, window_bounds = array<i64: 2048, 256>}, {pipeline_mode = #tpu.pipeline_mode<synchronous>, transform_indices = @transform_2, window_bounds = array<i64: 1, 256>}, {pipeline_mode = #tpu.pipeline_mode<synchronous>, transform_indices = @transform_3, window_bounds = array<i64: 1, 256>}, {transform_indices = @transform_4, window_bounds = array<i64: 16, 256>}]} {
    %c0 = arith.constant 0 : index
    %c0_0 = arith.constant 0 : index
    %0 = vector.load %arg2[%c0, %c0_0] : memref<16x2048xbf16, #tpu.memory_space<vmem>>, vector<16x2048xbf16>
    %c0_1 = arith.constant 0 : index
    %c0_2 = arith.constant 0 : index
    %1 = vector.load %arg3[%c0_1, %c0_2] : memref<2048x256xbf16, #tpu.memory_space<vmem>>, vector<2048x256xbf16>
    %cst = arith.constant dense<0.000000e+00> : vector<16x256xf32>
    %2 = tpu.matmul %0, %1, %cst {dimension_numbers = #tpu.dot_dimension_numbers<[1], [0], [0], [1], [0, 0, 1, 1], [], []>} : vector<16x2048xbf16>, vector<2048x256xbf16>, vector<16x256xf32> -> vector<16x256xf32>
    %c0_i32 = arith.constant 0 : i32
    %3 = arith.cmpi eq, %arg1, %c0_i32 : i32
    %4 = arith.extui %3 : i1 to i32
    %c0_i32_3 = arith.constant 0 : i32
    %5 = arith.cmpi ne, %4, %c0_i32_3 : i32
    scf.if %5 {
      %c0_8 = arith.constant 0 : index
      %c0_9 = arith.constant 0 : index
      %12 = vector.load %arg7[%c0_8, %c0_9] : memref<16x256xf32, #tpu.memory_space<vmem>>, vector<16x256xf32>
      tpu.vector_store %arg7[%c0_8, %c0_9], %2 {strides = array<i32>} : memref<16x256xf32, #tpu.memory_space<vmem>>, vector<16x256xf32>,
    } else {
    }
    %c0_i32_4 = arith.constant 0 : i32
    %6 = arith.cmpi sgt, %arg1, %c0_i32_4 : i32
    %7 = arith.extui %6 : i1 to i32
    %c0_i32_5 = arith.constant 0 : i32
    %8 = arith.cmpi ne, %7, %c0_i32_5 : i32
    scf.if %8 {
      %c0_8 = arith.constant 0 : index
      %c0_9 = arith.constant 0 : index
      %12 = vector.load %arg7[%c0_8, %c0_9] : memref<16x256xf32, #tpu.memory_space<vmem>>, vector<16x256xf32>
      %13 = arith.addf %12, %2 : vector<16x256xf32>
      %c0_10 = arith.constant 0 : index
      %c0_11 = arith.constant 0 : index
      %14 = vector.load %arg7[%c0_10, %c0_11] : memref<16x256xf32, #tpu.memory_space<vmem>>, vector<16x256xf32>
      tpu.vector_store %arg7[%c0_10, %c0_11], %13 {strides = array<i32>} : memref<16x256xf32, #tpu.memory_space<vmem>>, vector<16x256xf32>,
    } else {
    }
    %c0_i32_6 = arith.constant 0 : i32
    %9 = arith.cmpi eq, %arg1, %c0_i32_6 : i32
    %10 = arith.extui %9 : i1 to i32
    %c0_i32_7 = arith.constant 0 : i32
    %11 = arith.cmpi ne, %10, %c0_i32_7 : i32
    scf.if %11 {
      %c0_8 = arith.constant 0 : index
      %c0_9 = arith.constant 0 : index
      %12 = vector.load %arg7[%c0_8, %c0_9] : memref<16x256xf32, #tpu.memory_space<vmem>>, vector<16x256xf32>
      %c0_10 = arith.constant 0 : index
      %c0_11 = arith.constant 0 : index
      %13 = vector.load %arg4[%c0_10, %c0_11] : memref<1x256xf32, #tpu.memory_space<vmem>>, vector<1x256xf32>
      %14 = vector.broadcast %13 : vector<1x256xf32> to vector<16x256xf32>
      %15 = arith.mulf %12, %14 : vector<16x256xf32>
      %c0_12 = arith.constant 0 : index
      %c0_13 = arith.constant 0 : index
      %16 = vector.load %arg5[%c0_12, %c0_13] : memref<1x256xf32, #tpu.memory_space<vmem>>, vector<1x256xf32>
      %17 = vector.broadcast %16 : vector<1x256xf32> to vector<16x256xf32>
      %18 = arith.addf %15, %17 : vector<16x256xf32>
      %cst_14 = arith.constant 2.000000e-01 : f32
      %19 = vector.broadcast %cst_14 : f32 to vector<16x256xf32>
      %20 = arith.mulf %19, %18 : vector<16x256xf32>
      %21 = arith.maximumf %18, %20 : vector<16x256xf32>
      %22 = arith.truncf %21 : vector<16x256xf32> to vector<16x256xbf16>
      %c0_15 = arith.constant 0 : index
      %c0_16 = arith.constant 0 : index
      %23 = vector.load %arg6[%c0_15, %c0_16] : memref<16x256xbf16, #tpu.memory_space<vmem>>, vector<16x256xbf16>
      tpu.vector_store %arg6[%c0_15, %c0_16], %22 {strides = array<i32>} : memref<16x256xbf16, #tpu.memory_space<vmem>>, vector<16x256xbf16>,
    } else {
    }
    return
  }
  func.func @transform_0(%arg0: i32, %arg1: i32) -> (i32, i32) {
    %c0_i32 = arith.constant 0 : i32
    return %arg0, %arg1 : i32, i32
  }
  func.func @transform_1(%arg0: i32, %arg1: i32) -> (i32, i32) {
    %c0_i32 = arith.constant 0 : i32
    %c0_i32_0 = arith.constant 0 : i32
    return %arg1, %c0_i32 : i32, i32
  }
  func.func @transform_2(%arg0: i32, %arg1: i32) -> (i32, i32) {
    %c0_i32 = arith.constant 0 : i32
    %c0_i32_0 = arith.constant 0 : i32
    %c0_i32_1 = arith.constant 0 : i32
    return %c0_i32, %c0_i32_0 : i32, i32
  }
  func.func @transform_3(%arg0: i32, %arg1: i32) -> (i32, i32) {
    %c0_i32 = arith.constant 0 : i32
    %c0_i32_0 = arith.constant 0 : i32
    %c0_i32_1 = arith.constant 0 : i32
    return %c0_i32, %c0_i32_0 : i32, i32
  }
  func.func @transform_4(%arg0: i32, %arg1: i32) -> (i32, i32) {
    %c0_i32 = arith.constant 0 : i32
    %c0_i32_0 = arith.constant 0 : i32
    return %arg0, %c0_i32 : i32, i32
  }
}

module attributes {stable_mosaic.version = 11 : i64} {
  func.func @_final_block_kernel(%arg0: i32, %arg1: memref<8x4096xbf16, #tpu.memory_space<vmem>>, %arg2: memref<4096x512xbf16, #tpu.memory_space<vmem>>, %arg3: memref<1x512xf32, #tpu.memory_space<vmem>>, %arg4: memref<1x512xf32, #tpu.memory_space<vmem>>, %arg5: memref<512x128xf32, #tpu.memory_space<vmem>>, %arg6: memref<1x128xf32, #tpu.memory_space<vmem>>, %arg7: memref<8x8xf32, #tpu.memory_space<vmem>>, %arg8: memref<512x128xf32, #tpu.memory_space<vmem>>, %arg9: memref<1x128xf32, #tpu.memory_space<vmem>>, %arg10: memref<8x128xf32, #tpu.memory_space<vmem>>, %arg11: memref<8x128xf32, #tpu.memory_space<vmem>>, %arg12: memref<8x512xf32, #tpu.memory_space<vmem>>) attributes {dimension_semantics = [#tpu.dimension_semantics<arbitrary>], iteration_bounds = array<i64: 1>, scalar_prefetch = 0 : i64, scratch_operands = 1 : i64, tpu.core_type = #tpu.core_type<tc>, window_params = [{transform_indices = @transform_0, window_bounds = array<i64: 8, 4096>}, {transform_indices = @transform_1, window_bounds = array<i64: 4096, 512>}, {pipeline_mode = #tpu.pipeline_mode<synchronous>, transform_indices = @transform_2, window_bounds = array<i64: 1, 512>}, {pipeline_mode = #tpu.pipeline_mode<synchronous>, transform_indices = @transform_3, window_bounds = array<i64: 1, 512>}, {pipeline_mode = #tpu.pipeline_mode<synchronous>, transform_indices = @transform_4, window_bounds = array<i64: 512, 128>}, {pipeline_mode = #tpu.pipeline_mode<synchronous>, transform_indices = @transform_5, window_bounds = array<i64: 1, 128>}, {pipeline_mode = #tpu.pipeline_mode<synchronous>, transform_indices = @transform_6, window_bounds = array<i64: 8, 8>}, {pipeline_mode = #tpu.pipeline_mode<synchronous>, transform_indices = @transform_7, window_bounds = array<i64: 512, 128>}, {pipeline_mode = #tpu.pipeline_mode<synchronous>, transform_indices = @transform_8, window_bounds = array<i64: 1, 128>}, {pipeline_mode = #tpu.pipeline_mode<synchronous>, transform_indices = @transform_9, window_bounds = array<i64: 8, 128>}, {pipeline_mode = #tpu.pipeline_mode<synchronous>, transform_indices = @transform_10, window_bounds = array<i64: 8, 128>}]} {
    %c0 = arith.constant 0 : index
    %c0_0 = arith.constant 0 : index
    %0 = vector.load %arg1[%c0, %c0_0] : memref<8x4096xbf16, #tpu.memory_space<vmem>>, vector<8x4096xbf16>
    %c0_1 = arith.constant 0 : index
    %c0_2 = arith.constant 0 : index
    %1 = vector.load %arg2[%c0_1, %c0_2] : memref<4096x512xbf16, #tpu.memory_space<vmem>>, vector<4096x512xbf16>
    %cst = arith.constant dense<0.000000e+00> : vector<8x512xf32>
    %2 = tpu.matmul %0, %1, %cst {dimension_numbers = #tpu.dot_dimension_numbers<[1], [0], [0], [1], [0, 0, 1, 1], [], []>} : vector<8x4096xbf16>, vector<4096x512xbf16>, vector<8x512xf32> -> vector<8x512xf32>
    %c0_i32 = arith.constant 0 : i32
    %3 = arith.cmpi eq, %arg0, %c0_i32 : i32
    %4 = arith.extui %3 : i1 to i32
    %c0_i32_3 = arith.constant 0 : i32
    %5 = arith.cmpi ne, %4, %c0_i32_3 : i32
    scf.if %5 {
      %c0_8 = arith.constant 0 : index
      %c0_9 = arith.constant 0 : index
      %12 = vector.load %arg12[%c0_8, %c0_9] : memref<8x512xf32, #tpu.memory_space<vmem>>, vector<8x512xf32>
      tpu.vector_store %arg12[%c0_8, %c0_9], %2 {strides = array<i32>} : memref<8x512xf32, #tpu.memory_space<vmem>>, vector<8x512xf32>,
    } else {
    }
    %c0_i32_4 = arith.constant 0 : i32
    %6 = arith.cmpi sgt, %arg0, %c0_i32_4 : i32
    %7 = arith.extui %6 : i1 to i32
    %c0_i32_5 = arith.constant 0 : i32
    %8 = arith.cmpi ne, %7, %c0_i32_5 : i32
    scf.if %8 {
      %c0_8 = arith.constant 0 : index
      %c0_9 = arith.constant 0 : index
      %12 = vector.load %arg12[%c0_8, %c0_9] : memref<8x512xf32, #tpu.memory_space<vmem>>, vector<8x512xf32>
      %13 = arith.addf %12, %2 : vector<8x512xf32>
      %c0_10 = arith.constant 0 : index
      %c0_11 = arith.constant 0 : index
      %14 = vector.load %arg12[%c0_10, %c0_11] : memref<8x512xf32, #tpu.memory_space<vmem>>, vector<8x512xf32>
      tpu.vector_store %arg12[%c0_10, %c0_11], %13 {strides = array<i32>} : memref<8x512xf32, #tpu.memory_space<vmem>>, vector<8x512xf32>,
    } else {
    }
    %c0_i32_6 = arith.constant 0 : i32
    %9 = arith.cmpi eq, %arg0, %c0_i32_6 : i32
    %10 = arith.extui %9 : i1 to i32
    %c0_i32_7 = arith.constant 0 : i32
    %11 = arith.cmpi ne, %10, %c0_i32_7 : i32
    scf.if %11 {
      %c0_8 = arith.constant 0 : index
      %c0_9 = arith.constant 0 : index
      %12 = vector.load %arg12[%c0_8, %c0_9] : memref<8x512xf32, #tpu.memory_space<vmem>>, vector<8x512xf32>
      %c0_10 = arith.constant 0 : index
      %c0_11 = arith.constant 0 : index
      %13 = vector.load %arg3[%c0_10, %c0_11] : memref<1x512xf32, #tpu.memory_space<vmem>>, vector<1x512xf32>
      %14 = vector.broadcast %13 : vector<1x512xf32> to vector<8x512xf32>
      %15 = arith.mulf %12, %14 : vector<8x512xf32>
      %c0_12 = arith.constant 0 : index
      %c0_13 = arith.constant 0 : index
      %16 = vector.load %arg4[%c0_12, %c0_13] : memref<1x512xf32, #tpu.memory_space<vmem>>, vector<1x512xf32>
      %17 = vector.broadcast %16 : vector<1x512xf32> to vector<8x512xf32>
      %18 = arith.addf %15, %17 : vector<8x512xf32>
      %cst_14 = arith.constant 2.000000e-01 : f32
      %19 = vector.broadcast %cst_14 : f32 to vector<8x512xf32>
      %20 = arith.mulf %19, %18 : vector<8x512xf32>
      %21 = arith.maximumf %18, %20 : vector<8x512xf32>
      %c0_15 = arith.constant 0 : index
      %c0_16 = arith.constant 0 : index
      %22 = vector.load %arg5[%c0_15, %c0_16] : memref<512x128xf32, #tpu.memory_space<vmem>>, vector<512x128xf32>
      %cst_17 = arith.constant dense<0.000000e+00> : vector<8x128xf32>
      %23 = tpu.matmul %21, %22, %cst_17 {dimension_numbers = #tpu.dot_dimension_numbers<[1], [0], [0], [1], [0, 0, 1, 1], [], []>} : vector<8x512xf32>, vector<512x128xf32>, vector<8x128xf32> -> vector<8x128xf32>
      %c0_18 = arith.constant 0 : index
      %c0_19 = arith.constant 0 : index
      %24 = vector.load %arg6[%c0_18, %c0_19] : memref<1x128xf32, #tpu.memory_space<vmem>>, vector<1x128xf32>
      %25 = vector.broadcast %24 : vector<1x128xf32> to vector<8x128xf32>
      %26 = arith.addf %23, %25 : vector<8x128xf32>
      %c0_20 = arith.constant 0 : index
      %c0_21 = arith.constant 0 : index
      %27 = vector.load %arg10[%c0_20, %c0_21] : memref<8x128xf32, #tpu.memory_space<vmem>>, vector<8x128xf32>
      tpu.vector_store %arg10[%c0_20, %c0_21], %26 {strides = array<i32>} : memref<8x128xf32, #tpu.memory_space<vmem>>, vector<8x128xf32>,
      %c0_22 = arith.constant 0 : index
      %c0_23 = arith.constant 0 : index
      %28 = vector.load %arg7[%c0_22, %c0_23] : memref<8x8xf32, #tpu.memory_space<vmem>>, vector<8x8xf32>
      %cst_24 = arith.constant dense<0.000000e+00> : vector<8x512xf32>
      %29 = tpu.matmul %28, %21, %cst_24 {dimension_numbers = #tpu.dot_dimension_numbers<[1], [0], [0], [1], [0, 0, 1, 1], [], []>} : vector<8x8xf32>, vector<8x512xf32>, vector<8x512xf32> -> vector<8x512xf32>
      %c0_25 = arith.constant 0 : index
      %c0_26 = arith.constant 0 : index
      %30 = vector.load %arg8[%c0_25, %c0_26] : memref<512x128xf32, #tpu.memory_space<vmem>>, vector<512x128xf32>
      %cst_27 = arith.constant dense<0.000000e+00> : vector<8x128xf32>
      %31 = tpu.matmul %29, %30, %cst_27 {dimension_numbers = #tpu.dot_dimension_numbers<[1], [0], [0], [1], [0, 0, 1, 1], [], []>} : vector<8x512xf32>, vector<512x128xf32>, vector<8x128xf32> -> vector<8x128xf32>
      %c0_28 = arith.constant 0 : index
      %c0_29 = arith.constant 0 : index
      %32 = vector.load %arg9[%c0_28, %c0_29] : memref<1x128xf32, #tpu.memory_space<vmem>>, vector<1x128xf32>
      %33 = vector.broadcast %32 : vector<1x128xf32> to vector<8x128xf32>
      %34 = arith.addf %31, %33 : vector<8x128xf32>
      %c0_30 = arith.constant 0 : index
      %c0_31 = arith.constant 0 : index
      %35 = vector.load %arg11[%c0_30, %c0_31] : memref<8x128xf32, #tpu.memory_space<vmem>>, vector<8x128xf32>
      tpu.vector_store %arg11[%c0_30, %c0_31], %34 {strides = array<i32>} : memref<8x128xf32, #tpu.memory_space<vmem>>, vector<8x128xf32>,
    } else {
    }
    return
  }
  func.func @transform_0(%arg0: i32) -> (i32, i32) {
    %c0_i32 = arith.constant 0 : i32
    %c0_i32_0 = arith.constant 0 : i32
    return %c0_i32, %arg0 : i32, i32
  }
  func.func @transform_1(%arg0: i32) -> (i32, i32) {
    %c0_i32 = arith.constant 0 : i32
    %c0_i32_0 = arith.constant 0 : i32
    return %arg0, %c0_i32 : i32, i32
  }
  func.func @transform_2(%arg0: i32) -> (i32, i32) {
    %c0_i32 = arith.constant 0 : i32
    %c0_i32_0 = arith.constant 0 : i32
    %c0_i32_1 = arith.constant 0 : i32
    return %c0_i32, %c0_i32_0 : i32, i32
  }
  func.func @transform_3(%arg0: i32) -> (i32, i32) {
    %c0_i32 = arith.constant 0 : i32
    %c0_i32_0 = arith.constant 0 : i32
    %c0_i32_1 = arith.constant 0 : i32
    return %c0_i32, %c0_i32_0 : i32, i32
  }
  func.func @transform_4(%arg0: i32) -> (i32, i32) {
    %c0_i32 = arith.constant 0 : i32
    %c0_i32_0 = arith.constant 0 : i32
    %c0_i32_1 = arith.constant 0 : i32
    return %c0_i32, %c0_i32_0 : i32, i32
  }
  func.func @transform_5(%arg0: i32) -> (i32, i32) {
    %c0_i32 = arith.constant 0 : i32
    %c0_i32_0 = arith.constant 0 : i32
    %c0_i32_1 = arith.constant 0 : i32
    return %c0_i32, %c0_i32_0 : i32, i32
  }
  func.func @transform_6(%arg0: i32) -> (i32, i32) {
    %c0_i32 = arith.constant 0 : i32
    %c0_i32_0 = arith.constant 0 : i32
    %c0_i32_1 = arith.constant 0 : i32
    return %c0_i32, %c0_i32_0 : i32, i32
  }
  func.func @transform_7(%arg0: i32) -> (i32, i32) {
    %c0_i32 = arith.constant 0 : i32
    %c0_i32_0 = arith.constant 0 : i32
    %c0_i32_1 = arith.constant 0 : i32
    return %c0_i32, %c0_i32_0 : i32, i32
  }
  func.func @transform_8(%arg0: i32) -> (i32, i32) {
    %c0_i32 = arith.constant 0 : i32
    %c0_i32_0 = arith.constant 0 : i32
    %c0_i32_1 = arith.constant 0 : i32
    return %c0_i32, %c0_i32_0 : i32, i32
  }
  func.func @transform_9(%arg0: i32) -> (i32, i32) {
    %c0_i32 = arith.constant 0 : i32
    %c0_i32_0 = arith.constant 0 : i32
    %c0_i32_1 = arith.constant 0 : i32
    return %c0_i32, %c0_i32_0 : i32, i32
  }
  func.func @transform_10(%arg0: i32) -> (i32, i32) {
    %c0_i32 = arith.constant 0 : i32
    %c0_i32_0 = arith.constant 0 : i32
    %c0_i32_1 = arith.constant 0 : i32
    return %c0_i32, %c0_i32_0 : i32, i32
  }
}

</mosaic_0001>

<llo_original>
// kernel: discriminator_forward.4
$region0: #{discriminator_forward.4}
  #allocation0 [shape = 'u32[]', space=smem, size = 0x4, offset = 0x4, fixed_abs, tag = 'smem constant byte address 0x4 - core index']
  #allocation1 [shape = 'u32[144,128]{1,0:T(1,128)}', space=vmem, size = 0x12000, scoped, tag = 'internal scratch']
  #allocation2 [shape = 'f32[256,128]{1,0:T(8,128)}', space=vmem, size = 0x20000, scoped, tag = 'scratch operand']
  %s0 = inlined_call_operand.vmem [shape: bf16[512,128], index: 0, kind: input, shape index: {}]
  %s1 = inlined_call_operand.hbm [shape: bf16[128,128], index: 1, kind: input, shape index: {}]
  %s2 = inlined_call_operand.vmem [shape: f32[1,128], index: 2, kind: input, shape index: {}]
  %s3 = inlined_call_operand.hbm [shape: f32[1,128], index: 3, kind: input, shape index: {}]
  %s4 = inlined_call_operand.vmem [shape: bf16[512,128], index: 4, kind: output, shape index: {}]
  %s5 = sld [smem:[#allocation0]]
  $region69: #{discriminator_forward.4} parent=0
    _
  %s7 = ssub.s32 1, %s5
  %s8 = scalar_select 0, %s7, %s5
  $region1: #{discriminator_forward.4} parent=0
    #allocation3 [shape = 'u8[32768]{0}', space=vmem, size = 0x8000, scoped, tag = 'input window, operand 1, single buffered']
    #allocation4 [shape = 's32[2]{0}', space=sflag, size = 0x8, scoped, tag = 'scoped memory for discriminator_forward.4']
    #allocation5 [shape = 'u8[512]{0}', space=vmem, size = 0x400, scoped, tag = 'input window, operand 3, single buffered']
    #allocation6 [shape = 's32[1]{0}', space=sflag, size = 0x4, scoped, tag = 'scoped memory for discriminator_forward.4']
    %9 = vsyncpa [#allocation4], 0
    %10 = vsyncpa [#allocation6], 0
    loop: start=0, step=1, limit=4
    $region2: #{discriminator_forward.4} parent=1 // loop_pre_header
      _
    $region3: #{discriminator_forward.4} parent=1 // loop_header
      %s12 = sphi 0, %s16
      %p13 = scmp.ge.s32.totalorder %s12, 4
      %s19 = sphi 0, %s31
      %s20 = sphi 0, %s27
      %s21 = sphi 0, %s19
      %s22 = sphi 0, %s20
      %s23 = sphi 0, %s21
      %s24 = sphi 0, %s22
      %s36 = sphi 0, %s38
      %s39 = sphi 0, %s36
      %s40 = sphi 0, %s39
      %s56 = sphi 0, %s40
      %s62 = sphi 0, %s64
      %s65 = sphi 0, %s62
      %s66 = sphi 0, %s65
      %s82 = sphi 0, %s66
      %s86 = sphi 0, %s86
      %s88 = sphi 0, %s86
      %s89 = sphi 0, %s88
      %s103 = sphi 0, %s89
      %s107 = sphi 0, %s107
      %s109 = sphi 0, %s107
      %s110 = sphi 0, %s109
      %s124 = sphi 0, %s110
      %s130 = sphi 0, %s132
      %s133 = sphi 0, %s130
      %s134 = sphi 0, %s133
      %s150 = sphi 0, %s134
    $region4: #{discriminator_forward.4} parent=1 // loop_header_branch
      %15 = sbr.rel (%p13) target = $region8
    $region5: #{discriminator_forward.4} parent=1 // loop_body
      %s17 = ssub.s32 %s12, 1
      %s18 = ssub.s32 %s12, 2
      %s25 = sadd.s32 1, %s20
      %p26 = scmp.ge.s32.totalorder %s25, 1
      %s27 = scalar_select %p26, 0, %s25
      %s28 = sadd.s32 1, %s19
      %s29 = scalar_select %p26, %s28, %s19
      %p30 = scmp.ge.s32.totalorder %s29, 2
      %s31 = scalar_select %p30, 0, %s29
      %s32 = ssub.s32 %s19, %s31
      %s33 = ssub.s32 %s20, %s27
      %s34 = sor.u32 %s32, %s33
      %p35 = scmp.eq.s32.totalorder %s34, 0
      %s37 = sadd.s32 %s36, 1
      %s38 = scalar_select %p35, %s36, %s37
      %p41 = pneg %p35
      %p42 = scmp.eq.s32.totalorder %s12, 1
      %p43 = por %p41, %p42
      %p44 = scmp.ne.s32.totalorder %s36, %s39
      %p45 = scmp.eq.s32.totalorder %s12, 0
      %p46 = por %p44, %p45
      %p47 = scmp.ne.s32.totalorder %s36, %s39
      %p48 = scmp.eq.s32.totalorder %s17, 1
      %p49 = por %p47, %p48
      %p50 = scmp.ne.s32.totalorder %s39, %s40
      %p51 = scmp.eq.s32.totalorder %s17, 0
      %p52 = por %p50, %p51
      %p53 = scmp.ne.s32.totalorder %s39, %s40
      %p54 = scmp.eq.s32.totalorder %s18, 1
      %p55 = por %p53, %p54
      %p57 = scmp.ne.s32.totalorder %s40, %s56
      %p58 = scmp.eq.s32.totalorder %s18, 0
      %p59 = por %p57, %p58
      %s60 = ssub.s32 %s20, %s27
      %p61 = scmp.eq.s32.totalorder %s60, 0
      %s63 = sadd.s32 %s62, 1
      %s64 = scalar_select %p61, %s62, %s63
      %p67 = pneg %p61
      %p68 = scmp.eq.s32.totalorder %s12, 1
      %p69 = por %p67, %p68
      %p70 = scmp.ne.s32.totalorder %s62, %s65
      %p71 = scmp.eq.s32.totalorder %s12, 0
      %p72 = por %p70, %p71
      %p73 = scmp.ne.s32.totalorder %s62, %s65
      %p74 = scmp.eq.s32.totalorder %s17, 1
      %p75 = por %p73, %p74
      %p76 = scmp.ne.s32.totalorder %s65, %s66
      %p77 = scmp.eq.s32.totalorder %s17, 0
      %p78 = por %p76, %p77
      %p79 = scmp.ne.s32.totalorder %s65, %s66
      %p80 = scmp.eq.s32.totalorder %s18, 1
      %p81 = por %p79, %p80
      %p83 = scmp.ne.s32.totalorder %s66, %s82
      %p84 = scmp.eq.s32.totalorder %s18, 0
      %p85 = por %p83, %p84
      %s87 = sadd.s32 %s86, 1
      %p90 = scmp.eq.s32.totalorder %s12, 1
      %p91 = scmp.ne.s32.totalorder %s86, %s88
      %p92 = scmp.eq.s32.totalorder %s12, 0
      %p93 = por %p91, %p92
      %p94 = scmp.ne.s32.totalorder %s86, %s88
      %p95 = scmp.eq.s32.totalorder %s17, 1
      %p96 = por %p94, %p95
      %p97 = scmp.ne.s32.totalorder %s88, %s89
      %p98 = scmp.eq.s32.totalorder %s17, 0
      %p99 = por %p97, %p98
      %p100 = scmp.ne.s32.totalorder %s88, %s89
      %p101 = scmp.eq.s32.totalorder %s18, 1
      %p102 = por %p100, %p101
      %p104 = scmp.ne.s32.totalorder %s89, %s103
      %p105 = scmp.eq.s32.totalorder %s18, 0
      %p106 = por %p104, %p105
      %s108 = sadd.s32 %s107, 1
      %p111 = scmp.eq.s32.totalorder %s12, 1
      %p112 = scmp.ne.s32.totalorder %s107, %s109
      %p113 = scmp.eq.s32.totalorder %s12, 0
      %p114 = por %p112, %p113
      %p115 = scmp.ne.s32.totalorder %s107, %s109
      %p116 = scmp.eq.s32.totalorder %s17, 1
      %p117 = por %p115, %p116
      %p118 = scmp.ne.s32.totalorder %s109, %s110
      %p119 = scmp.eq.s32.totalorder %s17, 0
      %p120 = por %p118, %p119
      %p121 = scmp.ne.s32.totalorder %s109, %s110
      %p122 = scmp.eq.s32.totalorder %s18, 1
      %p123 = por %p121, %p122
      %p125 = scmp.ne.s32.totalorder %s110, %s124
      %p126 = scmp.eq.s32.totalorder %s18, 0
      %p127 = por %p125, %p126
      %s128 = ssub.s32 %s19, %s31
      %p129 = scmp.eq.s32.totalorder %s128, 0
      %s131 = sadd.s32 %s130, 1
      %s132 = scalar_select %p129, %s130, %s131
      %p135 = pneg %p129
      %p136 = scmp.eq.s32.totalorder %s12, 1
      %p137 = por %p135, %p136
      %p138 = scmp.ne.s32.totalorder %s130, %s133
      %p139 = scmp.eq.s32.totalorder %s12, 0
      %p140 = por %p138, %p139
      %p141 = scmp.ne.s32.totalorder %s130, %s133
      %p142 = scmp.eq.s32.totalorder %s17, 1
      %p143 = por %p141, %p142
      %p144 = scmp.ne.s32.totalorder %s133, %s134
      %p145 = scmp.eq.s32.totalorder %s17, 0
      %p146 = por %p144, %p145
      %p147 = scmp.ne.s32.totalorder %s133, %s134
      %p148 = scmp.eq.s32.totalorder %s18, 1
      %p149 = por %p147, %p148
      %p151 = scmp.ne.s32.totalorder %s134, %s150
      %p152 = scmp.eq.s32.totalorder %s18, 0
      %p153 = por %p151, %p152
      %p154 = scmp.le.s32.totalorder 1, %s12
      %p155 = scmp.lt.s32.totalorder %s12, 3
      %p156 = pnand %p154, %p155
      %p157 = pneg %p156
      // Predicated region
      $region9: #{discriminator_forward.4} parent=5 // pred_check
        _
      $region10: #{discriminator_forward.4} parent=5 // pred_check_branch
        %159 = sbr.rel (%p156) target = $region12
      $region11: #{discriminator_forward.4} parent=5 // pred_region
        %s160 = ssub.s32 %s12, 1
        // Predicated region
        $region13: #{discriminator_forward.4} parent=11 // pred_check
          %p161 = pneg %p78
        $region14: #{discriminator_forward.4} parent=11 // pred_check_branch
          %163 = sbr.rel (%p161) target = $region16
        $region15: #{discriminator_forward.4} parent=11 // pred_region
          %s164 = smul.u32 16, %s22
          %s166 = ssub.s32 1024, 1024
          %167 = vsyncadd [#allocation4], %s166
          %s168 = smul.addr %s164, 64
          %s169 = scalar_lea.hbm %s1, %s168
          %s170 = sshll.u32 [#allocation3], 4
          %s171 = int_to_ptr.vmem [resolvable:$true] %s170
          %176 = dma.hbm_to_vmem [thread:$0]  %s169, 1024, %s171, [#allocation4], 64, 64, 4
        $region16: #{discriminator_forward.4} parent=11 // pred_fallthru
          _
        // Predicated region
        $region17: #{discriminator_forward.4} parent=11 // pred_check
          %p177 = pneg %p99
        $region18: #{discriminator_forward.4} parent=11 // pred_check_branch
          %179 = sbr.rel (%p177) target = $region20
        $region19: #{discriminator_forward.4} parent=11 // pred_region
          _
        $region20: #{discriminator_forward.4} parent=11 // pred_fallthru
          _
        // Predicated region
        $region21: #{discriminator_forward.4} parent=11 // pred_check
          %p180 = pneg %p120
        $region22: #{discriminator_forward.4} parent=11 // pred_check_branch
          %182 = sbr.rel (%p180) target = $region24
        $region23: #{discriminator_forward.4} parent=11 // pred_region
          %s184 = ssub.s32 16, 16
          %185 = vsyncadd [#allocation6], %s184
          %s187 = sshll.u32 [#allocation5], 4
          %s188 = int_to_ptr.vmem [resolvable:$true] %s187
          %190 = dma.hbm_to_vmem [thread:$0]  %s3, 16, %s188, [#allocation6]
        $region24: #{discriminator_forward.4} parent=11 // pred_fallthru
          _
      $region12: #{discriminator_forward.4} parent=5 // pred_fallthru
        _
      %p191 = scmp.lt.s32.totalorder %s12, 2
      // Predicated region
      $region25: #{discriminator_forward.4} parent=5 // pred_check
        %p192 = pneg %p191
      $region26: #{discriminator_forward.4} parent=5 // pred_check_branch
        %194 = sbr.rel (%p192) target = $region28
      $region27: #{discriminator_forward.4} parent=5 // pred_region
        // Predicated region
        $region29: #{discriminator_forward.4} parent=27 // pred_check
          %p195 = pneg %p46
        $region30: #{discriminator_forward.4} parent=27 // pred_check_branch
          %197 = sbr.rel (%p195) target = $region32
        $region31: #{discriminator_forward.4} parent=27 // pred_region
          %s198 = smul.u32 32, %s19
          %p199 = scmp.lt.s32.totalorder %s198, 63
          %s200 = scalar_select %p199, %s198, 63
          %p201 = scmp.lt.s32.totalorder %s20, 0
          %s202 = scalar_select %p201, %s20, 0
          %s203 = sadd.s32 %s202, %s200
          %s204 = smul.addr %s203, 4
          %s205 = scalar_lea.vmem %s0, %s204
          %s206 = smul.u32 32, %s19
        $region32: #{discriminator_forward.4} parent=27 // pred_fallthru
          _
      $region28: #{discriminator_forward.4} parent=5 // pred_fallthru
        _
      %p207 = scmp.le.s32.totalorder 1, %s12
      %p208 = scmp.lt.s32.totalorder %s12, 3
      %p209 = pnand %p207, %p208
      %p210 = pneg %p209
      // Predicated region
      $region33: #{discriminator_forward.4} parent=5 // pred_check
        _
      $region34: #{discriminator_forward.4} parent=5 // pred_check_branch
        %212 = sbr.rel (%p209) target = $region36
      $region35: #{discriminator_forward.4} parent=5 // pred_region
        %s213 = ssub.s32 %s12, 1
        // Predicated region
        $region37: #{discriminator_forward.4} parent=35 // pred_check
          %p214 = pneg %p78
        $region38: #{discriminator_forward.4} parent=35 // pred_check_branch
          %216 = sbr.rel (%p214) target = $region40
        $region39: #{discriminator_forward.4} parent=35 // pred_region
          %217 = dma.done [#allocation4], 1024
        $region40: #{discriminator_forward.4} parent=35 // pred_fallthru
          _
        // Predicated region
        $region41: #{discriminator_forward.4} parent=35 // pred_check
          %p218 = pneg %p120
        $region42: #{discriminator_forward.4} parent=35 // pred_check_branch
          %220 = sbr.rel (%p218) target = $region44
        $region43: #{discriminator_forward.4} parent=35 // pred_region
          %221 = dma.done [#allocation6], 16
        $region44: #{discriminator_forward.4} parent=35 // pred_fallthru
          _
        %s222 = smul.u32 32, %s21
        %p223 = scmp.lt.s32.totalorder %s222, 63
        %s224 = scalar_select %p223, %s222, 63
        %p225 = scmp.lt.s32.totalorder %s22, 0
        %s226 = scalar_select %p225, %s22, 0
        %s227 = sadd.s32 %s226, %s224
        %s228 = smul.addr %s227, 4
        %s229 = scalar_lea.vmem %s0, %s228
        %p230 = pneg %p52
        %p231 = pneg %p49
        %p232 = pneg %p78
        %p233 = pneg %p75
        %p234 = pneg %p99
        %p235 = pneg %p96
        %p236 = pneg %p120
        %p237 = pneg %p117
        %p238 = pneg %p146
        %p239 = pneg %p143
        %s240 = smul.u32 32, %s21
        %p241 = scmp.lt.s32.totalorder %s240, 63
        %s242 = scalar_select %p241, %s240, 63
        %s243 = smul.addr %s242, 4
        %s244 = scalar_lea.vmem %s4, %s243
        %s245 = smul.u32 32, %s21
        %p246 = scmp.lt.s32.totalorder %s245, 63
        %s247 = scalar_select %p246, %s245, 63
        %p248 = scmp.lt.s32.totalorder %s22, 0
        %s249 = scalar_select %p248, %s22, 0
        %s250 = sadd.s32 %s249, %s247
        %s251 = smul.addr %s250, 4
        %s252 = scalar_lea.vmem %s0, %s251
        %s253 = smul.u32 32, %s21
        %s254 = smul.u32 16, %s22
        %s255 = smul.u32 32, %s21
        %p256 = scmp.lt.s32.totalorder %s255, 63
        %s257 = scalar_select %p256, %s255, 63
        %s258 = smul.addr %s257, 4
        %s259 = scalar_lea.vmem %s4, %s258
        %s260 = smul.u32 32, %s21
        %v262 = vld [vmem:[%s252] sm:$0xf]
        %v263 = vld [vmem:[%s252 + $0x4] sm:$0xf]
        %v264 = vld [vmem:[%s252 + $0x8] sm:$0xf]
        %v265 = vld [vmem:[%s252 + $0xc] sm:$0xf]
        %v266 = vld [vmem:[%s252 + $0x10] sm:$0xf]
        %v267 = vld [vmem:[%s252 + $0x14] sm:$0xf]
        %v268 = vld [vmem:[%s252 + $0x18] sm:$0xf]
        %v269 = vld [vmem:[%s252 + $0x1c] sm:$0xf]
        %v270 = vld [vmem:[%s252 + $0x20] sm:$0xf]
        %v271 = vld [vmem:[%s252 + $0x24] sm:$0xf]
        %v272 = vld [vmem:[%s252 + $0x28] sm:$0xf]
        %v273 = vld [vmem:[%s252 + $0x2c] sm:$0xf]
        %v274 = vld [vmem:[%s252 + $0x30] sm:$0xf]
        %v275 = vld [vmem:[%s252 + $0x34] sm:$0xf]
        %v276 = vld [vmem:[%s252 + $0x38] sm:$0xf]
        %v277 = vld [vmem:[%s252 + $0x3c] sm:$0xf]
        %v278 = vld [vmem:[%s252 + $0x40] sm:$0xf]
        %v279 = vld [vmem:[%s252 + $0x44] sm:$0xf]
        %v280 = vld [vmem:[%s252 + $0x48] sm:$0xf]
        %v281 = vld [vmem:[%s252 + $0x4c] sm:$0xf]
        %v282 = vld [vmem:[%s252 + $0x50] sm:$0xf]
        %v283 = vld [vmem:[%s252 + $0x54] sm:$0xf]
        %v284 = vld [vmem:[%s252 + $0x58] sm:$0xf]
        %v285 = vld [vmem:[%s252 + $0x5c] sm:$0xf]
        %v286 = vld [vmem:[%s252 + $0x60] sm:$0xf]
        %v287 = vld [vmem:[%s252 + $0x64] sm:$0xf]
        %v288 = vld [vmem:[%s252 + $0x68] sm:$0xf]
        %v289 = vld [vmem:[%s252 + $0x6c] sm:$0xf]
        %v290 = vld [vmem:[%s252 + $0x70] sm:$0xf]
        %v291 = vld [vmem:[%s252 + $0x74] sm:$0xf]
        %v292 = vld [vmem:[%s252 + $0x78] sm:$0xf]
        %v293 = vld [vmem:[%s252 + $0x7c] sm:$0xf]
        %v294 = vld [vmem:[#allocation3] sm:$0xf]
        %v295 = vld [vmem:[#allocation3 + $0x4] sm:$0xf]
        %v296 = vld [vmem:[#allocation3 + $0x8] sm:$0xf]
        %v297 = vld [vmem:[#allocation3 + $0xc] sm:$0xf]
        %v298 = vld [vmem:[#allocation3 + $0x10] sm:$0xf]
        %v299 = vld [vmem:[#allocation3 + $0x14] sm:$0xf]
        %v300 = vld [vmem:[#allocation3 + $0x18] sm:$0xf]
        %v301 = vld [vmem:[#allocation3 + $0x1c] sm:$0xf]
        %v302 = vld [vmem:[#allocation3 + $0x20] sm:$0xf]
        %v303 = vld [vmem:[#allocation3 + $0x24] sm:$0xf]
        %v304 = vld [vmem:[#allocation3 + $0x28] sm:$0xf]
        %v305 = vld [vmem:[#allocation3 + $0x2c] sm:$0xf]
        %v306 = vld [vmem:[#allocation3 + $0x30] sm:$0xf]
        %v307 = vld [vmem:[#allocation3 + $0x34] sm:$0xf]
        %v308 = vld [vmem:[#allocation3 + $0x38] sm:$0xf]
        %v309 = vld [vmem:[#allocation3 + $0x3c] sm:$0xf]
        %v342 = vunpack.c.l.b16 %v262
        %v343 = vunpack.c.l.b16 %v263
        %v344 = vunpack.c.l.b16 %v264
        %v345 = vunpack.c.l.b16 %v265
        %v346 = vunpack.c.l.b16 %v266
        %v347 = vunpack.c.l.b16 %v267
        %v348 = vunpack.c.l.b16 %v268
        %v349 = vunpack.c.l.b16 %v269
        %v350 = vunpack.c.l.b16 %v270
        %v351 = vunpack.c.l.b16 %v271
        %v352 = vunpack.c.l.b16 %v272
        %v353 = vunpack.c.l.b16 %v273
        %v354 = vunpack.c.l.b16 %v274
        %v355 = vunpack.c.l.b16 %v275
        %v356 = vunpack.c.l.b16 %v276
        %v357 = vunpack.c.l.b16 %v277
        %v358 = vunpack.c.l.b16 %v278
        %v359 = vunpack.c.l.b16 %v279
        %v360 = vunpack.c.l.b16 %v280
        %v361 = vunpack.c.l.b16 %v281
        %v362 = vunpack.c.l.b16 %v282
        %v363 = vunpack.c.l.b16 %v283
        %v364 = vunpack.c.l.b16 %v284
        %v365 = vunpack.c.l.b16 %v285
        %v366 = vunpack.c.l.b16 %v286
        %v367 = vunpack.c.l.b16 %v287
        %v368 = vunpack.c.l.b16 %v288
        %v369 = vunpack.c.l.b16 %v289
        %v370 = vunpack.c.l.b16 %v290
        %v371 = vunpack.c.l.b16 %v291
        %v372 = vunpack.c.l.b16 %v292
        %v373 = vunpack.c.l.b16 %v293
        %v374 = vpack.c.b16 %v343, %v342
        %v375 = vpack.c.b16 %v345, %v344
        %v376 = vpack.c.b16 %v347, %v346
        %v377 = vpack.c.b16 %v349, %v348
        %v378 = vpack.c.b16 %v351, %v350
        %v379 = vpack.c.b16 %v353, %v352
        %v380 = vpack.c.b16 %v355, %v354
        %v381 = vpack.c.b16 %v357, %v356
        %v382 = vpack.c.b16 %v359, %v358
        %v383 = vpack.c.b16 %v361, %v360
        %v384 = vpack.c.b16 %v363, %v362
        %v385 = vpack.c.b16 %v365, %v364
        %v386 = vpack.c.b16 %v367, %v366
        %v387 = vpack.c.b16 %v369, %v368
        %v388 = vpack.c.b16 %v371, %v370
        %v389 = vpack.c.b16 %v373, %v372
        %v422 = vunpack.c.l.b16 %v294
        %v423 = vunpack.c.l.b16 %v295
        %v424 = vunpack.c.l.b16 %v296
        %v425 = vunpack.c.l.b16 %v297
        %v426 = vunpack.c.l.b16 %v298
        %v427 = vunpack.c.l.b16 %v299
        %v428 = vunpack.c.l.b16 %v300
        %v429 = vunpack.c.l.b16 %v301
        %v430 = vunpack.c.l.b16 %v302
        %v431 = vunpack.c.l.b16 %v303
        %v432 = vunpack.c.l.b16 %v304
        %v433 = vunpack.c.l.b16 %v305
        %v434 = vunpack.c.l.b16 %v306
        %v435 = vunpack.c.l.b16 %v307
        %v436 = vunpack.c.l.b16 %v308
        %v437 = vunpack.c.l.b16 %v309
        %v438 = vpack.c.b16 %v423, %v422
        %v439 = vpack.c.b16 %v425, %v424
        %v440 = vpack.c.b16 %v427, %v426
        %v441 = vpack.c.b16 %v429, %v428
        %v442 = vpack.c.b16 %v431, %v430
        %v443 = vpack.c.b16 %v433, %v432
        %v444 = vpack.c.b16 %v435, %v434
        %v445 = vpack.c.b16 %v437, %v436
        %454 = vmatprep.subr.bf16.mxu0 0
        %455 = vmatpush1.bf16.msra.mxu0 %v445
        %456 = vmatprep.subr.bf16.mxu0 0
        %457 = vmatpush1.bf16.msra.mxu0 %v444
        %458 = vmatprep.subr.bf16.mxu0 0
        %459 = vmatpush1.bf16.msra.mxu0 %v443
        %460 = vmatprep.subr.bf16.mxu0 0
        %461 = vmatpush1.bf16.msra.mxu0 %v442
        %462 = vmatprep.subr.bf16.mxu0 0
        %463 = vmatpush1.bf16.msra.mxu0 %v441
        %464 = vmatprep.subr.bf16.mxu0 0
        %465 = vmatpush1.bf16.msra.mxu0 %v440
        %466 = vmatprep.subr.bf16.mxu0 0
        %467 = vmatpush1.bf16.msra.mxu0 %v439
        %468 = vmatprep.subr.bf16.mxu0 0
        %469 = vmatpush1.bf16.msra.mxu0 %v438
        %470 = vmatprep.subr.bf16.mxu0 0
        %471 = vmatpush2.bf16.msra.mxu0 0
        %472 = vmatprep.subr.bf16.mxu0 0
        %473 = vmatpush2.bf16.msra.mxu0 0
        %474 = vmatprep.subr.bf16.mxu0 0
        %475 = vmatpush2.bf16.msra.mxu0 0
        %476 = vmatprep.subr.bf16.mxu0 0
        %477 = vmatpush2.bf16.msra.mxu0 0
        %478 = vmatprep.subr.bf16.mxu0 0
        %479 = vmatpush2.bf16.msra.mxu0 0
        %480 = vmatprep.subr.bf16.mxu0 0
        %481 = vmatpush2.bf16.msra.mxu0 0
        %482 = vmatprep.subr.bf16.mxu0 0
        %483 = vmatpush2.bf16.msra.mxu0 0
        %484 = vmatprep.subr.bf16.mxu0 0
        %485 = vmatpush2.bf16.msra.mxu0 0
        %486 = vmatprep.mubr.bf16.mxu0 0
        %487 = vmatmul.mubr.bf16.gmra.mxu0 %v374
        %v488 = vpop.f32.mrf.mxu0
        %v489 = vadd.f32 0.0, %v488
        %v490 = vpop.f32.mrf.mxu0
        %v491 = vpop.f32.mrf.mxu0
        %v492 = vadd.f32 0.0, %v491
        %v493 = vpop.f32.mrf.mxu0
        %494 = vmatprep.mubr.bf16.mxu0 0
        %495 = vmatmul.mubr.bf16.gmra.mxu0 %v375
        %v496 = vpop.f32.mrf.mxu0
        %v497 = vadd.f32 0.0, %v496
        %v498 = vpop.f32.mrf.mxu0
        %v499 = vpop.f32.mrf.mxu0
        %v500 = vadd.f32 0.0, %v499
        %v501 = vpop.f32.mrf.mxu0
        %502 = vmatprep.mubr.bf16.mxu0 0
        %503 = vmatmul.mubr.bf16.gmra.mxu0 %v376
        %v504 = vpop.f32.mrf.mxu0
        %v505 = vadd.f32 0.0, %v504
        %v506 = vpop.f32.mrf.mxu0
        %v507 = vpop.f32.mrf.mxu0
        %v508 = vadd.f32 0.0, %v507
        %v509 = vpop.f32.mrf.mxu0
        %510 = vmatprep.mubr.bf16.mxu0 0
        %511 = vmatmul.mubr.bf16.gmra.mxu0 %v377
        %v512 = vpop.f32.mrf.mxu0
        %v513 = vadd.f32 0.0, %v512
        %v514 = vpop.f32.mrf.mxu0
        %v515 = vpop.f32.mrf.mxu0
        %v516 = vadd.f32 0.0, %v515
        %v517 = vpop.f32.mrf.mxu0
        %518 = vmatprep.mubr.bf16.mxu0 0
        %519 = vmatmul.mubr.bf16.gmra.mxu0 %v378
        %v520 = vpop.f32.mrf.mxu0
        %v521 = vadd.f32 0.0, %v520
        %v522 = vpop.f32.mrf.mxu0
        %v523 = vpop.f32.mrf.mxu0
        %v524 = vadd.f32 0.0, %v523
        %v525 = vpop.f32.mrf.mxu0
        %526 = vmatprep.mubr.bf16.mxu0 0
        %527 = vmatmul.mubr.bf16.gmra.mxu0 %v379
        %v528 = vpop.f32.mrf.mxu0
        %v529 = vadd.f32 0.0, %v528
        %v530 = vpop.f32.mrf.mxu0
        %v531 = vpop.f32.mrf.mxu0
        %v532 = vadd.f32 0.0, %v531
        %v533 = vpop.f32.mrf.mxu0
        %534 = vmatprep.mubr.bf16.mxu0 0
        %535 = vmatmul.mubr.bf16.gmra.mxu0 %v380
        %v536 = vpop.f32.mrf.mxu0
        %v537 = vadd.f32 0.0, %v536
        %v538 = vpop.f32.mrf.mxu0
        %v539 = vpop.f32.mrf.mxu0
        %v540 = vadd.f32 0.0, %v539
        %v541 = vpop.f32.mrf.mxu0
        %542 = vmatprep.mubr.bf16.mxu0 0
        %543 = vmatmul.mubr.bf16.gmra.mxu0 %v381
        %v544 = vpop.f32.mrf.mxu0
        %v545 = vadd.f32 0.0, %v544
        %v546 = vpop.f32.mrf.mxu0
        %v547 = vpop.f32.mrf.mxu0
        %v548 = vadd.f32 0.0, %v547
        %v549 = vpop.f32.mrf.mxu0
        %550 = vmatprep.mubr.bf16.mxu0 0
        %551 = vmatmul.mubr.bf16.gmra.mxu0 %v382
        %v552 = vpop.f32.mrf.mxu0
        %v553 = vadd.f32 0.0, %v552
        %v554 = vpop.f32.mrf.mxu0
        %v555 = vpop.f32.mrf.mxu0
        %v556 = vadd.f32 0.0, %v555
        %v557 = vpop.f32.mrf.mxu0
        %558 = vmatprep.mubr.bf16.mxu0 0
        %559 = vmatmul.mubr.bf16.gmra.mxu0 %v383
        %v560 = vpop.f32.mrf.mxu0
        %v561 = vadd.f32 0.0, %v560
        %v562 = vpop.f32.mrf.mxu0
        %v563 = vpop.f32.mrf.mxu0
        %v564 = vadd.f32 0.0, %v563
        %v565 = vpop.f32.mrf.mxu0
        %566 = vmatprep.mubr.bf16.mxu0 0
        %567 = vmatmul.mubr.bf16.gmra.mxu0 %v384
        %v568 = vpop.f32.mrf.mxu0
        %v569 = vadd.f32 0.0, %v568
        %v570 = vpop.f32.mrf.mxu0
        %v571 = vpop.f32.mrf.mxu0
        %v572 = vadd.f32 0.0, %v571
        %v573 = vpop.f32.mrf.mxu0
        %574 = vmatprep.mubr.bf16.mxu0 0
        %575 = vmatmul.mubr.bf16.gmra.mxu0 %v385
        %v576 = vpop.f32.mrf.mxu0
        %v577 = vadd.f32 0.0, %v576
        %v578 = vpop.f32.mrf.mxu0
        %v579 = vpop.f32.mrf.mxu0
        %v580 = vadd.f32 0.0, %v579
        %v581 = vpop.f32.mrf.mxu0
        %582 = vmatprep.mubr.bf16.mxu0 0
        %583 = vmatmul.mubr.bf16.gmra.mxu0 %v386
        %v584 = vpop.f32.mrf.mxu0
        %v585 = vadd.f32 0.0, %v584
        %v586 = vpop.f32.mrf.mxu0
        %v587 = vpop.f32.mrf.mxu0
        %v588 = vadd.f32 0.0, %v587
        %v589 = vpop.f32.mrf.mxu0
        %590 = vmatprep.mubr.bf16.mxu0 0
        %591 = vmatmul.mubr.bf16.gmra.mxu0 %v387
        %v592 = vpop.f32.mrf.mxu0
        %v593 = vadd.f32 0.0, %v592
        %v594 = vpop.f32.mrf.mxu0
        %v595 = vpop.f32.mrf.mxu0
        %v596 = vadd.f32 0.0, %v595
        %v597 = vpop.f32.mrf.mxu0
        %598 = vmatprep.mubr.bf16.mxu0 0
        %599 = vmatmul.mubr.bf16.gmra.mxu0 %v388
        %v600 = vpop.f32.mrf.mxu0
        %v601 = vadd.f32 0.0, %v600
        %v602 = vpop.f32.mrf.mxu0
        %v603 = vpop.f32.mrf.mxu0
        %v604 = vadd.f32 0.0, %v603
        %v605 = vpop.f32.mrf.mxu0
        %606 = vmatprep.mubr.bf16.mxu0 0
        %607 = vmatmul.mubr.bf16.gmra.mxu0 %v389
        %v608 = vpop.f32.mrf.mxu0
        %v609 = vadd.f32 0.0, %v608
        %v610 = vpop.f32.mrf.mxu0
        %v611 = vpop.f32.mrf.mxu0
        %v612 = vadd.f32 0.0, %v611
        %v613 = vpop.f32.mrf.mxu0
        %614 = vdwg.mxu0
        %p615 = scmp.eq.s32.totalorder %s22, 0
        // Predicated region
        $region45: #{discriminator_forward.4} parent=35 // pred_check
          %p616 = pneg %p615
        $region46: #{discriminator_forward.4} parent=35 // pred_check_branch
          %618 = sbr.rel (%p616) target = $region48
        $region47: #{discriminator_forward.4} parent=35 // pred_region
          %619 = vst [vmem:[#allocation2] sm:$0xff] %v489
          %620 = vst [vmem:[#allocation2 + $0x8] sm:$0xff] %v492
          %621 = vst [vmem:[#allocation2 + $0x10] sm:$0xff] %v497
          %622 = vst [vmem:[#allocation2 + $0x18] sm:$0xff] %v500
          %623 = vst [vmem:[#allocation2 + $0x20] sm:$0xff] %v505
          %624 = vst [vmem:[#allocation2 + $0x28] sm:$0xff] %v508
          %625 = vst [vmem:[#allocation2 + $0x30] sm:$0xff] %v513
          %626 = vst [vmem:[#allocation2 + $0x38] sm:$0xff] %v516
          %627 = vst [vmem:[#allocation2 + $0x40] sm:$0xff] %v521
          %628 = vst [vmem:[#allocation2 + $0x48] sm:$0xff] %v524
          %629 = vst [vmem:[#allocation2 + $0x50] sm:$0xff] %v529
          %630 = vst [vmem:[#allocation2 + $0x58] sm:$0xff] %v532
          %631 = vst [vmem:[#allocation2 + $0x60] sm:$0xff] %v537
          %632 = vst [vmem:[#allocation2 + $0x68] sm:$0xff] %v540
          %633 = vst [vmem:[#allocation2 + $0x70] sm:$0xff] %v545
          %634 = vst [vmem:[#allocation2 + $0x78] sm:$0xff] %v548
          %635 = vst [vmem:[#allocation2 + $0x80] sm:$0xff] %v553
          %636 = vst [vmem:[#allocation2 + $0x88] sm:$0xff] %v556
          %637 = vst [vmem:[#allocation2 + $0x90] sm:$0xff] %v561
          %638 = vst [vmem:[#allocation2 + $0x98] sm:$0xff] %v564
          %639 = vst [vmem:[#allocation2 + $0xa0] sm:$0xff] %v569
          %640 = vst [vmem:[#allocation2 + $0xa8] sm:$0xff] %v572
          %641 = vst [vmem:[#allocation2 + $0xb0] sm:$0xff] %v577
          %642 = vst [vmem:[#allocation2 + $0xb8] sm:$0xff] %v580
          %643 = vst [vmem:[#allocation2 + $0xc0] sm:$0xff] %v585
          %644 = vst [vmem:[#allocation2 + $0xc8] sm:$0xff] %v588
          %645 = vst [vmem:[#allocation2 + $0xd0] sm:$0xff] %v593
          %646 = vst [vmem:[#allocation2 + $0xd8] sm:$0xff] %v596
          %647 = vst [vmem:[#allocation2 + $0xe0] sm:$0xff] %v601
          %648 = vst [vmem:[#allocation2 + $0xe8] sm:$0xff] %v604
          %649 = vst [vmem:[#allocation2 + $0xf0] sm:$0xff] %v609
          %650 = vst [vmem:[#allocation2 + $0xf8] sm:$0xff] %v612
        $region48: #{discriminator_forward.4} parent=35 // pred_fallthru
          _
        %p651 = scmp.gt.s32.totalorder %s22, 0
        // Predicated region
        $region49: #{discriminator_forward.4} parent=35 // pred_check
          %p652 = pneg %p651
        $region50: #{discriminator_forward.4} parent=35 // pred_check_branch
          %654 = sbr.rel (%p652) target = $region52
        $region51: #{discriminator_forward.4} parent=35 // pred_region
          %v655 = vld [vmem:[#allocation2] sm:$0xff]
          %v656 = vld [vmem:[#allocation2 + $0x8] sm:$0xff]
          %v657 = vld [vmem:[#allocation2 + $0x10] sm:$0xff]
          %v658 = vld [vmem:[#allocation2 + $0x18] sm:$0xff]
          %v659 = vld [vmem:[#allocation2 + $0x20] sm:$0xff]
          %v660 = vld [vmem:[#allocation2 + $0x28] sm:$0xff]
          %v661 = vld [vmem:[#allocation2 + $0x30] sm:$0xff]
          %v662 = vld [vmem:[#allocation2 + $0x38] sm:$0xff]
          %v663 = vld [vmem:[#allocation2 + $0x40] sm:$0xff]
          %v664 = vld [vmem:[#allocation2 + $0x48] sm:$0xff]
          %v665 = vld [vmem:[#allocation2 + $0x50] sm:$0xff]
          %v666 = vld [vmem:[#allocation2 + $0x58] sm:$0xff]
          %v667 = vld [vmem:[#allocation2 + $0x60] sm:$0xff]
          %v668 = vld [vmem:[#allocation2 + $0x68] sm:$0xff]
          %v669 = vld [vmem:[#allocation2 + $0x70] sm:$0xff]
          %v670 = vld [vmem:[#allocation2 + $0x78] sm:$0xff]
          %v671 = vld [vmem:[#allocation2 + $0x80] sm:$0xff]
          %v672 = vld [vmem:[#allocation2 + $0x88] sm:$0xff]
          %v673 = vld [vmem:[#allocation2 + $0x90] sm:$0xff]
          %v674 = vld [vmem:[#allocation2 + $0x98] sm:$0xff]
          %v675 = vld [vmem:[#allocation2 + $0xa0] sm:$0xff]
          %v676 = vld [vmem:[#allocation2 + $0xa8] sm:$0xff]
          %v677 = vld [vmem:[#allocation2 + $0xb0] sm:$0xff]
          %v678 = vld [vmem:[#allocation2 + $0xb8] sm:$0xff]
          %v679 = vld [vmem:[#allocation2 + $0xc0] sm:$0xff]
          %v680 = vld [vmem:[#allocation2 + $0xc8] sm:$0xff]
          %v681 = vld [vmem:[#allocation2 + $0xd0] sm:$0xff]
          %v682 = vld [vmem:[#allocation2 + $0xd8] sm:$0xff]
          %v683 = vld [vmem:[#allocation2 + $0xe0] sm:$0xff]
          %v684 = vld [vmem:[#allocation2 + $0xe8] sm:$0xff]
          %v685 = vld [vmem:[#allocation2 + $0xf0] sm:$0xff]
          %v686 = vld [vmem:[#allocation2 + $0xf8] sm:$0xff]
          %v687 = vadd.f32 %v655, %v489
          %v688 = vadd.f32 %v656, %v492
          %v689 = vadd.f32 %v657, %v497
          %v690 = vadd.f32 %v658, %v500
          %v691 = vadd.f32 %v659, %v505
          %v692 = vadd.f32 %v660, %v508
          %v693 = vadd.f32 %v661, %v513
          %v694 = vadd.f32 %v662, %v516
          %v695 = vadd.f32 %v663, %v521
          %v696 = vadd.f32 %v664, %v524
          %v697 = vadd.f32 %v665, %v529
          %v698 = vadd.f32 %v666, %v532
          %v699 = vadd.f32 %v667, %v537
          %v700 = vadd.f32 %v668, %v540
          %v701 = vadd.f32 %v669, %v545
          %v702 = vadd.f32 %v670, %v548
          %v703 = vadd.f32 %v671, %v553
          %v704 = vadd.f32 %v672, %v556
          %v705 = vadd.f32 %v673, %v561
          %v706 = vadd.f32 %v674, %v564
          %v707 = vadd.f32 %v675, %v569
          %v708 = vadd.f32 %v676, %v572
          %v709 = vadd.f32 %v677, %v577
          %v710 = vadd.f32 %v678, %v580
          %v711 = vadd.f32 %v679, %v585
          %v712 = vadd.f32 %v680, %v588
          %v713 = vadd.f32 %v681, %v593
          %v714 = vadd.f32 %v682, %v596
          %v715 = vadd.f32 %v683, %v601
          %v716 = vadd.f32 %v684, %v604
          %v717 = vadd.f32 %v685, %v609
          %v718 = vadd.f32 %v686, %v612
          %719 = vst [vmem:[#allocation2] sm:$0xff] %v687
          %720 = vst [vmem:[#allocation2 + $0x8] sm:$0xff] %v688
          %721 = vst [vmem:[#allocation2 + $0x10] sm:$0xff] %v689
          %722 = vst [vmem:[#allocation2 + $0x18] sm:$0xff] %v690
          %723 = vst [vmem:[#allocation2 + $0x20] sm:$0xff] %v691
          %724 = vst [vmem:[#allocation2 + $0x28] sm:$0xff] %v692
          %725 = vst [vmem:[#allocation2 + $0x30] sm:$0xff] %v693
          %726 = vst [vmem:[#allocation2 + $0x38] sm:$0xff] %v694
          %727 = vst [vmem:[#allocation2 + $0x40] sm:$0xff] %v695
          %728 = vst [vmem:[#allocation2 + $0x48] sm:$0xff] %v696
          %729 = vst [vmem:[#allocation2 + $0x50] sm:$0xff] %v697
          %730 = vst [vmem:[#allocation2 + $0x58] sm:$0xff] %v698
          %731 = vst [vmem:[#allocation2 + $0x60] sm:$0xff] %v699
          %732 = vst [vmem:[#allocation2 + $0x68] sm:$0xff] %v700
          %733 = vst [vmem:[#allocation2 + $0x70] sm:$0xff] %v701
          %734 = vst [vmem:[#allocation2 + $0x78] sm:$0xff] %v702
          %735 = vst [vmem:[#allocation2 + $0x80] sm:$0xff] %v703
          %736 = vst [vmem:[#allocation2 + $0x88] sm:$0xff] %v704
          %737 = vst [vmem:[#allocation2 + $0x90] sm:$0xff] %v705
          %738 = vst [vmem:[#allocation2 + $0x98] sm:$0xff] %v706
          %739 = vst [vmem:[#allocation2 + $0xa0] sm:$0xff] %v707
          %740 = vst [vmem:[#allocation2 + $0xa8] sm:$0xff] %v708
          %741 = vst [vmem:[#allocation2 + $0xb0] sm:$0xff] %v709
          %742 = vst [vmem:[#allocation2 + $0xb8] sm:$0xff] %v710
          %743 = vst [vmem:[#allocation2 + $0xc0] sm:$0xff] %v711
          %744 = vst [vmem:[#allocation2 + $0xc8] sm:$0xff] %v712
          %745 = vst [vmem:[#allocation2 + $0xd0] sm:$0xff] %v713
          %746 = vst [vmem:[#allocation2 + $0xd8] sm:$0xff] %v714
          %747 = vst [vmem:[#allocation2 + $0xe0] sm:$0xff] %v715
          %748 = vst [vmem:[#allocation2 + $0xe8] sm:$0xff] %v716
          %749 = vst [vmem:[#allocation2 + $0xf0] sm:$0xff] %v717
          %750 = vst [vmem:[#allocation2 + $0xf8] sm:$0xff] %v718
        $region52: #{discriminator_forward.4} parent=35 // pred_fallthru
          _
        // Predicated region
        $region53: #{discriminator_forward.4} parent=35 // pred_check
          %p751 = pneg %p615
        $region54: #{discriminator_forward.4} parent=35 // pred_check_branch
          %753 = sbr.rel (%p751) target = $region56
        $region55: #{discriminator_forward.4} parent=35 // pred_region
          %v754 = vld [vmem:[#allocation2] sm:$0xff]
          %v755 = vld [vmem:[#allocation2 + $0x8] sm:$0xff]
          %v756 = vld [vmem:[#allocation2 + $0x10] sm:$0xff]
          %v757 = vld [vmem:[#allocation2 + $0x18] sm:$0xff]
          %v758 = vld [vmem:[#allocation2 + $0x20] sm:$0xff]
          %v759 = vld [vmem:[#allocation2 + $0x28] sm:$0xff]
          %v760 = vld [vmem:[#allocation2 + $0x30] sm:$0xff]
          %v761 = vld [vmem:[#allocation2 + $0x38] sm:$0xff]
          %v762 = vld [vmem:[#allocation2 + $0x40] sm:$0xff]
          %v763 = vld [vmem:[#allocation2 + $0x48] sm:$0xff]
          %v764 = vld [vmem:[#allocation2 + $0x50] sm:$0xff]
          %v765 = vld [vmem:[#allocation2 + $0x58] sm:$0xff]
          %v766 = vld [vmem:[#allocation2 + $0x60] sm:$0xff]
          %v767 = vld [vmem:[#allocation2 + $0x68] sm:$0xff]
          %v768 = vld [vmem:[#allocation2 + $0x70] sm:$0xff]
          %v769 = vld [vmem:[#allocation2 + $0x78] sm:$0xff]
          %v770 = vld [vmem:[#allocation2 + $0x80] sm:$0xff]
          %v771 = vld [vmem:[#allocation2 + $0x88] sm:$0xff]
          %v772 = vld [vmem:[#allocation2 + $0x90] sm:$0xff]
          %v773 = vld [vmem:[#allocation2 + $0x98] sm:$0xff]
          %v774 = vld [vmem:[#allocation2 + $0xa0] sm:$0xff]
          %v775 = vld [vmem:[#allocation2 + $0xa8] sm:$0xff]
          %v776 = vld [vmem:[#allocation2 + $0xb0] sm:$0xff]
          %v777 = vld [vmem:[#allocation2 + $0xb8] sm:$0xff]
          %v778 = vld [vmem:[#allocation2 + $0xc0] sm:$0xff]
          %v779 = vld [vmem:[#allocation2 + $0xc8] sm:$0xff]
          %v780 = vld [vmem:[#allocation2 + $0xd0] sm:$0xff]
          %v781 = vld [vmem:[#allocation2 + $0xd8] sm:$0xff]
          %v782 = vld [vmem:[#allocation2 + $0xe0] sm:$0xff]
          %v783 = vld [vmem:[#allocation2 + $0xe8] sm:$0xff]
          %v784 = vld [vmem:[#allocation2 + $0xf0] sm:$0xff]
          %v785 = vld [vmem:[#allocation2 + $0xf8] sm:$0xff]
          %v786 = vld [vmem:[%s2] sm:$0x1]
          %v788 = vlaneseq
          %v789 = vshrl.u32 %v788, 7
          %v790 = vsub.s32 0, %v789
          %v791 = vrot.slane %v786, %v790
          %v793 = vmul.f32 %v754, %v791
          %v794 = vmul.f32 %v755, %v791
          %v795 = vmul.f32 %v756, %v791
          %v796 = vmul.f32 %v757, %v791
          %v797 = vmul.f32 %v758, %v791
          %v798 = vmul.f32 %v759, %v791
          %v799 = vmul.f32 %v760, %v791
          %v800 = vmul.f32 %v761, %v791
          %v801 = vmul.f32 %v762, %v791
          %v802 = vmul.f32 %v763, %v791
          %v803 = vmul.f32 %v764, %v791
          %v804 = vmul.f32 %v765, %v791
          %v805 = vmul.f32 %v766, %v791
          %v806 = vmul.f32 %v767, %v791
          %v807 = vmul.f32 %v768, %v791
          %v808 = vmul.f32 %v769, %v791
          %v809 = vmul.f32 %v770, %v791
          %v810 = vmul.f32 %v771, %v791
          %v811 = vmul.f32 %v772, %v791
          %v812 = vmul.f32 %v773, %v791
          %v813 = vmul.f32 %v774, %v791
          %v814 = vmul.f32 %v775, %v791
          %v815 = vmul.f32 %v776, %v791
          %v816 = vmul.f32 %v777, %v791
          %v817 = vmul.f32 %v778, %v791
          %v818 = vmul.f32 %v779, %v791
          %v819 = vmul.f32 %v780, %v791
          %v820 = vmul.f32 %v781, %v791
          %v821 = vmul.f32 %v782, %v791
          %v822 = vmul.f32 %v783, %v791
          %v823 = vmul.f32 %v784, %v791
          %v824 = vmul.f32 %v785, %v791
          %v825 = vld [vmem:[#allocation5] sm:$0x1]
          %v827 = vlaneseq
          %v828 = vshrl.u32 %v827, 7
          %v829 = vsub.s32 0, %v828
          %v830 = vrot.slane %v825, %v829
          %v832 = vadd.f32 %v793, %v830
          %v833 = vadd.f32 %v794, %v830
          %v834 = vadd.f32 %v795, %v830
          %v835 = vadd.f32 %v796, %v830
          %v836 = vadd.f32 %v797, %v830
          %v837 = vadd.f32 %v798, %v830
          %v838 = vadd.f32 %v799, %v830
          %v839 = vadd.f32 %v800, %v830
          %v840 = vadd.f32 %v801, %v830
          %v841 = vadd.f32 %v802, %v830
          %v842 = vadd.f32 %v803, %v830
          %v843 = vadd.f32 %v804, %v830
          %v844 = vadd.f32 %v805, %v830
          %v845 = vadd.f32 %v806, %v830
          %v846 = vadd.f32 %v807, %v830
          %v847 = vadd.f32 %v808, %v830
          %v848 = vadd.f32 %v809, %v830
          %v849 = vadd.f32 %v810, %v830
          %v850 = vadd.f32 %v811, %v830
          %v851 = vadd.f32 %v812, %v830
          %v852 = vadd.f32 %v813, %v830
          %v853 = vadd.f32 %v814, %v830
          %v854 = vadd.f32 %v815, %v830
          %v855 = vadd.f32 %v816, %v830
          %v856 = vadd.f32 %v817, %v830
          %v857 = vadd.f32 %v818, %v830
          %v858 = vadd.f32 %v819, %v830
          %v859 = vadd.f32 %v820, %v830
          %v860 = vadd.f32 %v821, %v830
          %v861 = vadd.f32 %v822, %v830
          %v862 = vadd.f32 %v823, %v830
          %v863 = vadd.f32 %v824, %v830
          %v864 = vmul.f32 %v832, 0.2
          %v865 = vmul.f32 %v833, 0.2
          %v866 = vmul.f32 %v834, 0.2
          %v867 = vmul.f32 %v835, 0.2
          %v868 = vmul.f32 %v836, 0.2
          %v869 = vmul.f32 %v837, 0.2
          %v870 = vmul.f32 %v838, 0.2
          %v871 = vmul.f32 %v839, 0.2
          %v872 = vmul.f32 %v840, 0.2
          %v873 = vmul.f32 %v841, 0.2
          %v874 = vmul.f32 %v842, 0.2
          %v875 = vmul.f32 %v843, 0.2
          %v876 = vmul.f32 %v844, 0.2
          %v877 = vmul.f32 %v845, 0.2
          %v878 = vmul.f32 %v846, 0.2
          %v879 = vmul.f32 %v847, 0.2
          %v880 = vmul.f32 %v848, 0.2
          %v881 = vmul.f32 %v849, 0.2
          %v882 = vmul.f32 %v850, 0.2
          %v883 = vmul.f32 %v851, 0.2
          %v884 = vmul.f32 %v852, 0.2
          %v885 = vmul.f32 %v853, 0.2
          %v886 = vmul.f32 %v854, 0.2
          %v887 = vmul.f32 %v855, 0.2
          %v888 = vmul.f32 %v856, 0.2
          %v889 = vmul.f32 %v857, 0.2
          %v890 = vmul.f32 %v858, 0.2
          %v891 = vmul.f32 %v859, 0.2
          %v892 = vmul.f32 %v860, 0.2
          %v893 = vmul.f32 %v861, 0.2
          %v894 = vmul.f32 %v862, 0.2
          %v895 = vmul.f32 %v863, 0.2
          %v896 = vmax.f32 %v832, %v864
          %v897 = vmax.f32 %v833, %v865
          %v898 = vmax.f32 %v834, %v866
          %v899 = vmax.f32 %v835, %v867
          %v900 = vmax.f32 %v836, %v868
          %v901 = vmax.f32 %v837, %v869
          %v902 = vmax.f32 %v838, %v870
          %v903 = vmax.f32 %v839, %v871
          %v904 = vmax.f32 %v840, %v872
          %v905 = vmax.f32 %v841, %v873
          %v906 = vmax.f32 %v842, %v874
          %v907 = vmax.f32 %v843, %v875
          %v908 = vmax.f32 %v844, %v876
          %v909 = vmax.f32 %v845, %v877
          %v910 = vmax.f32 %v846, %v878
          %v911 = vmax.f32 %v847, %v879
          %v912 = vmax.f32 %v848, %v880
          %v913 = vmax.f32 %v849, %v881
          %v914 = vmax.f32 %v850, %v882
          %v915 = vmax.f32 %v851, %v883
          %v916 = vmax.f32 %v852, %v884
          %v917 = vmax.f32 %v853, %v885
          %v918 = vmax.f32 %v854, %v886
          %v919 = vmax.f32 %v855, %v887
          %v920 = vmax.f32 %v856, %v888
          %v921 = vmax.f32 %v857, %v889
          %v922 = vmax.f32 %v858, %v890
          %v923 = vmax.f32 %v859, %v891
          %v924 = vmax.f32 %v860, %v892
          %v925 = vmax.f32 %v861, %v893
          %v926 = vmax.f32 %v862, %v894
          %v927 = vmax.f32 %v863, %v895
          %v928 = vpack.c.bf16 %v897, %v896
          %v929 = vpack.c.bf16 %v899, %v898
          %v930 = vpack.c.bf16 %v901, %v900
          %v931 = vpack.c.bf16 %v903, %v902
          %v932 = vpack.c.bf16 %v905, %v904
          %v933 = vpack.c.bf16 %v907, %v906
          %v934 = vpack.c.bf16 %v909, %v908
          %v935 = vpack.c.bf16 %v911, %v910
          %v936 = vpack.c.bf16 %v913, %v912
          %v937 = vpack.c.bf16 %v915, %v914
          %v938 = vpack.c.bf16 %v917, %v916
          %v939 = vpack.c.bf16 %v919, %v918
          %v940 = vpack.c.bf16 %v921, %v920
          %v941 = vpack.c.bf16 %v923, %v922
          %v942 = vpack.c.bf16 %v925, %v924
          %v943 = vpack.c.bf16 %v927, %v926
          %v960 = vunpack.c.l.b16 %v928
          %v961 = vunpack.c.h.b16 %v928
          %v962 = vunpack.c.l.b16 %v929
          %v963 = vunpack.c.h.b16 %v929
          %v964 = vunpack.c.l.b16 %v930
          %v965 = vunpack.c.h.b16 %v930
          %v966 = vunpack.c.l.b16 %v931
          %v967 = vunpack.c.h.b16 %v931
          %v968 = vunpack.c.l.b16 %v932
          %v969 = vunpack.c.h.b16 %v932
          %v970 = vunpack.c.l.b16 %v933
          %v971 = vunpack.c.h.b16 %v933
          %v972 = vunpack.c.l.b16 %v934
          %v973 = vunpack.c.h.b16 %v934
          %v974 = vunpack.c.l.b16 %v935
          %v975 = vunpack.c.h.b16 %v935
          %v976 = vunpack.c.l.b16 %v936
          %v977 = vunpack.c.h.b16 %v936
          %v978 = vunpack.c.l.b16 %v937
          %v979 = vunpack.c.h.b16 %v937
          %v980 = vunpack.c.l.b16 %v938
          %v981 = vunpack.c.h.b16 %v938
          %v982 = vunpack.c.l.b16 %v939
          %v983 = vunpack.c.h.b16 %v939
          %v984 = vunpack.c.l.b16 %v940
          %v985 = vunpack.c.h.b16 %v940
          %v986 = vunpack.c.l.b16 %v941
          %v987 = vunpack.c.h.b16 %v941
          %v988 = vunpack.c.l.b16 %v942
          %v989 = vunpack.c.h.b16 %v942
          %v990 = vunpack.c.l.b16 %v943
          %v991 = vunpack.c.h.b16 %v943
          %v992 = vpack.c.b16 %v960, %v960
          %v993 = vpack.c.b16 %v961, %v961
          %v994 = vpack.c.b16 %v962, %v962
          %v995 = vpack.c.b16 %v963, %v963
          %v996 = vpack.c.b16 %v964, %v964
          %v997 = vpack.c.b16 %v965, %v965
          %v998 = vpack.c.b16 %v966, %v966
          %v999 = vpack.c.b16 %v967, %v967
          %v1000 = vpack.c.b16 %v968, %v968
          %v1001 = vpack.c.b16 %v969, %v969
          %v1002 = vpack.c.b16 %v970, %v970
          %v1003 = vpack.c.b16 %v971, %v971
          %v1004 = vpack.c.b16 %v972, %v972
          %v1005 = vpack.c.b16 %v973, %v973
          %v1006 = vpack.c.b16 %v974, %v974
          %v1007 = vpack.c.b16 %v975, %v975
          %v1008 = vpack.c.b16 %v976, %v976
          %v1009 = vpack.c.b16 %v977, %v977
          %v1010 = vpack.c.b16 %v978, %v978
          %v1011 = vpack.c.b16 %v979, %v979
          %v1012 = vpack.c.b16 %v980, %v980
          %v1013 = vpack.c.b16 %v981, %v981
          %v1014 = vpack.c.b16 %v982, %v982
          %v1015 = vpack.c.b16 %v983, %v983
          %v1016 = vpack.c.b16 %v984, %v984
          %v1017 = vpack.c.b16 %v985, %v985
          %v1018 = vpack.c.b16 %v986, %v986
          %v1019 = vpack.c.b16 %v987, %v987
          %v1020 = vpack.c.b16 %v988, %v988
          %v1021 = vpack.c.b16 %v989, %v989
          %v1022 = vpack.c.b16 %v990, %v990
          %v1023 = vpack.c.b16 %v991, %v991
          %1056 = vst [vmem:[%s259] sm:$0xf] %v992
          %1057 = vst [vmem:[%s259 + $0x4] sm:$0xf] %v993
          %1058 = vst [vmem:[%s259 + $0x8] sm:$0xf] %v994
          %1059 = vst [vmem:[%s259 + $0xc] sm:$0xf] %v995
          %1060 = vst [vmem:[%s259 + $0x10] sm:$0xf] %v996
          %1061 = vst [vmem:[%s259 + $0x14] sm:$0xf] %v997
          %1062 = vst [vmem:[%s259 + $0x18] sm:$0xf] %v998
          %1063 = vst [vmem:[%s259 + $0x1c] sm:$0xf] %v999
          %1064 = vst [vmem:[%s259 + $0x20] sm:$0xf] %v1000
          %1065 = vst [vmem:[%s259 + $0x24] sm:$0xf] %v1001
          %1066 = vst [vmem:[%s259 + $0x28] sm:$0xf] %v1002
          %1067 = vst [vmem:[%s259 + $0x2c] sm:$0xf] %v1003
          %1068 = vst [vmem:[%s259 + $0x30] sm:$0xf] %v1004
          %1069 = vst [vmem:[%s259 + $0x34] sm:$0xf] %v1005
          %1070 = vst [vmem:[%s259 + $0x38] sm:$0xf] %v1006
          %1071 = vst [vmem:[%s259 + $0x3c] sm:$0xf] %v1007
          %1072 = vst [vmem:[%s259 + $0x40] sm:$0xf] %v1008
          %1073 = vst [vmem:[%s259 + $0x44] sm:$0xf] %v1009
          %1074 = vst [vmem:[%s259 + $0x48] sm:$0xf] %v1010
          %1075 = vst [vmem:[%s259 + $0x4c] sm:$0xf] %v1011
          %1076 = vst [vmem:[%s259 + $0x50] sm:$0xf] %v1012
          %1077 = vst [vmem:[%s259 + $0x54] sm:$0xf] %v1013
          %1078 = vst [vmem:[%s259 + $0x58] sm:$0xf] %v1014
          %1079 = vst [vmem:[%s259 + $0x5c] sm:$0xf] %v1015
          %1080 = vst [vmem:[%s259 + $0x60] sm:$0xf] %v1016
          %1081 = vst [vmem:[%s259 + $0x64] sm:$0xf] %v1017
          %1082 = vst [vmem:[%s259 + $0x68] sm:$0xf] %v1018
          %1083 = vst [vmem:[%s259 + $0x6c] sm:$0xf] %v1019
          %1084 = vst [vmem:[%s259 + $0x70] sm:$0xf] %v1020
          %1085 = vst [vmem:[%s259 + $0x74] sm:$0xf] %v1021
          %1086 = vst [vmem:[%s259 + $0x78] sm:$0xf] %v1022
          %1087 = vst [vmem:[%s259 + $0x7c] sm:$0xf] %v1023
        $region56: #{discriminator_forward.4} parent=35 // pred_fallthru
          _
        %s1088 = smul.u32 32, %s21
        %p1089 = scmp.lt.s32.totalorder %s1088, 63
        %s1090 = scalar_select %p1089, %s1088, 63
        %s1091 = smul.addr %s1090, 4
        %s1092 = scalar_lea.vmem %s4, %s1091
        // Predicated region
        $region57: #{discriminator_forward.4} parent=35 // pred_check
          %p1093 = pneg %p143
        $region58: #{discriminator_forward.4} parent=35 // pred_check_branch
          %1095 = sbr.rel (%p1093) target = $region60
        $region59: #{discriminator_forward.4} parent=35 // pred_region
          %s1096 = smul.u32 32, %s21
        $region60: #{discriminator_forward.4} parent=35 // pred_fallthru
          _
      $region36: #{discriminator_forward.4} parent=5 // pred_fallthru
        _
      %p1097 = scmp.le.s32.totalorder 2, %s12
      // Predicated region
      $region61: #{discriminator_forward.4} parent=5 // pred_check
        %p1098 = pneg %p1097
      $region62: #{discriminator_forward.4} parent=5 // pred_check_branch
        %1100 = sbr.rel (%p1098) target = $region64
      $region63: #{discriminator_forward.4} parent=5 // pred_region
        %s1101 = ssub.s32 %s12, 2
        // Predicated region
        $region65: #{discriminator_forward.4} parent=63 // pred_check
          %p1102 = pneg %p149
        $region66: #{discriminator_forward.4} parent=63 // pred_check_branch
          %1104 = sbr.rel (%p1102) target = $region68
        $region67: #{discriminator_forward.4} parent=63 // pred_region
          %s1105 = smul.u32 32, %s23
          %p1106 = scmp.lt.s32.totalorder %s1105, 63
          %s1107 = scalar_select %p1106, %s1105, 63
          %s1108 = smul.addr %s1107, 4
          %s1109 = scalar_lea.vmem %s4, %s1108
        $region68: #{discriminator_forward.4} parent=63 // pred_fallthru
          _
      $region64: #{discriminator_forward.4} parent=5 // pred_fallthru
        _
    $region6: #{discriminator_forward.4} parent=1 // loop_footer
      %s16 = sadd.s32 1, %s12
    $region7: #{discriminator_forward.4} parent=1 // loop_footer_branch
      %11 = sbr.rel target = $region3
    $region8: #{discriminator_forward.4} parent=1 // loop_exit
      _
    %1110 = vsyncpa [#allocation4], 1
    %s1111 = scalar_lea.sflag [#allocation4], 1
    %1112 = vsyncpa %s1111, 1
    %1113 = vsyncpa [#allocation6], 1

// kernel: discriminator_forward.5
$region0: #{discriminator_forward.5}
  #allocation0 [shape = 'u32[]', space=smem, size = 0x4, offset = 0x4, fixed_abs, tag = 'smem constant byte address 0x4 - core index']
  #allocation1 [shape = 'u32[144,128]{1,0:T(1,128)}', space=vmem, size = 0x12000, scoped, tag = 'internal scratch']
  #allocation2 [shape = 'f32[64,128]{1,0:T(8,128)}', space=vmem, size = 0x8000, scoped, tag = 'scratch operand']
  %s0 = inlined_call_operand.vmem [shape: bf16[128,1024], index: 0, kind: input, shape index: {}]
  %s1 = inlined_call_operand.vmem [shape: bf16[1024,128], index: 1, kind: input, shape index: {}]
  %s2 = inlined_call_operand.vmem [shape: f32[1,128], index: 2, kind: input, shape index: {}]
  %s3 = inlined_call_operand.vmem [shape: f32[1,128], index: 3, kind: input, shape index: {}]
  %s4 = inlined_call_operand.vmem [shape: bf16[128,128], index: 4, kind: output, shape index: {}]
  %s5 = sld [smem:[#allocation0]]
  $region61: #{discriminator_forward.5} parent=0
    _
  %s7 = ssub.s32 1, %s5
  %s8 = scalar_select 0, %s7, %s5
  loop: start=0, step=1, limit=4
  $region2: #{discriminator_forward.5} parent=0 // loop_pre_header
    _
  $region3: #{discriminator_forward.5} parent=0 // loop_header
    %s10 = sphi 0, %s14
    %p11 = scmp.ge.s32.totalorder %s10, 4
    %s17 = sphi 0, %s29
    %s18 = sphi 0, %s25
    %s19 = sphi 0, %s17
    %s20 = sphi 0, %s18
    %s21 = sphi 0, %s19
    %s22 = sphi 0, %s20
    %s34 = sphi 0, %s36
    %s37 = sphi 0, %s34
    %s38 = sphi 0, %s37
    %s54 = sphi 0, %s38
    %s60 = sphi 0, %s62
    %s63 = sphi 0, %s60
    %s64 = sphi 0, %s63
    %s80 = sphi 0, %s64
    %s84 = sphi 0, %s84
    %s86 = sphi 0, %s84
    %s87 = sphi 0, %s86
    %s101 = sphi 0, %s87
    %s105 = sphi 0, %s105
    %s107 = sphi 0, %s105
    %s108 = sphi 0, %s107
    %s122 = sphi 0, %s108
    %s128 = sphi 0, %s130
    %s131 = sphi 0, %s128
    %s132 = sphi 0, %s131
    %s148 = sphi 0, %s132
  $region4: #{discriminator_forward.5} parent=0 // loop_header_branch
    %13 = sbr.rel (%p11) target = $region8
  $region5: #{discriminator_forward.5} parent=0 // loop_body
    %s15 = ssub.s32 %s10, 1
    %s16 = ssub.s32 %s10, 2
    %s23 = sadd.s32 1, %s18
    %p24 = scmp.ge.s32.totalorder %s23, 1
    %s25 = scalar_select %p24, 0, %s23
    %s26 = sadd.s32 1, %s17
    %s27 = scalar_select %p24, %s26, %s17
    %p28 = scmp.ge.s32.totalorder %s27, 2
    %s29 = scalar_select %p28, 0, %s27
    %s30 = ssub.s32 %s17, %s29
    %s31 = ssub.s32 %s18, %s25
    %s32 = sor.u32 %s30, %s31
    %p33 = scmp.eq.s32.totalorder %s32, 0
    %s35 = sadd.s32 %s34, 1
    %s36 = scalar_select %p33, %s34, %s35
    %p39 = pneg %p33
    %p40 = scmp.eq.s32.totalorder %s10, 1
    %p41 = por %p39, %p40
    %p42 = scmp.ne.s32.totalorder %s34, %s37
    %p43 = scmp.eq.s32.totalorder %s10, 0
    %p44 = por %p42, %p43
    %p45 = scmp.ne.s32.totalorder %s34, %s37
    %p46 = scmp.eq.s32.totalorder %s15, 1
    %p47 = por %p45, %p46
    %p48 = scmp.ne.s32.totalorder %s37, %s38
    %p49 = scmp.eq.s32.totalorder %s15, 0
    %p50 = por %p48, %p49
    %p51 = scmp.ne.s32.totalorder %s37, %s38
    %p52 = scmp.eq.s32.totalorder %s16, 1
    %p53 = por %p51, %p52
    %p55 = scmp.ne.s32.totalorder %s38, %s54
    %p56 = scmp.eq.s32.totalorder %s16, 0
    %p57 = por %p55, %p56
    %s58 = ssub.s32 %s18, %s25
    %p59 = scmp.eq.s32.totalorder %s58, 0
    %s61 = sadd.s32 %s60, 1
    %s62 = scalar_select %p59, %s60, %s61
    %p65 = pneg %p59
    %p66 = scmp.eq.s32.totalorder %s10, 1
    %p67 = por %p65, %p66
    %p68 = scmp.ne.s32.totalorder %s60, %s63
    %p69 = scmp.eq.s32.totalorder %s10, 0
    %p70 = por %p68, %p69
    %p71 = scmp.ne.s32.totalorder %s60, %s63
    %p72 = scmp.eq.s32.totalorder %s15, 1
    %p73 = por %p71, %p72
    %p74 = scmp.ne.s32.totalorder %s63, %s64
    %p75 = scmp.eq.s32.totalorder %s15, 0
    %p76 = por %p74, %p75
    %p77 = scmp.ne.s32.totalorder %s63, %s64
    %p78 = scmp.eq.s32.totalorder %s16, 1
    %p79 = por %p77, %p78
    %p81 = scmp.ne.s32.totalorder %s64, %s80
    %p82 = scmp.eq.s32.totalorder %s16, 0
    %p83 = por %p81, %p82
    %s85 = sadd.s32 %s84, 1
    %p88 = scmp.eq.s32.totalorder %s10, 1
    %p89 = scmp.ne.s32.totalorder %s84, %s86
    %p90 = scmp.eq.s32.totalorder %s10, 0
    %p91 = por %p89, %p90
    %p92 = scmp.ne.s32.totalorder %s84, %s86
    %p93 = scmp.eq.s32.totalorder %s15, 1
    %p94 = por %p92, %p93
    %p95 = scmp.ne.s32.totalorder %s86, %s87
    %p96 = scmp.eq.s32.totalorder %s15, 0
    %p97 = por %p95, %p96
    %p98 = scmp.ne.s32.totalorder %s86, %s87
    %p99 = scmp.eq.s32.totalorder %s16, 1
    %p100 = por %p98, %p99
    %p102 = scmp.ne.s32.totalorder %s87, %s101
    %p103 = scmp.eq.s32.totalorder %s16, 0
    %p104 = por %p102, %p103
    %s106 = sadd.s32 %s105, 1
    %p109 = scmp.eq.s32.totalorder %s10, 1
    %p110 = scmp.ne.s32.totalorder %s105, %s107
    %p111 = scmp.eq.s32.totalorder %s10, 0
    %p112 = por %p110, %p111
    %p113 = scmp.ne.s32.totalorder %s105, %s107
    %p114 = scmp.eq.s32.totalorder %s15, 1
    %p115 = por %p113, %p114
    %p116 = scmp.ne.s32.totalorder %s107, %s108
    %p117 = scmp.eq.s32.totalorder %s15, 0
    %p118 = por %p116, %p117
    %p119 = scmp.ne.s32.totalorder %s107, %s108
    %p120 = scmp.eq.s32.totalorder %s16, 1
    %p121 = por %p119, %p120
    %p123 = scmp.ne.s32.totalorder %s108, %s122
    %p124 = scmp.eq.s32.totalorder %s16, 0
    %p125 = por %p123, %p124
    %s126 = ssub.s32 %s17, %s29
    %p127 = scmp.eq.s32.totalorder %s126, 0
    %s129 = sadd.s32 %s128, 1
    %s130 = scalar_select %p127, %s128, %s129
    %p133 = pneg %p127
    %p134 = scmp.eq.s32.totalorder %s10, 1
    %p135 = por %p133, %p134
    %p136 = scmp.ne.s32.totalorder %s128, %s131
    %p137 = scmp.eq.s32.totalorder %s10, 0
    %p138 = por %p136, %p137
    %p139 = scmp.ne.s32.totalorder %s128, %s131
    %p140 = scmp.eq.s32.totalorder %s15, 1
    %p141 = por %p139, %p140
    %p142 = scmp.ne.s32.totalorder %s131, %s132
    %p143 = scmp.eq.s32.totalorder %s15, 0
    %p144 = por %p142, %p143
    %p145 = scmp.ne.s32.totalorder %s131, %s132
    %p146 = scmp.eq.s32.totalorder %s16, 1
    %p147 = por %p145, %p146
    %p149 = scmp.ne.s32.totalorder %s132, %s148
    %p150 = scmp.eq.s32.totalorder %s16, 0
    %p151 = por %p149, %p150
    %p152 = scmp.le.s32.totalorder 1, %s10
    %p153 = scmp.lt.s32.totalorder %s10, 3
    %p154 = pnand %p152, %p153
    %p155 = pneg %p154
    // Predicated region
    $region9: #{discriminator_forward.5} parent=5 // pred_check
      _
    $region10: #{discriminator_forward.5} parent=5 // pred_check_branch
      %157 = sbr.rel (%p154) target = $region12
    $region11: #{discriminator_forward.5} parent=5 // pred_region
      %s158 = ssub.s32 %s10, 1
      // Predicated region
      $region13: #{discriminator_forward.5} parent=11 // pred_check
        %p159 = pneg %p76
      $region14: #{discriminator_forward.5} parent=11 // pred_check_branch
        %161 = sbr.rel (%p159) target = $region16
      $region15: #{discriminator_forward.5} parent=11 // pred_region
        %s162 = smul.u32 128, %s20
        %p163 = scmp.lt.s32.totalorder %s162, 127
        %s164 = scalar_select %p163, %s162, 127
        %s165 = smul.addr %s164, 4
        %s166 = scalar_lea.vmem %s1, %s165
        %s167 = smul.u32 128, %s20
      $region16: #{discriminator_forward.5} parent=11 // pred_fallthru
        _
      // Predicated region
      $region17: #{discriminator_forward.5} parent=11 // pred_check
        %p168 = pneg %p97
      $region18: #{discriminator_forward.5} parent=11 // pred_check_branch
        %170 = sbr.rel (%p168) target = $region20
      $region19: #{discriminator_forward.5} parent=11 // pred_region
        _
      $region20: #{discriminator_forward.5} parent=11 // pred_fallthru
        _
      // Predicated region
      $region21: #{discriminator_forward.5} parent=11 // pred_check
        %p171 = pneg %p118
      $region22: #{discriminator_forward.5} parent=11 // pred_check_branch
        %173 = sbr.rel (%p171) target = $region24
      $region23: #{discriminator_forward.5} parent=11 // pred_region
        _
      $region24: #{discriminator_forward.5} parent=11 // pred_fallthru
        _
    $region12: #{discriminator_forward.5} parent=5 // pred_fallthru
      _
    %p174 = scmp.lt.s32.totalorder %s10, 2
    // Predicated region
    $region25: #{discriminator_forward.5} parent=5 // pred_check
      %p175 = pneg %p174
    $region26: #{discriminator_forward.5} parent=5 // pred_check_branch
      %177 = sbr.rel (%p175) target = $region28
    $region27: #{discriminator_forward.5} parent=5 // pred_region
      // Predicated region
      $region29: #{discriminator_forward.5} parent=27 // pred_check
        %p178 = pneg %p44
      $region30: #{discriminator_forward.5} parent=27 // pred_check_branch
        %180 = sbr.rel (%p178) target = $region32
      $region31: #{discriminator_forward.5} parent=27 // pred_region
        %s181 = smul.u32 8, %s17
        %s182 = smul.u32 8, %s18
        %p183 = scmp.lt.s32.totalorder %s181, 15
        %s184 = scalar_select %p183, %s181, 15
        %p185 = scmp.lt.s32.totalorder %s182, 7
        %s186 = scalar_select %p185, %s182, 7
        %s187 = smul.addr %s184, 8
        %s188 = sadd.s32 %s186, %s187
        %s189 = smul.addr %s188, 4
        %s190 = scalar_lea.vmem %s0, %s189
        %s191 = smul.u32 8, %s17
        %s192 = smul.u32 8, %s18
      $region32: #{discriminator_forward.5} parent=27 // pred_fallthru
        _
    $region28: #{discriminator_forward.5} parent=5 // pred_fallthru
      _
    %p193 = scmp.le.s32.totalorder 1, %s10
    %p194 = scmp.lt.s32.totalorder %s10, 3
    %p195 = pnand %p193, %p194
    %p196 = pneg %p195
    // Predicated region
    $region33: #{discriminator_forward.5} parent=5 // pred_check
      _
    $region34: #{discriminator_forward.5} parent=5 // pred_check_branch
      %198 = sbr.rel (%p195) target = $region36
    $region35: #{discriminator_forward.5} parent=5 // pred_region
      %s199 = ssub.s32 %s10, 1
      %s200 = smul.u32 8, %s19
      %s201 = smul.u32 8, %s20
      %p202 = scmp.lt.s32.totalorder %s200, 15
      %s203 = scalar_select %p202, %s200, 15
      %p204 = scmp.lt.s32.totalorder %s201, 7
      %s205 = scalar_select %p204, %s201, 7
      %s206 = smul.addr %s203, 8
      %s207 = sadd.s32 %s205, %s206
      %s208 = smul.addr %s207, 4
      %s209 = scalar_lea.vmem %s0, %s208
      %p210 = pneg %p50
      %p211 = pneg %p47
      %s212 = smul.u32 128, %s20
      %p213 = scmp.lt.s32.totalorder %s212, 127
      %s214 = scalar_select %p213, %s212, 127
      %s215 = smul.addr %s214, 4
      %s216 = scalar_lea.vmem %s1, %s215
      %p217 = pneg %p76
      %p218 = pneg %p73
      %p219 = pneg %p97
      %p220 = pneg %p94
      %p221 = pneg %p118
      %p222 = pneg %p115
      %p223 = pneg %p144
      %p224 = pneg %p141
      %s225 = smul.u32 8, %s19
      %p226 = scmp.lt.s32.totalorder %s225, 15
      %s227 = scalar_select %p226, %s225, 15
      %s228 = smul.addr %s227, 4
      %s229 = scalar_lea.vmem %s4, %s228
      %s230 = smul.u32 8, %s19
      %s231 = smul.u32 8, %s20
      %p232 = scmp.lt.s32.totalorder %s230, 15
      %s233 = scalar_select %p232, %s230, 15
      %p234 = scmp.lt.s32.totalorder %s231, 7
      %s235 = scalar_select %p234, %s231, 7
      %s236 = smul.addr %s233, 8
      %s237 = sadd.s32 %s235, %s236
      %s238 = smul.addr %s237, 4
      %s239 = scalar_lea.vmem %s0, %s238
      %s240 = smul.u32 8, %s19
      %s241 = smul.u32 8, %s20
      %s242 = smul.u32 128, %s20
      %p243 = scmp.lt.s32.totalorder %s242, 127
      %s244 = scalar_select %p243, %s242, 127
      %s245 = smul.addr %s244, 4
      %s246 = scalar_lea.vmem %s1, %s245
      %s247 = smul.u32 128, %s20
      %s248 = smul.u32 8, %s19
      %p249 = scmp.lt.s32.totalorder %s248, 15
      %s250 = scalar_select %p249, %s248, 15
      %s251 = smul.addr %s250, 4
      %s252 = scalar_lea.vmem %s4, %s251
      %s253 = smul.u32 8, %s19
      %v255 = vld [vmem:[%s239] sm:$0xff]
      %v256 = vld [vmem:[%s239 + $0x8] sm:$0xff]
      %v257 = vld [vmem:[%s239 + $0x10] sm:$0xff]
      %v258 = vld [vmem:[%s239 + $0x18] sm:$0xff]
      %v259 = vld [vmem:[%s239 + $0x20] sm:$0xff]
      %v260 = vld [vmem:[%s239 + $0x28] sm:$0xff]
      %v261 = vld [vmem:[%s239 + $0x30] sm:$0xff]
      %v262 = vld [vmem:[%s239 + $0x38] sm:$0xff]
      %v263 = vld [vmem:[%s239 + $0x40] sm:$0xff]
      %v264 = vld [vmem:[%s239 + $0x48] sm:$0xff]
      %v265 = vld [vmem:[%s239 + $0x50] sm:$0xff]
      %v266 = vld [vmem:[%s239 + $0x58] sm:$0xff]
      %v267 = vld [vmem:[%s239 + $0x60] sm:$0xff]
      %v268 = vld [vmem:[%s239 + $0x68] sm:$0xff]
      %v269 = vld [vmem:[%s239 + $0x70] sm:$0xff]
      %v270 = vld [vmem:[%s239 + $0x78] sm:$0xff]
      %v271 = vld [vmem:[%s239 + $0x80] sm:$0xff]
      %v272 = vld [vmem:[%s239 + $0x88] sm:$0xff]
      %v273 = vld [vmem:[%s239 + $0x90] sm:$0xff]
      %v274 = vld [vmem:[%s239 + $0x98] sm:$0xff]
      %v275 = vld [vmem:[%s239 + $0xa0] sm:$0xff]
      %v276 = vld [vmem:[%s239 + $0xa8] sm:$0xff]
      %v277 = vld [vmem:[%s239 + $0xb0] sm:$0xff]
      %v278 = vld [vmem:[%s239 + $0xb8] sm:$0xff]
      %v279 = vld [vmem:[%s239 + $0xc0] sm:$0xff]
      %v280 = vld [vmem:[%s239 + $0xc8] sm:$0xff]
      %v281 = vld [vmem:[%s239 + $0xd0] sm:$0xff]
      %v282 = vld [vmem:[%s239 + $0xd8] sm:$0xff]
      %v283 = vld [vmem:[%s239 + $0xe0] sm:$0xff]
      %v284 = vld [vmem:[%s239 + $0xe8] sm:$0xff]
      %v285 = vld [vmem:[%s239 + $0xf0] sm:$0xff]
      %v286 = vld [vmem:[%s239 + $0xf8] sm:$0xff]
      %v287 = vld [vmem:[%s246] sm:$0xf]
      %v288 = vld [vmem:[%s246 + $0x4] sm:$0xf]
      %v289 = vld [vmem:[%s246 + $0x8] sm:$0xf]
      %v290 = vld [vmem:[%s246 + $0xc] sm:$0xf]
      %v291 = vld [vmem:[%s246 + $0x10] sm:$0xf]
      %v292 = vld [vmem:[%s246 + $0x14] sm:$0xf]
      %v293 = vld [vmem:[%s246 + $0x18] sm:$0xf]
      %v294 = vld [vmem:[%s246 + $0x1c] sm:$0xf]
      %v295 = vld [vmem:[%s246 + $0x20] sm:$0xf]
      %v296 = vld [vmem:[%s246 + $0x24] sm:$0xf]
      %v297 = vld [vmem:[%s246 + $0x28] sm:$0xf]
      %v298 = vld [vmem:[%s246 + $0x2c] sm:$0xf]
      %v299 = vld [vmem:[%s246 + $0x30] sm:$0xf]
      %v300 = vld [vmem:[%s246 + $0x34] sm:$0xf]
      %v301 = vld [vmem:[%s246 + $0x38] sm:$0xf]
      %v302 = vld [vmem:[%s246 + $0x3c] sm:$0xf]
      %v303 = vld [vmem:[%s246 + $0x40] sm:$0xf]
      %v304 = vld [vmem:[%s246 + $0x44] sm:$0xf]
      %v305 = vld [vmem:[%s246 + $0x48] sm:$0xf]
      %v306 = vld [vmem:[%s246 + $0x4c] sm:$0xf]
      %v307 = vld [vmem:[%s246 + $0x50] sm:$0xf]
      %v308 = vld [vmem:[%s246 + $0x54] sm:$0xf]
      %v309 = vld [vmem:[%s246 + $0x58] sm:$0xf]
      %v310 = vld [vmem:[%s246 + $0x5c] sm:$0xf]
      %v311 = vld [vmem:[%s246 + $0x60] sm:$0xf]
      %v312 = vld [vmem:[%s246 + $0x64] sm:$0xf]
      %v313 = vld [vmem:[%s246 + $0x68] sm:$0xf]
      %v314 = vld [vmem:[%s246 + $0x6c] sm:$0xf]
      %v315 = vld [vmem:[%s246 + $0x70] sm:$0xf]
      %v316 = vld [vmem:[%s246 + $0x74] sm:$0xf]
      %v317 = vld [vmem:[%s246 + $0x78] sm:$0xf]
      %v318 = vld [vmem:[%s246 + $0x7c] sm:$0xf]
      %v319 = vld [vmem:[%s246 + $0x80] sm:$0xf]
      %v320 = vld [vmem:[%s246 + $0x84] sm:$0xf]
      %v321 = vld [vmem:[%s246 + $0x88] sm:$0xf]
      %v322 = vld [vmem:[%s246 + $0x8c] sm:$0xf]
      %v323 = vld [vmem:[%s246 + $0x90] sm:$0xf]
      %v324 = vld [vmem:[%s246 + $0x94] sm:$0xf]
      %v325 = vld [vmem:[%s246 + $0x98] sm:$0xf]
      %v326 = vld [vmem:[%s246 + $0x9c] sm:$0xf]
      %v327 = vld [vmem:[%s246 + $0xa0] sm:$0xf]
      %v328 = vld [vmem:[%s246 + $0xa4] sm:$0xf]
      %v329 = vld [vmem:[%s246 + $0xa8] sm:$0xf]
      %v330 = vld [vmem:[%s246 + $0xac] sm:$0xf]
      %v331 = vld [vmem:[%s246 + $0xb0] sm:$0xf]
      %v332 = vld [vmem:[%s246 + $0xb4] sm:$0xf]
      %v333 = vld [vmem:[%s246 + $0xb8] sm:$0xf]
      %v334 = vld [vmem:[%s246 + $0xbc] sm:$0xf]
      %v335 = vld [vmem:[%s246 + $0xc0] sm:$0xf]
      %v336 = vld [vmem:[%s246 + $0xc4] sm:$0xf]
      %v337 = vld [vmem:[%s246 + $0xc8] sm:$0xf]
      %v338 = vld [vmem:[%s246 + $0xcc] sm:$0xf]
      %v339 = vld [vmem:[%s246 + $0xd0] sm:$0xf]
      %v340 = vld [vmem:[%s246 + $0xd4] sm:$0xf]
      %v341 = vld [vmem:[%s246 + $0xd8] sm:$0xf]
      %v342 = vld [vmem:[%s246 + $0xdc] sm:$0xf]
      %v343 = vld [vmem:[%s246 + $0xe0] sm:$0xf]
      %v344 = vld [vmem:[%s246 + $0xe4] sm:$0xf]
      %v345 = vld [vmem:[%s246 + $0xe8] sm:$0xf]
      %v346 = vld [vmem:[%s246 + $0xec] sm:$0xf]
      %v347 = vld [vmem:[%s246 + $0xf0] sm:$0xf]
      %v348 = vld [vmem:[%s246 + $0xf4] sm:$0xf]
      %v349 = vld [vmem:[%s246 + $0xf8] sm:$0xf]
      %v350 = vld [vmem:[%s246 + $0xfc] sm:$0xf]
      %v351 = vld [vmem:[%s246 + $0x100] sm:$0xf]
      %v352 = vld [vmem:[%s246 + $0x104] sm:$0xf]
      %v353 = vld [vmem:[%s246 + $0x108] sm:$0xf]
      %v354 = vld [vmem:[%s246 + $0x10c] sm:$0xf]
      %v355 = vld [vmem:[%s246 + $0x110] sm:$0xf]
      %v356 = vld [vmem:[%s246 + $0x114] sm:$0xf]
      %v357 = vld [vmem:[%s246 + $0x118] sm:$0xf]
      %v358 = vld [vmem:[%s246 + $0x11c] sm:$0xf]
      %v359 = vld [vmem:[%s246 + $0x120] sm:$0xf]
      %v360 = vld [vmem:[%s246 + $0x124] sm:$0xf]
      %v361 = vld [vmem:[%s246 + $0x128] sm:$0xf]
      %v362 = vld [vmem:[%s246 + $0x12c] sm:$0xf]
      %v363 = vld [vmem:[%s246 + $0x130] sm:$0xf]
      %v364 = vld [vmem:[%s246 + $0x134] sm:$0xf]
      %v365 = vld [vmem:[%s246 + $0x138] sm:$0xf]
      %v366 = vld [vmem:[%s246 + $0x13c] sm:$0xf]
      %v367 = vld [vmem:[%s246 + $0x140] sm:$0xf]
      %v368 = vld [vmem:[%s246 + $0x144] sm:$0xf]
      %v369 = vld [vmem:[%s246 + $0x148] sm:$0xf]
      %v370 = vld [vmem:[%s246 + $0x14c] sm:$0xf]
      %v371 = vld [vmem:[%s246 + $0x150] sm:$0xf]
      %v372 = vld [vmem:[%s246 + $0x154] sm:$0xf]
      %v373 = vld [vmem:[%s246 + $0x158] sm:$0xf]
      %v374 = vld [vmem:[%s246 + $0x15c] sm:$0xf]
      %v375 = vld [vmem:[%s246 + $0x160] sm:$0xf]
      %v376 = vld [vmem:[%s246 + $0x164] sm:$0xf]
      %v377 = vld [vmem:[%s246 + $0x168] sm:$0xf]
      %v378 = vld [vmem:[%s246 + $0x16c] sm:$0xf]
      %v379 = vld [vmem:[%s246 + $0x170] sm:$0xf]
      %v380 = vld [vmem:[%s246 + $0x174] sm:$0xf]
      %v381 = vld [vmem:[%s246 + $0x178] sm:$0xf]
      %v382 = vld [vmem:[%s246 + $0x17c] sm:$0xf]
      %v383 = vld [vmem:[%s246 + $0x180] sm:$0xf]
      %v384 = vld [vmem:[%s246 + $0x184] sm:$0xf]
      %v385 = vld [vmem:[%s246 + $0x188] sm:$0xf]
      %v386 = vld [vmem:[%s246 + $0x18c] sm:$0xf]
      %v387 = vld [vmem:[%s246 + $0x190] sm:$0xf]
      %v388 = vld [vmem:[%s246 + $0x194] sm:$0xf]
      %v389 = vld [vmem:[%s246 + $0x198] sm:$0xf]
      %v390 = vld [vmem:[%s246 + $0x19c] sm:$0xf]
      %v391 = vld [vmem:[%s246 + $0x1a0] sm:$0xf]
      %v392 = vld [vmem:[%s246 + $0x1a4] sm:$0xf]
      %v393 = vld [vmem:[%s246 + $0x1a8] sm:$0xf]
      %v394 = vld [vmem:[%s246 + $0x1ac] sm:$0xf]
      %v395 = vld [vmem:[%s246 + $0x1b0] sm:$0xf]
      %v396 = vld [vmem:[%s246 + $0x1b4] sm:$0xf]
      %v397 = vld [vmem:[%s246 + $0x1b8] sm:$0xf]
      %v398 = vld [vmem:[%s246 + $0x1bc] sm:$0xf]
      %v399 = vld [vmem:[%s246 + $0x1c0] sm:$0xf]
      %v400 = vld [vmem:[%s246 + $0x1c4] sm:$0xf]
      %v401 = vld [vmem:[%s246 + $0x1c8] sm:$0xf]
      %v402 = vld [vmem:[%s246 + $0x1cc] sm:$0xf]
      %v403 = vld [vmem:[%s246 + $0x1d0] sm:$0xf]
      %v404 = vld [vmem:[%s246 + $0x1d4] sm:$0xf]
      %v405 = vld [vmem:[%s246 + $0x1d8] sm:$0xf]
      %v406 = vld [vmem:[%s246 + $0x1dc] sm:$0xf]
      %v407 = vld [vmem:[%s246 + $0x1e0] sm:$0xf]
      %v408 = vld [vmem:[%s246 + $0x1e4] sm:$0xf]
      %v409 = vld [vmem:[%s246 + $0x1e8] sm:$0xf]
      %v410 = vld [vmem:[%s246 + $0x1ec] sm:$0xf]
      %v411 = vld [vmem:[%s246 + $0x1f0] sm:$0xf]
      %v412 = vld [vmem:[%s246 + $0x1f4] sm:$0xf]
      %v413 = vld [vmem:[%s246 + $0x1f8] sm:$0xf]
      %v414 = vld [vmem:[%s246 + $0x1fc] sm:$0xf]
      %v447 = vunpack.c.l.b16 %v255
      %v448 = vunpack.c.h.b16 %v255
      %v449 = vunpack.c.l.b16 %v256
      %v450 = vunpack.c.h.b16 %v256
      %v451 = vunpack.c.l.b16 %v257
      %v452 = vunpack.c.h.b16 %v257
      %v453 = vunpack.c.l.b16 %v258
      %v454 = vunpack.c.h.b16 %v258
      %v455 = vunpack.c.l.b16 %v259
      %v456 = vunpack.c.h.b16 %v259
      %v457 = vunpack.c.l.b16 %v260
      %v458 = vunpack.c.h.b16 %v260
      %v459 = vunpack.c.l.b16 %v261
      %v460 = vunpack.c.h.b16 %v261
      %v461 = vunpack.c.l.b16 %v262
      %v462 = vunpack.c.h.b16 %v262
      %v463 = vunpack.c.l.b16 %v263
      %v464 = vunpack.c.h.b16 %v263
      %v465 = vunpack.c.l.b16 %v264
      %v466 = vunpack.c.h.b16 %v264
      %v467 = vunpack.c.l.b16 %v265
      %v468 = vunpack.c.h.b16 %v265
      %v469 = vunpack.c.l.b16 %v266
      %v470 = vunpack.c.h.b16 %v266
      %v471 = vunpack.c.l.b16 %v267
      %v472 = vunpack.c.h.b16 %v267
      %v473 = vunpack.c.l.b16 %v268
      %v474 = vunpack.c.h.b16 %v268
      %v475 = vunpack.c.l.b16 %v269
      %v476 = vunpack.c.h.b16 %v269
      %v477 = vunpack.c.l.b16 %v270
      %v478 = vunpack.c.h.b16 %v270
      %v479 = vunpack.c.l.b16 %v271
      %v480 = vunpack.c.h.b16 %v271
      %v481 = vunpack.c.l.b16 %v272
      %v482 = vunpack.c.h.b16 %v272
      %v483 = vunpack.c.l.b16 %v273
      %v484 = vunpack.c.h.b16 %v273
      %v485 = vunpack.c.l.b16 %v274
      %v486 = vunpack.c.h.b16 %v274
      %v487 = vunpack.c.l.b16 %v275
      %v488 = vunpack.c.h.b16 %v275
      %v489 = vunpack.c.l.b16 %v276
      %v490 = vunpack.c.h.b16 %v276
      %v491 = vunpack.c.l.b16 %v277
      %v492 = vunpack.c.h.b16 %v277
      %v493 = vunpack.c.l.b16 %v278
      %v494 = vunpack.c.h.b16 %v278
      %v495 = vunpack.c.l.b16 %v279
      %v496 = vunpack.c.h.b16 %v279
      %v497 = vunpack.c.l.b16 %v280
      %v498 = vunpack.c.h.b16 %v280
      %v499 = vunpack.c.l.b16 %v281
      %v500 = vunpack.c.h.b16 %v281
      %v501 = vunpack.c.l.b16 %v282
      %v502 = vunpack.c.h.b16 %v282
      %v503 = vunpack.c.l.b16 %v283
      %v504 = vunpack.c.h.b16 %v283
      %v505 = vunpack.c.l.b16 %v284
      %v506 = vunpack.c.h.b16 %v284
      %v507 = vunpack.c.l.b16 %v285
      %v508 = vunpack.c.h.b16 %v285
      %v509 = vunpack.c.l.b16 %v286
      %v510 = vunpack.c.h.b16 %v286
      %v511 = vpack.c.b16 %v455, %v447
      %v512 = vpack.c.b16 %v456, %v448
      %v513 = vpack.c.b16 %v457, %v449
      %v514 = vpack.c.b16 %v458, %v450
      %v515 = vpack.c.b16 %v459, %v451
      %v516 = vpack.c.b16 %v460, %v452
      %v517 = vpack.c.b16 %v461, %v453
      %v518 = vpack.c.b16 %v462, %v454
      %v519 = vpack.c.b16 %v471, %v463
      %v520 = vpack.c.b16 %v472, %v464
      %v521 = vpack.c.b16 %v473, %v465
      %v522 = vpack.c.b16 %v474, %v466
      %v523 = vpack.c.b16 %v475, %v467
      %v524 = vpack.c.b16 %v476, %v468
      %v525 = vpack.c.b16 %v477, %v469
      %v526 = vpack.c.b16 %v478, %v470
      %v527 = vpack.c.b16 %v487, %v479
      %v528 = vpack.c.b16 %v488, %v480
      %v529 = vpack.c.b16 %v489, %v481
      %v530 = vpack.c.b16 %v490, %v482
      %v531 = vpack.c.b16 %v491, %v483
      %v532 = vpack.c.b16 %v492, %v484
      %v533 = vpack.c.b16 %v493, %v485
      %v534 = vpack.c.b16 %v494, %v486
      %v535 = vpack.c.b16 %v503, %v495
      %v536 = vpack.c.b16 %v504, %v496
      %v537 = vpack.c.b16 %v505, %v497
      %v538 = vpack.c.b16 %v506, %v498
      %v539 = vpack.c.b16 %v507, %v499
      %v540 = vpack.c.b16 %v508, %v500
      %v541 = vpack.c.b16 %v509, %v501
      %v542 = vpack.c.b16 %v510, %v502
      %v703 = vunpack.c.l.b16 %v287
      %v704 = vunpack.c.l.b16 %v288
      %v705 = vunpack.c.l.b16 %v289
      %v706 = vunpack.c.l.b16 %v290
      %v707 = vunpack.c.l.b16 %v291
      %v708 = vunpack.c.l.b16 %v292
      %v709 = vunpack.c.l.b16 %v293
      %v710 = vunpack.c.l.b16 %v294
      %v711 = vunpack.c.l.b16 %v295
      %v712 = vunpack.c.l.b16 %v296
      %v713 = vunpack.c.l.b16 %v297
      %v714 = vunpack.c.l.b16 %v298
      %v715 = vunpack.c.l.b16 %v299
      %v716 = vunpack.c.l.b16 %v300
      %v717 = vunpack.c.l.b16 %v301
      %v718 = vunpack.c.l.b16 %v302
      %v719 = vunpack.c.l.b16 %v303
      %v720 = vunpack.c.l.b16 %v304
      %v721 = vunpack.c.l.b16 %v305
      %v722 = vunpack.c.l.b16 %v306
      %v723 = vunpack.c.l.b16 %v307
      %v724 = vunpack.c.l.b16 %v308
      %v725 = vunpack.c.l.b16 %v309
      %v726 = vunpack.c.l.b16 %v310
      %v727 = vunpack.c.l.b16 %v311
      %v728 = vunpack.c.l.b16 %v312
      %v729 = vunpack.c.l.b16 %v313
      %v730 = vunpack.c.l.b16 %v314
      %v731 = vunpack.c.l.b16 %v315
      %v732 = vunpack.c.l.b16 %v316
      %v733 = vunpack.c.l.b16 %v317
      %v734 = vunpack.c.l.b16 %v318
      %v735 = vunpack.c.l.b16 %v319
      %v736 = vunpack.c.l.b16 %v320
      %v737 = vunpack.c.l.b16 %v321
      %v738 = vunpack.c.l.b16 %v322
      %v739 = vunpack.c.l.b16 %v323
      %v740 = vunpack.c.l.b16 %v324
      %v741 = vunpack.c.l.b16 %v325
      %v742 = vunpack.c.l.b16 %v326
      %v743 = vunpack.c.l.b16 %v327
      %v744 = vunpack.c.l.b16 %v328
      %v745 = vunpack.c.l.b16 %v329
      %v746 = vunpack.c.l.b16 %v330
      %v747 = vunpack.c.l.b16 %v331
      %v748 = vunpack.c.l.b16 %v332
      %v749 = vunpack.c.l.b16 %v333
      %v750 = vunpack.c.l.b16 %v334
      %v751 = vunpack.c.l.b16 %v335
      %v752 = vunpack.c.l.b16 %v336
      %v753 = vunpack.c.l.b16 %v337
      %v754 = vunpack.c.l.b16 %v338
      %v755 = vunpack.c.l.b16 %v339
      %v756 = vunpack.c.l.b16 %v340
      %v757 = vunpack.c.l.b16 %v341
      %v758 = vunpack.c.l.b16 %v342
      %v759 = vunpack.c.l.b16 %v343
      %v760 = vunpack.c.l.b16 %v344
      %v761 = vunpack.c.l.b16 %v345
      %v762 = vunpack.c.l.b16 %v346
      %v763 = vunpack.c.l.b16 %v347
      %v764 = vunpack.c.l.b16 %v348
      %v765 = vunpack.c.l.b16 %v349
      %v766 = vunpack.c.l.b16 %v350
      %v767 = vunpack.c.l.b16 %v351
      %v768 = vunpack.c.l.b16 %v352
      %v769 = vunpack.c.l.b16 %v353
      %v770 = vunpack.c.l.b16 %v354
      %v771 = vunpack.c.l.b16 %v355
      %v772 = vunpack.c.l.b16 %v356
      %v773 = vunpack.c.l.b16 %v357
      %v774 = vunpack.c.l.b16 %v358
      %v775 = vunpack.c.l.b16 %v359
      %v776 = vunpack.c.l.b16 %v360
      %v777 = vunpack.c.l.b16 %v361
      %v778 = vunpack.c.l.b16 %v362
      %v779 = vunpack.c.l.b16 %v363
      %v780 = vunpack.c.l.b16 %v364
      %v781 = vunpack.c.l.b16 %v365
      %v782 = vunpack.c.l.b16 %v366
      %v783 = vunpack.c.l.b16 %v367
      %v784 = vunpack.c.l.b16 %v368
      %v785 = vunpack.c.l.b16 %v369
      %v786 = vunpack.c.l.b16 %v370
      %v787 = vunpack.c.l.b16 %v371
      %v788 = vunpack.c.l.b16 %v372
      %v789 = vunpack.c.l.b16 %v373
      %v790 = vunpack.c.l.b16 %v374
      %v791 = vunpack.c.l.b16 %v375
      %v792 = vunpack.c.l.b16 %v376
      %v793 = vunpack.c.l.b16 %v377
      %v794 = vunpack.c.l.b16 %v378
      %v795 = vunpack.c.l.b16 %v379
      %v796 = vunpack.c.l.b16 %v380
      %v797 = vunpack.c.l.b16 %v381
      %v798 = vunpack.c.l.b16 %v382
      %v799 = vunpack.c.l.b16 %v383
      %v800 = vunpack.c.l.b16 %v384
      %v801 = vunpack.c.l.b16 %v385
      %v802 = vunpack.c.l.b16 %v386
      %v803 = vunpack.c.l.b16 %v387
      %v804 = vunpack.c.l.b16 %v388
      %v805 = vunpack.c.l.b16 %v389
      %v806 = vunpack.c.l.b16 %v390
      %v807 = vunpack.c.l.b16 %v391
      %v808 = vunpack.c.l.b16 %v392
      %v809 = vunpack.c.l.b16 %v393
      %v810 = vunpack.c.l.b16 %v394
      %v811 = vunpack.c.l.b16 %v395
      %v812 = vunpack.c.l.b16 %v396
      %v813 = vunpack.c.l.b16 %v397
      %v814 = vunpack.c.l.b16 %v398
      %v815 = vunpack.c.l.b16 %v399
      %v816 = vunpack.c.l.b16 %v400
      %v817 = vunpack.c.l.b16 %v401
      %v818 = vunpack.c.l.b16 %v402
      %v819 = vunpack.c.l.b16 %v403
      %v820 = vunpack.c.l.b16 %v404
      %v821 = vunpack.c.l.b16 %v405
      %v822 = vunpack.c.l.b16 %v406
      %v823 = vunpack.c.l.b16 %v407
      %v824 = vunpack.c.l.b16 %v408
      %v825 = vunpack.c.l.b16 %v409
      %v826 = vunpack.c.l.b16 %v410
      %v827 = vunpack.c.l.b16 %v411
      %v828 = vunpack.c.l.b16 %v412
      %v829 = vunpack.c.l.b16 %v413
      %v830 = vunpack.c.l.b16 %v414
      %v831 = vpack.c.b16 %v704, %v703
      %v832 = vpack.c.b16 %v706, %v705
      %v833 = vpack.c.b16 %v708, %v707
      %v834 = vpack.c.b16 %v710, %v709
      %v835 = vpack.c.b16 %v712, %v711
      %v836 = vpack.c.b16 %v714, %v713
      %v837 = vpack.c.b16 %v716, %v715
      %v838 = vpack.c.b16 %v718, %v717
      %v839 = vpack.c.b16 %v720, %v719
      %v840 = vpack.c.b16 %v722, %v721
      %v841 = vpack.c.b16 %v724, %v723
      %v842 = vpack.c.b16 %v726, %v725
      %v843 = vpack.c.b16 %v728, %v727
      %v844 = vpack.c.b16 %v730, %v729
      %v845 = vpack.c.b16 %v732, %v731
      %v846 = vpack.c.b16 %v734, %v733
      %v847 = vpack.c.b16 %v736, %v735
      %v848 = vpack.c.b16 %v738, %v737
      %v849 = vpack.c.b16 %v740, %v739
      %v850 = vpack.c.b16 %v742, %v741
      %v851 = vpack.c.b16 %v744, %v743
      %v852 = vpack.c.b16 %v746, %v745
      %v853 = vpack.c.b16 %v748, %v747
      %v854 = vpack.c.b16 %v750, %v749
      %v855 = vpack.c.b16 %v752, %v751
      %v856 = vpack.c.b16 %v754, %v753
      %v857 = vpack.c.b16 %v756, %v755
      %v858 = vpack.c.b16 %v758, %v757
      %v859 = vpack.c.b16 %v760, %v759
      %v860 = vpack.c.b16 %v762, %v761
      %v861 = vpack.c.b16 %v764, %v763
      %v862 = vpack.c.b16 %v766, %v765
      %v863 = vpack.c.b16 %v768, %v767
      %v864 = vpack.c.b16 %v770, %v769
      %v865 = vpack.c.b16 %v772, %v771
      %v866 = vpack.c.b16 %v774, %v773
      %v867 = vpack.c.b16 %v776, %v775
      %v868 = vpack.c.b16 %v778, %v777
      %v869 = vpack.c.b16 %v780, %v779
      %v870 = vpack.c.b16 %v782, %v781
      %v871 = vpack.c.b16 %v784, %v783
      %v872 = vpack.c.b16 %v786, %v785
      %v873 = vpack.c.b16 %v788, %v787
      %v874 = vpack.c.b16 %v790, %v789
      %v875 = vpack.c.b16 %v792, %v791
      %v876 = vpack.c.b16 %v794, %v793
      %v877 = vpack.c.b16 %v796, %v795
      %v878 = vpack.c.b16 %v798, %v797
      %v879 = vpack.c.b16 %v800, %v799
      %v880 = vpack.c.b16 %v802, %v801
      %v881 = vpack.c.b16 %v804, %v803
      %v882 = vpack.c.b16 %v806, %v805
      %v883 = vpack.c.b16 %v808, %v807
      %v884 = vpack.c.b16 %v810, %v809
      %v885 = vpack.c.b16 %v812, %v811
      %v886 = vpack.c.b16 %v814, %v813
      %v887 = vpack.c.b16 %v816, %v815
      %v888 = vpack.c.b16 %v818, %v817
      %v889 = vpack.c.b16 %v820, %v819
      %v890 = vpack.c.b16 %v822, %v821
      %v891 = vpack.c.b16 %v824, %v823
      %v892 = vpack.c.b16 %v826, %v825
      %v893 = vpack.c.b16 %v828, %v827
      %v894 = vpack.c.b16 %v830, %v829
      %959 = vmatprep.subr.bf16.mxu0 0
      %960 = vmatpush1.bf16.msra.mxu0 %v838
      %961 = vmatprep.subr.bf16.mxu0 0
      %962 = vmatpush1.bf16.msra.mxu0 %v837
      %963 = vmatprep.subr.bf16.mxu0 0
      %964 = vmatpush1.bf16.msra.mxu0 %v836
      %965 = vmatprep.subr.bf16.mxu0 0
      %966 = vmatpush1.bf16.msra.mxu0 %v835
      %967 = vmatprep.subr.bf16.mxu0 0
      %968 = vmatpush1.bf16.msra.mxu0 %v834
      %969 = vmatprep.subr.bf16.mxu0 0
      %970 = vmatpush1.bf16.msra.mxu0 %v833
      %971 = vmatprep.subr.bf16.mxu0 0
      %972 = vmatpush1.bf16.msra.mxu0 %v832
      %973 = vmatprep.subr.bf16.mxu0 0
      %974 = vmatpush1.bf16.msra.mxu0 %v831
      %975 = vmatprep.subr.bf16.mxu0 0
      %976 = vmatpush2.bf16.msra.mxu0 %v846
      %977 = vmatprep.subr.bf16.mxu0 0
      %978 = vmatpush2.bf16.msra.mxu0 %v845
      %979 = vmatprep.subr.bf16.mxu0 0
      %980 = vmatpush2.bf16.msra.mxu0 %v844
      %981 = vmatprep.subr.bf16.mxu0 0
      %982 = vmatpush2.bf16.msra.mxu0 %v843
      %983 = vmatprep.subr.bf16.mxu0 0
      %984 = vmatpush2.bf16.msra.mxu0 %v842
      %985 = vmatprep.subr.bf16.mxu0 0
      %986 = vmatpush2.bf16.msra.mxu0 %v841
      %987 = vmatprep.subr.bf16.mxu0 0
      %988 = vmatpush2.bf16.msra.mxu0 %v840
      %989 = vmatprep.subr.bf16.mxu0 0
      %990 = vmatpush2.bf16.msra.mxu0 %v839
      %991 = vmatprep.mubr.bf16.mxu0 %v512
      %992 = vmatmul.mubr.bf16.gmra.mxu0 %v511
      %v993 = vpop.f32.mrf.mxu0
      %v994 = vadd.f32 0.0, %v993
      %v995 = vpop.f32.mrf.mxu0
      %v996 = vpop.f32.mrf.mxu0
      %v997 = vadd.f32 0.0, %v996
      %v998 = vpop.f32.mrf.mxu0
      %999 = vmatprep.mubr.bf16.mxu0 %v520
      %1000 = vmatmul.mubr.bf16.gmra.mxu0 %v519
      %v1001 = vpop.f32.mrf.mxu0
      %v1002 = vadd.f32 0.0, %v1001
      %v1003 = vpop.f32.mrf.mxu0
      %v1004 = vpop.f32.mrf.mxu0
      %v1005 = vadd.f32 0.0, %v1004
      %v1006 = vpop.f32.mrf.mxu0
      %1007 = vmatprep.mubr.bf16.mxu0 %v528
      %1008 = vmatmul.mubr.bf16.gmra.mxu0 %v527
      %v1009 = vpop.f32.mrf.mxu0
      %v1010 = vadd.f32 0.0, %v1009
      %v1011 = vpop.f32.mrf.mxu0
      %v1012 = vpop.f32.mrf.mxu0
      %v1013 = vadd.f32 0.0, %v1012
      %v1014 = vpop.f32.mrf.mxu0
      %1015 = vmatprep.mubr.bf16.mxu0 %v536
      %1016 = vmatmul.mubr.bf16.gmra.mxu0 %v535
      %v1017 = vpop.f32.mrf.mxu0
      %v1018 = vadd.f32 0.0, %v1017
      %v1019 = vpop.f32.mrf.mxu0
      %v1020 = vpop.f32.mrf.mxu0
      %v1021 = vadd.f32 0.0, %v1020
      %v1022 = vpop.f32.mrf.mxu0
      %1023 = vdwg.mxu0
      %1024 = vmatprep.subr.bf16.mxu0 0
      %1025 = vmatpush1.bf16.msra.mxu0 %v854
      %1026 = vmatprep.subr.bf16.mxu0 0
      %1027 = vmatpush1.bf16.msra.mxu0 %v853
      %1028 = vmatprep.subr.bf16.mxu0 0
      %1029 = vmatpush1.bf16.msra.mxu0 %v852
      %1030 = vmatprep.subr.bf16.mxu0 0
      %1031 = vmatpush1.bf16.msra.mxu0 %v851
      %1032 = vmatprep.subr.bf16.mxu0 0
      %1033 = vmatpush1.bf16.msra.mxu0 %v850
      %1034 = vmatprep.subr.bf16.mxu0 0
      %1035 = vmatpush1.bf16.msra.mxu0 %v849
      %1036 = vmatprep.subr.bf16.mxu0 0
      %1037 = vmatpush1.bf16.msra.mxu0 %v848
      %1038 = vmatprep.subr.bf16.mxu0 0
      %1039 = vmatpush1.bf16.msra.mxu0 %v847
      %1040 = vmatprep.subr.bf16.mxu0 0
      %1041 = vmatpush2.bf16.msra.mxu0 %v862
      %1042 = vmatprep.subr.bf16.mxu0 0
      %1043 = vmatpush2.bf16.msra.mxu0 %v861
      %1044 = vmatprep.subr.bf16.mxu0 0
      %1045 = vmatpush2.bf16.msra.mxu0 %v860
      %1046 = vmatprep.subr.bf16.mxu0 0
      %1047 = vmatpush2.bf16.msra.mxu0 %v859
      %1048 = vmatprep.subr.bf16.mxu0 0
      %1049 = vmatpush2.bf16.msra.mxu0 %v858
      %1050 = vmatprep.subr.bf16.mxu0 0
      %1051 = vmatpush2.bf16.msra.mxu0 %v857
      %1052 = vmatprep.subr.bf16.mxu0 0
      %1053 = vmatpush2.bf16.msra.mxu0 %v856
      %1054 = vmatprep.subr.bf16.mxu0 0
      %1055 = vmatpush2.bf16.msra.mxu0 %v855
      %1056 = vmatprep.mubr.bf16.mxu0 %v514
      %1057 = vmatmul.mubr.bf16.gmra.mxu0 %v513
      %v1058 = vpop.f32.mrf.mxu0
      %v1059 = vadd.f32 %v994, %v1058
      %v1060 = vpop.f32.mrf.mxu0
      %v1061 = vpop.f32.mrf.mxu0
      %v1062 = vadd.f32 %v997, %v1061
      %v1063 = vpop.f32.mrf.mxu0
      %1064 = vmatprep.mubr.bf16.mxu0 %v522
      %1065 = vmatmul.mubr.bf16.gmra.mxu0 %v521
      %v1066 = vpop.f32.mrf.mxu0
      %v1067 = vadd.f32 %v1002, %v1066
      %v1068 = vpop.f32.mrf.mxu0
      %v1069 = vpop.f32.mrf.mxu0
      %v1070 = vadd.f32 %v1005, %v1069
      %v1071 = vpop.f32.mrf.mxu0
      %1072 = vmatprep.mubr.bf16.mxu0 %v530
      %1073 = vmatmul.mubr.bf16.gmra.mxu0 %v529
      %v1074 = vpop.f32.mrf.mxu0
      %v1075 = vadd.f32 %v1010, %v1074
      %v1076 = vpop.f32.mrf.mxu0
      %v1077 = vpop.f32.mrf.mxu0
      %v1078 = vadd.f32 %v1013, %v1077
      %v1079 = vpop.f32.mrf.mxu0
      %1080 = vmatprep.mubr.bf16.mxu0 %v538
      %1081 = vmatmul.mubr.bf16.gmra.mxu0 %v537
      %v1082 = vpop.f32.mrf.mxu0
      %v1083 = vadd.f32 %v1018, %v1082
      %v1084 = vpop.f32.mrf.mxu0
      %v1085 = vpop.f32.mrf.mxu0
      %v1086 = vadd.f32 %v1021, %v1085
      %v1087 = vpop.f32.mrf.mxu0
      %1088 = vdwg.mxu0
      %1089 = vmatprep.subr.bf16.mxu0 0
      %1090 = vmatpush1.bf16.msra.mxu0 %v870
      %1091 = vmatprep.subr.bf16.mxu0 0
      %1092 = vmatpush1.bf16.msra.mxu0 %v869
      %1093 = vmatprep.subr.bf16.mxu0 0
      %1094 = vmatpush1.bf16.msra.mxu0 %v868
      %1095 = vmatprep.subr.bf16.mxu0 0
      %1096 = vmatpush1.bf16.msra.mxu0 %v867
      %1097 = vmatprep.subr.bf16.mxu0 0
      %1098 = vmatpush1.bf16.msra.mxu0 %v866
      %1099 = vmatprep.subr.bf16.mxu0 0
      %1100 = vmatpush1.bf16.msra.mxu0 %v865
      %1101 = vmatprep.subr.bf16.mxu0 0
      %1102 = vmatpush1.bf16.msra.mxu0 %v864
      %1103 = vmatprep.subr.bf16.mxu0 0
      %1104 = vmatpush1.bf16.msra.mxu0 %v863
      %1105 = vmatprep.subr.bf16.mxu0 0
      %1106 = vmatpush2.bf16.msra.mxu0 %v878
      %1107 = vmatprep.subr.bf16.mxu0 0
      %1108 = vmatpush2.bf16.msra.mxu0 %v877
      %1109 = vmatprep.subr.bf16.mxu0 0
      %1110 = vmatpush2.bf16.msra.mxu0 %v876
      %1111 = vmatprep.subr.bf16.mxu0 0
      %1112 = vmatpush2.bf16.msra.mxu0 %v875
      %1113 = vmatprep.subr.bf16.mxu0 0
      %1114 = vmatpush2.bf16.msra.mxu0 %v874
      %1115 = vmatprep.subr.bf16.mxu0 0
      %1116 = vmatpush2.bf16.msra.mxu0 %v873
      %1117 = vmatprep.subr.bf16.mxu0 0
      %1118 = vmatpush2.bf16.msra.mxu0 %v872
      %1119 = vmatprep.subr.bf16.mxu0 0
      %1120 = vmatpush2.bf16.msra.mxu0 %v871
      %1121 = vmatprep.mubr.bf16.mxu0 %v516
      %1122 = vmatmul.mubr.bf16.gmra.mxu0 %v515
      %v1123 = vpop.f32.mrf.mxu0
      %v1124 = vadd.f32 %v1059, %v1123
      %v1125 = vpop.f32.mrf.mxu0
      %v1126 = vpop.f32.mrf.mxu0
      %v1127 = vadd.f32 %v1062, %v1126
      %v1128 = vpop.f32.mrf.mxu0
      %1129 = vmatprep.mubr.bf16.mxu0 %v524
      %1130 = vmatmul.mubr.bf16.gmra.mxu0 %v523
      %v1131 = vpop.f32.mrf.mxu0
      %v1132 = vadd.f32 %v1067, %v1131
      %v1133 = vpop.f32.mrf.mxu0
      %v1134 = vpop.f32.mrf.mxu0
      %v1135 = vadd.f32 %v1070, %v1134
      %v1136 = vpop.f32.mrf.mxu0
      %1137 = vmatprep.mubr.bf16.mxu0 %v532
      %1138 = vmatmul.mubr.bf16.gmra.mxu0 %v531
      %v1139 = vpop.f32.mrf.mxu0
      %v1140 = vadd.f32 %v1075, %v1139
      %v1141 = vpop.f32.mrf.mxu0
      %v1142 = vpop.f32.mrf.mxu0
      %v1143 = vadd.f32 %v1078, %v1142
      %v1144 = vpop.f32.mrf.mxu0
      %1145 = vmatprep.mubr.bf16.mxu0 %v540
      %1146 = vmatmul.mubr.bf16.gmra.mxu0 %v539
      %v1147 = vpop.f32.mrf.mxu0
      %v1148 = vadd.f32 %v1083, %v1147
      %v1149 = vpop.f32.mrf.mxu0
      %v1150 = vpop.f32.mrf.mxu0
      %v1151 = vadd.f32 %v1086, %v1150
      %v1152 = vpop.f32.mrf.mxu0
      %1153 = vdwg.mxu0
      %1154 = vmatprep.subr.bf16.mxu0 0
      %1155 = vmatpush1.bf16.msra.mxu0 %v886
      %1156 = vmatprep.subr.bf16.mxu0 0
      %1157 = vmatpush1.bf16.msra.mxu0 %v885
      %1158 = vmatprep.subr.bf16.mxu0 0
      %1159 = vmatpush1.bf16.msra.mxu0 %v884
      %1160 = vmatprep.subr.bf16.mxu0 0
      %1161 = vmatpush1.bf16.msra.mxu0 %v883
      %1162 = vmatprep.subr.bf16.mxu0 0
      %1163 = vmatpush1.bf16.msra.mxu0 %v882
      %1164 = vmatprep.subr.bf16.mxu0 0
      %1165 = vmatpush1.bf16.msra.mxu0 %v881
      %1166 = vmatprep.subr.bf16.mxu0 0
      %1167 = vmatpush1.bf16.msra.mxu0 %v880
      %1168 = vmatprep.subr.bf16.mxu0 0
      %1169 = vmatpush1.bf16.msra.mxu0 %v879
      %1170 = vmatprep.subr.bf16.mxu0 0
      %1171 = vmatpush2.bf16.msra.mxu0 %v894
      %1172 = vmatprep.subr.bf16.mxu0 0
      %1173 = vmatpush2.bf16.msra.mxu0 %v893
      %1174 = vmatprep.subr.bf16.mxu0 0
      %1175 = vmatpush2.bf16.msra.mxu0 %v892
      %1176 = vmatprep.subr.bf16.mxu0 0
      %1177 = vmatpush2.bf16.msra.mxu0 %v891
      %1178 = vmatprep.subr.bf16.mxu0 0
      %1179 = vmatpush2.bf16.msra.mxu0 %v890
      %1180 = vmatprep.subr.bf16.mxu0 0
      %1181 = vmatpush2.bf16.msra.mxu0 %v889
      %1182 = vmatprep.subr.bf16.mxu0 0
      %1183 = vmatpush2.bf16.msra.mxu0 %v888
      %1184 = vmatprep.subr.bf16.mxu0 0
      %1185 = vmatpush2.bf16.msra.mxu0 %v887
      %1186 = vmatprep.mubr.bf16.mxu0 %v518
      %1187 = vmatmul.mubr.bf16.gmra.mxu0 %v517
      %v1188 = vpop.f32.mrf.mxu0
      %v1189 = vadd.f32 %v1124, %v1188
      %v1190 = vpop.f32.mrf.mxu0
      %v1191 = vpop.f32.mrf.mxu0
      %v1192 = vadd.f32 %v1127, %v1191
      %v1193 = vpop.f32.mrf.mxu0
      %1194 = vmatprep.mubr.bf16.mxu0 %v526
      %1195 = vmatmul.mubr.bf16.gmra.mxu0 %v525
      %v1196 = vpop.f32.mrf.mxu0
      %v1197 = vadd.f32 %v1132, %v1196
      %v1198 = vpop.f32.mrf.mxu0
      %v1199 = vpop.f32.mrf.mxu0
      %v1200 = vadd.f32 %v1135, %v1199
      %v1201 = vpop.f32.mrf.mxu0
      %1202 = vmatprep.mubr.bf16.mxu0 %v534
      %1203 = vmatmul.mubr.bf16.gmra.mxu0 %v533
      %v1204 = vpop.f32.mrf.mxu0
      %v1205 = vadd.f32 %v1140, %v1204
      %v1206 = vpop.f32.mrf.mxu0
      %v1207 = vpop.f32.mrf.mxu0
      %v1208 = vadd.f32 %v1143, %v1207
      %v1209 = vpop.f32.mrf.mxu0
      %1210 = vmatprep.mubr.bf16.mxu0 %v542
      %1211 = vmatmul.mubr.bf16.gmra.mxu0 %v541
      %v1212 = vpop.f32.mrf.mxu0
      %v1213 = vadd.f32 %v1148, %v1212
      %v1214 = vpop.f32.mrf.mxu0
      %v1215 = vpop.f32.mrf.mxu0
      %v1216 = vadd.f32 %v1151, %v1215
      %v1217 = vpop.f32.mrf.mxu0
      %1218 = vdwg.mxu0
      %p1219 = scmp.eq.s32.totalorder %s20, 0
      // Predicated region
      $region37: #{discriminator_forward.5} parent=35 // pred_check
        %p1220 = pneg %p1219
      $region38: #{discriminator_forward.5} parent=35 // pred_check_branch
        %1222 = sbr.rel (%p1220) target = $region40
      $region39: #{discriminator_forward.5} parent=35 // pred_region
        %1223 = vst [vmem:[#allocation2] sm:$0xff] %v1189
        %1224 = vst [vmem:[#allocation2 + $0x8] sm:$0xff] %v1192
        %1225 = vst [vmem:[#allocation2 + $0x10] sm:$0xff] %v1197
        %1226 = vst [vmem:[#allocation2 + $0x18] sm:$0xff] %v1200
        %1227 = vst [vmem:[#allocation2 + $0x20] sm:$0xff] %v1205
        %1228 = vst [vmem:[#allocation2 + $0x28] sm:$0xff] %v1208
        %1229 = vst [vmem:[#allocation2 + $0x30] sm:$0xff] %v1213
        %1230 = vst [vmem:[#allocation2 + $0x38] sm:$0xff] %v1216
      $region40: #{discriminator_forward.5} parent=35 // pred_fallthru
        _
      %p1231 = scmp.gt.s32.totalorder %s20, 0
      // Predicated region
      $region41: #{discriminator_forward.5} parent=35 // pred_check
        %p1232 = pneg %p1231
      $region42: #{discriminator_forward.5} parent=35 // pred_check_branch
        %1234 = sbr.rel (%p1232) target = $region44
      $region43: #{discriminator_forward.5} parent=35 // pred_region
        %v1235 = vld [vmem:[#allocation2] sm:$0xff]
        %v1236 = vld [vmem:[#allocation2 + $0x8] sm:$0xff]
        %v1237 = vld [vmem:[#allocation2 + $0x10] sm:$0xff]
        %v1238 = vld [vmem:[#allocation2 + $0x18] sm:$0xff]
        %v1239 = vld [vmem:[#allocation2 + $0x20] sm:$0xff]
        %v1240 = vld [vmem:[#allocation2 + $0x28] sm:$0xff]
        %v1241 = vld [vmem:[#allocation2 + $0x30] sm:$0xff]
        %v1242 = vld [vmem:[#allocation2 + $0x38] sm:$0xff]
        %v1243 = vadd.f32 %v1235, %v1189
        %v1244 = vadd.f32 %v1236, %v1192
        %v1245 = vadd.f32 %v1237, %v1197
        %v1246 = vadd.f32 %v1238, %v1200
        %v1247 = vadd.f32 %v1239, %v1205
        %v1248 = vadd.f32 %v1240, %v1208
        %v1249 = vadd.f32 %v1241, %v1213
        %v1250 = vadd.f32 %v1242, %v1216
        %1251 = vst [vmem:[#allocation2] sm:$0xff] %v1243
        %1252 = vst [vmem:[#allocation2 + $0x8] sm:$0xff] %v1244
        %1253 = vst [vmem:[#allocation2 + $0x10] sm:$0xff] %v1245
        %1254 = vst [vmem:[#allocation2 + $0x18] sm:$0xff] %v1246
        %1255 = vst [vmem:[#allocation2 + $0x20] sm:$0xff] %v1247
        %1256 = vst [vmem:[#allocation2 + $0x28] sm:$0xff] %v1248
        %1257 = vst [vmem:[#allocation2 + $0x30] sm:$0xff] %v1249
        %1258 = vst [vmem:[#allocation2 + $0x38] sm:$0xff] %v1250
      $region44: #{discriminator_forward.5} parent=35 // pred_fallthru
        _
      // Predicated region
      $region45: #{discriminator_forward.5} parent=35 // pred_check
        %p1259 = pneg %p1219
      $region46: #{discriminator_forward.5} parent=35 // pred_check_branch
        %1261 = sbr.rel (%p1259) target = $region48
      $region47: #{discriminator_forward.5} parent=35 // pred_region
        %v1262 = vld [vmem:[#allocation2] sm:$0xff]
        %v1263 = vld [vmem:[#allocation2 + $0x8] sm:$0xff]
        %v1264 = vld [vmem:[#allocation2 + $0x10] sm:$0xff]
        %v1265 = vld [vmem:[#allocation2 + $0x18] sm:$0xff]
        %v1266 = vld [vmem:[#allocation2 + $0x20] sm:$0xff]
        %v1267 = vld [vmem:[#allocation2 + $0x28] sm:$0xff]
        %v1268 = vld [vmem:[#allocation2 + $0x30] sm:$0xff]
        %v1269 = vld [vmem:[#allocation2 + $0x38] sm:$0xff]
        %v1270 = vld [vmem:[%s2] sm:$0x1]
        %v1272 = vlaneseq
        %v1273 = vshrl.u32 %v1272, 7
        %v1274 = vsub.s32 0, %v1273
        %v1275 = vrot.slane %v1270, %v1274
        %v1277 = vmul.f32 %v1262, %v1275
        %v1278 = vmul.f32 %v1263, %v1275
        %v1279 = vmul.f32 %v1264, %v1275
        %v1280 = vmul.f32 %v1265, %v1275
        %v1281 = vmul.f32 %v1266, %v1275
        %v1282 = vmul.f32 %v1267, %v1275
        %v1283 = vmul.f32 %v1268, %v1275
        %v1284 = vmul.f32 %v1269, %v1275
        %v1285 = vld [vmem:[%s3] sm:$0x1]
        %v1287 = vlaneseq
        %v1288 = vshrl.u32 %v1287, 7
        %v1289 = vsub.s32 0, %v1288
        %v1290 = vrot.slane %v1285, %v1289
        %v1292 = vadd.f32 %v1277, %v1290
        %v1293 = vadd.f32 %v1278, %v1290
        %v1294 = vadd.f32 %v1279, %v1290
        %v1295 = vadd.f32 %v1280, %v1290
        %v1296 = vadd.f32 %v1281, %v1290
        %v1297 = vadd.f32 %v1282, %v1290
        %v1298 = vadd.f32 %v1283, %v1290
        %v1299 = vadd.f32 %v1284, %v1290
        %v1300 = vmul.f32 %v1292, 0.2
        %v1301 = vmul.f32 %v1293, 0.2
        %v1302 = vmul.f32 %v1294, 0.2
        %v1303 = vmul.f32 %v1295, 0.2
        %v1304 = vmul.f32 %v1296, 0.2
        %v1305 = vmul.f32 %v1297, 0.2
        %v1306 = vmul.f32 %v1298, 0.2
        %v1307 = vmul.f32 %v1299, 0.2
        %v1308 = vmax.f32 %v1292, %v1300
        %v1309 = vmax.f32 %v1293, %v1301
        %v1310 = vmax.f32 %v1294, %v1302
        %v1311 = vmax.f32 %v1295, %v1303
        %v1312 = vmax.f32 %v1296, %v1304
        %v1313 = vmax.f32 %v1297, %v1305
        %v1314 = vmax.f32 %v1298, %v1306
        %v1315 = vmax.f32 %v1299, %v1307
        %v1316 = vpack.c.bf16 %v1309, %v1308
        %v1317 = vpack.c.bf16 %v1311, %v1310
        %v1318 = vpack.c.bf16 %v1313, %v1312
        %v1319 = vpack.c.bf16 %v1315, %v1314
        %v1324 = vunpack.c.l.b16 %v1316
        %v1325 = vunpack.c.h.b16 %v1316
        %v1326 = vunpack.c.l.b16 %v1317
        %v1327 = vunpack.c.h.b16 %v1317
        %v1328 = vunpack.c.l.b16 %v1318
        %v1329 = vunpack.c.h.b16 %v1318
        %v1330 = vunpack.c.l.b16 %v1319
        %v1331 = vunpack.c.h.b16 %v1319
        %v1332 = vpack.c.b16 %v1324, %v1324
        %v1333 = vpack.c.b16 %v1325, %v1325
        %v1334 = vpack.c.b16 %v1326, %v1326
        %v1335 = vpack.c.b16 %v1327, %v1327
        %v1336 = vpack.c.b16 %v1328, %v1328
        %v1337 = vpack.c.b16 %v1329, %v1329
        %v1338 = vpack.c.b16 %v1330, %v1330
        %v1339 = vpack.c.b16 %v1331, %v1331
        %1348 = vst [vmem:[%s252] sm:$0xf] %v1332
        %1349 = vst [vmem:[%s252 + $0x4] sm:$0xf] %v1333
        %1350 = vst [vmem:[%s252 + $0x8] sm:$0xf] %v1334
        %1351 = vst [vmem:[%s252 + $0xc] sm:$0xf] %v1335
        %1352 = vst [vmem:[%s252 + $0x10] sm:$0xf] %v1336
        %1353 = vst [vmem:[%s252 + $0x14] sm:$0xf] %v1337
        %1354 = vst [vmem:[%s252 + $0x18] sm:$0xf] %v1338
        %1355 = vst [vmem:[%s252 + $0x1c] sm:$0xf] %v1339
      $region48: #{discriminator_forward.5} parent=35 // pred_fallthru
        _
      %s1356 = smul.u32 8, %s19
      %p1357 = scmp.lt.s32.totalorder %s1356, 15
      %s1358 = scalar_select %p1357, %s1356, 15
      %s1359 = smul.addr %s1358, 4
      %s1360 = scalar_lea.vmem %s4, %s1359
      // Predicated region
      $region49: #{discriminator_forward.5} parent=35 // pred_check
        %p1361 = pneg %p141
      $region50: #{discriminator_forward.5} parent=35 // pred_check_branch
        %1363 = sbr.rel (%p1361) target = $region52
      $region51: #{discriminator_forward.5} parent=35 // pred_region
        %s1364 = smul.u32 8, %s19
      $region52: #{discriminator_forward.5} parent=35 // pred_fallthru
        _
    $region36: #{discriminator_forward.5} parent=5 // pred_fallthru
      _
    %p1365 = scmp.le.s32.totalorder 2, %s10
    // Predicated region
    $region53: #{discriminator_forward.5} parent=5 // pred_check
      %p1366 = pneg %p1365
    $region54: #{discriminator_forward.5} parent=5 // pred_check_branch
      %1368 = sbr.rel (%p1366) target = $region56
    $region55: #{discriminator_forward.5} parent=5 // pred_region
      %s1369 = ssub.s32 %s10, 2
      // Predicated region
      $region57: #{discriminator_forward.5} parent=55 // pred_check
        %p1370 = pneg %p147
      $region58: #{discriminator_forward.5} parent=55 // pred_check_branch
        %1372 = sbr.rel (%p1370) target = $region60
      $region59: #{discriminator_forward.5} parent=55 // pred_region
        %s1373 = smul.u32 8, %s21
        %p1374 = scmp.lt.s32.totalorder %s1373, 15
        %s1375 = scalar_select %p1374, %s1373, 15
        %s1376 = smul.addr %s1375, 4
        %s1377 = scalar_lea.vmem %s4, %s1376
      $region60: #{discriminator_forward.5} parent=55 // pred_fallthru
        _
    $region56: #{discriminator_forward.5} parent=5 // pred_fallthru
      _
  $region6: #{discriminator_forward.5} parent=0 // loop_footer
    %s14 = sadd.s32 1, %s10
  $region7: #{discriminator_forward.5} parent=0 // loop_footer_branch
    %9 = sbr.rel target = $region3
  $region8: #{discriminator_forward.5} parent=0 // loop_exit
    _

// kernel: discriminator_forward.6
$region0: #{discriminator_forward.6}
  #allocation0 [shape = 'u32[]', space=smem, size = 0x4, offset = 0x4, fixed_abs, tag = 'smem constant byte address 0x4 - core index']
  #allocation1 [shape = 'u32[144,128]{1,0:T(1,128)}', space=vmem, size = 0x12000, scoped, tag = 'internal scratch']
  #allocation2 [shape = 'f32[16,256]{1,0:T(8,128)}', space=vmem, size = 0x4000, scoped, tag = 'scratch operand']
  %s0 = inlined_call_operand.vmem [shape: bf16[32,2048], index: 0, kind: input, shape index: {}]
  %s1 = inlined_call_operand.vmem [shape: bf16[2048,256], index: 1, kind: input, shape index: {}]
  %s2 = inlined_call_operand.vmem [shape: f32[1,256], index: 2, kind: input, shape index: {}]
  %s3 = inlined_call_operand.vmem [shape: f32[1,256], index: 3, kind: input, shape index: {}]
  %s4 = inlined_call_operand.vmem [shape: bf16[32,256], index: 4, kind: output, shape index: {}]
  %s5 = sld [smem:[#allocation0]]
  $region61: #{discriminator_forward.6} parent=0
    _
  %s7 = ssub.s32 1, %s5
  %s8 = scalar_select 0, %s7, %s5
  loop: start=0, step=1, limit=4
  $region2: #{discriminator_forward.6} parent=0 // loop_pre_header
    _
  $region3: #{discriminator_forward.6} parent=0 // loop_header
    %s10 = sphi 0, %s14
    %p11 = scmp.ge.s32.totalorder %s10, 4
    %s17 = sphi 0, %s29
    %s18 = sphi 0, %s25
    %s19 = sphi 0, %s17
    %s20 = sphi 0, %s18
    %s21 = sphi 0, %s19
    %s22 = sphi 0, %s20
    %s34 = sphi 0, %s36
    %s37 = sphi 0, %s34
    %s38 = sphi 0, %s37
    %s54 = sphi 0, %s38
    %s60 = sphi 0, %s62
    %s63 = sphi 0, %s60
    %s64 = sphi 0, %s63
    %s80 = sphi 0, %s64
    %s84 = sphi 0, %s84
    %s86 = sphi 0, %s84
    %s87 = sphi 0, %s86
    %s101 = sphi 0, %s87
    %s105 = sphi 0, %s105
    %s107 = sphi 0, %s105
    %s108 = sphi 0, %s107
    %s122 = sphi 0, %s108
    %s128 = sphi 0, %s130
    %s131 = sphi 0, %s128
    %s132 = sphi 0, %s131
    %s148 = sphi 0, %s132
  $region4: #{discriminator_forward.6} parent=0 // loop_header_branch
    %13 = sbr.rel (%p11) target = $region8
  $region5: #{discriminator_forward.6} parent=0 // loop_body
    %s15 = ssub.s32 %s10, 1
    %s16 = ssub.s32 %s10, 2
    %s23 = sadd.s32 1, %s18
    %p24 = scmp.ge.s32.totalorder %s23, 1
    %s25 = scalar_select %p24, 0, %s23
    %s26 = sadd.s32 1, %s17
    %s27 = scalar_select %p24, %s26, %s17
    %p28 = scmp.ge.s32.totalorder %s27, 2
    %s29 = scalar_select %p28, 0, %s27
    %s30 = ssub.s32 %s17, %s29
    %s31 = ssub.s32 %s18, %s25
    %s32 = sor.u32 %s30, %s31
    %p33 = scmp.eq.s32.totalorder %s32, 0
    %s35 = sadd.s32 %s34, 1
    %s36 = scalar_select %p33, %s34, %s35
    %p39 = pneg %p33
    %p40 = scmp.eq.s32.totalorder %s10, 1
    %p41 = por %p39, %p40
    %p42 = scmp.ne.s32.totalorder %s34, %s37
    %p43 = scmp.eq.s32.totalorder %s10, 0
    %p44 = por %p42, %p43
    %p45 = scmp.ne.s32.totalorder %s34, %s37
    %p46 = scmp.eq.s32.totalorder %s15, 1
    %p47 = por %p45, %p46
    %p48 = scmp.ne.s32.totalorder %s37, %s38
    %p49 = scmp.eq.s32.totalorder %s15, 0
    %p50 = por %p48, %p49
    %p51 = scmp.ne.s32.totalorder %s37, %s38
    %p52 = scmp.eq.s32.totalorder %s16, 1
    %p53 = por %p51, %p52
    %p55 = scmp.ne.s32.totalorder %s38, %s54
    %p56 = scmp.eq.s32.totalorder %s16, 0
    %p57 = por %p55, %p56
    %s58 = ssub.s32 %s18, %s25
    %p59 = scmp.eq.s32.totalorder %s58, 0
    %s61 = sadd.s32 %s60, 1
    %s62 = scalar_select %p59, %s60, %s61
    %p65 = pneg %p59
    %p66 = scmp.eq.s32.totalorder %s10, 1
    %p67 = por %p65, %p66
    %p68 = scmp.ne.s32.totalorder %s60, %s63
    %p69 = scmp.eq.s32.totalorder %s10, 0
    %p70 = por %p68, %p69
    %p71 = scmp.ne.s32.totalorder %s60, %s63
    %p72 = scmp.eq.s32.totalorder %s15, 1
    %p73 = por %p71, %p72
    %p74 = scmp.ne.s32.totalorder %s63, %s64
    %p75 = scmp.eq.s32.totalorder %s15, 0
    %p76 = por %p74, %p75
    %p77 = scmp.ne.s32.totalorder %s63, %s64
    %p78 = scmp.eq.s32.totalorder %s16, 1
    %p79 = por %p77, %p78
    %p81 = scmp.ne.s32.totalorder %s64, %s80
    %p82 = scmp.eq.s32.totalorder %s16, 0
    %p83 = por %p81, %p82
    %s85 = sadd.s32 %s84, 1
    %p88 = scmp.eq.s32.totalorder %s10, 1
    %p89 = scmp.ne.s32.totalorder %s84, %s86
    %p90 = scmp.eq.s32.totalorder %s10, 0
    %p91 = por %p89, %p90
    %p92 = scmp.ne.s32.totalorder %s84, %s86
    %p93 = scmp.eq.s32.totalorder %s15, 1
    %p94 = por %p92, %p93
    %p95 = scmp.ne.s32.totalorder %s86, %s87
    %p96 = scmp.eq.s32.totalorder %s15, 0
    %p97 = por %p95, %p96
    %p98 = scmp.ne.s32.totalorder %s86, %s87
    %p99 = scmp.eq.s32.totalorder %s16, 1
    %p100 = por %p98, %p99
    %p102 = scmp.ne.s32.totalorder %s87, %s101
    %p103 = scmp.eq.s32.totalorder %s16, 0
    %p104 = por %p102, %p103
    %s106 = sadd.s32 %s105, 1
    %p109 = scmp.eq.s32.totalorder %s10, 1
    %p110 = scmp.ne.s32.totalorder %s105, %s107
    %p111 = scmp.eq.s32.totalorder %s10, 0
    %p112 = por %p110, %p111
    %p113 = scmp.ne.s32.totalorder %s105, %s107
    %p114 = scmp.eq.s32.totalorder %s15, 1
    %p115 = por %p113, %p114
    %p116 = scmp.ne.s32.totalorder %s107, %s108
    %p117 = scmp.eq.s32.totalorder %s15, 0
    %p118 = por %p116, %p117
    %p119 = scmp.ne.s32.totalorder %s107, %s108
    %p120 = scmp.eq.s32.totalorder %s16, 1
    %p121 = por %p119, %p120
    %p123 = scmp.ne.s32.totalorder %s108, %s122
    %p124 = scmp.eq.s32.totalorder %s16, 0
    %p125 = por %p123, %p124
    %s126 = ssub.s32 %s17, %s29
    %p127 = scmp.eq.s32.totalorder %s126, 0
    %s129 = sadd.s32 %s128, 1
    %s130 = scalar_select %p127, %s128, %s129
    %p133 = pneg %p127
    %p134 = scmp.eq.s32.totalorder %s10, 1
    %p135 = por %p133, %p134
    %p136 = scmp.ne.s32.totalorder %s128, %s131
    %p137 = scmp.eq.s32.totalorder %s10, 0
    %p138 = por %p136, %p137
    %p139 = scmp.ne.s32.totalorder %s128, %s131
    %p140 = scmp.eq.s32.totalorder %s15, 1
    %p141 = por %p139, %p140
    %p142 = scmp.ne.s32.totalorder %s131, %s132
    %p143 = scmp.eq.s32.totalorder %s15, 0
    %p144 = por %p142, %p143
    %p145 = scmp.ne.s32.totalorder %s131, %s132
    %p146 = scmp.eq.s32.totalorder %s16, 1
    %p147 = por %p145, %p146
    %p149 = scmp.ne.s32.totalorder %s132, %s148
    %p150 = scmp.eq.s32.totalorder %s16, 0
    %p151 = por %p149, %p150
    %p152 = scmp.le.s32.totalorder 1, %s10
    %p153 = scmp.lt.s32.totalorder %s10, 3
    %p154 = pnand %p152, %p153
    %p155 = pneg %p154
    // Predicated region
    $region9: #{discriminator_forward.6} parent=5 // pred_check
      _
    $region10: #{discriminator_forward.6} parent=5 // pred_check_branch
      %157 = sbr.rel (%p154) target = $region12
    $region11: #{discriminator_forward.6} parent=5 // pred_region
      %s158 = ssub.s32 %s10, 1
      // Predicated region
      $region13: #{discriminator_forward.6} parent=11 // pred_check
        %p159 = pneg %p76
      $region14: #{discriminator_forward.6} parent=11 // pred_check_branch
        %161 = sbr.rel (%p159) target = $region16
      $region15: #{discriminator_forward.6} parent=11 // pred_region
        %s162 = smul.u32 256, %s20
        %p163 = scmp.lt.s32.totalorder %s162, 255
        %s164 = scalar_select %p163, %s162, 255
        %s165 = smul.addr %s164, 2
        %s166 = smul.addr %s165, 4
        %s167 = scalar_lea.vmem %s1, %s166
        %s168 = smul.u32 256, %s20
      $region16: #{discriminator_forward.6} parent=11 // pred_fallthru
        _
      // Predicated region
      $region17: #{discriminator_forward.6} parent=11 // pred_check
        %p169 = pneg %p97
      $region18: #{discriminator_forward.6} parent=11 // pred_check_branch
        %171 = sbr.rel (%p169) target = $region20
      $region19: #{discriminator_forward.6} parent=11 // pred_region
        _
      $region20: #{discriminator_forward.6} parent=11 // pred_fallthru
        _
      // Predicated region
      $region21: #{discriminator_forward.6} parent=11 // pred_check
        %p172 = pneg %p118
      $region22: #{discriminator_forward.6} parent=11 // pred_check_branch
        %174 = sbr.rel (%p172) target = $region24
      $region23: #{discriminator_forward.6} parent=11 // pred_region
        _
      $region24: #{discriminator_forward.6} parent=11 // pred_fallthru
        _
    $region12: #{discriminator_forward.6} parent=5 // pred_fallthru
      _
    %p175 = scmp.lt.s32.totalorder %s10, 2
    // Predicated region
    $region25: #{discriminator_forward.6} parent=5 // pred_check
      %p176 = pneg %p175
    $region26: #{discriminator_forward.6} parent=5 // pred_check_branch
      %178 = sbr.rel (%p176) target = $region28
    $region27: #{discriminator_forward.6} parent=5 // pred_region
      // Predicated region
      $region29: #{discriminator_forward.6} parent=27 // pred_check
        %p179 = pneg %p44
      $region30: #{discriminator_forward.6} parent=27 // pred_check_branch
        %181 = sbr.rel (%p179) target = $region32
      $region31: #{discriminator_forward.6} parent=27 // pred_region
        %s182 = smul.u32 2, %s17
        %s183 = smul.u32 16, %s18
        %p184 = scmp.lt.s32.totalorder %s182, 3
        %s185 = scalar_select %p184, %s182, 3
        %p186 = scmp.lt.s32.totalorder %s183, 15
        %s187 = scalar_select %p186, %s183, 15
        %s188 = smul.addr %s185, 16
        %s189 = sadd.s32 %s187, %s188
        %s190 = smul.addr %s189, 4
        %s191 = scalar_lea.vmem %s0, %s190
        %s192 = smul.u32 2, %s17
        %s193 = smul.u32 16, %s18
      $region32: #{discriminator_forward.6} parent=27 // pred_fallthru
        _
    $region28: #{discriminator_forward.6} parent=5 // pred_fallthru
      _
    %p194 = scmp.le.s32.totalorder 1, %s10
    %p195 = scmp.lt.s32.totalorder %s10, 3
    %p196 = pnand %p194, %p195
    %p197 = pneg %p196
    // Predicated region
    $region33: #{discriminator_forward.6} parent=5 // pred_check
      _
    $region34: #{discriminator_forward.6} parent=5 // pred_check_branch
      %199 = sbr.rel (%p196) target = $region36
    $region35: #{discriminator_forward.6} parent=5 // pred_region
      %s200 = ssub.s32 %s10, 1
      %s201 = smul.u32 2, %s19
      %s202 = smul.u32 16, %s20
      %p203 = scmp.lt.s32.totalorder %s201, 3
      %s204 = scalar_select %p203, %s201, 3
      %p205 = scmp.lt.s32.totalorder %s202, 15
      %s206 = scalar_select %p205, %s202, 15
      %s207 = smul.addr %s204, 16
      %s208 = sadd.s32 %s206, %s207
      %s209 = smul.addr %s208, 4
      %s210 = scalar_lea.vmem %s0, %s209
      %p211 = pneg %p50
      %p212 = pneg %p47
      %s213 = smul.u32 256, %s20
      %p214 = scmp.lt.s32.totalorder %s213, 255
      %s215 = scalar_select %p214, %s213, 255
      %s216 = smul.addr %s215, 2
      %s217 = smul.addr %s216, 4
      %s218 = scalar_lea.vmem %s1, %s217
      %p219 = pneg %p76
      %p220 = pneg %p73
      %p221 = pneg %p97
      %p222 = pneg %p94
      %p223 = pneg %p118
      %p224 = pneg %p115
      %p225 = pneg %p144
      %p226 = pneg %p141
      %s227 = smul.u32 2, %s19
      %p228 = scmp.lt.s32.totalorder %s227, 3
      %s229 = scalar_select %p228, %s227, 3
      %s230 = smul.addr %s229, 2
      %s231 = smul.addr %s230, 4
      %s232 = scalar_lea.vmem %s4, %s231
      %s233 = smul.u32 2, %s19
      %s234 = smul.u32 16, %s20
      %p235 = scmp.lt.s32.totalorder %s233, 3
      %s236 = scalar_select %p235, %s233, 3
      %p237 = scmp.lt.s32.totalorder %s234, 15
      %s238 = scalar_select %p237, %s234, 15
      %s239 = smul.addr %s236, 16
      %s240 = sadd.s32 %s238, %s239
      %s241 = smul.addr %s240, 4
      %s242 = scalar_lea.vmem %s0, %s241
      %s243 = smul.u32 2, %s19
      %s244 = smul.u32 16, %s20
      %s245 = smul.u32 256, %s20
      %p246 = scmp.lt.s32.totalorder %s245, 255
      %s247 = scalar_select %p246, %s245, 255
      %s248 = smul.addr %s247, 2
      %s249 = smul.addr %s248, 4
      %s250 = scalar_lea.vmem %s1, %s249
      %s251 = smul.u32 256, %s20
      %s252 = smul.u32 2, %s19
      %p253 = scmp.lt.s32.totalorder %s252, 3
      %s254 = scalar_select %p253, %s252, 3
      %s255 = smul.addr %s254, 2
      %s256 = smul.addr %s255, 4
      %s257 = scalar_lea.vmem %s4, %s256
      %s258 = smul.u32 2, %s19
      %v259 = vld [vmem:[%s242] sm:$0xff]
      %v260 = vld [vmem:[%s242 + $0x8] sm:$0xff]
      %v261 = vld [vmem:[%s242 + $0x10] sm:$0xff]
      %v262 = vld [vmem:[%s242 + $0x18] sm:$0xff]
      %v263 = vld [vmem:[%s242 + $0x20] sm:$0xff]
      %v264 = vld [vmem:[%s242 + $0x28] sm:$0xff]
      %v265 = vld [vmem:[%s242 + $0x30] sm:$0xff]
      %v266 = vld [vmem:[%s242 + $0x38] sm:$0xff]
      %v267 = vld [vmem:[%s242 + $0x40] sm:$0xff]
      %v268 = vld [vmem:[%s242 + $0x48] sm:$0xff]
      %v269 = vld [vmem:[%s242 + $0x50] sm:$0xff]
      %v270 = vld [vmem:[%s242 + $0x58] sm:$0xff]
      %v271 = vld [vmem:[%s242 + $0x60] sm:$0xff]
      %v272 = vld [vmem:[%s242 + $0x68] sm:$0xff]
      %v273 = vld [vmem:[%s242 + $0x70] sm:$0xff]
      %v274 = vld [vmem:[%s242 + $0x78] sm:$0xff]
      %v275 = vld [vmem:[%s250] sm:$0xff]
      %v276 = vld [vmem:[%s250 + $0x8] sm:$0xff]
      %v277 = vld [vmem:[%s250 + $0x10] sm:$0xff]
      %v278 = vld [vmem:[%s250 + $0x18] sm:$0xff]
      %v279 = vld [vmem:[%s250 + $0x20] sm:$0xff]
      %v280 = vld [vmem:[%s250 + $0x28] sm:$0xff]
      %v281 = vld [vmem:[%s250 + $0x30] sm:$0xff]
      %v282 = vld [vmem:[%s250 + $0x38] sm:$0xff]
      %v283 = vld [vmem:[%s250 + $0x40] sm:$0xff]
      %v284 = vld [vmem:[%s250 + $0x48] sm:$0xff]
      %v285 = vld [vmem:[%s250 + $0x50] sm:$0xff]
      %v286 = vld [vmem:[%s250 + $0x58] sm:$0xff]
      %v287 = vld [vmem:[%s250 + $0x60] sm:$0xff]
      %v288 = vld [vmem:[%s250 + $0x68] sm:$0xff]
      %v289 = vld [vmem:[%s250 + $0x70] sm:$0xff]
      %v290 = vld [vmem:[%s250 + $0x78] sm:$0xff]
      %v291 = vld [vmem:[%s250 + $0x80] sm:$0xff]
      %v292 = vld [vmem:[%s250 + $0x88] sm:$0xff]
      %v293 = vld [vmem:[%s250 + $0x90] sm:$0xff]
      %v294 = vld [vmem:[%s250 + $0x98] sm:$0xff]
      %v295 = vld [vmem:[%s250 + $0xa0] sm:$0xff]
      %v296 = vld [vmem:[%s250 + $0xa8] sm:$0xff]
      %v297 = vld [vmem:[%s250 + $0xb0] sm:$0xff]
      %v298 = vld [vmem:[%s250 + $0xb8] sm:$0xff]
      %v299 = vld [vmem:[%s250 + $0xc0] sm:$0xff]
      %v300 = vld [vmem:[%s250 + $0xc8] sm:$0xff]
      %v301 = vld [vmem:[%s250 + $0xd0] sm:$0xff]
      %v302 = vld [vmem:[%s250 + $0xd8] sm:$0xff]
      %v303 = vld [vmem:[%s250 + $0xe0] sm:$0xff]
      %v304 = vld [vmem:[%s250 + $0xe8] sm:$0xff]
      %v305 = vld [vmem:[%s250 + $0xf0] sm:$0xff]
      %v306 = vld [vmem:[%s250 + $0xf8] sm:$0xff]
      %v307 = vld [vmem:[%s250 + $0x100] sm:$0xff]
      %v308 = vld [vmem:[%s250 + $0x108] sm:$0xff]
      %v309 = vld [vmem:[%s250 + $0x110] sm:$0xff]
      %v310 = vld [vmem:[%s250 + $0x118] sm:$0xff]
      %v311 = vld [vmem:[%s250 + $0x120] sm:$0xff]
      %v312 = vld [vmem:[%s250 + $0x128] sm:$0xff]
      %v313 = vld [vmem:[%s250 + $0x130] sm:$0xff]
      %v314 = vld [vmem:[%s250 + $0x138] sm:$0xff]
      %v315 = vld [vmem:[%s250 + $0x140] sm:$0xff]
      %v316 = vld [vmem:[%s250 + $0x148] sm:$0xff]
      %v317 = vld [vmem:[%s250 + $0x150] sm:$0xff]
      %v318 = vld [vmem:[%s250 + $0x158] sm:$0xff]
      %v319 = vld [vmem:[%s250 + $0x160] sm:$0xff]
      %v320 = vld [vmem:[%s250 + $0x168] sm:$0xff]
      %v321 = vld [vmem:[%s250 + $0x170] sm:$0xff]
      %v322 = vld [vmem:[%s250 + $0x178] sm:$0xff]
      %v323 = vld [vmem:[%s250 + $0x180] sm:$0xff]
      %v324 = vld [vmem:[%s250 + $0x188] sm:$0xff]
      %v325 = vld [vmem:[%s250 + $0x190] sm:$0xff]
      %v326 = vld [vmem:[%s250 + $0x198] sm:$0xff]
      %v327 = vld [vmem:[%s250 + $0x1a0] sm:$0xff]
      %v328 = vld [vmem:[%s250 + $0x1a8] sm:$0xff]
      %v329 = vld [vmem:[%s250 + $0x1b0] sm:$0xff]
      %v330 = vld [vmem:[%s250 + $0x1b8] sm:$0xff]
      %v331 = vld [vmem:[%s250 + $0x1c0] sm:$0xff]
      %v332 = vld [vmem:[%s250 + $0x1c8] sm:$0xff]
      %v333 = vld [vmem:[%s250 + $0x1d0] sm:$0xff]
      %v334 = vld [vmem:[%s250 + $0x1d8] sm:$0xff]
      %v335 = vld [vmem:[%s250 + $0x1e0] sm:$0xff]
      %v336 = vld [vmem:[%s250 + $0x1e8] sm:$0xff]
      %v337 = vld [vmem:[%s250 + $0x1f0] sm:$0xff]
      %v338 = vld [vmem:[%s250 + $0x1f8] sm:$0xff]
      %v339 = vld [vmem:[%s250 + $0x200] sm:$0xff]
      %v340 = vld [vmem:[%s250 + $0x208] sm:$0xff]
      %v341 = vld [vmem:[%s250 + $0x210] sm:$0xff]
      %v342 = vld [vmem:[%s250 + $0x218] sm:$0xff]
      %v343 = vld [vmem:[%s250 + $0x220] sm:$0xff]
      %v344 = vld [vmem:[%s250 + $0x228] sm:$0xff]
      %v345 = vld [vmem:[%s250 + $0x230] sm:$0xff]
      %v346 = vld [vmem:[%s250 + $0x238] sm:$0xff]
      %v347 = vld [vmem:[%s250 + $0x240] sm:$0xff]
      %v348 = vld [vmem:[%s250 + $0x248] sm:$0xff]
      %v349 = vld [vmem:[%s250 + $0x250] sm:$0xff]
      %v350 = vld [vmem:[%s250 + $0x258] sm:$0xff]
      %v351 = vld [vmem:[%s250 + $0x260] sm:$0xff]
      %v352 = vld [vmem:[%s250 + $0x268] sm:$0xff]
      %v353 = vld [vmem:[%s250 + $0x270] sm:$0xff]
      %v354 = vld [vmem:[%s250 + $0x278] sm:$0xff]
      %v355 = vld [vmem:[%s250 + $0x280] sm:$0xff]
      %v356 = vld [vmem:[%s250 + $0x288] sm:$0xff]
      %v357 = vld [vmem:[%s250 + $0x290] sm:$0xff]
      %v358 = vld [vmem:[%s250 + $0x298] sm:$0xff]
      %v359 = vld [vmem:[%s250 + $0x2a0] sm:$0xff]
      %v360 = vld [vmem:[%s250 + $0x2a8] sm:$0xff]
      %v361 = vld [vmem:[%s250 + $0x2b0] sm:$0xff]
      %v362 = vld [vmem:[%s250 + $0x2b8] sm:$0xff]
      %v363 = vld [vmem:[%s250 + $0x2c0] sm:$0xff]
      %v364 = vld [vmem:[%s250 + $0x2c8] sm:$0xff]
      %v365 = vld [vmem:[%s250 + $0x2d0] sm:$0xff]
      %v366 = vld [vmem:[%s250 + $0x2d8] sm:$0xff]
      %v367 = vld [vmem:[%s250 + $0x2e0] sm:$0xff]
      %v368 = vld [vmem:[%s250 + $0x2e8] sm:$0xff]
      %v369 = vld [vmem:[%s250 + $0x2f0] sm:$0xff]
      %v370 = vld [vmem:[%s250 + $0x2f8] sm:$0xff]
      %v371 = vld [vmem:[%s250 + $0x300] sm:$0xff]
      %v372 = vld [vmem:[%s250 + $0x308] sm:$0xff]
      %v373 = vld [vmem:[%s250 + $0x310] sm:$0xff]
      %v374 = vld [vmem:[%s250 + $0x318] sm:$0xff]
      %v375 = vld [vmem:[%s250 + $0x320] sm:$0xff]
      %v376 = vld [vmem:[%s250 + $0x328] sm:$0xff]
      %v377 = vld [vmem:[%s250 + $0x330] sm:$0xff]
      %v378 = vld [vmem:[%s250 + $0x338] sm:$0xff]
      %v379 = vld [vmem:[%s250 + $0x340] sm:$0xff]
      %v380 = vld [vmem:[%s250 + $0x348] sm:$0xff]
      %v381 = vld [vmem:[%s250 + $0x350] sm:$0xff]
      %v382 = vld [vmem:[%s250 + $0x358] sm:$0xff]
      %v383 = vld [vmem:[%s250 + $0x360] sm:$0xff]
      %v384 = vld [vmem:[%s250 + $0x368] sm:$0xff]
      %v385 = vld [vmem:[%s250 + $0x370] sm:$0xff]
      %v386 = vld [vmem:[%s250 + $0x378] sm:$0xff]
      %v387 = vld [vmem:[%s250 + $0x380] sm:$0xff]
      %v388 = vld [vmem:[%s250 + $0x388] sm:$0xff]
      %v389 = vld [vmem:[%s250 + $0x390] sm:$0xff]
      %v390 = vld [vmem:[%s250 + $0x398] sm:$0xff]
      %v391 = vld [vmem:[%s250 + $0x3a0] sm:$0xff]
      %v392 = vld [vmem:[%s250 + $0x3a8] sm:$0xff]
      %v393 = vld [vmem:[%s250 + $0x3b0] sm:$0xff]
      %v394 = vld [vmem:[%s250 + $0x3b8] sm:$0xff]
      %v395 = vld [vmem:[%s250 + $0x3c0] sm:$0xff]
      %v396 = vld [vmem:[%s250 + $0x3c8] sm:$0xff]
      %v397 = vld [vmem:[%s250 + $0x3d0] sm:$0xff]
      %v398 = vld [vmem:[%s250 + $0x3d8] sm:$0xff]
      %v399 = vld [vmem:[%s250 + $0x3e0] sm:$0xff]
      %v400 = vld [vmem:[%s250 + $0x3e8] sm:$0xff]
      %v401 = vld [vmem:[%s250 + $0x3f0] sm:$0xff]
      %v402 = vld [vmem:[%s250 + $0x3f8] sm:$0xff]
      %v403 = vld [vmem:[%s250 + $0x400] sm:$0xff]
      %v404 = vld [vmem:[%s250 + $0x408] sm:$0xff]
      %v405 = vld [vmem:[%s250 + $0x410] sm:$0xff]
      %v406 = vld [vmem:[%s250 + $0x418] sm:$0xff]
      %v407 = vld [vmem:[%s250 + $0x420] sm:$0xff]
      %v408 = vld [vmem:[%s250 + $0x428] sm:$0xff]
      %v409 = vld [vmem:[%s250 + $0x430] sm:$0xff]
      %v410 = vld [vmem:[%s250 + $0x438] sm:$0xff]
      %v411 = vld [vmem:[%s250 + $0x440] sm:$0xff]
      %v412 = vld [vmem:[%s250 + $0x448] sm:$0xff]
      %v413 = vld [vmem:[%s250 + $0x450] sm:$0xff]
      %v414 = vld [vmem:[%s250 + $0x458] sm:$0xff]
      %v415 = vld [vmem:[%s250 + $0x460] sm:$0xff]
      %v416 = vld [vmem:[%s250 + $0x468] sm:$0xff]
      %v417 = vld [vmem:[%s250 + $0x470] sm:$0xff]
      %v418 = vld [vmem:[%s250 + $0x478] sm:$0xff]
      %v419 = vld [vmem:[%s250 + $0x480] sm:$0xff]
      %v420 = vld [vmem:[%s250 + $0x488] sm:$0xff]
      %v421 = vld [vmem:[%s250 + $0x490] sm:$0xff]
      %v422 = vld [vmem:[%s250 + $0x498] sm:$0xff]
      %v423 = vld [vmem:[%s250 + $0x4a0] sm:$0xff]
      %v424 = vld [vmem:[%s250 + $0x4a8] sm:$0xff]
      %v425 = vld [vmem:[%s250 + $0x4b0] sm:$0xff]
      %v426 = vld [vmem:[%s250 + $0x4b8] sm:$0xff]
      %v427 = vld [vmem:[%s250 + $0x4c0] sm:$0xff]
      %v428 = vld [vmem:[%s250 + $0x4c8] sm:$0xff]
      %v429 = vld [vmem:[%s250 + $0x4d0] sm:$0xff]
      %v430 = vld [vmem:[%s250 + $0x4d8] sm:$0xff]
      %v431 = vld [vmem:[%s250 + $0x4e0] sm:$0xff]
      %v432 = vld [vmem:[%s250 + $0x4e8] sm:$0xff]
      %v433 = vld [vmem:[%s250 + $0x4f0] sm:$0xff]
      %v434 = vld [vmem:[%s250 + $0x4f8] sm:$0xff]
      %v435 = vld [vmem:[%s250 + $0x500] sm:$0xff]
      %v436 = vld [vmem:[%s250 + $0x508] sm:$0xff]
      %v437 = vld [vmem:[%s250 + $0x510] sm:$0xff]
      %v438 = vld [vmem:[%s250 + $0x518] sm:$0xff]
      %v439 = vld [vmem:[%s250 + $0x520] sm:$0xff]
      %v440 = vld [vmem:[%s250 + $0x528] sm:$0xff]
      %v441 = vld [vmem:[%s250 + $0x530] sm:$0xff]
      %v442 = vld [vmem:[%s250 + $0x538] sm:$0xff]
      %v443 = vld [vmem:[%s250 + $0x540] sm:$0xff]
      %v444 = vld [vmem:[%s250 + $0x548] sm:$0xff]
      %v445 = vld [vmem:[%s250 + $0x550] sm:$0xff]
      %v446 = vld [vmem:[%s250 + $0x558] sm:$0xff]
      %v447 = vld [vmem:[%s250 + $0x560] sm:$0xff]
      %v448 = vld [vmem:[%s250 + $0x568] sm:$0xff]
      %v449 = vld [vmem:[%s250 + $0x570] sm:$0xff]
      %v450 = vld [vmem:[%s250 + $0x578] sm:$0xff]
      %v451 = vld [vmem:[%s250 + $0x580] sm:$0xff]
      %v452 = vld [vmem:[%s250 + $0x588] sm:$0xff]
      %v453 = vld [vmem:[%s250 + $0x590] sm:$0xff]
      %v454 = vld [vmem:[%s250 + $0x598] sm:$0xff]
      %v455 = vld [vmem:[%s250 + $0x5a0] sm:$0xff]
      %v456 = vld [vmem:[%s250 + $0x5a8] sm:$0xff]
      %v457 = vld [vmem:[%s250 + $0x5b0] sm:$0xff]
      %v458 = vld [vmem:[%s250 + $0x5b8] sm:$0xff]
      %v459 = vld [vmem:[%s250 + $0x5c0] sm:$0xff]
      %v460 = vld [vmem:[%s250 + $0x5c8] sm:$0xff]
      %v461 = vld [vmem:[%s250 + $0x5d0] sm:$0xff]
      %v462 = vld [vmem:[%s250 + $0x5d8] sm:$0xff]
      %v463 = vld [vmem:[%s250 + $0x5e0] sm:$0xff]
      %v464 = vld [vmem:[%s250 + $0x5e8] sm:$0xff]
      %v465 = vld [vmem:[%s250 + $0x5f0] sm:$0xff]
      %v466 = vld [vmem:[%s250 + $0x5f8] sm:$0xff]
      %v467 = vld [vmem:[%s250 + $0x600] sm:$0xff]
      %v468 = vld [vmem:[%s250 + $0x608] sm:$0xff]
      %v469 = vld [vmem:[%s250 + $0x610] sm:$0xff]
      %v470 = vld [vmem:[%s250 + $0x618] sm:$0xff]
      %v471 = vld [vmem:[%s250 + $0x620] sm:$0xff]
      %v472 = vld [vmem:[%s250 + $0x628] sm:$0xff]
      %v473 = vld [vmem:[%s250 + $0x630] sm:$0xff]
      %v474 = vld [vmem:[%s250 + $0x638] sm:$0xff]
      %v475 = vld [vmem:[%s250 + $0x640] sm:$0xff]
      %v476 = vld [vmem:[%s250 + $0x648] sm:$0xff]
      %v477 = vld [vmem:[%s250 + $0x650] sm:$0xff]
      %v478 = vld [vmem:[%s250 + $0x658] sm:$0xff]
      %v479 = vld [vmem:[%s250 + $0x660] sm:$0xff]
      %v480 = vld [vmem:[%s250 + $0x668] sm:$0xff]
      %v481 = vld [vmem:[%s250 + $0x670] sm:$0xff]
      %v482 = vld [vmem:[%s250 + $0x678] sm:$0xff]
      %v483 = vld [vmem:[%s250 + $0x680] sm:$0xff]
      %v484 = vld [vmem:[%s250 + $0x688] sm:$0xff]
      %v485 = vld [vmem:[%s250 + $0x690] sm:$0xff]
      %v486 = vld [vmem:[%s250 + $0x698] sm:$0xff]
      %v487 = vld [vmem:[%s250 + $0x6a0] sm:$0xff]
      %v488 = vld [vmem:[%s250 + $0x6a8] sm:$0xff]
      %v489 = vld [vmem:[%s250 + $0x6b0] sm:$0xff]
      %v490 = vld [vmem:[%s250 + $0x6b8] sm:$0xff]
      %v491 = vld [vmem:[%s250 + $0x6c0] sm:$0xff]
      %v492 = vld [vmem:[%s250 + $0x6c8] sm:$0xff]
      %v493 = vld [vmem:[%s250 + $0x6d0] sm:$0xff]
      %v494 = vld [vmem:[%s250 + $0x6d8] sm:$0xff]
      %v495 = vld [vmem:[%s250 + $0x6e0] sm:$0xff]
      %v496 = vld [vmem:[%s250 + $0x6e8] sm:$0xff]
      %v497 = vld [vmem:[%s250 + $0x6f0] sm:$0xff]
      %v498 = vld [vmem:[%s250 + $0x6f8] sm:$0xff]
      %v499 = vld [vmem:[%s250 + $0x700] sm:$0xff]
      %v500 = vld [vmem:[%s250 + $0x708] sm:$0xff]
      %v501 = vld [vmem:[%s250 + $0x710] sm:$0xff]
      %v502 = vld [vmem:[%s250 + $0x718] sm:$0xff]
      %v503 = vld [vmem:[%s250 + $0x720] sm:$0xff]
      %v504 = vld [vmem:[%s250 + $0x728] sm:$0xff]
      %v505 = vld [vmem:[%s250 + $0x730] sm:$0xff]
      %v506 = vld [vmem:[%s250 + $0x738] sm:$0xff]
      %v507 = vld [vmem:[%s250 + $0x740] sm:$0xff]
      %v508 = vld [vmem:[%s250 + $0x748] sm:$0xff]
      %v509 = vld [vmem:[%s250 + $0x750] sm:$0xff]
      %v510 = vld [vmem:[%s250 + $0x758] sm:$0xff]
      %v511 = vld [vmem:[%s250 + $0x760] sm:$0xff]
      %v512 = vld [vmem:[%s250 + $0x768] sm:$0xff]
      %v513 = vld [vmem:[%s250 + $0x770] sm:$0xff]
      %v514 = vld [vmem:[%s250 + $0x778] sm:$0xff]
      %v515 = vld [vmem:[%s250 + $0x780] sm:$0xff]
      %v516 = vld [vmem:[%s250 + $0x788] sm:$0xff]
      %v517 = vld [vmem:[%s250 + $0x790] sm:$0xff]
      %v518 = vld [vmem:[%s250 + $0x798] sm:$0xff]
      %v519 = vld [vmem:[%s250 + $0x7a0] sm:$0xff]
      %v520 = vld [vmem:[%s250 + $0x7a8] sm:$0xff]
      %v521 = vld [vmem:[%s250 + $0x7b0] sm:$0xff]
      %v522 = vld [vmem:[%s250 + $0x7b8] sm:$0xff]
      %v523 = vld [vmem:[%s250 + $0x7c0] sm:$0xff]
      %v524 = vld [vmem:[%s250 + $0x7c8] sm:$0xff]
      %v525 = vld [vmem:[%s250 + $0x7d0] sm:$0xff]
      %v526 = vld [vmem:[%s250 + $0x7d8] sm:$0xff]
      %v527 = vld [vmem:[%s250 + $0x7e0] sm:$0xff]
      %v528 = vld [vmem:[%s250 + $0x7e8] sm:$0xff]
      %v529 = vld [vmem:[%s250 + $0x7f0] sm:$0xff]
      %v530 = vld [vmem:[%s250 + $0x7f8] sm:$0xff]
      %v547 = vunpack.c.l.b16 %v259
      %v548 = vunpack.c.h.b16 %v259
      %v549 = vunpack.c.l.b16 %v260
      %v550 = vunpack.c.h.b16 %v260
      %v551 = vunpack.c.l.b16 %v261
      %v552 = vunpack.c.h.b16 %v261
      %v553 = vunpack.c.l.b16 %v262
      %v554 = vunpack.c.h.b16 %v262
      %v555 = vunpack.c.l.b16 %v263
      %v556 = vunpack.c.h.b16 %v263
      %v557 = vunpack.c.l.b16 %v264
      %v558 = vunpack.c.h.b16 %v264
      %v559 = vunpack.c.l.b16 %v265
      %v560 = vunpack.c.h.b16 %v265
      %v561 = vunpack.c.l.b16 %v266
      %v562 = vunpack.c.h.b16 %v266
      %v563 = vunpack.c.l.b16 %v267
      %v564 = vunpack.c.h.b16 %v267
      %v565 = vunpack.c.l.b16 %v268
      %v566 = vunpack.c.h.b16 %v268
      %v567 = vunpack.c.l.b16 %v269
      %v568 = vunpack.c.h.b16 %v269
      %v569 = vunpack.c.l.b16 %v270
      %v570 = vunpack.c.h.b16 %v270
      %v571 = vunpack.c.l.b16 %v271
      %v572 = vunpack.c.h.b16 %v271
      %v573 = vunpack.c.l.b16 %v272
      %v574 = vunpack.c.h.b16 %v272
      %v575 = vunpack.c.l.b16 %v273
      %v576 = vunpack.c.h.b16 %v273
      %v577 = vunpack.c.l.b16 %v274
      %v578 = vunpack.c.h.b16 %v274
      %v579 = vpack.c.b16 %v563, %v547
      %v580 = vpack.c.b16 %v564, %v548
      %v581 = vpack.c.b16 %v565, %v549
      %v582 = vpack.c.b16 %v566, %v550
      %v583 = vpack.c.b16 %v567, %v551
      %v584 = vpack.c.b16 %v568, %v552
      %v585 = vpack.c.b16 %v569, %v553
      %v586 = vpack.c.b16 %v570, %v554
      %v587 = vpack.c.b16 %v571, %v555
      %v588 = vpack.c.b16 %v572, %v556
      %v589 = vpack.c.b16 %v573, %v557
      %v590 = vpack.c.b16 %v574, %v558
      %v591 = vpack.c.b16 %v575, %v559
      %v592 = vpack.c.b16 %v576, %v560
      %v593 = vpack.c.b16 %v577, %v561
      %v594 = vpack.c.b16 %v578, %v562
      %v867 = vunpack.c.l.b16 %v275
      %v868 = vunpack.c.h.b16 %v275
      %v869 = vunpack.c.l.b16 %v276
      %v870 = vunpack.c.h.b16 %v276
      %v871 = vunpack.c.l.b16 %v277
      %v872 = vunpack.c.h.b16 %v277
      %v873 = vunpack.c.l.b16 %v278
      %v874 = vunpack.c.h.b16 %v278
      %v875 = vunpack.c.l.b16 %v279
      %v876 = vunpack.c.h.b16 %v279
      %v877 = vunpack.c.l.b16 %v280
      %v878 = vunpack.c.h.b16 %v280
      %v879 = vunpack.c.l.b16 %v281
      %v880 = vunpack.c.h.b16 %v281
      %v881 = vunpack.c.l.b16 %v282
      %v882 = vunpack.c.h.b16 %v282
      %v883 = vunpack.c.l.b16 %v283
      %v884 = vunpack.c.h.b16 %v283
      %v885 = vunpack.c.l.b16 %v284
      %v886 = vunpack.c.h.b16 %v284
      %v887 = vunpack.c.l.b16 %v285
      %v888 = vunpack.c.h.b16 %v285
      %v889 = vunpack.c.l.b16 %v286
      %v890 = vunpack.c.h.b16 %v286
      %v891 = vunpack.c.l.b16 %v287
      %v892 = vunpack.c.h.b16 %v287
      %v893 = vunpack.c.l.b16 %v288
      %v894 = vunpack.c.h.b16 %v288
      %v895 = vunpack.c.l.b16 %v289
      %v896 = vunpack.c.h.b16 %v289
      %v897 = vunpack.c.l.b16 %v290
      %v898 = vunpack.c.h.b16 %v290
      %v899 = vunpack.c.l.b16 %v291
      %v900 = vunpack.c.h.b16 %v291
      %v901 = vunpack.c.l.b16 %v292
      %v902 = vunpack.c.h.b16 %v292
      %v903 = vunpack.c.l.b16 %v293
      %v904 = vunpack.c.h.b16 %v293
      %v905 = vunpack.c.l.b16 %v294
      %v906 = vunpack.c.h.b16 %v294
      %v907 = vunpack.c.l.b16 %v295
      %v908 = vunpack.c.h.b16 %v295
      %v909 = vunpack.c.l.b16 %v296
      %v910 = vunpack.c.h.b16 %v296
      %v911 = vunpack.c.l.b16 %v297
      %v912 = vunpack.c.h.b16 %v297
      %v913 = vunpack.c.l.b16 %v298
      %v914 = vunpack.c.h.b16 %v298
      %v915 = vunpack.c.l.b16 %v299
      %v916 = vunpack.c.h.b16 %v299
      %v917 = vunpack.c.l.b16 %v300
      %v918 = vunpack.c.h.b16 %v300
      %v919 = vunpack.c.l.b16 %v301
      %v920 = vunpack.c.h.b16 %v301
      %v921 = vunpack.c.l.b16 %v302
      %v922 = vunpack.c.h.b16 %v302
      %v923 = vunpack.c.l.b16 %v303
      %v924 = vunpack.c.h.b16 %v303
      %v925 = vunpack.c.l.b16 %v304
      %v926 = vunpack.c.h.b16 %v304
      %v927 = vunpack.c.l.b16 %v305
      %v928 = vunpack.c.h.b16 %v305
      %v929 = vunpack.c.l.b16 %v306
      %v930 = vunpack.c.h.b16 %v306
      %v931 = vunpack.c.l.b16 %v307
      %v932 = vunpack.c.h.b16 %v307
      %v933 = vunpack.c.l.b16 %v308
      %v934 = vunpack.c.h.b16 %v308
      %v935 = vunpack.c.l.b16 %v309
      %v936 = vunpack.c.h.b16 %v309
      %v937 = vunpack.c.l.b16 %v310
      %v938 = vunpack.c.h.b16 %v310
      %v939 = vunpack.c.l.b16 %v311
      %v940 = vunpack.c.h.b16 %v311
      %v941 = vunpack.c.l.b16 %v312
      %v942 = vunpack.c.h.b16 %v312
      %v943 = vunpack.c.l.b16 %v313
      %v944 = vunpack.c.h.b16 %v313
      %v945 = vunpack.c.l.b16 %v314
      %v946 = vunpack.c.h.b16 %v314
      %v947 = vunpack.c.l.b16 %v315
      %v948 = vunpack.c.h.b16 %v315
      %v949 = vunpack.c.l.b16 %v316
      %v950 = vunpack.c.h.b16 %v316
      %v951 = vunpack.c.l.b16 %v317
      %v952 = vunpack.c.h.b16 %v317
      %v953 = vunpack.c.l.b16 %v318
      %v954 = vunpack.c.h.b16 %v318
      %v955 = vunpack.c.l.b16 %v319
      %v956 = vunpack.c.h.b16 %v319
      %v957 = vunpack.c.l.b16 %v320
      %v958 = vunpack.c.h.b16 %v320
      %v959 = vunpack.c.l.b16 %v321
      %v960 = vunpack.c.h.b16 %v321
      %v961 = vunpack.c.l.b16 %v322
      %v962 = vunpack.c.h.b16 %v322
      %v963 = vunpack.c.l.b16 %v323
      %v964 = vunpack.c.h.b16 %v323
      %v965 = vunpack.c.l.b16 %v324
      %v966 = vunpack.c.h.b16 %v324
      %v967 = vunpack.c.l.b16 %v325
      %v968 = vunpack.c.h.b16 %v325
      %v969 = vunpack.c.l.b16 %v326
      %v970 = vunpack.c.h.b16 %v326
      %v971 = vunpack.c.l.b16 %v327
      %v972 = vunpack.c.h.b16 %v327
      %v973 = vunpack.c.l.b16 %v328
      %v974 = vunpack.c.h.b16 %v328
      %v975 = vunpack.c.l.b16 %v329
      %v976 = vunpack.c.h.b16 %v329
      %v977 = vunpack.c.l.b16 %v330
      %v978 = vunpack.c.h.b16 %v330
      %v979 = vunpack.c.l.b16 %v331
      %v980 = vunpack.c.h.b16 %v331
      %v981 = vunpack.c.l.b16 %v332
      %v982 = vunpack.c.h.b16 %v332
      %v983 = vunpack.c.l.b16 %v333
      %v984 = vunpack.c.h.b16 %v333
      %v985 = vunpack.c.l.b16 %v334
      %v986 = vunpack.c.h.b16 %v334
      %v987 = vunpack.c.l.b16 %v335
      %v988 = vunpack.c.h.b16 %v335
      %v989 = vunpack.c.l.b16 %v336
      %v990 = vunpack.c.h.b16 %v336
      %v991 = vunpack.c.l.b16 %v337
      %v992 = vunpack.c.h.b16 %v337
      %v993 = vunpack.c.l.b16 %v338
      %v994 = vunpack.c.h.b16 %v338
      %v995 = vunpack.c.l.b16 %v339
      %v996 = vunpack.c.h.b16 %v339
      %v997 = vunpack.c.l.b16 %v340
      %v998 = vunpack.c.h.b16 %v340
      %v999 = vunpack.c.l.b16 %v341
      %v1000 = vunpack.c.h.b16 %v341
      %v1001 = vunpack.c.l.b16 %v342
      %v1002 = vunpack.c.h.b16 %v342
      %v1003 = vunpack.c.l.b16 %v343
      %v1004 = vunpack.c.h.b16 %v343
      %v1005 = vunpack.c.l.b16 %v344
      %v1006 = vunpack.c.h.b16 %v344
      %v1007 = vunpack.c.l.b16 %v345
      %v1008 = vunpack.c.h.b16 %v345
      %v1009 = vunpack.c.l.b16 %v346
      %v1010 = vunpack.c.h.b16 %v346
      %v1011 = vunpack.c.l.b16 %v347
      %v1012 = vunpack.c.h.b16 %v347
      %v1013 = vunpack.c.l.b16 %v348
      %v1014 = vunpack.c.h.b16 %v348
      %v1015 = vunpack.c.l.b16 %v349
      %v1016 = vunpack.c.h.b16 %v349
      %v1017 = vunpack.c.l.b16 %v350
      %v1018 = vunpack.c.h.b16 %v350
      %v1019 = vunpack.c.l.b16 %v351
      %v1020 = vunpack.c.h.b16 %v351
      %v1021 = vunpack.c.l.b16 %v352
      %v1022 = vunpack.c.h.b16 %v352
      %v1023 = vunpack.c.l.b16 %v353
      %v1024 = vunpack.c.h.b16 %v353
      %v1025 = vunpack.c.l.b16 %v354
      %v1026 = vunpack.c.h.b16 %v354
      %v1027 = vunpack.c.l.b16 %v355
      %v1028 = vunpack.c.h.b16 %v355
      %v1029 = vunpack.c.l.b16 %v356
      %v1030 = vunpack.c.h.b16 %v356
      %v1031 = vunpack.c.l.b16 %v357
      %v1032 = vunpack.c.h.b16 %v357
      %v1033 = vunpack.c.l.b16 %v358
      %v1034 = vunpack.c.h.b16 %v358
      %v1035 = vunpack.c.l.b16 %v359
      %v1036 = vunpack.c.h.b16 %v359
      %v1037 = vunpack.c.l.b16 %v360
      %v1038 = vunpack.c.h.b16 %v360
      %v1039 = vunpack.c.l.b16 %v361
      %v1040 = vunpack.c.h.b16 %v361
      %v1041 = vunpack.c.l.b16 %v362
      %v1042 = vunpack.c.h.b16 %v362
      %v1043 = vunpack.c.l.b16 %v363
      %v1044 = vunpack.c.h.b16 %v363
      %v1045 = vunpack.c.l.b16 %v364
      %v1046 = vunpack.c.h.b16 %v364
      %v1047 = vunpack.c.l.b16 %v365
      %v1048 = vunpack.c.h.b16 %v365
      %v1049 = vunpack.c.l.b16 %v366
      %v1050 = vunpack.c.h.b16 %v366
      %v1051 = vunpack.c.l.b16 %v367
      %v1052 = vunpack.c.h.b16 %v367
      %v1053 = vunpack.c.l.b16 %v368
      %v1054 = vunpack.c.h.b16 %v368
      %v1055 = vunpack.c.l.b16 %v369
      %v1056 = vunpack.c.h.b16 %v369
      %v1057 = vunpack.c.l.b16 %v370
      %v1058 = vunpack.c.h.b16 %v370
      %v1059 = vunpack.c.l.b16 %v371
      %v1060 = vunpack.c.h.b16 %v371
      %v1061 = vunpack.c.l.b16 %v372
      %v1062 = vunpack.c.h.b16 %v372
      %v1063 = vunpack.c.l.b16 %v373
      %v1064 = vunpack.c.h.b16 %v373
      %v1065 = vunpack.c.l.b16 %v374
      %v1066 = vunpack.c.h.b16 %v374
      %v1067 = vunpack.c.l.b16 %v375
      %v1068 = vunpack.c.h.b16 %v375
      %v1069 = vunpack.c.l.b16 %v376
      %v1070 = vunpack.c.h.b16 %v376
      %v1071 = vunpack.c.l.b16 %v377
      %v1072 = vunpack.c.h.b16 %v377
      %v1073 = vunpack.c.l.b16 %v378
      %v1074 = vunpack.c.h.b16 %v378
      %v1075 = vunpack.c.l.b16 %v379
      %v1076 = vunpack.c.h.b16 %v379
      %v1077 = vunpack.c.l.b16 %v380
      %v1078 = vunpack.c.h.b16 %v380
      %v1079 = vunpack.c.l.b16 %v381
      %v1080 = vunpack.c.h.b16 %v381
      %v1081 = vunpack.c.l.b16 %v382
      %v1082 = vunpack.c.h.b16 %v382
      %v1083 = vunpack.c.l.b16 %v383
      %v1084 = vunpack.c.h.b16 %v383
      %v1085 = vunpack.c.l.b16 %v384
      %v1086 = vunpack.c.h.b16 %v384
      %v1087 = vunpack.c.l.b16 %v385
      %v1088 = vunpack.c.h.b16 %v385
      %v1089 = vunpack.c.l.b16 %v386
      %v1090 = vunpack.c.h.b16 %v386
      %v1091 = vunpack.c.l.b16 %v387
      %v1092 = vunpack.c.h.b16 %v387
      %v1093 = vunpack.c.l.b16 %v388
      %v1094 = vunpack.c.h.b16 %v388
      %v1095 = vunpack.c.l.b16 %v389
      %v1096 = vunpack.c.h.b16 %v389
      %v1097 = vunpack.c.l.b16 %v390
      %v1098 = vunpack.c.h.b16 %v390
      %v1099 = vunpack.c.l.b16 %v391
      %v1100 = vunpack.c.h.b16 %v391
      %v1101 = vunpack.c.l.b16 %v392
      %v1102 = vunpack.c.h.b16 %v392
      %v1103 = vunpack.c.l.b16 %v393
      %v1104 = vunpack.c.h.b16 %v393
      %v1105 = vunpack.c.l.b16 %v394
      %v1106 = vunpack.c.h.b16 %v394
      %v1107 = vunpack.c.l.b16 %v395
      %v1108 = vunpack.c.h.b16 %v395
      %v1109 = vunpack.c.l.b16 %v396
      %v1110 = vunpack.c.h.b16 %v396
      %v1111 = vunpack.c.l.b16 %v397
      %v1112 = vunpack.c.h.b16 %v397
      %v1113 = vunpack.c.l.b16 %v398
      %v1114 = vunpack.c.h.b16 %v398
      %v1115 = vunpack.c.l.b16 %v399
      %v1116 = vunpack.c.h.b16 %v399
      %v1117 = vunpack.c.l.b16 %v400
      %v1118 = vunpack.c.h.b16 %v400
      %v1119 = vunpack.c.l.b16 %v401
      %v1120 = vunpack.c.h.b16 %v401
      %v1121 = vunpack.c.l.b16 %v402
      %v1122 = vunpack.c.h.b16 %v402
      %v1123 = vunpack.c.l.b16 %v403
      %v1124 = vunpack.c.h.b16 %v403
      %v1125 = vunpack.c.l.b16 %v404
      %v1126 = vunpack.c.h.b16 %v404
      %v1127 = vunpack.c.l.b16 %v405
      %v1128 = vunpack.c.h.b16 %v405
      %v1129 = vunpack.c.l.b16 %v406
      %v1130 = vunpack.c.h.b16 %v406
      %v1131 = vunpack.c.l.b16 %v407
      %v1132 = vunpack.c.h.b16 %v407
      %v1133 = vunpack.c.l.b16 %v408
      %v1134 = vunpack.c.h.b16 %v408
      %v1135 = vunpack.c.l.b16 %v409
      %v1136 = vunpack.c.h.b16 %v409
      %v1137 = vunpack.c.l.b16 %v410
      %v1138 = vunpack.c.h.b16 %v410
      %v1139 = vunpack.c.l.b16 %v411
      %v1140 = vunpack.c.h.b16 %v411
      %v1141 = vunpack.c.l.b16 %v412
      %v1142 = vunpack.c.h.b16 %v412
      %v1143 = vunpack.c.l.b16 %v413
      %v1144 = vunpack.c.h.b16 %v413
      %v1145 = vunpack.c.l.b16 %v414
      %v1146 = vunpack.c.h.b16 %v414
      %v1147 = vunpack.c.l.b16 %v415
      %v1148 = vunpack.c.h.b16 %v415
      %v1149 = vunpack.c.l.b16 %v416
      %v1150 = vunpack.c.h.b16 %v416
      %v1151 = vunpack.c.l.b16 %v417
      %v1152 = vunpack.c.h.b16 %v417
      %v1153 = vunpack.c.l.b16 %v418
      %v1154 = vunpack.c.h.b16 %v418
      %v1155 = vunpack.c.l.b16 %v419
      %v1156 = vunpack.c.h.b16 %v419
      %v1157 = vunpack.c.l.b16 %v420
      %v1158 = vunpack.c.h.b16 %v420
      %v1159 = vunpack.c.l.b16 %v421
      %v1160 = vunpack.c.h.b16 %v421
      %v1161 = vunpack.c.l.b16 %v422
      %v1162 = vunpack.c.h.b16 %v422
      %v1163 = vunpack.c.l.b16 %v423
      %v1164 = vunpack.c.h.b16 %v423
      %v1165 = vunpack.c.l.b16 %v424
      %v1166 = vunpack.c.h.b16 %v424
      %v1167 = vunpack.c.l.b16 %v425
      %v1168 = vunpack.c.h.b16 %v425
      %v1169 = vunpack.c.l.b16 %v426
      %v1170 = vunpack.c.h.b16 %v426
      %v1171 = vunpack.c.l.b16 %v427
      %v1172 = vunpack.c.h.b16 %v427
      %v1173 = vunpack.c.l.b16 %v428
      %v1174 = vunpack.c.h.b16 %v428
      %v1175 = vunpack.c.l.b16 %v429
      %v1176 = vunpack.c.h.b16 %v429
      %v1177 = vunpack.c.l.b16 %v430
      %v1178 = vunpack.c.h.b16 %v430
      %v1179 = vunpack.c.l.b16 %v431
      %v1180 = vunpack.c.h.b16 %v431
      %v1181 = vunpack.c.l.b16 %v432
      %v1182 = vunpack.c.h.b16 %v432
      %v1183 = vunpack.c.l.b16 %v433
      %v1184 = vunpack.c.h.b16 %v433
      %v1185 = vunpack.c.l.b16 %v434
      %v1186 = vunpack.c.h.b16 %v434
      %v1187 = vunpack.c.l.b16 %v435
      %v1188 = vunpack.c.h.b16 %v435
      %v1189 = vunpack.c.l.b16 %v436
      %v1190 = vunpack.c.h.b16 %v436
      %v1191 = vunpack.c.l.b16 %v437
      %v1192 = vunpack.c.h.b16 %v437
      %v1193 = vunpack.c.l.b16 %v438
      %v1194 = vunpack.c.h.b16 %v438
      %v1195 = vunpack.c.l.b16 %v439
      %v1196 = vunpack.c.h.b16 %v439
      %v1197 = vunpack.c.l.b16 %v440
      %v1198 = vunpack.c.h.b16 %v440
      %v1199 = vunpack.c.l.b16 %v441
      %v1200 = vunpack.c.h.b16 %v441
      %v1201 = vunpack.c.l.b16 %v442
      %v1202 = vunpack.c.h.b16 %v442
      %v1203 = vunpack.c.l.b16 %v443
      %v1204 = vunpack.c.h.b16 %v443
      %v1205 = vunpack.c.l.b16 %v444
      %v1206 = vunpack.c.h.b16 %v444
      %v1207 = vunpack.c.l.b16 %v445
      %v1208 = vunpack.c.h.b16 %v445
      %v1209 = vunpack.c.l.b16 %v446
      %v1210 = vunpack.c.h.b16 %v446
      %v1211 = vunpack.c.l.b16 %v447
      %v1212 = vunpack.c.h.b16 %v447
      %v1213 = vunpack.c.l.b16 %v448
      %v1214 = vunpack.c.h.b16 %v448
      %v1215 = vunpack.c.l.b16 %v449
      %v1216 = vunpack.c.h.b16 %v449
      %v1217 = vunpack.c.l.b16 %v450
      %v1218 = vunpack.c.h.b16 %v450
      %v1219 = vunpack.c.l.b16 %v451
      %v1220 = vunpack.c.h.b16 %v451
      %v1221 = vunpack.c.l.b16 %v452
      %v1222 = vunpack.c.h.b16 %v452
      %v1223 = vunpack.c.l.b16 %v453
      %v1224 = vunpack.c.h.b16 %v453
      %v1225 = vunpack.c.l.b16 %v454
      %v1226 = vunpack.c.h.b16 %v454
      %v1227 = vunpack.c.l.b16 %v455
      %v1228 = vunpack.c.h.b16 %v455
      %v1229 = vunpack.c.l.b16 %v456
      %v1230 = vunpack.c.h.b16 %v456
      %v1231 = vunpack.c.l.b16 %v457
      %v1232 = vunpack.c.h.b16 %v457
      %v1233 = vunpack.c.l.b16 %v458
      %v1234 = vunpack.c.h.b16 %v458
      %v1235 = vunpack.c.l.b16 %v459
      %v1236 = vunpack.c.h.b16 %v459
      %v1237 = vunpack.c.l.b16 %v460
      %v1238 = vunpack.c.h.b16 %v460
      %v1239 = vunpack.c.l.b16 %v461
      %v1240 = vunpack.c.h.b16 %v461
      %v1241 = vunpack.c.l.b16 %v462
      %v1242 = vunpack.c.h.b16 %v462
      %v1243 = vunpack.c.l.b16 %v463
      %v1244 = vunpack.c.h.b16 %v463
      %v1245 = vunpack.c.l.b16 %v464
      %v1246 = vunpack.c.h.b16 %v464
      %v1247 = vunpack.c.l.b16 %v465
      %v1248 = vunpack.c.h.b16 %v465
      %v1249 = vunpack.c.l.b16 %v466
      %v1250 = vunpack.c.h.b16 %v466
      %v1251 = vunpack.c.l.b16 %v467
      %v1252 = vunpack.c.h.b16 %v467
      %v1253 = vunpack.c.l.b16 %v468
      %v1254 = vunpack.c.h.b16 %v468
      %v1255 = vunpack.c.l.b16 %v469
      %v1256 = vunpack.c.h.b16 %v469
      %v1257 = vunpack.c.l.b16 %v470
      %v1258 = vunpack.c.h.b16 %v470
      %v1259 = vunpack.c.l.b16 %v471
      %v1260 = vunpack.c.h.b16 %v471
      %v1261 = vunpack.c.l.b16 %v472
      %v1262 = vunpack.c.h.b16 %v472
      %v1263 = vunpack.c.l.b16 %v473
      %v1264 = vunpack.c.h.b16 %v473
      %v1265 = vunpack.c.l.b16 %v474
      %v1266 = vunpack.c.h.b16 %v474
      %v1267 = vunpack.c.l.b16 %v475
      %v1268 = vunpack.c.h.b16 %v475
      %v1269 = vunpack.c.l.b16 %v476
      %v1270 = vunpack.c.h.b16 %v476
      %v1271 = vunpack.c.l.b16 %v477
      %v1272 = vunpack.c.h.b16 %v477
      %v1273 = vunpack.c.l.b16 %v478
      %v1274 = vunpack.c.h.b16 %v478
      %v1275 = vunpack.c.l.b16 %v479
      %v1276 = vunpack.c.h.b16 %v479
      %v1277 = vunpack.c.l.b16 %v480
      %v1278 = vunpack.c.h.b16 %v480
      %v1279 = vunpack.c.l.b16 %v481
      %v1280 = vunpack.c.h.b16 %v481
      %v1281 = vunpack.c.l.b16 %v482
      %v1282 = vunpack.c.h.b16 %v482
      %v1283 = vunpack.c.l.b16 %v483
      %v1284 = vunpack.c.h.b16 %v483
      %v1285 = vunpack.c.l.b16 %v484
      %v1286 = vunpack.c.h.b16 %v484
      %v1287 = vunpack.c.l.b16 %v485
      %v1288 = vunpack.c.h.b16 %v485
      %v1289 = vunpack.c.l.b16 %v486
      %v1290 = vunpack.c.h.b16 %v486
      %v1291 = vunpack.c.l.b16 %v487
      %v1292 = vunpack.c.h.b16 %v487
      %v1293 = vunpack.c.l.b16 %v488
      %v1294 = vunpack.c.h.b16 %v488
      %v1295 = vunpack.c.l.b16 %v489
      %v1296 = vunpack.c.h.b16 %v489
      %v1297 = vunpack.c.l.b16 %v490
      %v1298 = vunpack.c.h.b16 %v490
      %v1299 = vunpack.c.l.b16 %v491
      %v1300 = vunpack.c.h.b16 %v491
      %v1301 = vunpack.c.l.b16 %v492
      %v1302 = vunpack.c.h.b16 %v492
      %v1303 = vunpack.c.l.b16 %v493
      %v1304 = vunpack.c.h.b16 %v493
      %v1305 = vunpack.c.l.b16 %v494
      %v1306 = vunpack.c.h.b16 %v494
      %v1307 = vunpack.c.l.b16 %v495
      %v1308 = vunpack.c.h.b16 %v495
      %v1309 = vunpack.c.l.b16 %v496
      %v1310 = vunpack.c.h.b16 %v496
      %v1311 = vunpack.c.l.b16 %v497
      %v1312 = vunpack.c.h.b16 %v497
      %v1313 = vunpack.c.l.b16 %v498
      %v1314 = vunpack.c.h.b16 %v498
      %v1315 = vunpack.c.l.b16 %v499
      %v1316 = vunpack.c.h.b16 %v499
      %v1317 = vunpack.c.l.b16 %v500
      %v1318 = vunpack.c.h.b16 %v500
      %v1319 = vunpack.c.l.b16 %v501
      %v1320 = vunpack.c.h.b16 %v501
      %v1321 = vunpack.c.l.b16 %v502
      %v1322 = vunpack.c.h.b16 %v502
      %v1323 = vunpack.c.l.b16 %v503
      %v1324 = vunpack.c.h.b16 %v503
      %v1325 = vunpack.c.l.b16 %v504
      %v1326 = vunpack.c.h.b16 %v504
      %v1327 = vunpack.c.l.b16 %v505
      %v1328 = vunpack.c.h.b16 %v505
      %v1329 = vunpack.c.l.b16 %v506
      %v1330 = vunpack.c.h.b16 %v506
      %v1331 = vunpack.c.l.b16 %v507
      %v1332 = vunpack.c.h.b16 %v507
      %v1333 = vunpack.c.l.b16 %v508
      %v1334 = vunpack.c.h.b16 %v508
      %v1335 = vunpack.c.l.b16 %v509
      %v1336 = vunpack.c.h.b16 %v509
      %v1337 = vunpack.c.l.b16 %v510
      %v1338 = vunpack.c.h.b16 %v510
      %v1339 = vunpack.c.l.b16 %v511
      %v1340 = vunpack.c.h.b16 %v511
      %v1341 = vunpack.c.l.b16 %v512
      %v1342 = vunpack.c.h.b16 %v512
      %v1343 = vunpack.c.l.b16 %v513
      %v1344 = vunpack.c.h.b16 %v513
      %v1345 = vunpack.c.l.b16 %v514
      %v1346 = vunpack.c.h.b16 %v514
      %v1347 = vunpack.c.l.b16 %v515
      %v1348 = vunpack.c.h.b16 %v515
      %v1349 = vunpack.c.l.b16 %v516
      %v1350 = vunpack.c.h.b16 %v516
      %v1351 = vunpack.c.l.b16 %v517
      %v1352 = vunpack.c.h.b16 %v517
      %v1353 = vunpack.c.l.b16 %v518
      %v1354 = vunpack.c.h.b16 %v518
      %v1355 = vunpack.c.l.b16 %v519
      %v1356 = vunpack.c.h.b16 %v519
      %v1357 = vunpack.c.l.b16 %v520
      %v1358 = vunpack.c.h.b16 %v520
      %v1359 = vunpack.c.l.b16 %v521
      %v1360 = vunpack.c.h.b16 %v521
      %v1361 = vunpack.c.l.b16 %v522
      %v1362 = vunpack.c.h.b16 %v522
      %v1363 = vunpack.c.l.b16 %v523
      %v1364 = vunpack.c.h.b16 %v523
      %v1365 = vunpack.c.l.b16 %v524
      %v1366 = vunpack.c.h.b16 %v524
      %v1367 = vunpack.c.l.b16 %v525
      %v1368 = vunpack.c.h.b16 %v525
      %v1369 = vunpack.c.l.b16 %v526
      %v1370 = vunpack.c.h.b16 %v526
      %v1371 = vunpack.c.l.b16 %v527
      %v1372 = vunpack.c.h.b16 %v527
      %v1373 = vunpack.c.l.b16 %v528
      %v1374 = vunpack.c.h.b16 %v528
      %v1375 = vunpack.c.l.b16 %v529
      %v1376 = vunpack.c.h.b16 %v529
      %v1377 = vunpack.c.l.b16 %v530
      %v1378 = vunpack.c.h.b16 %v530
      %v1379 = vpack.c.b16 %v869, %v867
      %v1380 = vpack.c.b16 %v870, %v868
      %v1381 = vpack.c.b16 %v873, %v871
      %v1382 = vpack.c.b16 %v874, %v872
      %v1383 = vpack.c.b16 %v877, %v875
      %v1384 = vpack.c.b16 %v878, %v876
      %v1385 = vpack.c.b16 %v881, %v879
      %v1386 = vpack.c.b16 %v882, %v880
      %v1387 = vpack.c.b16 %v885, %v883
      %v1388 = vpack.c.b16 %v886, %v884
      %v1389 = vpack.c.b16 %v889, %v887
      %v1390 = vpack.c.b16 %v890, %v888
      %v1391 = vpack.c.b16 %v893, %v891
      %v1392 = vpack.c.b16 %v894, %v892
      %v1393 = vpack.c.b16 %v897, %v895
      %v1394 = vpack.c.b16 %v898, %v896
      %v1395 = vpack.c.b16 %v901, %v899
      %v1396 = vpack.c.b16 %v902, %v900
      %v1397 = vpack.c.b16 %v905, %v903
      %v1398 = vpack.c.b16 %v906, %v904
      %v1399 = vpack.c.b16 %v909, %v907
      %v1400 = vpack.c.b16 %v910, %v908
      %v1401 = vpack.c.b16 %v913, %v911
      %v1402 = vpack.c.b16 %v914, %v912
      %v1403 = vpack.c.b16 %v917, %v915
      %v1404 = vpack.c.b16 %v918, %v916
      %v1405 = vpack.c.b16 %v921, %v919
      %v1406 = vpack.c.b16 %v922, %v920
      %v1407 = vpack.c.b16 %v925, %v923
      %v1408 = vpack.c.b16 %v926, %v924
      %v1409 = vpack.c.b16 %v929, %v927
      %v1410 = vpack.c.b16 %v930, %v928
      %v1411 = vpack.c.b16 %v933, %v931
      %v1412 = vpack.c.b16 %v934, %v932
      %v1413 = vpack.c.b16 %v937, %v935
      %v1414 = vpack.c.b16 %v938, %v936
      %v1415 = vpack.c.b16 %v941, %v939
      %v1416 = vpack.c.b16 %v942, %v940
      %v1417 = vpack.c.b16 %v945, %v943
      %v1418 = vpack.c.b16 %v946, %v944
      %v1419 = vpack.c.b16 %v949, %v947
      %v1420 = vpack.c.b16 %v950, %v948
      %v1421 = vpack.c.b16 %v953, %v951
      %v1422 = vpack.c.b16 %v954, %v952
      %v1423 = vpack.c.b16 %v957, %v955
      %v1424 = vpack.c.b16 %v958, %v956
      %v1425 = vpack.c.b16 %v961, %v959
      %v1426 = vpack.c.b16 %v962, %v960
      %v1427 = vpack.c.b16 %v965, %v963
      %v1428 = vpack.c.b16 %v966, %v964
      %v1429 = vpack.c.b16 %v969, %v967
      %v1430 = vpack.c.b16 %v970, %v968
      %v1431 = vpack.c.b16 %v973, %v971
      %v1432 = vpack.c.b16 %v974, %v972
      %v1433 = vpack.c.b16 %v977, %v975
      %v1434 = vpack.c.b16 %v978, %v976
      %v1435 = vpack.c.b16 %v981, %v979
      %v1436 = vpack.c.b16 %v982, %v980
      %v1437 = vpack.c.b16 %v985, %v983
      %v1438 = vpack.c.b16 %v986, %v984
      %v1439 = vpack.c.b16 %v989, %v987
      %v1440 = vpack.c.b16 %v990, %v988
      %v1441 = vpack.c.b16 %v993, %v991
      %v1442 = vpack.c.b16 %v994, %v992
      %v1443 = vpack.c.b16 %v997, %v995
      %v1444 = vpack.c.b16 %v998, %v996
      %v1445 = vpack.c.b16 %v1001, %v999
      %v1446 = vpack.c.b16 %v1002, %v1000
      %v1447 = vpack.c.b16 %v1005, %v1003
      %v1448 = vpack.c.b16 %v1006, %v1004
      %v1449 = vpack.c.b16 %v1009, %v1007
      %v1450 = vpack.c.b16 %v1010, %v1008
      %v1451 = vpack.c.b16 %v1013, %v1011
      %v1452 = vpack.c.b16 %v1014, %v1012
      %v1453 = vpack.c.b16 %v1017, %v1015
      %v1454 = vpack.c.b16 %v1018, %v1016
      %v1455 = vpack.c.b16 %v1021, %v1019
      %v1456 = vpack.c.b16 %v1022, %v1020
      %v1457 = vpack.c.b16 %v1025, %v1023
      %v1458 = vpack.c.b16 %v1026, %v1024
      %v1459 = vpack.c.b16 %v1029, %v1027
      %v1460 = vpack.c.b16 %v1030, %v1028
      %v1461 = vpack.c.b16 %v1033, %v1031
      %v1462 = vpack.c.b16 %v1034, %v1032
      %v1463 = vpack.c.b16 %v1037, %v1035
      %v1464 = vpack.c.b16 %v1038, %v1036
      %v1465 = vpack.c.b16 %v1041, %v1039
      %v1466 = vpack.c.b16 %v1042, %v1040
      %v1467 = vpack.c.b16 %v1045, %v1043
      %v1468 = vpack.c.b16 %v1046, %v1044
      %v1469 = vpack.c.b16 %v1049, %v1047
      %v1470 = vpack.c.b16 %v1050, %v1048
      %v1471 = vpack.c.b16 %v1053, %v1051
      %v1472 = vpack.c.b16 %v1054, %v1052
      %v1473 = vpack.c.b16 %v1057, %v1055
      %v1474 = vpack.c.b16 %v1058, %v1056
      %v1475 = vpack.c.b16 %v1061, %v1059
      %v1476 = vpack.c.b16 %v1062, %v1060
      %v1477 = vpack.c.b16 %v1065, %v1063
      %v1478 = vpack.c.b16 %v1066, %v1064
      %v1479 = vpack.c.b16 %v1069, %v1067
      %v1480 = vpack.c.b16 %v1070, %v1068
      %v1481 = vpack.c.b16 %v1073, %v1071
      %v1482 = vpack.c.b16 %v1074, %v1072
      %v1483 = vpack.c.b16 %v1077, %v1075
      %v1484 = vpack.c.b16 %v1078, %v1076
      %v1485 = vpack.c.b16 %v1081, %v1079
      %v1486 = vpack.c.b16 %v1082, %v1080
      %v1487 = vpack.c.b16 %v1085, %v1083
      %v1488 = vpack.c.b16 %v1086, %v1084
      %v1489 = vpack.c.b16 %v1089, %v1087
      %v1490 = vpack.c.b16 %v1090, %v1088
      %v1491 = vpack.c.b16 %v1093, %v1091
      %v1492 = vpack.c.b16 %v1094, %v1092
      %v1493 = vpack.c.b16 %v1097, %v1095
      %v1494 = vpack.c.b16 %v1098, %v1096
      %v1495 = vpack.c.b16 %v1101, %v1099
      %v1496 = vpack.c.b16 %v1102, %v1100
      %v1497 = vpack.c.b16 %v1105, %v1103
      %v1498 = vpack.c.b16 %v1106, %v1104
      %v1499 = vpack.c.b16 %v1109, %v1107
      %v1500 = vpack.c.b16 %v1110, %v1108
      %v1501 = vpack.c.b16 %v1113, %v1111
      %v1502 = vpack.c.b16 %v1114, %v1112
      %v1503 = vpack.c.b16 %v1117, %v1115
      %v1504 = vpack.c.b16 %v1118, %v1116
      %v1505 = vpack.c.b16 %v1121, %v1119
      %v1506 = vpack.c.b16 %v1122, %v1120
      %v1507 = vpack.c.b16 %v1125, %v1123
      %v1508 = vpack.c.b16 %v1126, %v1124
      %v1509 = vpack.c.b16 %v1129, %v1127
      %v1510 = vpack.c.b16 %v1130, %v1128
      %v1511 = vpack.c.b16 %v1133, %v1131
      %v1512 = vpack.c.b16 %v1134, %v1132
      %v1513 = vpack.c.b16 %v1137, %v1135
      %v1514 = vpack.c.b16 %v1138, %v1136
      %v1515 = vpack.c.b16 %v1141, %v1139
      %v1516 = vpack.c.b16 %v1142, %v1140
      %v1517 = vpack.c.b16 %v1145, %v1143
      %v1518 = vpack.c.b16 %v1146, %v1144
      %v1519 = vpack.c.b16 %v1149, %v1147
      %v1520 = vpack.c.b16 %v1150, %v1148
      %v1521 = vpack.c.b16 %v1153, %v1151
      %v1522 = vpack.c.b16 %v1154, %v1152
      %v1523 = vpack.c.b16 %v1157, %v1155
      %v1524 = vpack.c.b16 %v1158, %v1156
      %v1525 = vpack.c.b16 %v1161, %v1159
      %v1526 = vpack.c.b16 %v1162, %v1160
      %v1527 = vpack.c.b16 %v1165, %v1163
      %v1528 = vpack.c.b16 %v1166, %v1164
      %v1529 = vpack.c.b16 %v1169, %v1167
      %v1530 = vpack.c.b16 %v1170, %v1168
      %v1531 = vpack.c.b16 %v1173, %v1171
      %v1532 = vpack.c.b16 %v1174, %v1172
      %v1533 = vpack.c.b16 %v1177, %v1175
      %v1534 = vpack.c.b16 %v1178, %v1176
      %v1535 = vpack.c.b16 %v1181, %v1179
      %v1536 = vpack.c.b16 %v1182, %v1180
      %v1537 = vpack.c.b16 %v1185, %v1183
      %v1538 = vpack.c.b16 %v1186, %v1184
      %v1539 = vpack.c.b16 %v1189, %v1187
      %v1540 = vpack.c.b16 %v1190, %v1188
      %v1541 = vpack.c.b16 %v1193, %v1191
      %v1542 = vpack.c.b16 %v1194, %v1192
      %v1543 = vpack.c.b16 %v1197, %v1195
      %v1544 = vpack.c.b16 %v1198, %v1196
      %v1545 = vpack.c.b16 %v1201, %v1199
      %v1546 = vpack.c.b16 %v1202, %v1200
      %v1547 = vpack.c.b16 %v1205, %v1203
      %v1548 = vpack.c.b16 %v1206, %v1204
      %v1549 = vpack.c.b16 %v1209, %v1207
      %v1550 = vpack.c.b16 %v1210, %v1208
      %v1551 = vpack.c.b16 %v1213, %v1211
      %v1552 = vpack.c.b16 %v1214, %v1212
      %v1553 = vpack.c.b16 %v1217, %v1215
      %v1554 = vpack.c.b16 %v1218, %v1216
      %v1555 = vpack.c.b16 %v1221, %v1219
      %v1556 = vpack.c.b16 %v1222, %v1220
      %v1557 = vpack.c.b16 %v1225, %v1223
      %v1558 = vpack.c.b16 %v1226, %v1224
      %v1559 = vpack.c.b16 %v1229, %v1227
      %v1560 = vpack.c.b16 %v1230, %v1228
      %v1561 = vpack.c.b16 %v1233, %v1231
      %v1562 = vpack.c.b16 %v1234, %v1232
      %v1563 = vpack.c.b16 %v1237, %v1235
      %v1564 = vpack.c.b16 %v1238, %v1236
      %v1565 = vpack.c.b16 %v1241, %v1239
      %v1566 = vpack.c.b16 %v1242, %v1240
      %v1567 = vpack.c.b16 %v1245, %v1243
      %v1568 = vpack.c.b16 %v1246, %v1244
      %v1569 = vpack.c.b16 %v1249, %v1247
      %v1570 = vpack.c.b16 %v1250, %v1248
      %v1571 = vpack.c.b16 %v1253, %v1251
      %v1572 = vpack.c.b16 %v1254, %v1252
      %v1573 = vpack.c.b16 %v1257, %v1255
      %v1574 = vpack.c.b16 %v1258, %v1256
      %v1575 = vpack.c.b16 %v1261, %v1259
      %v1576 = vpack.c.b16 %v1262, %v1260
      %v1577 = vpack.c.b16 %v1265, %v1263
      %v1578 = vpack.c.b16 %v1266, %v1264
      %v1579 = vpack.c.b16 %v1269, %v1267
      %v1580 = vpack.c.b16 %v1270, %v1268
      %v1581 = vpack.c.b16 %v1273, %v1271
      %v1582 = vpack.c.b16 %v1274, %v1272
      %v1583 = vpack.c.b16 %v1277, %v1275
      %v1584 = vpack.c.b16 %v1278, %v1276
      %v1585 = vpack.c.b16 %v1281, %v1279
      %v1586 = vpack.c.b16 %v1282, %v1280
      %v1587 = vpack.c.b16 %v1285, %v1283
      %v1588 = vpack.c.b16 %v1286, %v1284
      %v1589 = vpack.c.b16 %v1289, %v1287
      %v1590 = vpack.c.b16 %v1290, %v1288
      %v1591 = vpack.c.b16 %v1293, %v1291
      %v1592 = vpack.c.b16 %v1294, %v1292
      %v1593 = vpack.c.b16 %v1297, %v1295
      %v1594 = vpack.c.b16 %v1298, %v1296
      %v1595 = vpack.c.b16 %v1301, %v1299
      %v1596 = vpack.c.b16 %v1302, %v1300
      %v1597 = vpack.c.b16 %v1305, %v1303
      %v1598 = vpack.c.b16 %v1306, %v1304
      %v1599 = vpack.c.b16 %v1309, %v1307
      %v1600 = vpack.c.b16 %v1310, %v1308
      %v1601 = vpack.c.b16 %v1313, %v1311
      %v1602 = vpack.c.b16 %v1314, %v1312
      %v1603 = vpack.c.b16 %v1317, %v1315
      %v1604 = vpack.c.b16 %v1318, %v1316
      %v1605 = vpack.c.b16 %v1321, %v1319
      %v1606 = vpack.c.b16 %v1322, %v1320
      %v1607 = vpack.c.b16 %v1325, %v1323
      %v1608 = vpack.c.b16 %v1326, %v1324
      %v1609 = vpack.c.b16 %v1329, %v1327
      %v1610 = vpack.c.b16 %v1330, %v1328
      %v1611 = vpack.c.b16 %v1333, %v1331
      %v1612 = vpack.c.b16 %v1334, %v1332
      %v1613 = vpack.c.b16 %v1337, %v1335
      %v1614 = vpack.c.b16 %v1338, %v1336
      %v1615 = vpack.c.b16 %v1341, %v1339
      %v1616 = vpack.c.b16 %v1342, %v1340
      %v1617 = vpack.c.b16 %v1345, %v1343
      %v1618 = vpack.c.b16 %v1346, %v1344
      %v1619 = vpack.c.b16 %v1349, %v1347
      %v1620 = vpack.c.b16 %v1350, %v1348
      %v1621 = vpack.c.b16 %v1353, %v1351
      %v1622 = vpack.c.b16 %v1354, %v1352
      %v1623 = vpack.c.b16 %v1357, %v1355
      %v1624 = vpack.c.b16 %v1358, %v1356
      %v1625 = vpack.c.b16 %v1361, %v1359
      %v1626 = vpack.c.b16 %v1362, %v1360
      %v1627 = vpack.c.b16 %v1365, %v1363
      %v1628 = vpack.c.b16 %v1366, %v1364
      %v1629 = vpack.c.b16 %v1369, %v1367
      %v1630 = vpack.c.b16 %v1370, %v1368
      %v1631 = vpack.c.b16 %v1373, %v1371
      %v1632 = vpack.c.b16 %v1374, %v1372
      %v1633 = vpack.c.b16 %v1377, %v1375
      %v1634 = vpack.c.b16 %v1378, %v1376
      %1891 = vmatprep.subr.bf16.mxu0 %v1394
      %1892 = vmatpush1.bf16.msra.mxu0 %v1393
      %1893 = vmatprep.subr.bf16.mxu0 %v1392
      %1894 = vmatpush1.bf16.msra.mxu0 %v1391
      %1895 = vmatprep.subr.bf16.mxu0 %v1390
      %1896 = vmatpush1.bf16.msra.mxu0 %v1389
      %1897 = vmatprep.subr.bf16.mxu0 %v1388
      %1898 = vmatpush1.bf16.msra.mxu0 %v1387
      %1899 = vmatprep.subr.bf16.mxu0 %v1386
      %1900 = vmatpush1.bf16.msra.mxu0 %v1385
      %1901 = vmatprep.subr.bf16.mxu0 %v1384
      %1902 = vmatpush1.bf16.msra.mxu0 %v1383
      %1903 = vmatprep.subr.bf16.mxu0 %v1382
      %1904 = vmatpush1.bf16.msra.mxu0 %v1381
      %1905 = vmatprep.subr.bf16.mxu0 %v1380
      %1906 = vmatpush1.bf16.msra.mxu0 %v1379
      %1907 = vmatprep.subr.bf16.mxu0 %v1410
      %1908 = vmatpush2.bf16.msra.mxu0 %v1409
      %1909 = vmatprep.subr.bf16.mxu0 %v1408
      %1910 = vmatpush2.bf16.msra.mxu0 %v1407
      %1911 = vmatprep.subr.bf16.mxu0 %v1406
      %1912 = vmatpush2.bf16.msra.mxu0 %v1405
      %1913 = vmatprep.subr.bf16.mxu0 %v1404
      %1914 = vmatpush2.bf16.msra.mxu0 %v1403
      %1915 = vmatprep.subr.bf16.mxu0 %v1402
      %1916 = vmatpush2.bf16.msra.mxu0 %v1401
      %1917 = vmatprep.subr.bf16.mxu0 %v1400
      %1918 = vmatpush2.bf16.msra.mxu0 %v1399
      %1919 = vmatprep.subr.bf16.mxu0 %v1398
      %1920 = vmatpush2.bf16.msra.mxu0 %v1397
      %1921 = vmatprep.subr.bf16.mxu0 %v1396
      %1922 = vmatpush2.bf16.msra.mxu0 %v1395
      %1923 = vmatprep.mubr.bf16.mxu0 %v580
      %1924 = vmatmul.mubr.bf16.gmra.mxu0 %v579
      %v1925 = vpop.f32.mrf.mxu0
      %v1926 = vadd.f32 0.0, %v1925
      %v1927 = vpop.f32.mrf.mxu0
      %v1928 = vadd.f32 0.0, %v1927
      %v1929 = vpop.f32.mrf.mxu0
      %v1930 = vadd.f32 0.0, %v1929
      %v1931 = vpop.f32.mrf.mxu0
      %v1932 = vadd.f32 0.0, %v1931
      %1933 = vdwg.mxu0
      %1934 = vmatprep.subr.bf16.mxu0 %v1426
      %1935 = vmatpush1.bf16.msra.mxu0 %v1425
      %1936 = vmatprep.subr.bf16.mxu0 %v1424
      %1937 = vmatpush1.bf16.msra.mxu0 %v1423
      %1938 = vmatprep.subr.bf16.mxu0 %v1422
      %1939 = vmatpush1.bf16.msra.mxu0 %v1421
      %1940 = vmatprep.subr.bf16.mxu0 %v1420
      %1941 = vmatpush1.bf16.msra.mxu0 %v1419
      %1942 = vmatprep.subr.bf16.mxu0 %v1418
      %1943 = vmatpush1.bf16.msra.mxu0 %v1417
      %1944 = vmatprep.subr.bf16.mxu0 %v1416
      %1945 = vmatpush1.bf16.msra.mxu0 %v1415
      %1946 = vmatprep.subr.bf16.mxu0 %v1414
      %1947 = vmatpush1.bf16.msra.mxu0 %v1413
      %1948 = vmatprep.subr.bf16.mxu0 %v1412
      %1949 = vmatpush1.bf16.msra.mxu0 %v1411
      %1950 = vmatprep.subr.bf16.mxu0 %v1442
      %1951 = vmatpush2.bf16.msra.mxu0 %v1441
      %1952 = vmatprep.subr.bf16.mxu0 %v1440
      %1953 = vmatpush2.bf16.msra.mxu0 %v1439
      %1954 = vmatprep.subr.bf16.mxu0 %v1438
      %1955 = vmatpush2.bf16.msra.mxu0 %v1437
      %1956 = vmatprep.subr.bf16.mxu0 %v1436
      %1957 = vmatpush2.bf16.msra.mxu0 %v1435
      %1958 = vmatprep.subr.bf16.mxu0 %v1434
      %1959 = vmatpush2.bf16.msra.mxu0 %v1433
      %1960 = vmatprep.subr.bf16.mxu0 %v1432
      %1961 = vmatpush2.bf16.msra.mxu0 %v1431
      %1962 = vmatprep.subr.bf16.mxu0 %v1430
      %1963 = vmatpush2.bf16.msra.mxu0 %v1429
      %1964 = vmatprep.subr.bf16.mxu0 %v1428
      %1965 = vmatpush2.bf16.msra.mxu0 %v1427
      %1966 = vmatprep.mubr.bf16.mxu0 %v582
      %1967 = vmatmul.mubr.bf16.gmra.mxu0 %v581
      %v1968 = vpop.f32.mrf.mxu0
      %v1969 = vadd.f32 %v1926, %v1968
      %v1970 = vpop.f32.mrf.mxu0
      %v1971 = vadd.f32 %v1928, %v1970
      %v1972 = vpop.f32.mrf.mxu0
      %v1973 = vadd.f32 %v1930, %v1972
      %v1974 = vpop.f32.mrf.mxu0
      %v1975 = vadd.f32 %v1932, %v1974
      %1976 = vdwg.mxu0
      %1977 = vmatprep.subr.bf16.mxu0 %v1458
      %1978 = vmatpush1.bf16.msra.mxu0 %v1457
      %1979 = vmatprep.subr.bf16.mxu0 %v1456
      %1980 = vmatpush1.bf16.msra.mxu0 %v1455
      %1981 = vmatprep.subr.bf16.mxu0 %v1454
      %1982 = vmatpush1.bf16.msra.mxu0 %v1453
      %1983 = vmatprep.subr.bf16.mxu0 %v1452
      %1984 = vmatpush1.bf16.msra.mxu0 %v1451
      %1985 = vmatprep.subr.bf16.mxu0 %v1450
      %1986 = vmatpush1.bf16.msra.mxu0 %v1449
      %1987 = vmatprep.subr.bf16.mxu0 %v1448
      %1988 = vmatpush1.bf16.msra.mxu0 %v1447
      %1989 = vmatprep.subr.bf16.mxu0 %v1446
      %1990 = vmatpush1.bf16.msra.mxu0 %v1445
      %1991 = vmatprep.subr.bf16.mxu0 %v1444
      %1992 = vmatpush1.bf16.msra.mxu0 %v1443
      %1993 = vmatprep.subr.bf16.mxu0 %v1474
      %1994 = vmatpush2.bf16.msra.mxu0 %v1473
      %1995 = vmatprep.subr.bf16.mxu0 %v1472
      %1996 = vmatpush2.bf16.msra.mxu0 %v1471
      %1997 = vmatprep.subr.bf16.mxu0 %v1470
      %1998 = vmatpush2.bf16.msra.mxu0 %v1469
      %1999 = vmatprep.subr.bf16.mxu0 %v1468
      %2000 = vmatpush2.bf16.msra.mxu0 %v1467
      %2001 = vmatprep.subr.bf16.mxu0 %v1466
      %2002 = vmatpush2.bf16.msra.mxu0 %v1465
      %2003 = vmatprep.subr.bf16.mxu0 %v1464
      %2004 = vmatpush2.bf16.msra.mxu0 %v1463
      %2005 = vmatprep.subr.bf16.mxu0 %v1462
      %2006 = vmatpush2.bf16.msra.mxu0 %v1461
      %2007 = vmatprep.subr.bf16.mxu0 %v1460
      %2008 = vmatpush2.bf16.msra.mxu0 %v1459
      %2009 = vmatprep.mubr.bf16.mxu0 %v584
      %2010 = vmatmul.mubr.bf16.gmra.mxu0 %v583
      %v2011 = vpop.f32.mrf.mxu0
      %v2012 = vadd.f32 %v1969, %v2011
      %v2013 = vpop.f32.mrf.mxu0
      %v2014 = vadd.f32 %v1971, %v2013
      %v2015 = vpop.f32.mrf.mxu0
      %v2016 = vadd.f32 %v1973, %v2015
      %v2017 = vpop.f32.mrf.mxu0
      %v2018 = vadd.f32 %v1975, %v2017
      %2019 = vdwg.mxu0
      %2020 = vmatprep.subr.bf16.mxu0 %v1490
      %2021 = vmatpush1.bf16.msra.mxu0 %v1489
      %2022 = vmatprep.subr.bf16.mxu0 %v1488
      %2023 = vmatpush1.bf16.msra.mxu0 %v1487
      %2024 = vmatprep.subr.bf16.mxu0 %v1486
      %2025 = vmatpush1.bf16.msra.mxu0 %v1485
      %2026 = vmatprep.subr.bf16.mxu0 %v1484
      %2027 = vmatpush1.bf16.msra.mxu0 %v1483
      %2028 = vmatprep.subr.bf16.mxu0 %v1482
      %2029 = vmatpush1.bf16.msra.mxu0 %v1481
      %2030 = vmatprep.subr.bf16.mxu0 %v1480
      %2031 = vmatpush1.bf16.msra.mxu0 %v1479
      %2032 = vmatprep.subr.bf16.mxu0 %v1478
      %2033 = vmatpush1.bf16.msra.mxu0 %v1477
      %2034 = vmatprep.subr.bf16.mxu0 %v1476
      %2035 = vmatpush1.bf16.msra.mxu0 %v1475
      %2036 = vmatprep.subr.bf16.mxu0 %v1506
      %2037 = vmatpush2.bf16.msra.mxu0 %v1505
      %2038 = vmatprep.subr.bf16.mxu0 %v1504
      %2039 = vmatpush2.bf16.msra.mxu0 %v1503
      %2040 = vmatprep.subr.bf16.mxu0 %v1502
      %2041 = vmatpush2.bf16.msra.mxu0 %v1501
      %2042 = vmatprep.subr.bf16.mxu0 %v1500
      %2043 = vmatpush2.bf16.msra.mxu0 %v1499
      %2044 = vmatprep.subr.bf16.mxu0 %v1498
      %2045 = vmatpush2.bf16.msra.mxu0 %v1497
      %2046 = vmatprep.subr.bf16.mxu0 %v1496
      %2047 = vmatpush2.bf16.msra.mxu0 %v1495
      %2048 = vmatprep.subr.bf16.mxu0 %v1494
      %2049 = vmatpush2.bf16.msra.mxu0 %v1493
      %2050 = vmatprep.subr.bf16.mxu0 %v1492
      %2051 = vmatpush2.bf16.msra.mxu0 %v1491
      %2052 = vmatprep.mubr.bf16.mxu0 %v586
      %2053 = vmatmul.mubr.bf16.gmra.mxu0 %v585
      %v2054 = vpop.f32.mrf.mxu0
      %v2055 = vadd.f32 %v2012, %v2054
      %v2056 = vpop.f32.mrf.mxu0
      %v2057 = vadd.f32 %v2014, %v2056
      %v2058 = vpop.f32.mrf.mxu0
      %v2059 = vadd.f32 %v2016, %v2058
      %v2060 = vpop.f32.mrf.mxu0
      %v2061 = vadd.f32 %v2018, %v2060
      %2062 = vdwg.mxu0
      %2063 = vmatprep.subr.bf16.mxu0 %v1522
      %2064 = vmatpush1.bf16.msra.mxu0 %v1521
      %2065 = vmatprep.subr.bf16.mxu0 %v1520
      %2066 = vmatpush1.bf16.msra.mxu0 %v1519
      %2067 = vmatprep.subr.bf16.mxu0 %v1518
      %2068 = vmatpush1.bf16.msra.mxu0 %v1517
      %2069 = vmatprep.subr.bf16.mxu0 %v1516
      %2070 = vmatpush1.bf16.msra.mxu0 %v1515
      %2071 = vmatprep.subr.bf16.mxu0 %v1514
      %2072 = vmatpush1.bf16.msra.mxu0 %v1513
      %2073 = vmatprep.subr.bf16.mxu0 %v1512
      %2074 = vmatpush1.bf16.msra.mxu0 %v1511
      %2075 = vmatprep.subr.bf16.mxu0 %v1510
      %2076 = vmatpush1.bf16.msra.mxu0 %v1509
      %2077 = vmatprep.subr.bf16.mxu0 %v1508
      %2078 = vmatpush1.bf16.msra.mxu0 %v1507
      %2079 = vmatprep.subr.bf16.mxu0 %v1538
      %2080 = vmatpush2.bf16.msra.mxu0 %v1537
      %2081 = vmatprep.subr.bf16.mxu0 %v1536
      %2082 = vmatpush2.bf16.msra.mxu0 %v1535
      %2083 = vmatprep.subr.bf16.mxu0 %v1534
      %2084 = vmatpush2.bf16.msra.mxu0 %v1533
      %2085 = vmatprep.subr.bf16.mxu0 %v1532
      %2086 = vmatpush2.bf16.msra.mxu0 %v1531
      %2087 = vmatprep.subr.bf16.mxu0 %v1530
      %2088 = vmatpush2.bf16.msra.mxu0 %v1529
      %2089 = vmatprep.subr.bf16.mxu0 %v1528
      %2090 = vmatpush2.bf16.msra.mxu0 %v1527
      %2091 = vmatprep.subr.bf16.mxu0 %v1526
      %2092 = vmatpush2.bf16.msra.mxu0 %v1525
      %2093 = vmatprep.subr.bf16.mxu0 %v1524
      %2094 = vmatpush2.bf16.msra.mxu0 %v1523
      %2095 = vmatprep.mubr.bf16.mxu0 %v588
      %2096 = vmatmul.mubr.bf16.gmra.mxu0 %v587
      %v2097 = vpop.f32.mrf.mxu0
      %v2098 = vadd.f32 %v2055, %v2097
      %v2099 = vpop.f32.mrf.mxu0
      %v2100 = vadd.f32 %v2057, %v2099
      %v2101 = vpop.f32.mrf.mxu0
      %v2102 = vadd.f32 %v2059, %v2101
      %v2103 = vpop.f32.mrf.mxu0
      %v2104 = vadd.f32 %v2061, %v2103
      %2105 = vdwg.mxu0
      %2106 = vmatprep.subr.bf16.mxu0 %v1554
      %2107 = vmatpush1.bf16.msra.mxu0 %v1553
      %2108 = vmatprep.subr.bf16.mxu0 %v1552
      %2109 = vmatpush1.bf16.msra.mxu0 %v1551
      %2110 = vmatprep.subr.bf16.mxu0 %v1550
      %2111 = vmatpush1.bf16.msra.mxu0 %v1549
      %2112 = vmatprep.subr.bf16.mxu0 %v1548
      %2113 = vmatpush1.bf16.msra.mxu0 %v1547
      %2114 = vmatprep.subr.bf16.mxu0 %v1546
      %2115 = vmatpush1.bf16.msra.mxu0 %v1545
      %2116 = vmatprep.subr.bf16.mxu0 %v1544
      %2117 = vmatpush1.bf16.msra.mxu0 %v1543
      %2118 = vmatprep.subr.bf16.mxu0 %v1542
      %2119 = vmatpush1.bf16.msra.mxu0 %v1541
      %2120 = vmatprep.subr.bf16.mxu0 %v1540
      %2121 = vmatpush1.bf16.msra.mxu0 %v1539
      %2122 = vmatprep.subr.bf16.mxu0 %v1570
      %2123 = vmatpush2.bf16.msra.mxu0 %v1569
      %2124 = vmatprep.subr.bf16.mxu0 %v1568
      %2125 = vmatpush2.bf16.msra.mxu0 %v1567
      %2126 = vmatprep.subr.bf16.mxu0 %v1566
      %2127 = vmatpush2.bf16.msra.mxu0 %v1565
      %2128 = vmatprep.subr.bf16.mxu0 %v1564
      %2129 = vmatpush2.bf16.msra.mxu0 %v1563
      %2130 = vmatprep.subr.bf16.mxu0 %v1562
      %2131 = vmatpush2.bf16.msra.mxu0 %v1561
      %2132 = vmatprep.subr.bf16.mxu0 %v1560
      %2133 = vmatpush2.bf16.msra.mxu0 %v1559
      %2134 = vmatprep.subr.bf16.mxu0 %v1558
      %2135 = vmatpush2.bf16.msra.mxu0 %v1557
      %2136 = vmatprep.subr.bf16.mxu0 %v1556
      %2137 = vmatpush2.bf16.msra.mxu0 %v1555
      %2138 = vmatprep.mubr.bf16.mxu0 %v590
      %2139 = vmatmul.mubr.bf16.gmra.mxu0 %v589
      %v2140 = vpop.f32.mrf.mxu0
      %v2141 = vadd.f32 %v2098, %v2140
      %v2142 = vpop.f32.mrf.mxu0
      %v2143 = vadd.f32 %v2100, %v2142
      %v2144 = vpop.f32.mrf.mxu0
      %v2145 = vadd.f32 %v2102, %v2144
      %v2146 = vpop.f32.mrf.mxu0
      %v2147 = vadd.f32 %v2104, %v2146
      %2148 = vdwg.mxu0
      %2149 = vmatprep.subr.bf16.mxu0 %v1586
      %2150 = vmatpush1.bf16.msra.mxu0 %v1585
      %2151 = vmatprep.subr.bf16.mxu0 %v1584
      %2152 = vmatpush1.bf16.msra.mxu0 %v1583
      %2153 = vmatprep.subr.bf16.mxu0 %v1582
      %2154 = vmatpush1.bf16.msra.mxu0 %v1581
      %2155 = vmatprep.subr.bf16.mxu0 %v1580
      %2156 = vmatpush1.bf16.msra.mxu0 %v1579
      %2157 = vmatprep.subr.bf16.mxu0 %v1578
      %2158 = vmatpush1.bf16.msra.mxu0 %v1577
      %2159 = vmatprep.subr.bf16.mxu0 %v1576
      %2160 = vmatpush1.bf16.msra.mxu0 %v1575
      %2161 = vmatprep.subr.bf16.mxu0 %v1574
      %2162 = vmatpush1.bf16.msra.mxu0 %v1573
      %2163 = vmatprep.subr.bf16.mxu0 %v1572
      %2164 = vmatpush1.bf16.msra.mxu0 %v1571
      %2165 = vmatprep.subr.bf16.mxu0 %v1602
      %2166 = vmatpush2.bf16.msra.mxu0 %v1601
      %2167 = vmatprep.subr.bf16.mxu0 %v1600
      %2168 = vmatpush2.bf16.msra.mxu0 %v1599
      %2169 = vmatprep.subr.bf16.mxu0 %v1598
      %2170 = vmatpush2.bf16.msra.mxu0 %v1597
      %2171 = vmatprep.subr.bf16.mxu0 %v1596
      %2172 = vmatpush2.bf16.msra.mxu0 %v1595
      %2173 = vmatprep.subr.bf16.mxu0 %v1594
      %2174 = vmatpush2.bf16.msra.mxu0 %v1593
      %2175 = vmatprep.subr.bf16.mxu0 %v1592
      %2176 = vmatpush2.bf16.msra.mxu0 %v1591
      %2177 = vmatprep.subr.bf16.mxu0 %v1590
      %2178 = vmatpush2.bf16.msra.mxu0 %v1589
      %2179 = vmatprep.subr.bf16.mxu0 %v1588
      %2180 = vmatpush2.bf16.msra.mxu0 %v1587
      %2181 = vmatprep.mubr.bf16.mxu0 %v592
      %2182 = vmatmul.mubr.bf16.gmra.mxu0 %v591
      %v2183 = vpop.f32.mrf.mxu0
      %v2184 = vadd.f32 %v2141, %v2183
      %v2185 = vpop.f32.mrf.mxu0
      %v2186 = vadd.f32 %v2143, %v2185
      %v2187 = vpop.f32.mrf.mxu0
      %v2188 = vadd.f32 %v2145, %v2187
      %v2189 = vpop.f32.mrf.mxu0
      %v2190 = vadd.f32 %v2147, %v2189
      %2191 = vdwg.mxu0
      %2192 = vmatprep.subr.bf16.mxu0 %v1618
      %2193 = vmatpush1.bf16.msra.mxu0 %v1617
      %2194 = vmatprep.subr.bf16.mxu0 %v1616
      %2195 = vmatpush1.bf16.msra.mxu0 %v1615
      %2196 = vmatprep.subr.bf16.mxu0 %v1614
      %2197 = vmatpush1.bf16.msra.mxu0 %v1613
      %2198 = vmatprep.subr.bf16.mxu0 %v1612
      %2199 = vmatpush1.bf16.msra.mxu0 %v1611
      %2200 = vmatprep.subr.bf16.mxu0 %v1610
      %2201 = vmatpush1.bf16.msra.mxu0 %v1609
      %2202 = vmatprep.subr.bf16.mxu0 %v1608
      %2203 = vmatpush1.bf16.msra.mxu0 %v1607
      %2204 = vmatprep.subr.bf16.mxu0 %v1606
      %2205 = vmatpush1.bf16.msra.mxu0 %v1605
      %2206 = vmatprep.subr.bf16.mxu0 %v1604
      %2207 = vmatpush1.bf16.msra.mxu0 %v1603
      %2208 = vmatprep.subr.bf16.mxu0 %v1634
      %2209 = vmatpush2.bf16.msra.mxu0 %v1633
      %2210 = vmatprep.subr.bf16.mxu0 %v1632
      %2211 = vmatpush2.bf16.msra.mxu0 %v1631
      %2212 = vmatprep.subr.bf16.mxu0 %v1630
      %2213 = vmatpush2.bf16.msra.mxu0 %v1629
      %2214 = vmatprep.subr.bf16.mxu0 %v1628
      %2215 = vmatpush2.bf16.msra.mxu0 %v1627
      %2216 = vmatprep.subr.bf16.mxu0 %v1626
      %2217 = vmatpush2.bf16.msra.mxu0 %v1625
      %2218 = vmatprep.subr.bf16.mxu0 %v1624
      %2219 = vmatpush2.bf16.msra.mxu0 %v1623
      %2220 = vmatprep.subr.bf16.mxu0 %v1622
      %2221 = vmatpush2.bf16.msra.mxu0 %v1621
      %2222 = vmatprep.subr.bf16.mxu0 %v1620
      %2223 = vmatpush2.bf16.msra.mxu0 %v1619
      %2224 = vmatprep.mubr.bf16.mxu0 %v594
      %2225 = vmatmul.mubr.bf16.gmra.mxu0 %v593
      %v2226 = vpop.f32.mrf.mxu0
      %v2227 = vadd.f32 %v2184, %v2226
      %v2228 = vpop.f32.mrf.mxu0
      %v2229 = vadd.f32 %v2186, %v2228
      %v2230 = vpop.f32.mrf.mxu0
      %v2231 = vadd.f32 %v2188, %v2230
      %v2232 = vpop.f32.mrf.mxu0
      %v2233 = vadd.f32 %v2190, %v2232
      %2234 = vdwg.mxu0
      %p2235 = scmp.eq.s32.totalorder %s20, 0
      // Predicated region
      $region37: #{discriminator_forward.6} parent=35 // pred_check
        %p2236 = pneg %p2235
      $region38: #{discriminator_forward.6} parent=35 // pred_check_branch
        %2238 = sbr.rel (%p2236) target = $region40
      $region39: #{discriminator_forward.6} parent=35 // pred_region
        %2239 = vst [vmem:[#allocation2] sm:$0xff] %v2227
        %2240 = vst [vmem:[#allocation2 + $0x8] sm:$0xff] %v2229
        %2241 = vst [vmem:[#allocation2 + $0x10] sm:$0xff] %v2231
        %2242 = vst [vmem:[#allocation2 + $0x18] sm:$0xff] %v2233
      $region40: #{discriminator_forward.6} parent=35 // pred_fallthru
        _
      %p2243 = scmp.gt.s32.totalorder %s20, 0
      // Predicated region
      $region41: #{discriminator_forward.6} parent=35 // pred_check
        %p2244 = pneg %p2243
      $region42: #{discriminator_forward.6} parent=35 // pred_check_branch
        %2246 = sbr.rel (%p2244) target = $region44
      $region43: #{discriminator_forward.6} parent=35 // pred_region
        %v2247 = vld [vmem:[#allocation2] sm:$0xff]
        %v2248 = vld [vmem:[#allocation2 + $0x8] sm:$0xff]
        %v2249 = vld [vmem:[#allocation2 + $0x10] sm:$0xff]
        %v2250 = vld [vmem:[#allocation2 + $0x18] sm:$0xff]
        %v2251 = vadd.f32 %v2247, %v2227
        %v2252 = vadd.f32 %v2248, %v2229
        %v2253 = vadd.f32 %v2249, %v2231
        %v2254 = vadd.f32 %v2250, %v2233
        %2255 = vst [vmem:[#allocation2] sm:$0xff] %v2251
        %2256 = vst [vmem:[#allocation2 + $0x8] sm:$0xff] %v2252
        %2257 = vst [vmem:[#allocation2 + $0x10] sm:$0xff] %v2253
        %2258 = vst [vmem:[#allocation2 + $0x18] sm:$0xff] %v2254
      $region44: #{discriminator_forward.6} parent=35 // pred_fallthru
        _
      // Predicated region
      $region45: #{discriminator_forward.6} parent=35 // pred_check
        %p2259 = pneg %p2235
      $region46: #{discriminator_forward.6} parent=35 // pred_check_branch
        %2261 = sbr.rel (%p2259) target = $region48
      $region47: #{discriminator_forward.6} parent=35 // pred_region
        %v2262 = vld [vmem:[#allocation2] sm:$0xff]
        %v2263 = vld [vmem:[#allocation2 + $0x8] sm:$0xff]
        %v2264 = vld [vmem:[#allocation2 + $0x10] sm:$0xff]
        %v2265 = vld [vmem:[#allocation2 + $0x18] sm:$0xff]
        %v2266 = vld [vmem:[%s2] sm:$0x3]
        %v2268 = vlaneseq
        %v2269 = vshrl.u32 %v2268, 7
        %v2270 = vsub.s32 0, %v2269
        %v2271 = vrot.slane %v2266, %v2270
        %v2272 = vlaneseq
        %v2273 = vshrl.u32 %v2272, 7
        %v2274 = vsub.s32 1, %v2273
        %v2275 = vrot.slane %v2266, %v2274
        %v2278 = vmul.f32 %v2262, %v2271
        %v2279 = vmul.f32 %v2263, %v2275
        %v2280 = vmul.f32 %v2264, %v2271
        %v2281 = vmul.f32 %v2265, %v2275
        %v2282 = vld [vmem:[%s3] sm:$0x3]
        %v2284 = vlaneseq
        %v2285 = vshrl.u32 %v2284, 7
        %v2286 = vsub.s32 0, %v2285
        %v2287 = vrot.slane %v2282, %v2286
        %v2288 = vlaneseq
        %v2289 = vshrl.u32 %v2288, 7
        %v2290 = vsub.s32 1, %v2289
        %v2291 = vrot.slane %v2282, %v2290
        %v2294 = vadd.f32 %v2278, %v2287
        %v2295 = vadd.f32 %v2279, %v2291
        %v2296 = vadd.f32 %v2280, %v2287
        %v2297 = vadd.f32 %v2281, %v2291
        %v2298 = vmul.f32 %v2294, 0.2
        %v2299 = vmul.f32 %v2295, 0.2
        %v2300 = vmul.f32 %v2296, 0.2
        %v2301 = vmul.f32 %v2297, 0.2
        %v2302 = vmax.f32 %v2294, %v2298
        %v2303 = vmax.f32 %v2295, %v2299
        %v2304 = vmax.f32 %v2296, %v2300
        %v2305 = vmax.f32 %v2297, %v2301
        %v2306 = vpack.c.bf16 %v2304, %v2302
        %v2307 = vpack.c.bf16 %v2305, %v2303
        %v2310 = vunpack.c.l.b16 %v2306
        %v2311 = vunpack.c.l.b16 %v2307
        %v2312 = vunpack.c.h.b16 %v2306
        %v2313 = vunpack.c.h.b16 %v2307
        %v2314 = vpack.c.b16 %v2311, %v2310
        %v2315 = vpack.c.b16 %v2313, %v2312
        %2318 = vst [vmem:[%s257] sm:$0xff] %v2314
        %2319 = vst [vmem:[%s257 + $0x8] sm:$0xff] %v2315
      $region48: #{discriminator_forward.6} parent=35 // pred_fallthru
        _
      %s2320 = smul.u32 2, %s19
      %p2321 = scmp.lt.s32.totalorder %s2320, 3
      %s2322 = scalar_select %p2321, %s2320, 3
      %s2323 = smul.addr %s2322, 2
      %s2324 = smul.addr %s2323, 4
      %s2325 = scalar_lea.vmem %s4, %s2324
      // Predicated region
      $region49: #{discriminator_forward.6} parent=35 // pred_check
        %p2326 = pneg %p141
      $region50: #{discriminator_forward.6} parent=35 // pred_check_branch
        %2328 = sbr.rel (%p2326) target = $region52
      $region51: #{discriminator_forward.6} parent=35 // pred_region
        %s2329 = smul.u32 2, %s19
      $region52: #{discriminator_forward.6} parent=35 // pred_fallthru
        _
    $region36: #{discriminator_forward.6} parent=5 // pred_fallthru
      _
    %p2330 = scmp.le.s32.totalorder 2, %s10
    // Predicated region
    $region53: #{discriminator_forward.6} parent=5 // pred_check
      %p2331 = pneg %p2330
    $region54: #{discriminator_forward.6} parent=5 // pred_check_branch
      %2333 = sbr.rel (%p2331) target = $region56
    $region55: #{discriminator_forward.6} parent=5 // pred_region
      %s2334 = ssub.s32 %s10, 2
      // Predicated region
      $region57: #{discriminator_forward.6} parent=55 // pred_check
        %p2335 = pneg %p147
      $region58: #{discriminator_forward.6} parent=55 // pred_check_branch
        %2337 = sbr.rel (%p2335) target = $region60
      $region59: #{discriminator_forward.6} parent=55 // pred_region
        %s2338 = smul.u32 2, %s21
        %p2339 = scmp.lt.s32.totalorder %s2338, 3
        %s2340 = scalar_select %p2339, %s2338, 3
        %s2341 = smul.addr %s2340, 2
        %s2342 = smul.addr %s2341, 4
        %s2343 = scalar_lea.vmem %s4, %s2342
      $region60: #{discriminator_forward.6} parent=55 // pred_fallthru
        _
    $region56: #{discriminator_forward.6} parent=5 // pred_fallthru
      _
  $region6: #{discriminator_forward.6} parent=0 // loop_footer
    %s14 = sadd.s32 1, %s10
  $region7: #{discriminator_forward.6} parent=0 // loop_footer_branch
    %9 = sbr.rel target = $region3
  $region8: #{discriminator_forward.6} parent=0 // loop_exit
    _

// kernel: discriminator_forward.7
$region0: #{discriminator_forward.7}
  #allocation0 [shape = 'u32[]', space=smem, size = 0x4, offset = 0x4, fixed_abs, tag = 'smem constant byte address 0x4 - core index']
  #allocation1 [shape = 'u32[144,128]{1,0:T(1,128)}', space=vmem, size = 0x12000, scoped, tag = 'internal scratch']
  #allocation2 [shape = 'f32[8,512]{1,0:T(8,128)}', space=vmem, size = 0x4000, scoped, tag = 'scratch operand']
  %s0 = inlined_call_operand.vmem [shape: bf16[8,4096], index: 0, kind: input, shape index: {}]
  %s1 = inlined_call_operand.vmem [shape: bf16[4096,512], index: 1, kind: input, shape index: {}]
  %s2 = inlined_call_operand.vmem [shape: f32[1,512], index: 2, kind: input, shape index: {}]
  %s3 = inlined_call_operand.vmem [shape: f32[1,512], index: 3, kind: input, shape index: {}]
  %s4 = inlined_call_operand.vmem [shape: f32[512,128], index: 4, kind: input, shape index: {}]
  %s5 = inlined_call_operand.vmem [shape: f32[1,128], index: 5, kind: input, shape index: {}]
  %s6 = inlined_call_operand.vmem [shape: f32[8,8], index: 6, kind: input, shape index: {}]
  %s7 = inlined_call_operand.vmem [shape: f32[512,128], index: 7, kind: input, shape index: {}]
  %s8 = inlined_call_operand.vmem [shape: f32[1,128], index: 8, kind: input, shape index: {}]
  %s9 = inlined_call_operand.vmem [shape: f32[8,128], index: 9, kind: output, shape index: {0}]
  %s10 = inlined_call_operand.vmem [shape: f32[8,128], index: 10, kind: output, shape index: {1}]
  %11 = xla_tuple %s9, %s10
  %s12 = sld [smem:[#allocation0]]
  $region66: #{discriminator_forward.7} parent=0
    _
  %s14 = ssub.s32 1, %s12
  %s15 = scalar_select 0, %s14, %s12
  // Predicated region
  $region2: #{discriminator_forward.7} parent=0 // pred_check
    _
  $region3: #{discriminator_forward.7} parent=0 // pred_check_branch
    %17 = sbr.rel (0) target = $region5
  $region4: #{discriminator_forward.7} parent=0 // pred_region
    _
  $region5: #{discriminator_forward.7} parent=0 // pred_fallthru
    _
  // Predicated region
  $region6: #{discriminator_forward.7} parent=0 // pred_check
    _
  $region7: #{discriminator_forward.7} parent=0 // pred_check_branch
    %19 = sbr.rel (0) target = $region9
  $region8: #{discriminator_forward.7} parent=0 // pred_region
    _
  $region9: #{discriminator_forward.7} parent=0 // pred_fallthru
    _
  // Predicated region
  $region10: #{discriminator_forward.7} parent=0 // pred_check
    _
  $region11: #{discriminator_forward.7} parent=0 // pred_check_branch
    %21 = sbr.rel (0) target = $region13
  $region12: #{discriminator_forward.7} parent=0 // pred_region
    _
  $region13: #{discriminator_forward.7} parent=0 // pred_fallthru
    _
  // Predicated region
  $region14: #{discriminator_forward.7} parent=0 // pred_check
    _
  $region15: #{discriminator_forward.7} parent=0 // pred_check_branch
    %23 = sbr.rel (0) target = $region17
  $region16: #{discriminator_forward.7} parent=0 // pred_region
    _
  $region17: #{discriminator_forward.7} parent=0 // pred_fallthru
    _
  // Predicated region
  $region18: #{discriminator_forward.7} parent=0 // pred_check
    _
  $region19: #{discriminator_forward.7} parent=0 // pred_check_branch
    %25 = sbr.rel (0) target = $region21
  $region20: #{discriminator_forward.7} parent=0 // pred_region
    _
  $region21: #{discriminator_forward.7} parent=0 // pred_fallthru
    _
  // Predicated region
  $region22: #{discriminator_forward.7} parent=0 // pred_check
    _
  $region23: #{discriminator_forward.7} parent=0 // pred_check_branch
    %27 = sbr.rel (0) target = $region25
  $region24: #{discriminator_forward.7} parent=0 // pred_region
    _
  $region25: #{discriminator_forward.7} parent=0 // pred_fallthru
    _
  // Predicated region
  $region26: #{discriminator_forward.7} parent=0 // pred_check
    _
  $region27: #{discriminator_forward.7} parent=0 // pred_check_branch
    %29 = sbr.rel (0) target = $region29
  $region28: #{discriminator_forward.7} parent=0 // pred_region
    _
  $region29: #{discriminator_forward.7} parent=0 // pred_fallthru
    _
  // Predicated region
  $region30: #{discriminator_forward.7} parent=0 // pred_check
    _
  $region31: #{discriminator_forward.7} parent=0 // pred_check_branch
    %31 = sbr.rel (0) target = $region33
  $region32: #{discriminator_forward.7} parent=0 // pred_region
    _
  $region33: #{discriminator_forward.7} parent=0 // pred_fallthru
    _
  // Predicated region
  $region34: #{discriminator_forward.7} parent=0 // pred_check
    _
  $region35: #{discriminator_forward.7} parent=0 // pred_check_branch
    %33 = sbr.rel (0) target = $region37
  $region36: #{discriminator_forward.7} parent=0 // pred_region
    _
  $region37: #{discriminator_forward.7} parent=0 // pred_fallthru
    _
  %v34 = vld [vmem:[%s0] sm:$0xff]
  %v35 = vld [vmem:[%s0 + $0x8] sm:$0xff]
  %v36 = vld [vmem:[%s0 + $0x10] sm:$0xff]
  %v37 = vld [vmem:[%s0 + $0x18] sm:$0xff]
  %v38 = vld [vmem:[%s0 + $0x20] sm:$0xff]
  %v39 = vld [vmem:[%s0 + $0x28] sm:$0xff]
  %v40 = vld [vmem:[%s0 + $0x30] sm:$0xff]
  %v41 = vld [vmem:[%s0 + $0x38] sm:$0xff]
  %v42 = vld [vmem:[%s0 + $0x40] sm:$0xff]
  %v43 = vld [vmem:[%s0 + $0x48] sm:$0xff]
  %v44 = vld [vmem:[%s0 + $0x50] sm:$0xff]
  %v45 = vld [vmem:[%s0 + $0x58] sm:$0xff]
  %v46 = vld [vmem:[%s0 + $0x60] sm:$0xff]
  %v47 = vld [vmem:[%s0 + $0x68] sm:$0xff]
  %v48 = vld [vmem:[%s0 + $0x70] sm:$0xff]
  %v49 = vld [vmem:[%s0 + $0x78] sm:$0xff]
  %v50 = vld [vmem:[%s1] sm:$0xff]
  %v51 = vld [vmem:[%s1 + $0x8] sm:$0xff]
  %v52 = vld [vmem:[%s1 + $0x10] sm:$0xff]
  %v53 = vld [vmem:[%s1 + $0x18] sm:$0xff]
  %v54 = vld [vmem:[%s1 + $0x20] sm:$0xff]
  %v55 = vld [vmem:[%s1 + $0x28] sm:$0xff]
  %v56 = vld [vmem:[%s1 + $0x30] sm:$0xff]
  %v57 = vld [vmem:[%s1 + $0x38] sm:$0xff]
  %v58 = vld [vmem:[%s1 + $0x40] sm:$0xff]
  %v59 = vld [vmem:[%s1 + $0x48] sm:$0xff]
  %v60 = vld [vmem:[%s1 + $0x50] sm:$0xff]
  %v61 = vld [vmem:[%s1 + $0x58] sm:$0xff]
  %v62 = vld [vmem:[%s1 + $0x60] sm:$0xff]
  %v63 = vld [vmem:[%s1 + $0x68] sm:$0xff]
  %v64 = vld [vmem:[%s1 + $0x70] sm:$0xff]
  %v65 = vld [vmem:[%s1 + $0x78] sm:$0xff]
  %v66 = vld [vmem:[%s1 + $0x80] sm:$0xff]
  %v67 = vld [vmem:[%s1 + $0x88] sm:$0xff]
  %v68 = vld [vmem:[%s1 + $0x90] sm:$0xff]
  %v69 = vld [vmem:[%s1 + $0x98] sm:$0xff]
  %v70 = vld [vmem:[%s1 + $0xa0] sm:$0xff]
  %v71 = vld [vmem:[%s1 + $0xa8] sm:$0xff]
  %v72 = vld [vmem:[%s1 + $0xb0] sm:$0xff]
  %v73 = vld [vmem:[%s1 + $0xb8] sm:$0xff]
  %v74 = vld [vmem:[%s1 + $0xc0] sm:$0xff]
  %v75 = vld [vmem:[%s1 + $0xc8] sm:$0xff]
  %v76 = vld [vmem:[%s1 + $0xd0] sm:$0xff]
  %v77 = vld [vmem:[%s1 + $0xd8] sm:$0xff]
  %v78 = vld [vmem:[%s1 + $0xe0] sm:$0xff]
  %v79 = vld [vmem:[%s1 + $0xe8] sm:$0xff]
  %v80 = vld [vmem:[%s1 + $0xf0] sm:$0xff]
  %v81 = vld [vmem:[%s1 + $0xf8] sm:$0xff]
  %v82 = vld [vmem:[%s1 + $0x100] sm:$0xff]
  %v83 = vld [vmem:[%s1 + $0x108] sm:$0xff]
  %v84 = vld [vmem:[%s1 + $0x110] sm:$0xff]
  %v85 = vld [vmem:[%s1 + $0x118] sm:$0xff]
  %v86 = vld [vmem:[%s1 + $0x120] sm:$0xff]
  %v87 = vld [vmem:[%s1 + $0x128] sm:$0xff]
  %v88 = vld [vmem:[%s1 + $0x130] sm:$0xff]
  %v89 = vld [vmem:[%s1 + $0x138] sm:$0xff]
  %v90 = vld [vmem:[%s1 + $0x140] sm:$0xff]
  %v91 = vld [vmem:[%s1 + $0x148] sm:$0xff]
  %v92 = vld [vmem:[%s1 + $0x150] sm:$0xff]
  %v93 = vld [vmem:[%s1 + $0x158] sm:$0xff]
  %v94 = vld [vmem:[%s1 + $0x160] sm:$0xff]
  %v95 = vld [vmem:[%s1 + $0x168] sm:$0xff]
  %v96 = vld [vmem:[%s1 + $0x170] sm:$0xff]
  %v97 = vld [vmem:[%s1 + $0x178] sm:$0xff]
  %v98 = vld [vmem:[%s1 + $0x180] sm:$0xff]
  %v99 = vld [vmem:[%s1 + $0x188] sm:$0xff]
  %v100 = vld [vmem:[%s1 + $0x190] sm:$0xff]
  %v101 = vld [vmem:[%s1 + $0x198] sm:$0xff]
  %v102 = vld [vmem:[%s1 + $0x1a0] sm:$0xff]
  %v103 = vld [vmem:[%s1 + $0x1a8] sm:$0xff]
  %v104 = vld [vmem:[%s1 + $0x1b0] sm:$0xff]
  %v105 = vld [vmem:[%s1 + $0x1b8] sm:$0xff]
  %v106 = vld [vmem:[%s1 + $0x1c0] sm:$0xff]
  %v107 = vld [vmem:[%s1 + $0x1c8] sm:$0xff]
  %v108 = vld [vmem:[%s1 + $0x1d0] sm:$0xff]
  %v109 = vld [vmem:[%s1 + $0x1d8] sm:$0xff]
  %v110 = vld [vmem:[%s1 + $0x1e0] sm:$0xff]
  %v111 = vld [vmem:[%s1 + $0x1e8] sm:$0xff]
  %v112 = vld [vmem:[%s1 + $0x1f0] sm:$0xff]
  %v113 = vld [vmem:[%s1 + $0x1f8] sm:$0xff]
  %v114 = vld [vmem:[%s1 + $0x200] sm:$0xff]
  %v115 = vld [vmem:[%s1 + $0x208] sm:$0xff]
  %v116 = vld [vmem:[%s1 + $0x210] sm:$0xff]
  %v117 = vld [vmem:[%s1 + $0x218] sm:$0xff]
  %v118 = vld [vmem:[%s1 + $0x220] sm:$0xff]
  %v119 = vld [vmem:[%s1 + $0x228] sm:$0xff]
  %v120 = vld [vmem:[%s1 + $0x230] sm:$0xff]
  %v121 = vld [vmem:[%s1 + $0x238] sm:$0xff]
  %v122 = vld [vmem:[%s1 + $0x240] sm:$0xff]
  %v123 = vld [vmem:[%s1 + $0x248] sm:$0xff]
  %v124 = vld [vmem:[%s1 + $0x250] sm:$0xff]
  %v125 = vld [vmem:[%s1 + $0x258] sm:$0xff]
  %v126 = vld [vmem:[%s1 + $0x260] sm:$0xff]
  %v127 = vld [vmem:[%s1 + $0x268] sm:$0xff]
  %v128 = vld [vmem:[%s1 + $0x270] sm:$0xff]
  %v129 = vld [vmem:[%s1 + $0x278] sm:$0xff]
  %v130 = vld [vmem:[%s1 + $0x280] sm:$0xff]
  %v131 = vld [vmem:[%s1 + $0x288] sm:$0xff]
  %v132 = vld [vmem:[%s1 + $0x290] sm:$0xff]
  %v133 = vld [vmem:[%s1 + $0x298] sm:$0xff]
  %v134 = vld [vmem:[%s1 + $0x2a0] sm:$0xff]
  %v135 = vld [vmem:[%s1 + $0x2a8] sm:$0xff]
  %v136 = vld [vmem:[%s1 + $0x2b0] sm:$0xff]
  %v137 = vld [vmem:[%s1 + $0x2b8] sm:$0xff]
  %v138 = vld [vmem:[%s1 + $0x2c0] sm:$0xff]
  %v139 = vld [vmem:[%s1 + $0x2c8] sm:$0xff]
  %v140 = vld [vmem:[%s1 + $0x2d0] sm:$0xff]
  %v141 = vld [vmem:[%s1 + $0x2d8] sm:$0xff]
  %v142 = vld [vmem:[%s1 + $0x2e0] sm:$0xff]
  %v143 = vld [vmem:[%s1 + $0x2e8] sm:$0xff]
  %v144 = vld [vmem:[%s1 + $0x2f0] sm:$0xff]
  %v145 = vld [vmem:[%s1 + $0x2f8] sm:$0xff]
  %v146 = vld [vmem:[%s1 + $0x300] sm:$0xff]
  %v147 = vld [vmem:[%s1 + $0x308] sm:$0xff]
  %v148 = vld [vmem:[%s1 + $0x310] sm:$0xff]
  %v149 = vld [vmem:[%s1 + $0x318] sm:$0xff]
  %v150 = vld [vmem:[%s1 + $0x320] sm:$0xff]
  %v151 = vld [vmem:[%s1 + $0x328] sm:$0xff]
  %v152 = vld [vmem:[%s1 + $0x330] sm:$0xff]
  %v153 = vld [vmem:[%s1 + $0x338] sm:$0xff]
  %v154 = vld [vmem:[%s1 + $0x340] sm:$0xff]
  %v155 = vld [vmem:[%s1 + $0x348] sm:$0xff]
  %v156 = vld [vmem:[%s1 + $0x350] sm:$0xff]
  %v157 = vld [vmem:[%s1 + $0x358] sm:$0xff]
  %v158 = vld [vmem:[%s1 + $0x360] sm:$0xff]
  %v159 = vld [vmem:[%s1 + $0x368] sm:$0xff]
  %v160 = vld [vmem:[%s1 + $0x370] sm:$0xff]
  %v161 = vld [vmem:[%s1 + $0x378] sm:$0xff]
  %v162 = vld [vmem:[%s1 + $0x380] sm:$0xff]
  %v163 = vld [vmem:[%s1 + $0x388] sm:$0xff]
  %v164 = vld [vmem:[%s1 + $0x390] sm:$0xff]
  %v165 = vld [vmem:[%s1 + $0x398] sm:$0xff]
  %v166 = vld [vmem:[%s1 + $0x3a0] sm:$0xff]
  %v167 = vld [vmem:[%s1 + $0x3a8] sm:$0xff]
  %v168 = vld [vmem:[%s1 + $0x3b0] sm:$0xff]
  %v169 = vld [vmem:[%s1 + $0x3b8] sm:$0xff]
  %v170 = vld [vmem:[%s1 + $0x3c0] sm:$0xff]
  %v171 = vld [vmem:[%s1 + $0x3c8] sm:$0xff]
  %v172 = vld [vmem:[%s1 + $0x3d0] sm:$0xff]
  %v173 = vld [vmem:[%s1 + $0x3d8] sm:$0xff]
  %v174 = vld [vmem:[%s1 + $0x3e0] sm:$0xff]
  %v175 = vld [vmem:[%s1 + $0x3e8] sm:$0xff]
  %v176 = vld [vmem:[%s1 + $0x3f0] sm:$0xff]
  %v177 = vld [vmem:[%s1 + $0x3f8] sm:$0xff]
  %v178 = vld [vmem:[%s1 + $0x400] sm:$0xff]
  %v179 = vld [vmem:[%s1 + $0x408] sm:$0xff]
  %v180 = vld [vmem:[%s1 + $0x410] sm:$0xff]
  %v181 = vld [vmem:[%s1 + $0x418] sm:$0xff]
  %v182 = vld [vmem:[%s1 + $0x420] sm:$0xff]
  %v183 = vld [vmem:[%s1 + $0x428] sm:$0xff]
  %v184 = vld [vmem:[%s1 + $0x430] sm:$0xff]
  %v185 = vld [vmem:[%s1 + $0x438] sm:$0xff]
  %v186 = vld [vmem:[%s1 + $0x440] sm:$0xff]
  %v187 = vld [vmem:[%s1 + $0x448] sm:$0xff]
  %v188 = vld [vmem:[%s1 + $0x450] sm:$0xff]
  %v189 = vld [vmem:[%s1 + $0x458] sm:$0xff]
  %v190 = vld [vmem:[%s1 + $0x460] sm:$0xff]
  %v191 = vld [vmem:[%s1 + $0x468] sm:$0xff]
  %v192 = vld [vmem:[%s1 + $0x470] sm:$0xff]
  %v193 = vld [vmem:[%s1 + $0x478] sm:$0xff]
  %v194 = vld [vmem:[%s1 + $0x480] sm:$0xff]
  %v195 = vld [vmem:[%s1 + $0x488] sm:$0xff]
  %v196 = vld [vmem:[%s1 + $0x490] sm:$0xff]
  %v197 = vld [vmem:[%s1 + $0x498] sm:$0xff]
  %v198 = vld [vmem:[%s1 + $0x4a0] sm:$0xff]
  %v199 = vld [vmem:[%s1 + $0x4a8] sm:$0xff]
  %v200 = vld [vmem:[%s1 + $0x4b0] sm:$0xff]
  %v201 = vld [vmem:[%s1 + $0x4b8] sm:$0xff]
  %v202 = vld [vmem:[%s1 + $0x4c0] sm:$0xff]
  %v203 = vld [vmem:[%s1 + $0x4c8] sm:$0xff]
  %v204 = vld [vmem:[%s1 + $0x4d0] sm:$0xff]
  %v205 = vld [vmem:[%s1 + $0x4d8] sm:$0xff]
  %v206 = vld [vmem:[%s1 + $0x4e0] sm:$0xff]
  %v207 = vld [vmem:[%s1 + $0x4e8] sm:$0xff]
  %v208 = vld [vmem:[%s1 + $0x4f0] sm:$0xff]
  %v209 = vld [vmem:[%s1 + $0x4f8] sm:$0xff]
  %v210 = vld [vmem:[%s1 + $0x500] sm:$0xff]
  %v211 = vld [vmem:[%s1 + $0x508] sm:$0xff]
  %v212 = vld [vmem:[%s1 + $0x510] sm:$0xff]
  %v213 = vld [vmem:[%s1 + $0x518] sm:$0xff]
  %v214 = vld [vmem:[%s1 + $0x520] sm:$0xff]
  %v215 = vld [vmem:[%s1 + $0x528] sm:$0xff]
  %v216 = vld [vmem:[%s1 + $0x530] sm:$0xff]
  %v217 = vld [vmem:[%s1 + $0x538] sm:$0xff]
  %v218 = vld [vmem:[%s1 + $0x540] sm:$0xff]
  %v219 = vld [vmem:[%s1 + $0x548] sm:$0xff]
  %v220 = vld [vmem:[%s1 + $0x550] sm:$0xff]
  %v221 = vld [vmem:[%s1 + $0x558] sm:$0xff]
  %v222 = vld [vmem:[%s1 + $0x560] sm:$0xff]
  %v223 = vld [vmem:[%s1 + $0x568] sm:$0xff]
  %v224 = vld [vmem:[%s1 + $0x570] sm:$0xff]
  %v225 = vld [vmem:[%s1 + $0x578] sm:$0xff]
  %v226 = vld [vmem:[%s1 + $0x580] sm:$0xff]
  %v227 = vld [vmem:[%s1 + $0x588] sm:$0xff]
  %v228 = vld [vmem:[%s1 + $0x590] sm:$0xff]
  %v229 = vld [vmem:[%s1 + $0x598] sm:$0xff]
  %v230 = vld [vmem:[%s1 + $0x5a0] sm:$0xff]
  %v231 = vld [vmem:[%s1 + $0x5a8] sm:$0xff]
  %v232 = vld [vmem:[%s1 + $0x5b0] sm:$0xff]
  %v233 = vld [vmem:[%s1 + $0x5b8] sm:$0xff]
  %v234 = vld [vmem:[%s1 + $0x5c0] sm:$0xff]
  %v235 = vld [vmem:[%s1 + $0x5c8] sm:$0xff]
  %v236 = vld [vmem:[%s1 + $0x5d0] sm:$0xff]
  %v237 = vld [vmem:[%s1 + $0x5d8] sm:$0xff]
  %v238 = vld [vmem:[%s1 + $0x5e0] sm:$0xff]
  %v239 = vld [vmem:[%s1 + $0x5e8] sm:$0xff]
  %v240 = vld [vmem:[%s1 + $0x5f0] sm:$0xff]
  %v241 = vld [vmem:[%s1 + $0x5f8] sm:$0xff]
  %v242 = vld [vmem:[%s1 + $0x600] sm:$0xff]
  %v243 = vld [vmem:[%s1 + $0x608] sm:$0xff]
  %v244 = vld [vmem:[%s1 + $0x610] sm:$0xff]
  %v245 = vld [vmem:[%s1 + $0x618] sm:$0xff]
  %v246 = vld [vmem:[%s1 + $0x620] sm:$0xff]
  %v247 = vld [vmem:[%s1 + $0x628] sm:$0xff]
  %v248 = vld [vmem:[%s1 + $0x630] sm:$0xff]
  %v249 = vld [vmem:[%s1 + $0x638] sm:$0xff]
  %v250 = vld [vmem:[%s1 + $0x640] sm:$0xff]
  %v251 = vld [vmem:[%s1 + $0x648] sm:$0xff]
  %v252 = vld [vmem:[%s1 + $0x650] sm:$0xff]
  %v253 = vld [vmem:[%s1 + $0x658] sm:$0xff]
  %v254 = vld [vmem:[%s1 + $0x660] sm:$0xff]
  %v255 = vld [vmem:[%s1 + $0x668] sm:$0xff]
  %v256 = vld [vmem:[%s1 + $0x670] sm:$0xff]
  %v257 = vld [vmem:[%s1 + $0x678] sm:$0xff]
  %v258 = vld [vmem:[%s1 + $0x680] sm:$0xff]
  %v259 = vld [vmem:[%s1 + $0x688] sm:$0xff]
  %v260 = vld [vmem:[%s1 + $0x690] sm:$0xff]
  %v261 = vld [vmem:[%s1 + $0x698] sm:$0xff]
  %v262 = vld [vmem:[%s1 + $0x6a0] sm:$0xff]
  %v263 = vld [vmem:[%s1 + $0x6a8] sm:$0xff]
  %v264 = vld [vmem:[%s1 + $0x6b0] sm:$0xff]
  %v265 = vld [vmem:[%s1 + $0x6b8] sm:$0xff]
  %v266 = vld [vmem:[%s1 + $0x6c0] sm:$0xff]
  %v267 = vld [vmem:[%s1 + $0x6c8] sm:$0xff]
  %v268 = vld [vmem:[%s1 + $0x6d0] sm:$0xff]
  %v269 = vld [vmem:[%s1 + $0x6d8] sm:$0xff]
  %v270 = vld [vmem:[%s1 + $0x6e0] sm:$0xff]
  %v271 = vld [vmem:[%s1 + $0x6e8] sm:$0xff]
  %v272 = vld [vmem:[%s1 + $0x6f0] sm:$0xff]
  %v273 = vld [vmem:[%s1 + $0x6f8] sm:$0xff]
  %v274 = vld [vmem:[%s1 + $0x700] sm:$0xff]
  %v275 = vld [vmem:[%s1 + $0x708] sm:$0xff]
  %v276 = vld [vmem:[%s1 + $0x710] sm:$0xff]
  %v277 = vld [vmem:[%s1 + $0x718] sm:$0xff]
  %v278 = vld [vmem:[%s1 + $0x720] sm:$0xff]
  %v279 = vld [vmem:[%s1 + $0x728] sm:$0xff]
  %v280 = vld [vmem:[%s1 + $0x730] sm:$0xff]
  %v281 = vld [vmem:[%s1 + $0x738] sm:$0xff]
  %v282 = vld [vmem:[%s1 + $0x740] sm:$0xff]
  %v283 = vld [vmem:[%s1 + $0x748] sm:$0xff]
  %v284 = vld [vmem:[%s1 + $0x750] sm:$0xff]
  %v285 = vld [vmem:[%s1 + $0x758] sm:$0xff]
  %v286 = vld [vmem:[%s1 + $0x760] sm:$0xff]
  %v287 = vld [vmem:[%s1 + $0x768] sm:$0xff]
  %v288 = vld [vmem:[%s1 + $0x770] sm:$0xff]
  %v289 = vld [vmem:[%s1 + $0x778] sm:$0xff]
  %v290 = vld [vmem:[%s1 + $0x780] sm:$0xff]
  %v291 = vld [vmem:[%s1 + $0x788] sm:$0xff]
  %v292 = vld [vmem:[%s1 + $0x790] sm:$0xff]
  %v293 = vld [vmem:[%s1 + $0x798] sm:$0xff]
  %v294 = vld [vmem:[%s1 + $0x7a0] sm:$0xff]
  %v295 = vld [vmem:[%s1 + $0x7a8] sm:$0xff]
  %v296 = vld [vmem:[%s1 + $0x7b0] sm:$0xff]
  %v297 = vld [vmem:[%s1 + $0x7b8] sm:$0xff]
  %v298 = vld [vmem:[%s1 + $0x7c0] sm:$0xff]
  %v299 = vld [vmem:[%s1 + $0x7c8] sm:$0xff]
  %v300 = vld [vmem:[%s1 + $0x7d0] sm:$0xff]
  %v301 = vld [vmem:[%s1 + $0x7d8] sm:$0xff]
  %v302 = vld [vmem:[%s1 + $0x7e0] sm:$0xff]
  %v303 = vld [vmem:[%s1 + $0x7e8] sm:$0xff]
  %v304 = vld [vmem:[%s1 + $0x7f0] sm:$0xff]
  %v305 = vld [vmem:[%s1 + $0x7f8] sm:$0xff]
  %v306 = vld [vmem:[%s1 + $0x800] sm:$0xff]
  %v307 = vld [vmem:[%s1 + $0x808] sm:$0xff]
  %v308 = vld [vmem:[%s1 + $0x810] sm:$0xff]
  %v309 = vld [vmem:[%s1 + $0x818] sm:$0xff]
  %v310 = vld [vmem:[%s1 + $0x820] sm:$0xff]
  %v311 = vld [vmem:[%s1 + $0x828] sm:$0xff]
  %v312 = vld [vmem:[%s1 + $0x830] sm:$0xff]
  %v313 = vld [vmem:[%s1 + $0x838] sm:$0xff]
  %v314 = vld [vmem:[%s1 + $0x840] sm:$0xff]
  %v315 = vld [vmem:[%s1 + $0x848] sm:$0xff]
  %v316 = vld [vmem:[%s1 + $0x850] sm:$0xff]
  %v317 = vld [vmem:[%s1 + $0x858] sm:$0xff]
  %v318 = vld [vmem:[%s1 + $0x860] sm:$0xff]
  %v319 = vld [vmem:[%s1 + $0x868] sm:$0xff]
  %v320 = vld [vmem:[%s1 + $0x870] sm:$0xff]
  %v321 = vld [vmem:[%s1 + $0x878] sm:$0xff]
  %v322 = vld [vmem:[%s1 + $0x880] sm:$0xff]
  %v323 = vld [vmem:[%s1 + $0x888] sm:$0xff]
  %v324 = vld [vmem:[%s1 + $0x890] sm:$0xff]
  %v325 = vld [vmem:[%s1 + $0x898] sm:$0xff]
  %v326 = vld [vmem:[%s1 + $0x8a0] sm:$0xff]
  %v327 = vld [vmem:[%s1 + $0x8a8] sm:$0xff]
  %v328 = vld [vmem:[%s1 + $0x8b0] sm:$0xff]
  %v329 = vld [vmem:[%s1 + $0x8b8] sm:$0xff]
  %v330 = vld [vmem:[%s1 + $0x8c0] sm:$0xff]
  %v331 = vld [vmem:[%s1 + $0x8c8] sm:$0xff]
  %v332 = vld [vmem:[%s1 + $0x8d0] sm:$0xff]
  %v333 = vld [vmem:[%s1 + $0x8d8] sm:$0xff]
  %v334 = vld [vmem:[%s1 + $0x8e0] sm:$0xff]
  %v335 = vld [vmem:[%s1 + $0x8e8] sm:$0xff]
  %v336 = vld [vmem:[%s1 + $0x8f0] sm:$0xff]
  %v337 = vld [vmem:[%s1 + $0x8f8] sm:$0xff]
  %v338 = vld [vmem:[%s1 + $0x900] sm:$0xff]
  %v339 = vld [vmem:[%s1 + $0x908] sm:$0xff]
  %v340 = vld [vmem:[%s1 + $0x910] sm:$0xff]
  %v341 = vld [vmem:[%s1 + $0x918] sm:$0xff]
  %v342 = vld [vmem:[%s1 + $0x920] sm:$0xff]
  %v343 = vld [vmem:[%s1 + $0x928] sm:$0xff]
  %v344 = vld [vmem:[%s1 + $0x930] sm:$0xff]
  %v345 = vld [vmem:[%s1 + $0x938] sm:$0xff]
  %v346 = vld [vmem:[%s1 + $0x940] sm:$0xff]
  %v347 = vld [vmem:[%s1 + $0x948] sm:$0xff]
  %v348 = vld [vmem:[%s1 + $0x950] sm:$0xff]
  %v349 = vld [vmem:[%s1 + $0x958] sm:$0xff]
  %v350 = vld [vmem:[%s1 + $0x960] sm:$0xff]
  %v351 = vld [vmem:[%s1 + $0x968] sm:$0xff]
  %v352 = vld [vmem:[%s1 + $0x970] sm:$0xff]
  %v353 = vld [vmem:[%s1 + $0x978] sm:$0xff]
  %v354 = vld [vmem:[%s1 + $0x980] sm:$0xff]
  %v355 = vld [vmem:[%s1 + $0x988] sm:$0xff]
  %v356 = vld [vmem:[%s1 + $0x990] sm:$0xff]
  %v357 = vld [vmem:[%s1 + $0x998] sm:$0xff]
  %v358 = vld [vmem:[%s1 + $0x9a0] sm:$0xff]
  %v359 = vld [vmem:[%s1 + $0x9a8] sm:$0xff]
  %v360 = vld [vmem:[%s1 + $0x9b0] sm:$0xff]
  %v361 = vld [vmem:[%s1 + $0x9b8] sm:$0xff]
  %v362 = vld [vmem:[%s1 + $0x9c0] sm:$0xff]
  %v363 = vld [vmem:[%s1 + $0x9c8] sm:$0xff]
  %v364 = vld [vmem:[%s1 + $0x9d0] sm:$0xff]
  %v365 = vld [vmem:[%s1 + $0x9d8] sm:$0xff]
  %v366 = vld [vmem:[%s1 + $0x9e0] sm:$0xff]
  %v367 = vld [vmem:[%s1 + $0x9e8] sm:$0xff]
  %v368 = vld [vmem:[%s1 + $0x9f0] sm:$0xff]
  %v369 = vld [vmem:[%s1 + $0x9f8] sm:$0xff]
  %v370 = vld [vmem:[%s1 + $0xa00] sm:$0xff]
  %v371 = vld [vmem:[%s1 + $0xa08] sm:$0xff]
  %v372 = vld [vmem:[%s1 + $0xa10] sm:$0xff]
  %v373 = vld [vmem:[%s1 + $0xa18] sm:$0xff]
  %v374 = vld [vmem:[%s1 + $0xa20] sm:$0xff]
  %v375 = vld [vmem:[%s1 + $0xa28] sm:$0xff]
  %v376 = vld [vmem:[%s1 + $0xa30] sm:$0xff]
  %v377 = vld [vmem:[%s1 + $0xa38] sm:$0xff]
  %v378 = vld [vmem:[%s1 + $0xa40] sm:$0xff]
  %v379 = vld [vmem:[%s1 + $0xa48] sm:$0xff]
  %v380 = vld [vmem:[%s1 + $0xa50] sm:$0xff]
  %v381 = vld [vmem:[%s1 + $0xa58] sm:$0xff]
  %v382 = vld [vmem:[%s1 + $0xa60] sm:$0xff]
  %v383 = vld [vmem:[%s1 + $0xa68] sm:$0xff]
  %v384 = vld [vmem:[%s1 + $0xa70] sm:$0xff]
  %v385 = vld [vmem:[%s1 + $0xa78] sm:$0xff]
  %v386 = vld [vmem:[%s1 + $0xa80] sm:$0xff]
  %v387 = vld [vmem:[%s1 + $0xa88] sm:$0xff]
  %v388 = vld [vmem:[%s1 + $0xa90] sm:$0xff]
  %v389 = vld [vmem:[%s1 + $0xa98] sm:$0xff]
  %v390 = vld [vmem:[%s1 + $0xaa0] sm:$0xff]
  %v391 = vld [vmem:[%s1 + $0xaa8] sm:$0xff]
  %v392 = vld [vmem:[%s1 + $0xab0] sm:$0xff]
  %v393 = vld [vmem:[%s1 + $0xab8] sm:$0xff]
  %v394 = vld [vmem:[%s1 + $0xac0] sm:$0xff]
  %v395 = vld [vmem:[%s1 + $0xac8] sm:$0xff]
  %v396 = vld [vmem:[%s1 + $0xad0] sm:$0xff]
  %v397 = vld [vmem:[%s1 + $0xad8] sm:$0xff]
  %v398 = vld [vmem:[%s1 + $0xae0] sm:$0xff]
  %v399 = vld [vmem:[%s1 + $0xae8] sm:$0xff]
  %v400 = vld [vmem:[%s1 + $0xaf0] sm:$0xff]
  %v401 = vld [vmem:[%s1 + $0xaf8] sm:$0xff]
  %v402 = vld [vmem:[%s1 + $0xb00] sm:$0xff]
  %v403 = vld [vmem:[%s1 + $0xb08] sm:$0xff]
  %v404 = vld [vmem:[%s1 + $0xb10] sm:$0xff]
  %v405 = vld [vmem:[%s1 + $0xb18] sm:$0xff]
  %v406 = vld [vmem:[%s1 + $0xb20] sm:$0xff]
  %v407 = vld [vmem:[%s1 + $0xb28] sm:$0xff]
  %v408 = vld [vmem:[%s1 + $0xb30] sm:$0xff]
  %v409 = vld [vmem:[%s1 + $0xb38] sm:$0xff]
  %v410 = vld [vmem:[%s1 + $0xb40] sm:$0xff]
  %v411 = vld [vmem:[%s1 + $0xb48] sm:$0xff]
  %v412 = vld [vmem:[%s1 + $0xb50] sm:$0xff]
  %v413 = vld [vmem:[%s1 + $0xb58] sm:$0xff]
  %v414 = vld [vmem:[%s1 + $0xb60] sm:$0xff]
  %v415 = vld [vmem:[%s1 + $0xb68] sm:$0xff]
  %v416 = vld [vmem:[%s1 + $0xb70] sm:$0xff]
  %v417 = vld [vmem:[%s1 + $0xb78] sm:$0xff]
  %v418 = vld [vmem:[%s1 + $0xb80] sm:$0xff]
  %v419 = vld [vmem:[%s1 + $0xb88] sm:$0xff]
  %v420 = vld [vmem:[%s1 + $0xb90] sm:$0xff]
  %v421 = vld [vmem:[%s1 + $0xb98] sm:$0xff]
  %v422 = vld [vmem:[%s1 + $0xba0] sm:$0xff]
  %v423 = vld [vmem:[%s1 + $0xba8] sm:$0xff]
  %v424 = vld [vmem:[%s1 + $0xbb0] sm:$0xff]
  %v425 = vld [vmem:[%s1 + $0xbb8] sm:$0xff]
  %v426 = vld [vmem:[%s1 + $0xbc0] sm:$0xff]
  %v427 = vld [vmem:[%s1 + $0xbc8] sm:$0xff]
  %v428 = vld [vmem:[%s1 + $0xbd0] sm:$0xff]
  %v429 = vld [vmem:[%s1 + $0xbd8] sm:$0xff]
  %v430 = vld [vmem:[%s1 + $0xbe0] sm:$0xff]
  %v431 = vld [vmem:[%s1 + $0xbe8] sm:$0xff]
  %v432 = vld [vmem:[%s1 + $0xbf0] sm:$0xff]
  %v433 = vld [vmem:[%s1 + $0xbf8] sm:$0xff]
  %v434 = vld [vmem:[%s1 + $0xc00] sm:$0xff]
  %v435 = vld [vmem:[%s1 + $0xc08] sm:$0xff]
  %v436 = vld [vmem:[%s1 + $0xc10] sm:$0xff]
  %v437 = vld [vmem:[%s1 + $0xc18] sm:$0xff]
  %v438 = vld [vmem:[%s1 + $0xc20] sm:$0xff]
  %v439 = vld [vmem:[%s1 + $0xc28] sm:$0xff]
  %v440 = vld [vmem:[%s1 + $0xc30] sm:$0xff]
  %v441 = vld [vmem:[%s1 + $0xc38] sm:$0xff]
  %v442 = vld [vmem:[%s1 + $0xc40] sm:$0xff]
  %v443 = vld [vmem:[%s1 + $0xc48] sm:$0xff]
  %v444 = vld [vmem:[%s1 + $0xc50] sm:$0xff]
  %v445 = vld [vmem:[%s1 + $0xc58] sm:$0xff]
  %v446 = vld [vmem:[%s1 + $0xc60] sm:$0xff]
  %v447 = vld [vmem:[%s1 + $0xc68] sm:$0xff]
  %v448 = vld [vmem:[%s1 + $0xc70] sm:$0xff]
  %v449 = vld [vmem:[%s1 + $0xc78] sm:$0xff]
  %v450 = vld [vmem:[%s1 + $0xc80] sm:$0xff]
  %v451 = vld [vmem:[%s1 + $0xc88] sm:$0xff]
  %v452 = vld [vmem:[%s1 + $0xc90] sm:$0xff]
  %v453 = vld [vmem:[%s1 + $0xc98] sm:$0xff]
  %v454 = vld [vmem:[%s1 + $0xca0] sm:$0xff]
  %v455 = vld [vmem:[%s1 + $0xca8] sm:$0xff]
  %v456 = vld [vmem:[%s1 + $0xcb0] sm:$0xff]
  %v457 = vld [vmem:[%s1 + $0xcb8] sm:$0xff]
  %v458 = vld [vmem:[%s1 + $0xcc0] sm:$0xff]
  %v459 = vld [vmem:[%s1 + $0xcc8] sm:$0xff]
  %v460 = vld [vmem:[%s1 + $0xcd0] sm:$0xff]
  %v461 = vld [vmem:[%s1 + $0xcd8] sm:$0xff]
  %v462 = vld [vmem:[%s1 + $0xce0] sm:$0xff]
  %v463 = vld [vmem:[%s1 + $0xce8] sm:$0xff]
  %v464 = vld [vmem:[%s1 + $0xcf0] sm:$0xff]
  %v465 = vld [vmem:[%s1 + $0xcf8] sm:$0xff]
  %v466 = vld [vmem:[%s1 + $0xd00] sm:$0xff]
  %v467 = vld [vmem:[%s1 + $0xd08] sm:$0xff]
  %v468 = vld [vmem:[%s1 + $0xd10] sm:$0xff]
  %v469 = vld [vmem:[%s1 + $0xd18] sm:$0xff]
  %v470 = vld [vmem:[%s1 + $0xd20] sm:$0xff]
  %v471 = vld [vmem:[%s1 + $0xd28] sm:$0xff]
  %v472 = vld [vmem:[%s1 + $0xd30] sm:$0xff]
  %v473 = vld [vmem:[%s1 + $0xd38] sm:$0xff]
  %v474 = vld [vmem:[%s1 + $0xd40] sm:$0xff]
  %v475 = vld [vmem:[%s1 + $0xd48] sm:$0xff]
  %v476 = vld [vmem:[%s1 + $0xd50] sm:$0xff]
  %v477 = vld [vmem:[%s1 + $0xd58] sm:$0xff]
  %v478 = vld [vmem:[%s1 + $0xd60] sm:$0xff]
  %v479 = vld [vmem:[%s1 + $0xd68] sm:$0xff]
  %v480 = vld [vmem:[%s1 + $0xd70] sm:$0xff]
  %v481 = vld [vmem:[%s1 + $0xd78] sm:$0xff]
  %v482 = vld [vmem:[%s1 + $0xd80] sm:$0xff]
  %v483 = vld [vmem:[%s1 + $0xd88] sm:$0xff]
  %v484 = vld [vmem:[%s1 + $0xd90] sm:$0xff]
  %v485 = vld [vmem:[%s1 + $0xd98] sm:$0xff]
  %v486 = vld [vmem:[%s1 + $0xda0] sm:$0xff]
  %v487 = vld [vmem:[%s1 + $0xda8] sm:$0xff]
  %v488 = vld [vmem:[%s1 + $0xdb0] sm:$0xff]
  %v489 = vld [vmem:[%s1 + $0xdb8] sm:$0xff]
  %v490 = vld [vmem:[%s1 + $0xdc0] sm:$0xff]
  %v491 = vld [vmem:[%s1 + $0xdc8] sm:$0xff]
  %v492 = vld [vmem:[%s1 + $0xdd0] sm:$0xff]
  %v493 = vld [vmem:[%s1 + $0xdd8] sm:$0xff]
  %v494 = vld [vmem:[%s1 + $0xde0] sm:$0xff]
  %v495 = vld [vmem:[%s1 + $0xde8] sm:$0xff]
  %v496 = vld [vmem:[%s1 + $0xdf0] sm:$0xff]
  %v497 = vld [vmem:[%s1 + $0xdf8] sm:$0xff]
  %v498 = vld [vmem:[%s1 + $0xe00] sm:$0xff]
  %v499 = vld [vmem:[%s1 + $0xe08] sm:$0xff]
  %v500 = vld [vmem:[%s1 + $0xe10] sm:$0xff]
  %v501 = vld [vmem:[%s1 + $0xe18] sm:$0xff]
  %v502 = vld [vmem:[%s1 + $0xe20] sm:$0xff]
  %v503 = vld [vmem:[%s1 + $0xe28] sm:$0xff]
  %v504 = vld [vmem:[%s1 + $0xe30] sm:$0xff]
  %v505 = vld [vmem:[%s1 + $0xe38] sm:$0xff]
  %v506 = vld [vmem:[%s1 + $0xe40] sm:$0xff]
  %v507 = vld [vmem:[%s1 + $0xe48] sm:$0xff]
  %v508 = vld [vmem:[%s1 + $0xe50] sm:$0xff]
  %v509 = vld [vmem:[%s1 + $0xe58] sm:$0xff]
  %v510 = vld [vmem:[%s1 + $0xe60] sm:$0xff]
  %v511 = vld [vmem:[%s1 + $0xe68] sm:$0xff]
  %v512 = vld [vmem:[%s1 + $0xe70] sm:$0xff]
  %v513 = vld [vmem:[%s1 + $0xe78] sm:$0xff]
  %v514 = vld [vmem:[%s1 + $0xe80] sm:$0xff]
  %v515 = vld [vmem:[%s1 + $0xe88] sm:$0xff]
  %v516 = vld [vmem:[%s1 + $0xe90] sm:$0xff]
  %v517 = vld [vmem:[%s1 + $0xe98] sm:$0xff]
  %v518 = vld [vmem:[%s1 + $0xea0] sm:$0xff]
  %v519 = vld [vmem:[%s1 + $0xea8] sm:$0xff]
  %v520 = vld [vmem:[%s1 + $0xeb0] sm:$0xff]
  %v521 = vld [vmem:[%s1 + $0xeb8] sm:$0xff]
  %v522 = vld [vmem:[%s1 + $0xec0] sm:$0xff]
  %v523 = vld [vmem:[%s1 + $0xec8] sm:$0xff]
  %v524 = vld [vmem:[%s1 + $0xed0] sm:$0xff]
  %v525 = vld [vmem:[%s1 + $0xed8] sm:$0xff]
  %v526 = vld [vmem:[%s1 + $0xee0] sm:$0xff]
  %v527 = vld [vmem:[%s1 + $0xee8] sm:$0xff]
  %v528 = vld [vmem:[%s1 + $0xef0] sm:$0xff]
  %v529 = vld [vmem:[%s1 + $0xef8] sm:$0xff]
  %v530 = vld [vmem:[%s1 + $0xf00] sm:$0xff]
  %v531 = vld [vmem:[%s1 + $0xf08] sm:$0xff]
  %v532 = vld [vmem:[%s1 + $0xf10] sm:$0xff]
  %v533 = vld [vmem:[%s1 + $0xf18] sm:$0xff]
  %v534 = vld [vmem:[%s1 + $0xf20] sm:$0xff]
  %v535 = vld [vmem:[%s1 + $0xf28] sm:$0xff]
  %v536 = vld [vmem:[%s1 + $0xf30] sm:$0xff]
  %v537 = vld [vmem:[%s1 + $0xf38] sm:$0xff]
  %v538 = vld [vmem:[%s1 + $0xf40] sm:$0xff]
  %v539 = vld [vmem:[%s1 + $0xf48] sm:$0xff]
  %v540 = vld [vmem:[%s1 + $0xf50] sm:$0xff]
  %v541 = vld [vmem:[%s1 + $0xf58] sm:$0xff]
  %v542 = vld [vmem:[%s1 + $0xf60] sm:$0xff]
  %v543 = vld [vmem:[%s1 + $0xf68] sm:$0xff]
  %v544 = vld [vmem:[%s1 + $0xf70] sm:$0xff]
  %v545 = vld [vmem:[%s1 + $0xf78] sm:$0xff]
  %v546 = vld [vmem:[%s1 + $0xf80] sm:$0xff]
  %v547 = vld [vmem:[%s1 + $0xf88] sm:$0xff]
  %v548 = vld [vmem:[%s1 + $0xf90] sm:$0xff]
  %v549 = vld [vmem:[%s1 + $0xf98] sm:$0xff]
  %v550 = vld [vmem:[%s1 + $0xfa0] sm:$0xff]
  %v551 = vld [vmem:[%s1 + $0xfa8] sm:$0xff]
  %v552 = vld [vmem:[%s1 + $0xfb0] sm:$0xff]
  %v553 = vld [vmem:[%s1 + $0xfb8] sm:$0xff]
  %v554 = vld [vmem:[%s1 + $0xfc0] sm:$0xff]
  %v555 = vld [vmem:[%s1 + $0xfc8] sm:$0xff]
  %v556 = vld [vmem:[%s1 + $0xfd0] sm:$0xff]
  %v557 = vld [vmem:[%s1 + $0xfd8] sm:$0xff]
  %v558 = vld [vmem:[%s1 + $0xfe0] sm:$0xff]
  %v559 = vld [vmem:[%s1 + $0xfe8] sm:$0xff]
  %v560 = vld [vmem:[%s1 + $0xff0] sm:$0xff]
  %v561 = vld [vmem:[%s1 + $0xff8] sm:$0xff]
  %v562 = vld [vmem:[%s1 + $0x1000] sm:$0xff]
  %v563 = vld [vmem:[%s1 + $0x1008] sm:$0xff]
  %v564 = vld [vmem:[%s1 + $0x1010] sm:$0xff]
  %v565 = vld [vmem:[%s1 + $0x1018] sm:$0xff]
  %v566 = vld [vmem:[%s1 + $0x1020] sm:$0xff]
  %v567 = vld [vmem:[%s1 + $0x1028] sm:$0xff]
  %v568 = vld [vmem:[%s1 + $0x1030] sm:$0xff]
  %v569 = vld [vmem:[%s1 + $0x1038] sm:$0xff]
  %v570 = vld [vmem:[%s1 + $0x1040] sm:$0xff]
  %v571 = vld [vmem:[%s1 + $0x1048] sm:$0xff]
  %v572 = vld [vmem:[%s1 + $0x1050] sm:$0xff]
  %v573 = vld [vmem:[%s1 + $0x1058] sm:$0xff]
  %v574 = vld [vmem:[%s1 + $0x1060] sm:$0xff]
  %v575 = vld [vmem:[%s1 + $0x1068] sm:$0xff]
  %v576 = vld [vmem:[%s1 + $0x1070] sm:$0xff]
  %v577 = vld [vmem:[%s1 + $0x1078] sm:$0xff]
  %v578 = vld [vmem:[%s1 + $0x1080] sm:$0xff]
  %v579 = vld [vmem:[%s1 + $0x1088] sm:$0xff]
  %v580 = vld [vmem:[%s1 + $0x1090] sm:$0xff]
  %v581 = vld [vmem:[%s1 + $0x1098] sm:$0xff]
  %v582 = vld [vmem:[%s1 + $0x10a0] sm:$0xff]
  %v583 = vld [vmem:[%s1 + $0x10a8] sm:$0xff]
  %v584 = vld [vmem:[%s1 + $0x10b0] sm:$0xff]
  %v585 = vld [vmem:[%s1 + $0x10b8] sm:$0xff]
  %v586 = vld [vmem:[%s1 + $0x10c0] sm:$0xff]
  %v587 = vld [vmem:[%s1 + $0x10c8] sm:$0xff]
  %v588 = vld [vmem:[%s1 + $0x10d0] sm:$0xff]
  %v589 = vld [vmem:[%s1 + $0x10d8] sm:$0xff]
  %v590 = vld [vmem:[%s1 + $0x10e0] sm:$0xff]
  %v591 = vld [vmem:[%s1 + $0x10e8] sm:$0xff]
  %v592 = vld [vmem:[%s1 + $0x10f0] sm:$0xff]
  %v593 = vld [vmem:[%s1 + $0x10f8] sm:$0xff]
  %v594 = vld [vmem:[%s1 + $0x1100] sm:$0xff]
  %v595 = vld [vmem:[%s1 + $0x1108] sm:$0xff]
  %v596 = vld [vmem:[%s1 + $0x1110] sm:$0xff]
  %v597 = vld [vmem:[%s1 + $0x1118] sm:$0xff]
  %v598 = vld [vmem:[%s1 + $0x1120] sm:$0xff]
  %v599 = vld [vmem:[%s1 + $0x1128] sm:$0xff]
  %v600 = vld [vmem:[%s1 + $0x1130] sm:$0xff]
  %v601 = vld [vmem:[%s1 + $0x1138] sm:$0xff]
  %v602 = vld [vmem:[%s1 + $0x1140] sm:$0xff]
  %v603 = vld [vmem:[%s1 + $0x1148] sm:$0xff]
  %v604 = vld [vmem:[%s1 + $0x1150] sm:$0xff]
  %v605 = vld [vmem:[%s1 + $0x1158] sm:$0xff]
  %v606 = vld [vmem:[%s1 + $0x1160] sm:$0xff]
  %v607 = vld [vmem:[%s1 + $0x1168] sm:$0xff]
  %v608 = vld [vmem:[%s1 + $0x1170] sm:$0xff]
  %v609 = vld [vmem:[%s1 + $0x1178] sm:$0xff]
  %v610 = vld [vmem:[%s1 + $0x1180] sm:$0xff]
  %v611 = vld [vmem:[%s1 + $0x1188] sm:$0xff]
  %v612 = vld [vmem:[%s1 + $0x1190] sm:$0xff]
  %v613 = vld [vmem:[%s1 + $0x1198] sm:$0xff]
  %v614 = vld [vmem:[%s1 + $0x11a0] sm:$0xff]
  %v615 = vld [vmem:[%s1 + $0x11a8] sm:$0xff]
  %v616 = vld [vmem:[%s1 + $0x11b0] sm:$0xff]
  %v617 = vld [vmem:[%s1 + $0x11b8] sm:$0xff]
  %v618 = vld [vmem:[%s1 + $0x11c0] sm:$0xff]
  %v619 = vld [vmem:[%s1 + $0x11c8] sm:$0xff]
  %v620 = vld [vmem:[%s1 + $0x11d0] sm:$0xff]
  %v621 = vld [vmem:[%s1 + $0x11d8] sm:$0xff]
  %v622 = vld [vmem:[%s1 + $0x11e0] sm:$0xff]
  %v623 = vld [vmem:[%s1 + $0x11e8] sm:$0xff]
  %v624 = vld [vmem:[%s1 + $0x11f0] sm:$0xff]
  %v625 = vld [vmem:[%s1 + $0x11f8] sm:$0xff]
  %v626 = vld [vmem:[%s1 + $0x1200] sm:$0xff]
  %v627 = vld [vmem:[%s1 + $0x1208] sm:$0xff]
  %v628 = vld [vmem:[%s1 + $0x1210] sm:$0xff]
  %v629 = vld [vmem:[%s1 + $0x1218] sm:$0xff]
  %v630 = vld [vmem:[%s1 + $0x1220] sm:$0xff]
  %v631 = vld [vmem:[%s1 + $0x1228] sm:$0xff]
  %v632 = vld [vmem:[%s1 + $0x1230] sm:$0xff]
  %v633 = vld [vmem:[%s1 + $0x1238] sm:$0xff]
  %v634 = vld [vmem:[%s1 + $0x1240] sm:$0xff]
  %v635 = vld [vmem:[%s1 + $0x1248] sm:$0xff]
  %v636 = vld [vmem:[%s1 + $0x1250] sm:$0xff]
  %v637 = vld [vmem:[%s1 + $0x1258] sm:$0xff]
  %v638 = vld [vmem:[%s1 + $0x1260] sm:$0xff]
  %v639 = vld [vmem:[%s1 + $0x1268] sm:$0xff]
  %v640 = vld [vmem:[%s1 + $0x1270] sm:$0xff]
  %v641 = vld [vmem:[%s1 + $0x1278] sm:$0xff]
  %v642 = vld [vmem:[%s1 + $0x1280] sm:$0xff]
  %v643 = vld [vmem:[%s1 + $0x1288] sm:$0xff]
  %v644 = vld [vmem:[%s1 + $0x1290] sm:$0xff]
  %v645 = vld [vmem:[%s1 + $0x1298] sm:$0xff]
  %v646 = vld [vmem:[%s1 + $0x12a0] sm:$0xff]
  %v647 = vld [vmem:[%s1 + $0x12a8] sm:$0xff]
  %v648 = vld [vmem:[%s1 + $0x12b0] sm:$0xff]
  %v649 = vld [vmem:[%s1 + $0x12b8] sm:$0xff]
  %v650 = vld [vmem:[%s1 + $0x12c0] sm:$0xff]
  %v651 = vld [vmem:[%s1 + $0x12c8] sm:$0xff]
  %v652 = vld [vmem:[%s1 + $0x12d0] sm:$0xff]
  %v653 = vld [vmem:[%s1 + $0x12d8] sm:$0xff]
  %v654 = vld [vmem:[%s1 + $0x12e0] sm:$0xff]
  %v655 = vld [vmem:[%s1 + $0x12e8] sm:$0xff]
  %v656 = vld [vmem:[%s1 + $0x12f0] sm:$0xff]
  %v657 = vld [vmem:[%s1 + $0x12f8] sm:$0xff]
  %v658 = vld [vmem:[%s1 + $0x1300] sm:$0xff]
  %v659 = vld [vmem:[%s1 + $0x1308] sm:$0xff]
  %v660 = vld [vmem:[%s1 + $0x1310] sm:$0xff]
  %v661 = vld [vmem:[%s1 + $0x1318] sm:$0xff]
  %v662 = vld [vmem:[%s1 + $0x1320] sm:$0xff]
  %v663 = vld [vmem:[%s1 + $0x1328] sm:$0xff]
  %v664 = vld [vmem:[%s1 + $0x1330] sm:$0xff]
  %v665 = vld [vmem:[%s1 + $0x1338] sm:$0xff]
  %v666 = vld [vmem:[%s1 + $0x1340] sm:$0xff]
  %v667 = vld [vmem:[%s1 + $0x1348] sm:$0xff]
  %v668 = vld [vmem:[%s1 + $0x1350] sm:$0xff]
  %v669 = vld [vmem:[%s1 + $0x1358] sm:$0xff]
  %v670 = vld [vmem:[%s1 + $0x1360] sm:$0xff]
  %v671 = vld [vmem:[%s1 + $0x1368] sm:$0xff]
  %v672 = vld [vmem:[%s1 + $0x1370] sm:$0xff]
  %v673 = vld [vmem:[%s1 + $0x1378] sm:$0xff]
  %v674 = vld [vmem:[%s1 + $0x1380] sm:$0xff]
  %v675 = vld [vmem:[%s1 + $0x1388] sm:$0xff]
  %v676 = vld [vmem:[%s1 + $0x1390] sm:$0xff]
  %v677 = vld [vmem:[%s1 + $0x1398] sm:$0xff]
  %v678 = vld [vmem:[%s1 + $0x13a0] sm:$0xff]
  %v679 = vld [vmem:[%s1 + $0x13a8] sm:$0xff]
  %v680 = vld [vmem:[%s1 + $0x13b0] sm:$0xff]
  %v681 = vld [vmem:[%s1 + $0x13b8] sm:$0xff]
  %v682 = vld [vmem:[%s1 + $0x13c0] sm:$0xff]
  %v683 = vld [vmem:[%s1 + $0x13c8] sm:$0xff]
  %v684 = vld [vmem:[%s1 + $0x13d0] sm:$0xff]
  %v685 = vld [vmem:[%s1 + $0x13d8] sm:$0xff]
  %v686 = vld [vmem:[%s1 + $0x13e0] sm:$0xff]
  %v687 = vld [vmem:[%s1 + $0x13e8] sm:$0xff]
  %v688 = vld [vmem:[%s1 + $0x13f0] sm:$0xff]
  %v689 = vld [vmem:[%s1 + $0x13f8] sm:$0xff]
  %v690 = vld [vmem:[%s1 + $0x1400] sm:$0xff]
  %v691 = vld [vmem:[%s1 + $0x1408] sm:$0xff]
  %v692 = vld [vmem:[%s1 + $0x1410] sm:$0xff]
  %v693 = vld [vmem:[%s1 + $0x1418] sm:$0xff]
  %v694 = vld [vmem:[%s1 + $0x1420] sm:$0xff]
  %v695 = vld [vmem:[%s1 + $0x1428] sm:$0xff]
  %v696 = vld [vmem:[%s1 + $0x1430] sm:$0xff]
  %v697 = vld [vmem:[%s1 + $0x1438] sm:$0xff]
  %v698 = vld [vmem:[%s1 + $0x1440] sm:$0xff]
  %v699 = vld [vmem:[%s1 + $0x1448] sm:$0xff]
  %v700 = vld [vmem:[%s1 + $0x1450] sm:$0xff]
  %v701 = vld [vmem:[%s1 + $0x1458] sm:$0xff]
  %v702 = vld [vmem:[%s1 + $0x1460] sm:$0xff]
  %v703 = vld [vmem:[%s1 + $0x1468] sm:$0xff]
  %v704 = vld [vmem:[%s1 + $0x1470] sm:$0xff]
  %v705 = vld [vmem:[%s1 + $0x1478] sm:$0xff]
  %v706 = vld [vmem:[%s1 + $0x1480] sm:$0xff]
  %v707 = vld [vmem:[%s1 + $0x1488] sm:$0xff]
  %v708 = vld [vmem:[%s1 + $0x1490] sm:$0xff]
  %v709 = vld [vmem:[%s1 + $0x1498] sm:$0xff]
  %v710 = vld [vmem:[%s1 + $0x14a0] sm:$0xff]
  %v711 = vld [vmem:[%s1 + $0x14a8] sm:$0xff]
  %v712 = vld [vmem:[%s1 + $0x14b0] sm:$0xff]
  %v713 = vld [vmem:[%s1 + $0x14b8] sm:$0xff]
  %v714 = vld [vmem:[%s1 + $0x14c0] sm:$0xff]
  %v715 = vld [vmem:[%s1 + $0x14c8] sm:$0xff]
  %v716 = vld [vmem:[%s1 + $0x14d0] sm:$0xff]
  %v717 = vld [vmem:[%s1 + $0x14d8] sm:$0xff]
  %v718 = vld [vmem:[%s1 + $0x14e0] sm:$0xff]
  %v719 = vld [vmem:[%s1 + $0x14e8] sm:$0xff]
  %v720 = vld [vmem:[%s1 + $0x14f0] sm:$0xff]
  %v721 = vld [vmem:[%s1 + $0x14f8] sm:$0xff]
  %v722 = vld [vmem:[%s1 + $0x1500] sm:$0xff]
  %v723 = vld [vmem:[%s1 + $0x1508] sm:$0xff]
  %v724 = vld [vmem:[%s1 + $0x1510] sm:$0xff]
  %v725 = vld [vmem:[%s1 + $0x1518] sm:$0xff]
  %v726 = vld [vmem:[%s1 + $0x1520] sm:$0xff]
  %v727 = vld [vmem:[%s1 + $0x1528] sm:$0xff]
  %v728 = vld [vmem:[%s1 + $0x1530] sm:$0xff]
  %v729 = vld [vmem:[%s1 + $0x1538] sm:$0xff]
  %v730 = vld [vmem:[%s1 + $0x1540] sm:$0xff]
  %v731 = vld [vmem:[%s1 + $0x1548] sm:$0xff]
  %v732 = vld [vmem:[%s1 + $0x1550] sm:$0xff]
  %v733 = vld [vmem:[%s1 + $0x1558] sm:$0xff]
  %v734 = vld [vmem:[%s1 + $0x1560] sm:$0xff]
  %v735 = vld [vmem:[%s1 + $0x1568] sm:$0xff]
  %v736 = vld [vmem:[%s1 + $0x1570] sm:$0xff]
  %v737 = vld [vmem:[%s1 + $0x1578] sm:$0xff]
  %v738 = vld [vmem:[%s1 + $0x1580] sm:$0xff]
  %v739 = vld [vmem:[%s1 + $0x1588] sm:$0xff]
  %v740 = vld [vmem:[%s1 + $0x1590] sm:$0xff]
  %v741 = vld [vmem:[%s1 + $0x1598] sm:$0xff]
  %v742 = vld [vmem:[%s1 + $0x15a0] sm:$0xff]
  %v743 = vld [vmem:[%s1 + $0x15a8] sm:$0xff]
  %v744 = vld [vmem:[%s1 + $0x15b0] sm:$0xff]
  %v745 = vld [vmem:[%s1 + $0x15b8] sm:$0xff]
  %v746 = vld [vmem:[%s1 + $0x15c0] sm:$0xff]
  %v747 = vld [vmem:[%s1 + $0x15c8] sm:$0xff]
  %v748 = vld [vmem:[%s1 + $0x15d0] sm:$0xff]
  %v749 = vld [vmem:[%s1 + $0x15d8] sm:$0xff]
  %v750 = vld [vmem:[%s1 + $0x15e0] sm:$0xff]
  %v751 = vld [vmem:[%s1 + $0x15e8] sm:$0xff]
  %v752 = vld [vmem:[%s1 + $0x15f0] sm:$0xff]
  %v753 = vld [vmem:[%s1 + $0x15f8] sm:$0xff]
  %v754 = vld [vmem:[%s1 + $0x1600] sm:$0xff]
  %v755 = vld [vmem:[%s1 + $0x1608] sm:$0xff]
  %v756 = vld [vmem:[%s1 + $0x1610] sm:$0xff]
  %v757 = vld [vmem:[%s1 + $0x1618] sm:$0xff]
  %v758 = vld [vmem:[%s1 + $0x1620] sm:$0xff]
  %v759 = vld [vmem:[%s1 + $0x1628] sm:$0xff]
  %v760 = vld [vmem:[%s1 + $0x1630] sm:$0xff]
  %v761 = vld [vmem:[%s1 + $0x1638] sm:$0xff]
  %v762 = vld [vmem:[%s1 + $0x1640] sm:$0xff]
  %v763 = vld [vmem:[%s1 + $0x1648] sm:$0xff]
  %v764 = vld [vmem:[%s1 + $0x1650] sm:$0xff]
  %v765 = vld [vmem:[%s1 + $0x1658] sm:$0xff]
  %v766 = vld [vmem:[%s1 + $0x1660] sm:$0xff]
  %v767 = vld [vmem:[%s1 + $0x1668] sm:$0xff]
  %v768 = vld [vmem:[%s1 + $0x1670] sm:$0xff]
  %v769 = vld [vmem:[%s1 + $0x1678] sm:$0xff]
  %v770 = vld [vmem:[%s1 + $0x1680] sm:$0xff]
  %v771 = vld [vmem:[%s1 + $0x1688] sm:$0xff]
  %v772 = vld [vmem:[%s1 + $0x1690] sm:$0xff]
  %v773 = vld [vmem:[%s1 + $0x1698] sm:$0xff]
  %v774 = vld [vmem:[%s1 + $0x16a0] sm:$0xff]
  %v775 = vld [vmem:[%s1 + $0x16a8] sm:$0xff]
  %v776 = vld [vmem:[%s1 + $0x16b0] sm:$0xff]
  %v777 = vld [vmem:[%s1 + $0x16b8] sm:$0xff]
  %v778 = vld [vmem:[%s1 + $0x16c0] sm:$0xff]
  %v779 = vld [vmem:[%s1 + $0x16c8] sm:$0xff]
  %v780 = vld [vmem:[%s1 + $0x16d0] sm:$0xff]
  %v781 = vld [vmem:[%s1 + $0x16d8] sm:$0xff]
  %v782 = vld [vmem:[%s1 + $0x16e0] sm:$0xff]
  %v783 = vld [vmem:[%s1 + $0x16e8] sm:$0xff]
  %v784 = vld [vmem:[%s1 + $0x16f0] sm:$0xff]
  %v785 = vld [vmem:[%s1 + $0x16f8] sm:$0xff]
  %v786 = vld [vmem:[%s1 + $0x1700] sm:$0xff]
  %v787 = vld [vmem:[%s1 + $0x1708] sm:$0xff]
  %v788 = vld [vmem:[%s1 + $0x1710] sm:$0xff]
  %v789 = vld [vmem:[%s1 + $0x1718] sm:$0xff]
  %v790 = vld [vmem:[%s1 + $0x1720] sm:$0xff]
  %v791 = vld [vmem:[%s1 + $0x1728] sm:$0xff]
  %v792 = vld [vmem:[%s1 + $0x1730] sm:$0xff]
  %v793 = vld [vmem:[%s1 + $0x1738] sm:$0xff]
  %v794 = vld [vmem:[%s1 + $0x1740] sm:$0xff]
  %v795 = vld [vmem:[%s1 + $0x1748] sm:$0xff]
  %v796 = vld [vmem:[%s1 + $0x1750] sm:$0xff]
  %v797 = vld [vmem:[%s1 + $0x1758] sm:$0xff]
  %v798 = vld [vmem:[%s1 + $0x1760] sm:$0xff]
  %v799 = vld [vmem:[%s1 + $0x1768] sm:$0xff]
  %v800 = vld [vmem:[%s1 + $0x1770] sm:$0xff]
  %v801 = vld [vmem:[%s1 + $0x1778] sm:$0xff]
  %v802 = vld [vmem:[%s1 + $0x1780] sm:$0xff]
  %v803 = vld [vmem:[%s1 + $0x1788] sm:$0xff]
  %v804 = vld [vmem:[%s1 + $0x1790] sm:$0xff]
  %v805 = vld [vmem:[%s1 + $0x1798] sm:$0xff]
  %v806 = vld [vmem:[%s1 + $0x17a0] sm:$0xff]
  %v807 = vld [vmem:[%s1 + $0x17a8] sm:$0xff]
  %v808 = vld [vmem:[%s1 + $0x17b0] sm:$0xff]
  %v809 = vld [vmem:[%s1 + $0x17b8] sm:$0xff]
  %v810 = vld [vmem:[%s1 + $0x17c0] sm:$0xff]
  %v811 = vld [vmem:[%s1 + $0x17c8] sm:$0xff]
  %v812 = vld [vmem:[%s1 + $0x17d0] sm:$0xff]
  %v813 = vld [vmem:[%s1 + $0x17d8] sm:$0xff]
  %v814 = vld [vmem:[%s1 + $0x17e0] sm:$0xff]
  %v815 = vld [vmem:[%s1 + $0x17e8] sm:$0xff]
  %v816 = vld [vmem:[%s1 + $0x17f0] sm:$0xff]
  %v817 = vld [vmem:[%s1 + $0x17f8] sm:$0xff]
  %v818 = vld [vmem:[%s1 + $0x1800] sm:$0xff]
  %v819 = vld [vmem:[%s1 + $0x1808] sm:$0xff]
  %v820 = vld [vmem:[%s1 + $0x1810] sm:$0xff]
  %v821 = vld [vmem:[%s1 + $0x1818] sm:$0xff]
  %v822 = vld [vmem:[%s1 + $0x1820] sm:$0xff]
  %v823 = vld [vmem:[%s1 + $0x1828] sm:$0xff]
  %v824 = vld [vmem:[%s1 + $0x1830] sm:$0xff]
  %v825 = vld [vmem:[%s1 + $0x1838] sm:$0xff]
  %v826 = vld [vmem:[%s1 + $0x1840] sm:$0xff]
  %v827 = vld [vmem:[%s1 + $0x1848] sm:$0xff]
  %v828 = vld [vmem:[%s1 + $0x1850] sm:$0xff]
  %v829 = vld [vmem:[%s1 + $0x1858] sm:$0xff]
  %v830 = vld [vmem:[%s1 + $0x1860] sm:$0xff]
  %v831 = vld [vmem:[%s1 + $0x1868] sm:$0xff]
  %v832 = vld [vmem:[%s1 + $0x1870] sm:$0xff]
  %v833 = vld [vmem:[%s1 + $0x1878] sm:$0xff]
  %v834 = vld [vmem:[%s1 + $0x1880] sm:$0xff]
  %v835 = vld [vmem:[%s1 + $0x1888] sm:$0xff]
  %v836 = vld [vmem:[%s1 + $0x1890] sm:$0xff]
  %v837 = vld [vmem:[%s1 + $0x1898] sm:$0xff]
  %v838 = vld [vmem:[%s1 + $0x18a0] sm:$0xff]
  %v839 = vld [vmem:[%s1 + $0x18a8] sm:$0xff]
  %v840 = vld [vmem:[%s1 + $0x18b0] sm:$0xff]
  %v841 = vld [vmem:[%s1 + $0x18b8] sm:$0xff]
  %v842 = vld [vmem:[%s1 + $0x18c0] sm:$0xff]
  %v843 = vld [vmem:[%s1 + $0x18c8] sm:$0xff]
  %v844 = vld [vmem:[%s1 + $0x18d0] sm:$0xff]
  %v845 = vld [vmem:[%s1 + $0x18d8] sm:$0xff]
  %v846 = vld [vmem:[%s1 + $0x18e0] sm:$0xff]
  %v847 = vld [vmem:[%s1 + $0x18e8] sm:$0xff]
  %v848 = vld [vmem:[%s1 + $0x18f0] sm:$0xff]
  %v849 = vld [vmem:[%s1 + $0x18f8] sm:$0xff]
  %v850 = vld [vmem:[%s1 + $0x1900] sm:$0xff]
  %v851 = vld [vmem:[%s1 + $0x1908] sm:$0xff]
  %v852 = vld [vmem:[%s1 + $0x1910] sm:$0xff]
  %v853 = vld [vmem:[%s1 + $0x1918] sm:$0xff]
  %v854 = vld [vmem:[%s1 + $0x1920] sm:$0xff]
  %v855 = vld [vmem:[%s1 + $0x1928] sm:$0xff]
  %v856 = vld [vmem:[%s1 + $0x1930] sm:$0xff]
  %v857 = vld [vmem:[%s1 + $0x1938] sm:$0xff]
  %v858 = vld [vmem:[%s1 + $0x1940] sm:$0xff]
  %v859 = vld [vmem:[%s1 + $0x1948] sm:$0xff]
  %v860 = vld [vmem:[%s1 + $0x1950] sm:$0xff]
  %v861 = vld [vmem:[%s1 + $0x1958] sm:$0xff]
  %v862 = vld [vmem:[%s1 + $0x1960] sm:$0xff]
  %v863 = vld [vmem:[%s1 + $0x1968] sm:$0xff]
  %v864 = vld [vmem:[%s1 + $0x1970] sm:$0xff]
  %v865 = vld [vmem:[%s1 + $0x1978] sm:$0xff]
  %v866 = vld [vmem:[%s1 + $0x1980] sm:$0xff]
  %v867 = vld [vmem:[%s1 + $0x1988] sm:$0xff]
  %v868 = vld [vmem:[%s1 + $0x1990] sm:$0xff]
  %v869 = vld [vmem:[%s1 + $0x1998] sm:$0xff]
  %v870 = vld [vmem:[%s1 + $0x19a0] sm:$0xff]
  %v871 = vld [vmem:[%s1 + $0x19a8] sm:$0xff]
  %v872 = vld [vmem:[%s1 + $0x19b0] sm:$0xff]
  %v873 = vld [vmem:[%s1 + $0x19b8] sm:$0xff]
  %v874 = vld [vmem:[%s1 + $0x19c0] sm:$0xff]
  %v875 = vld [vmem:[%s1 + $0x19c8] sm:$0xff]
  %v876 = vld [vmem:[%s1 + $0x19d0] sm:$0xff]
  %v877 = vld [vmem:[%s1 + $0x19d8] sm:$0xff]
  %v878 = vld [vmem:[%s1 + $0x19e0] sm:$0xff]
  %v879 = vld [vmem:[%s1 + $0x19e8] sm:$0xff]
  %v880 = vld [vmem:[%s1 + $0x19f0] sm:$0xff]
  %v881 = vld [vmem:[%s1 + $0x19f8] sm:$0xff]
  %v882 = vld [vmem:[%s1 + $0x1a00] sm:$0xff]
  %v883 = vld [vmem:[%s1 + $0x1a08] sm:$0xff]
  %v884 = vld [vmem:[%s1 + $0x1a10] sm:$0xff]
  %v885 = vld [vmem:[%s1 + $0x1a18] sm:$0xff]
  %v886 = vld [vmem:[%s1 + $0x1a20] sm:$0xff]
  %v887 = vld [vmem:[%s1 + $0x1a28] sm:$0xff]
  %v888 = vld [vmem:[%s1 + $0x1a30] sm:$0xff]
  %v889 = vld [vmem:[%s1 + $0x1a38] sm:$0xff]
  %v890 = vld [vmem:[%s1 + $0x1a40] sm:$0xff]
  %v891 = vld [vmem:[%s1 + $0x1a48] sm:$0xff]
  %v892 = vld [vmem:[%s1 + $0x1a50] sm:$0xff]
  %v893 = vld [vmem:[%s1 + $0x1a58] sm:$0xff]
  %v894 = vld [vmem:[%s1 + $0x1a60] sm:$0xff]
  %v895 = vld [vmem:[%s1 + $0x1a68] sm:$0xff]
  %v896 = vld [vmem:[%s1 + $0x1a70] sm:$0xff]
  %v897 = vld [vmem:[%s1 + $0x1a78] sm:$0xff]
  %v898 = vld [vmem:[%s1 + $0x1a80] sm:$0xff]
  %v899 = vld [vmem:[%s1 + $0x1a88] sm:$0xff]
  %v900 = vld [vmem:[%s1 + $0x1a90] sm:$0xff]
  %v901 = vld [vmem:[%s1 + $0x1a98] sm:$0xff]
  %v902 = vld [vmem:[%s1 + $0x1aa0] sm:$0xff]
  %v903 = vld [vmem:[%s1 + $0x1aa8] sm:$0xff]
  %v904 = vld [vmem:[%s1 + $0x1ab0] sm:$0xff]
  %v905 = vld [vmem:[%s1 + $0x1ab8] sm:$0xff]
  %v906 = vld [vmem:[%s1 + $0x1ac0] sm:$0xff]
  %v907 = vld [vmem:[%s1 + $0x1ac8] sm:$0xff]
  %v908 = vld [vmem:[%s1 + $0x1ad0] sm:$0xff]
  %v909 = vld [vmem:[%s1 + $0x1ad8] sm:$0xff]
  %v910 = vld [vmem:[%s1 + $0x1ae0] sm:$0xff]
  %v911 = vld [vmem:[%s1 + $0x1ae8] sm:$0xff]
  %v912 = vld [vmem:[%s1 + $0x1af0] sm:$0xff]
  %v913 = vld [vmem:[%s1 + $0x1af8] sm:$0xff]
  %v914 = vld [vmem:[%s1 + $0x1b00] sm:$0xff]
  %v915 = vld [vmem:[%s1 + $0x1b08] sm:$0xff]
  %v916 = vld [vmem:[%s1 + $0x1b10] sm:$0xff]
  %v917 = vld [vmem:[%s1 + $0x1b18] sm:$0xff]
  %v918 = vld [vmem:[%s1 + $0x1b20] sm:$0xff]
  %v919 = vld [vmem:[%s1 + $0x1b28] sm:$0xff]
  %v920 = vld [vmem:[%s1 + $0x1b30] sm:$0xff]
  %v921 = vld [vmem:[%s1 + $0x1b38] sm:$0xff]
  %v922 = vld [vmem:[%s1 + $0x1b40] sm:$0xff]
  %v923 = vld [vmem:[%s1 + $0x1b48] sm:$0xff]
  %v924 = vld [vmem:[%s1 + $0x1b50] sm:$0xff]
  %v925 = vld [vmem:[%s1 + $0x1b58] sm:$0xff]
  %v926 = vld [vmem:[%s1 + $0x1b60] sm:$0xff]
  %v927 = vld [vmem:[%s1 + $0x1b68] sm:$0xff]
  %v928 = vld [vmem:[%s1 + $0x1b70] sm:$0xff]
  %v929 = vld [vmem:[%s1 + $0x1b78] sm:$0xff]
  %v930 = vld [vmem:[%s1 + $0x1b80] sm:$0xff]
  %v931 = vld [vmem:[%s1 + $0x1b88] sm:$0xff]
  %v932 = vld [vmem:[%s1 + $0x1b90] sm:$0xff]
  %v933 = vld [vmem:[%s1 + $0x1b98] sm:$0xff]
  %v934 = vld [vmem:[%s1 + $0x1ba0] sm:$0xff]
  %v935 = vld [vmem:[%s1 + $0x1ba8] sm:$0xff]
  %v936 = vld [vmem:[%s1 + $0x1bb0] sm:$0xff]
  %v937 = vld [vmem:[%s1 + $0x1bb8] sm:$0xff]
  %v938 = vld [vmem:[%s1 + $0x1bc0] sm:$0xff]
  %v939 = vld [vmem:[%s1 + $0x1bc8] sm:$0xff]
  %v940 = vld [vmem:[%s1 + $0x1bd0] sm:$0xff]
  %v941 = vld [vmem:[%s1 + $0x1bd8] sm:$0xff]
  %v942 = vld [vmem:[%s1 + $0x1be0] sm:$0xff]
  %v943 = vld [vmem:[%s1 + $0x1be8] sm:$0xff]
  %v944 = vld [vmem:[%s1 + $0x1bf0] sm:$0xff]
  %v945 = vld [vmem:[%s1 + $0x1bf8] sm:$0xff]
  %v946 = vld [vmem:[%s1 + $0x1c00] sm:$0xff]
  %v947 = vld [vmem:[%s1 + $0x1c08] sm:$0xff]
  %v948 = vld [vmem:[%s1 + $0x1c10] sm:$0xff]
  %v949 = vld [vmem:[%s1 + $0x1c18] sm:$0xff]
  %v950 = vld [vmem:[%s1 + $0x1c20] sm:$0xff]
  %v951 = vld [vmem:[%s1 + $0x1c28] sm:$0xff]
  %v952 = vld [vmem:[%s1 + $0x1c30] sm:$0xff]
  %v953 = vld [vmem:[%s1 + $0x1c38] sm:$0xff]
  %v954 = vld [vmem:[%s1 + $0x1c40] sm:$0xff]
  %v955 = vld [vmem:[%s1 + $0x1c48] sm:$0xff]
  %v956 = vld [vmem:[%s1 + $0x1c50] sm:$0xff]
  %v957 = vld [vmem:[%s1 + $0x1c58] sm:$0xff]
  %v958 = vld [vmem:[%s1 + $0x1c60] sm:$0xff]
  %v959 = vld [vmem:[%s1 + $0x1c68] sm:$0xff]
  %v960 = vld [vmem:[%s1 + $0x1c70] sm:$0xff]
  %v961 = vld [vmem:[%s1 + $0x1c78] sm:$0xff]
  %v962 = vld [vmem:[%s1 + $0x1c80] sm:$0xff]
  %v963 = vld [vmem:[%s1 + $0x1c88] sm:$0xff]
  %v964 = vld [vmem:[%s1 + $0x1c90] sm:$0xff]
  %v965 = vld [vmem:[%s1 + $0x1c98] sm:$0xff]
  %v966 = vld [vmem:[%s1 + $0x1ca0] sm:$0xff]
  %v967 = vld [vmem:[%s1 + $0x1ca8] sm:$0xff]
  %v968 = vld [vmem:[%s1 + $0x1cb0] sm:$0xff]
  %v969 = vld [vmem:[%s1 + $0x1cb8] sm:$0xff]
  %v970 = vld [vmem:[%s1 + $0x1cc0] sm:$0xff]
  %v971 = vld [vmem:[%s1 + $0x1cc8] sm:$0xff]
  %v972 = vld [vmem:[%s1 + $0x1cd0] sm:$0xff]
  %v973 = vld [vmem:[%s1 + $0x1cd8] sm:$0xff]
  %v974 = vld [vmem:[%s1 + $0x1ce0] sm:$0xff]
  %v975 = vld [vmem:[%s1 + $0x1ce8] sm:$0xff]
  %v976 = vld [vmem:[%s1 + $0x1cf0] sm:$0xff]
  %v977 = vld [vmem:[%s1 + $0x1cf8] sm:$0xff]
  %v978 = vld [vmem:[%s1 + $0x1d00] sm:$0xff]
  %v979 = vld [vmem:[%s1 + $0x1d08] sm:$0xff]
  %v980 = vld [vmem:[%s1 + $0x1d10] sm:$0xff]
  %v981 = vld [vmem:[%s1 + $0x1d18] sm:$0xff]
  %v982 = vld [vmem:[%s1 + $0x1d20] sm:$0xff]
  %v983 = vld [vmem:[%s1 + $0x1d28] sm:$0xff]
  %v984 = vld [vmem:[%s1 + $0x1d30] sm:$0xff]
  %v985 = vld [vmem:[%s1 + $0x1d38] sm:$0xff]
  %v986 = vld [vmem:[%s1 + $0x1d40] sm:$0xff]
  %v987 = vld [vmem:[%s1 + $0x1d48] sm:$0xff]
  %v988 = vld [vmem:[%s1 + $0x1d50] sm:$0xff]
  %v989 = vld [vmem:[%s1 + $0x1d58] sm:$0xff]
  %v990 = vld [vmem:[%s1 + $0x1d60] sm:$0xff]
  %v991 = vld [vmem:[%s1 + $0x1d68] sm:$0xff]
  %v992 = vld [vmem:[%s1 + $0x1d70] sm:$0xff]
  %v993 = vld [vmem:[%s1 + $0x1d78] sm:$0xff]
  %v994 = vld [vmem:[%s1 + $0x1d80] sm:$0xff]
  %v995 = vld [vmem:[%s1 + $0x1d88] sm:$0xff]
  %v996 = vld [vmem:[%s1 + $0x1d90] sm:$0xff]
  %v997 = vld [vmem:[%s1 + $0x1d98] sm:$0xff]
  %v998 = vld [vmem:[%s1 + $0x1da0] sm:$0xff]
  %v999 = vld [vmem:[%s1 + $0x1da8] sm:$0xff]
  %v1000 = vld [vmem:[%s1 + $0x1db0] sm:$0xff]
  %v1001 = vld [vmem:[%s1 + $0x1db8] sm:$0xff]
  %v1002 = vld [vmem:[%s1 + $0x1dc0] sm:$0xff]
  %v1003 = vld [vmem:[%s1 + $0x1dc8] sm:$0xff]
  %v1004 = vld [vmem:[%s1 + $0x1dd0] sm:$0xff]
  %v1005 = vld [vmem:[%s1 + $0x1dd8] sm:$0xff]
  %v1006 = vld [vmem:[%s1 + $0x1de0] sm:$0xff]
  %v1007 = vld [vmem:[%s1 + $0x1de8] sm:$0xff]
  %v1008 = vld [vmem:[%s1 + $0x1df0] sm:$0xff]
  %v1009 = vld [vmem:[%s1 + $0x1df8] sm:$0xff]
  %v1010 = vld [vmem:[%s1 + $0x1e00] sm:$0xff]
  %v1011 = vld [vmem:[%s1 + $0x1e08] sm:$0xff]
  %v1012 = vld [vmem:[%s1 + $0x1e10] sm:$0xff]
  %v1013 = vld [vmem:[%s1 + $0x1e18] sm:$0xff]
  %v1014 = vld [vmem:[%s1 + $0x1e20] sm:$0xff]
  %v1015 = vld [vmem:[%s1 + $0x1e28] sm:$0xff]
  %v1016 = vld [vmem:[%s1 + $0x1e30] sm:$0xff]
  %v1017 = vld [vmem:[%s1 + $0x1e38] sm:$0xff]
  %v1018 = vld [vmem:[%s1 + $0x1e40] sm:$0xff]
  %v1019 = vld [vmem:[%s1 + $0x1e48] sm:$0xff]
  %v1020 = vld [vmem:[%s1 + $0x1e50] sm:$0xff]
  %v1021 = vld [vmem:[%s1 + $0x1e58] sm:$0xff]
  %v1022 = vld [vmem:[%s1 + $0x1e60] sm:$0xff]
  %v1023 = vld [vmem:[%s1 + $0x1e68] sm:$0xff]
  %v1024 = vld [vmem:[%s1 + $0x1e70] sm:$0xff]
  %v1025 = vld [vmem:[%s1 + $0x1e78] sm:$0xff]
  %v1026 = vld [vmem:[%s1 + $0x1e80] sm:$0xff]
  %v1027 = vld [vmem:[%s1 + $0x1e88] sm:$0xff]
  %v1028 = vld [vmem:[%s1 + $0x1e90] sm:$0xff]
  %v1029 = vld [vmem:[%s1 + $0x1e98] sm:$0xff]
  %v1030 = vld [vmem:[%s1 + $0x1ea0] sm:$0xff]
  %v1031 = vld [vmem:[%s1 + $0x1ea8] sm:$0xff]
  %v1032 = vld [vmem:[%s1 + $0x1eb0] sm:$0xff]
  %v1033 = vld [vmem:[%s1 + $0x1eb8] sm:$0xff]
  %v1034 = vld [vmem:[%s1 + $0x1ec0] sm:$0xff]
  %v1035 = vld [vmem:[%s1 + $0x1ec8] sm:$0xff]
  %v1036 = vld [vmem:[%s1 + $0x1ed0] sm:$0xff]
  %v1037 = vld [vmem:[%s1 + $0x1ed8] sm:$0xff]
  %v1038 = vld [vmem:[%s1 + $0x1ee0] sm:$0xff]
  %v1039 = vld [vmem:[%s1 + $0x1ee8] sm:$0xff]
  %v1040 = vld [vmem:[%s1 + $0x1ef0] sm:$0xff]
  %v1041 = vld [vmem:[%s1 + $0x1ef8] sm:$0xff]
  %v1042 = vld [vmem:[%s1 + $0x1f00] sm:$0xff]
  %v1043 = vld [vmem:[%s1 + $0x1f08] sm:$0xff]
  %v1044 = vld [vmem:[%s1 + $0x1f10] sm:$0xff]
  %v1045 = vld [vmem:[%s1 + $0x1f18] sm:$0xff]
  %v1046 = vld [vmem:[%s1 + $0x1f20] sm:$0xff]
  %v1047 = vld [vmem:[%s1 + $0x1f28] sm:$0xff]
  %v1048 = vld [vmem:[%s1 + $0x1f30] sm:$0xff]
  %v1049 = vld [vmem:[%s1 + $0x1f38] sm:$0xff]
  %v1050 = vld [vmem:[%s1 + $0x1f40] sm:$0xff]
  %v1051 = vld [vmem:[%s1 + $0x1f48] sm:$0xff]
  %v1052 = vld [vmem:[%s1 + $0x1f50] sm:$0xff]
  %v1053 = vld [vmem:[%s1 + $0x1f58] sm:$0xff]
  %v1054 = vld [vmem:[%s1 + $0x1f60] sm:$0xff]
  %v1055 = vld [vmem:[%s1 + $0x1f68] sm:$0xff]
  %v1056 = vld [vmem:[%s1 + $0x1f70] sm:$0xff]
  %v1057 = vld [vmem:[%s1 + $0x1f78] sm:$0xff]
  %v1058 = vld [vmem:[%s1 + $0x1f80] sm:$0xff]
  %v1059 = vld [vmem:[%s1 + $0x1f88] sm:$0xff]
  %v1060 = vld [vmem:[%s1 + $0x1f90] sm:$0xff]
  %v1061 = vld [vmem:[%s1 + $0x1f98] sm:$0xff]
  %v1062 = vld [vmem:[%s1 + $0x1fa0] sm:$0xff]
  %v1063 = vld [vmem:[%s1 + $0x1fa8] sm:$0xff]
  %v1064 = vld [vmem:[%s1 + $0x1fb0] sm:$0xff]
  %v1065 = vld [vmem:[%s1 + $0x1fb8] sm:$0xff]
  %v1066 = vld [vmem:[%s1 + $0x1fc0] sm:$0xff]
  %v1067 = vld [vmem:[%s1 + $0x1fc8] sm:$0xff]
  %v1068 = vld [vmem:[%s1 + $0x1fd0] sm:$0xff]
  %v1069 = vld [vmem:[%s1 + $0x1fd8] sm:$0xff]
  %v1070 = vld [vmem:[%s1 + $0x1fe0] sm:$0xff]
  %v1071 = vld [vmem:[%s1 + $0x1fe8] sm:$0xff]
  %v1072 = vld [vmem:[%s1 + $0x1ff0] sm:$0xff]
  %v1073 = vld [vmem:[%s1 + $0x1ff8] sm:$0xff]
  %v1090 = vunpack.c.l.b16 %v34
  %v1091 = vunpack.c.h.b16 %v34
  %v1092 = vunpack.c.l.b16 %v35
  %v1093 = vunpack.c.h.b16 %v35
  %v1094 = vunpack.c.l.b16 %v36
  %v1095 = vunpack.c.h.b16 %v36
  %v1096 = vunpack.c.l.b16 %v37
  %v1097 = vunpack.c.h.b16 %v37
  %v1098 = vunpack.c.l.b16 %v38
  %v1099 = vunpack.c.h.b16 %v38
  %v1100 = vunpack.c.l.b16 %v39
  %v1101 = vunpack.c.h.b16 %v39
  %v1102 = vunpack.c.l.b16 %v40
  %v1103 = vunpack.c.h.b16 %v40
  %v1104 = vunpack.c.l.b16 %v41
  %v1105 = vunpack.c.h.b16 %v41
  %v1106 = vunpack.c.l.b16 %v42
  %v1107 = vunpack.c.h.b16 %v42
  %v1108 = vunpack.c.l.b16 %v43
  %v1109 = vunpack.c.h.b16 %v43
  %v1110 = vunpack.c.l.b16 %v44
  %v1111 = vunpack.c.h.b16 %v44
  %v1112 = vunpack.c.l.b16 %v45
  %v1113 = vunpack.c.h.b16 %v45
  %v1114 = vunpack.c.l.b16 %v46
  %v1115 = vunpack.c.h.b16 %v46
  %v1116 = vunpack.c.l.b16 %v47
  %v1117 = vunpack.c.h.b16 %v47
  %v1118 = vunpack.c.l.b16 %v48
  %v1119 = vunpack.c.h.b16 %v48
  %v1120 = vunpack.c.l.b16 %v49
  %v1121 = vunpack.c.h.b16 %v49
  %v1122 = vpack.c.b16 %v1090, %v1090
  %v1123 = vpack.c.b16 %v1091, %v1091
  %v1124 = vpack.c.b16 %v1092, %v1092
  %v1125 = vpack.c.b16 %v1093, %v1093
  %v1126 = vpack.c.b16 %v1094, %v1094
  %v1127 = vpack.c.b16 %v1095, %v1095
  %v1128 = vpack.c.b16 %v1096, %v1096
  %v1129 = vpack.c.b16 %v1097, %v1097
  %v1130 = vpack.c.b16 %v1098, %v1098
  %v1131 = vpack.c.b16 %v1099, %v1099
  %v1132 = vpack.c.b16 %v1100, %v1100
  %v1133 = vpack.c.b16 %v1101, %v1101
  %v1134 = vpack.c.b16 %v1102, %v1102
  %v1135 = vpack.c.b16 %v1103, %v1103
  %v1136 = vpack.c.b16 %v1104, %v1104
  %v1137 = vpack.c.b16 %v1105, %v1105
  %v1138 = vpack.c.b16 %v1106, %v1106
  %v1139 = vpack.c.b16 %v1107, %v1107
  %v1140 = vpack.c.b16 %v1108, %v1108
  %v1141 = vpack.c.b16 %v1109, %v1109
  %v1142 = vpack.c.b16 %v1110, %v1110
  %v1143 = vpack.c.b16 %v1111, %v1111
  %v1144 = vpack.c.b16 %v1112, %v1112
  %v1145 = vpack.c.b16 %v1113, %v1113
  %v1146 = vpack.c.b16 %v1114, %v1114
  %v1147 = vpack.c.b16 %v1115, %v1115
  %v1148 = vpack.c.b16 %v1116, %v1116
  %v1149 = vpack.c.b16 %v1117, %v1117
  %v1150 = vpack.c.b16 %v1118, %v1118
  %v1151 = vpack.c.b16 %v1119, %v1119
  %v1152 = vpack.c.b16 %v1120, %v1120
  %v1153 = vpack.c.b16 %v1121, %v1121
  %v2210 = vunpack.c.l.b16 %v50
  %v2211 = vunpack.c.h.b16 %v50
  %v2212 = vunpack.c.l.b16 %v51
  %v2213 = vunpack.c.h.b16 %v51
  %v2214 = vunpack.c.l.b16 %v52
  %v2215 = vunpack.c.h.b16 %v52
  %v2216 = vunpack.c.l.b16 %v53
  %v2217 = vunpack.c.h.b16 %v53
  %v2218 = vunpack.c.l.b16 %v54
  %v2219 = vunpack.c.h.b16 %v54
  %v2220 = vunpack.c.l.b16 %v55
  %v2221 = vunpack.c.h.b16 %v55
  %v2222 = vunpack.c.l.b16 %v56
  %v2223 = vunpack.c.h.b16 %v56
  %v2224 = vunpack.c.l.b16 %v57
  %v2225 = vunpack.c.h.b16 %v57
  %v2226 = vunpack.c.l.b16 %v58
  %v2227 = vunpack.c.h.b16 %v58
  %v2228 = vunpack.c.l.b16 %v59
  %v2229 = vunpack.c.h.b16 %v59
  %v2230 = vunpack.c.l.b16 %v60
  %v2231 = vunpack.c.h.b16 %v60
  %v2232 = vunpack.c.l.b16 %v61
  %v2233 = vunpack.c.h.b16 %v61
  %v2234 = vunpack.c.l.b16 %v62
  %v2235 = vunpack.c.h.b16 %v62
  %v2236 = vunpack.c.l.b16 %v63
  %v2237 = vunpack.c.h.b16 %v63
  %v2238 = vunpack.c.l.b16 %v64
  %v2239 = vunpack.c.h.b16 %v64
  %v2240 = vunpack.c.l.b16 %v65
  %v2241 = vunpack.c.h.b16 %v65
  %v2242 = vunpack.c.l.b16 %v66
  %v2243 = vunpack.c.h.b16 %v66
  %v2244 = vunpack.c.l.b16 %v67
  %v2245 = vunpack.c.h.b16 %v67
  %v2246 = vunpack.c.l.b16 %v68
  %v2247 = vunpack.c.h.b16 %v68
  %v2248 = vunpack.c.l.b16 %v69
  %v2249 = vunpack.c.h.b16 %v69
  %v2250 = vunpack.c.l.b16 %v70
  %v2251 = vunpack.c.h.b16 %v70
  %v2252 = vunpack.c.l.b16 %v71
  %v2253 = vunpack.c.h.b16 %v71
  %v2254 = vunpack.c.l.b16 %v72
  %v2255 = vunpack.c.h.b16 %v72
  %v2256 = vunpack.c.l.b16 %v73
  %v2257 = vunpack.c.h.b16 %v73
  %v2258 = vunpack.c.l.b16 %v74
  %v2259 = vunpack.c.h.b16 %v74
  %v2260 = vunpack.c.l.b16 %v75
  %v2261 = vunpack.c.h.b16 %v75
  %v2262 = vunpack.c.l.b16 %v76
  %v2263 = vunpack.c.h.b16 %v76
  %v2264 = vunpack.c.l.b16 %v77
  %v2265 = vunpack.c.h.b16 %v77
  %v2266 = vunpack.c.l.b16 %v78
  %v2267 = vunpack.c.h.b16 %v78
  %v2268 = vunpack.c.l.b16 %v79
  %v2269 = vunpack.c.h.b16 %v79
  %v2270 = vunpack.c.l.b16 %v80
  %v2271 = vunpack.c.h.b16 %v80
  %v2272 = vunpack.c.l.b16 %v81
  %v2273 = vunpack.c.h.b16 %v81
  %v2274 = vunpack.c.l.b16 %v82
  %v2275 = vunpack.c.h.b16 %v82
  %v2276 = vunpack.c.l.b16 %v83
  %v2277 = vunpack.c.h.b16 %v83
  %v2278 = vunpack.c.l.b16 %v84
  %v2279 = vunpack.c.h.b16 %v84
  %v2280 = vunpack.c.l.b16 %v85
  %v2281 = vunpack.c.h.b16 %v85
  %v2282 = vunpack.c.l.b16 %v86
  %v2283 = vunpack.c.h.b16 %v86
  %v2284 = vunpack.c.l.b16 %v87
  %v2285 = vunpack.c.h.b16 %v87
  %v2286 = vunpack.c.l.b16 %v88
  %v2287 = vunpack.c.h.b16 %v88
  %v2288 = vunpack.c.l.b16 %v89
  %v2289 = vunpack.c.h.b16 %v89
  %v2290 = vunpack.c.l.b16 %v90
  %v2291 = vunpack.c.h.b16 %v90
  %v2292 = vunpack.c.l.b16 %v91
  %v2293 = vunpack.c.h.b16 %v91
  %v2294 = vunpack.c.l.b16 %v92
  %v2295 = vunpack.c.h.b16 %v92
  %v2296 = vunpack.c.l.b16 %v93
  %v2297 = vunpack.c.h.b16 %v93
  %v2298 = vunpack.c.l.b16 %v94
  %v2299 = vunpack.c.h.b16 %v94
  %v2300 = vunpack.c.l.b16 %v95
  %v2301 = vunpack.c.h.b16 %v95
  %v2302 = vunpack.c.l.b16 %v96
  %v2303 = vunpack.c.h.b16 %v96
  %v2304 = vunpack.c.l.b16 %v97
  %v2305 = vunpack.c.h.b16 %v97
  %v2306 = vunpack.c.l.b16 %v98
  %v2307 = vunpack.c.h.b16 %v98
  %v2308 = vunpack.c.l.b16 %v99
  %v2309 = vunpack.c.h.b16 %v99
  %v2310 = vunpack.c.l.b16 %v100
  %v2311 = vunpack.c.h.b16 %v100
  %v2312 = vunpack.c.l.b16 %v101
  %v2313 = vunpack.c.h.b16 %v101
  %v2314 = vunpack.c.l.b16 %v102
  %v2315 = vunpack.c.h.b16 %v102
  %v2316 = vunpack.c.l.b16 %v103
  %v2317 = vunpack.c.h.b16 %v103
  %v2318 = vunpack.c.l.b16 %v104
  %v2319 = vunpack.c.h.b16 %v104
  %v2320 = vunpack.c.l.b16 %v105
  %v2321 = vunpack.c.h.b16 %v105
  %v2322 = vunpack.c.l.b16 %v106
  %v2323 = vunpack.c.h.b16 %v106
  %v2324 = vunpack.c.l.b16 %v107
  %v2325 = vunpack.c.h.b16 %v107
  %v2326 = vunpack.c.l.b16 %v108
  %v2327 = vunpack.c.h.b16 %v108
  %v2328 = vunpack.c.l.b16 %v109
  %v2329 = vunpack.c.h.b16 %v109
  %v2330 = vunpack.c.l.b16 %v110
  %v2331 = vunpack.c.h.b16 %v110
  %v2332 = vunpack.c.l.b16 %v111
  %v2333 = vunpack.c.h.b16 %v111
  %v2334 = vunpack.c.l.b16 %v112
  %v2335 = vunpack.c.h.b16 %v112
  %v2336 = vunpack.c.l.b16 %v113
  %v2337 = vunpack.c.h.b16 %v113
  %v2338 = vunpack.c.l.b16 %v114
  %v2339 = vunpack.c.h.b16 %v114
  %v2340 = vunpack.c.l.b16 %v115
  %v2341 = vunpack.c.h.b16 %v115
  %v2342 = vunpack.c.l.b16 %v116
  %v2343 = vunpack.c.h.b16 %v116
  %v2344 = vunpack.c.l.b16 %v117
  %v2345 = vunpack.c.h.b16 %v117
  %v2346 = vunpack.c.l.b16 %v118
  %v2347 = vunpack.c.h.b16 %v118
  %v2348 = vunpack.c.l.b16 %v119
  %v2349 = vunpack.c.h.b16 %v119
  %v2350 = vunpack.c.l.b16 %v120
  %v2351 = vunpack.c.h.b16 %v120
  %v2352 = vunpack.c.l.b16 %v121
  %v2353 = vunpack.c.h.b16 %v121
  %v2354 = vunpack.c.l.b16 %v122
  %v2355 = vunpack.c.h.b16 %v122
  %v2356 = vunpack.c.l.b16 %v123
  %v2357 = vunpack.c.h.b16 %v123
  %v2358 = vunpack.c.l.b16 %v124
  %v2359 = vunpack.c.h.b16 %v124
  %v2360 = vunpack.c.l.b16 %v125
  %v2361 = vunpack.c.h.b16 %v125
  %v2362 = vunpack.c.l.b16 %v126
  %v2363 = vunpack.c.h.b16 %v126
  %v2364 = vunpack.c.l.b16 %v127
  %v2365 = vunpack.c.h.b16 %v127
  %v2366 = vunpack.c.l.b16 %v128
  %v2367 = vunpack.c.h.b16 %v128
  %v2368 = vunpack.c.l.b16 %v129
  %v2369 = vunpack.c.h.b16 %v129
  %v2370 = vunpack.c.l.b16 %v130
  %v2371 = vunpack.c.h.b16 %v130
  %v2372 = vunpack.c.l.b16 %v131
  %v2373 = vunpack.c.h.b16 %v131
  %v2374 = vunpack.c.l.b16 %v132
  %v2375 = vunpack.c.h.b16 %v132
  %v2376 = vunpack.c.l.b16 %v133
  %v2377 = vunpack.c.h.b16 %v133
  %v2378 = vunpack.c.l.b16 %v134
  %v2379 = vunpack.c.h.b16 %v134
  %v2380 = vunpack.c.l.b16 %v135
  %v2381 = vunpack.c.h.b16 %v135
  %v2382 = vunpack.c.l.b16 %v136
  %v2383 = vunpack.c.h.b16 %v136
  %v2384 = vunpack.c.l.b16 %v137
  %v2385 = vunpack.c.h.b16 %v137
  %v2386 = vunpack.c.l.b16 %v138
  %v2387 = vunpack.c.h.b16 %v138
  %v2388 = vunpack.c.l.b16 %v139
  %v2389 = vunpack.c.h.b16 %v139
  %v2390 = vunpack.c.l.b16 %v140
  %v2391 = vunpack.c.h.b16 %v140
  %v2392 = vunpack.c.l.b16 %v141
  %v2393 = vunpack.c.h.b16 %v141
  %v2394 = vunpack.c.l.b16 %v142
  %v2395 = vunpack.c.h.b16 %v142
  %v2396 = vunpack.c.l.b16 %v143
  %v2397 = vunpack.c.h.b16 %v143
  %v2398 = vunpack.c.l.b16 %v144
  %v2399 = vunpack.c.h.b16 %v144
  %v2400 = vunpack.c.l.b16 %v145
  %v2401 = vunpack.c.h.b16 %v145
  %v2402 = vunpack.c.l.b16 %v146
  %v2403 = vunpack.c.h.b16 %v146
  %v2404 = vunpack.c.l.b16 %v147
  %v2405 = vunpack.c.h.b16 %v147
  %v2406 = vunpack.c.l.b16 %v148
  %v2407 = vunpack.c.h.b16 %v148
  %v2408 = vunpack.c.l.b16 %v149
  %v2409 = vunpack.c.h.b16 %v149
  %v2410 = vunpack.c.l.b16 %v150
  %v2411 = vunpack.c.h.b16 %v150
  %v2412 = vunpack.c.l.b16 %v151
  %v2413 = vunpack.c.h.b16 %v151
  %v2414 = vunpack.c.l.b16 %v152
  %v2415 = vunpack.c.h.b16 %v152
  %v2416 = vunpack.c.l.b16 %v153
  %v2417 = vunpack.c.h.b16 %v153
  %v2418 = vunpack.c.l.b16 %v154
  %v2419 = vunpack.c.h.b16 %v154
  %v2420 = vunpack.c.l.b16 %v155
  %v2421 = vunpack.c.h.b16 %v155
  %v2422 = vunpack.c.l.b16 %v156
  %v2423 = vunpack.c.h.b16 %v156
  %v2424 = vunpack.c.l.b16 %v157
  %v2425 = vunpack.c.h.b16 %v157
  %v2426 = vunpack.c.l.b16 %v158
  %v2427 = vunpack.c.h.b16 %v158
  %v2428 = vunpack.c.l.b16 %v159
  %v2429 = vunpack.c.h.b16 %v159
  %v2430 = vunpack.c.l.b16 %v160
  %v2431 = vunpack.c.h.b16 %v160
  %v2432 = vunpack.c.l.b16 %v161
  %v2433 = vunpack.c.h.b16 %v161
  %v2434 = vunpack.c.l.b16 %v162
  %v2435 = vunpack.c.h.b16 %v162
  %v2436 = vunpack.c.l.b16 %v163
  %v2437 = vunpack.c.h.b16 %v163
  %v2438 = vunpack.c.l.b16 %v164
  %v2439 = vunpack.c.h.b16 %v164
  %v2440 = vunpack.c.l.b16 %v165
  %v2441 = vunpack.c.h.b16 %v165
  %v2442 = vunpack.c.l.b16 %v166
  %v2443 = vunpack.c.h.b16 %v166
  %v2444 = vunpack.c.l.b16 %v167
  %v2445 = vunpack.c.h.b16 %v167
  %v2446 = vunpack.c.l.b16 %v168
  %v2447 = vunpack.c.h.b16 %v168
  %v2448 = vunpack.c.l.b16 %v169
  %v2449 = vunpack.c.h.b16 %v169
  %v2450 = vunpack.c.l.b16 %v170
  %v2451 = vunpack.c.h.b16 %v170
  %v2452 = vunpack.c.l.b16 %v171
  %v2453 = vunpack.c.h.b16 %v171
  %v2454 = vunpack.c.l.b16 %v172
  %v2455 = vunpack.c.h.b16 %v172
  %v2456 = vunpack.c.l.b16 %v173
  %v2457 = vunpack.c.h.b16 %v173
  %v2458 = vunpack.c.l.b16 %v174
  %v2459 = vunpack.c.h.b16 %v174
  %v2460 = vunpack.c.l.b16 %v175
  %v2461 = vunpack.c.h.b16 %v175
  %v2462 = vunpack.c.l.b16 %v176
  %v2463 = vunpack.c.h.b16 %v176
  %v2464 = vunpack.c.l.b16 %v177
  %v2465 = vunpack.c.h.b16 %v177
  %v2466 = vunpack.c.l.b16 %v178
  %v2467 = vunpack.c.h.b16 %v178
  %v2468 = vunpack.c.l.b16 %v179
  %v2469 = vunpack.c.h.b16 %v179
  %v2470 = vunpack.c.l.b16 %v180
  %v2471 = vunpack.c.h.b16 %v180
  %v2472 = vunpack.c.l.b16 %v181
  %v2473 = vunpack.c.h.b16 %v181
  %v2474 = vunpack.c.l.b16 %v182
  %v2475 = vunpack.c.h.b16 %v182
  %v2476 = vunpack.c.l.b16 %v183
  %v2477 = vunpack.c.h.b16 %v183
  %v2478 = vunpack.c.l.b16 %v184
  %v2479 = vunpack.c.h.b16 %v184
  %v2480 = vunpack.c.l.b16 %v185
  %v2481 = vunpack.c.h.b16 %v185
  %v2482 = vunpack.c.l.b16 %v186
  %v2483 = vunpack.c.h.b16 %v186
  %v2484 = vunpack.c.l.b16 %v187
  %v2485 = vunpack.c.h.b16 %v187
  %v2486 = vunpack.c.l.b16 %v188
  %v2487 = vunpack.c.h.b16 %v188
  %v2488 = vunpack.c.l.b16 %v189
  %v2489 = vunpack.c.h.b16 %v189
  %v2490 = vunpack.c.l.b16 %v190
  %v2491 = vunpack.c.h.b16 %v190
  %v2492 = vunpack.c.l.b16 %v191
  %v2493 = vunpack.c.h.b16 %v191
  %v2494 = vunpack.c.l.b16 %v192
  %v2495 = vunpack.c.h.b16 %v192
  %v2496 = vunpack.c.l.b16 %v193
  %v2497 = vunpack.c.h.b16 %v193
  %v2498 = vunpack.c.l.b16 %v194
  %v2499 = vunpack.c.h.b16 %v194
  %v2500 = vunpack.c.l.b16 %v195
  %v2501 = vunpack.c.h.b16 %v195
  %v2502 = vunpack.c.l.b16 %v196
  %v2503 = vunpack.c.h.b16 %v196
  %v2504 = vunpack.c.l.b16 %v197
  %v2505 = vunpack.c.h.b16 %v197
  %v2506 = vunpack.c.l.b16 %v198
  %v2507 = vunpack.c.h.b16 %v198
  %v2508 = vunpack.c.l.b16 %v199
  %v2509 = vunpack.c.h.b16 %v199
  %v2510 = vunpack.c.l.b16 %v200
  %v2511 = vunpack.c.h.b16 %v200
  %v2512 = vunpack.c.l.b16 %v201
  %v2513 = vunpack.c.h.b16 %v201
  %v2514 = vunpack.c.l.b16 %v202
  %v2515 = vunpack.c.h.b16 %v202
  %v2516 = vunpack.c.l.b16 %v203
  %v2517 = vunpack.c.h.b16 %v203
  %v2518 = vunpack.c.l.b16 %v204
  %v2519 = vunpack.c.h.b16 %v204
  %v2520 = vunpack.c.l.b16 %v205
  %v2521 = vunpack.c.h.b16 %v205
  %v2522 = vunpack.c.l.b16 %v206
  %v2523 = vunpack.c.h.b16 %v206
  %v2524 = vunpack.c.l.b16 %v207
  %v2525 = vunpack.c.h.b16 %v207
  %v2526 = vunpack.c.l.b16 %v208
  %v2527 = vunpack.c.h.b16 %v208
  %v2528 = vunpack.c.l.b16 %v209
  %v2529 = vunpack.c.h.b16 %v209
  %v2530 = vunpack.c.l.b16 %v210
  %v2531 = vunpack.c.h.b16 %v210
  %v2532 = vunpack.c.l.b16 %v211
  %v2533 = vunpack.c.h.b16 %v211
  %v2534 = vunpack.c.l.b16 %v212
  %v2535 = vunpack.c.h.b16 %v212
  %v2536 = vunpack.c.l.b16 %v213
  %v2537 = vunpack.c.h.b16 %v213
  %v2538 = vunpack.c.l.b16 %v214
  %v2539 = vunpack.c.h.b16 %v214
  %v2540 = vunpack.c.l.b16 %v215
  %v2541 = vunpack.c.h.b16 %v215
  %v2542 = vunpack.c.l.b16 %v216
  %v2543 = vunpack.c.h.b16 %v216
  %v2544 = vunpack.c.l.b16 %v217
  %v2545 = vunpack.c.h.b16 %v217
  %v2546 = vunpack.c.l.b16 %v218
  %v2547 = vunpack.c.h.b16 %v218
  %v2548 = vunpack.c.l.b16 %v219
  %v2549 = vunpack.c.h.b16 %v219
  %v2550 = vunpack.c.l.b16 %v220
  %v2551 = vunpack.c.h.b16 %v220
  %v2552 = vunpack.c.l.b16 %v221
  %v2553 = vunpack.c.h.b16 %v221
  %v2554 = vunpack.c.l.b16 %v222
  %v2555 = vunpack.c.h.b16 %v222
  %v2556 = vunpack.c.l.b16 %v223
  %v2557 = vunpack.c.h.b16 %v223
  %v2558 = vunpack.c.l.b16 %v224
  %v2559 = vunpack.c.h.b16 %v224
  %v2560 = vunpack.c.l.b16 %v225
  %v2561 = vunpack.c.h.b16 %v225
  %v2562 = vunpack.c.l.b16 %v226
  %v2563 = vunpack.c.h.b16 %v226
  %v2564 = vunpack.c.l.b16 %v227
  %v2565 = vunpack.c.h.b16 %v227
  %v2566 = vunpack.c.l.b16 %v228
  %v2567 = vunpack.c.h.b16 %v228
  %v2568 = vunpack.c.l.b16 %v229
  %v2569 = vunpack.c.h.b16 %v229
  %v2570 = vunpack.c.l.b16 %v230
  %v2571 = vunpack.c.h.b16 %v230
  %v2572 = vunpack.c.l.b16 %v231
  %v2573 = vunpack.c.h.b16 %v231
  %v2574 = vunpack.c.l.b16 %v232
  %v2575 = vunpack.c.h.b16 %v232
  %v2576 = vunpack.c.l.b16 %v233
  %v2577 = vunpack.c.h.b16 %v233
  %v2578 = vunpack.c.l.b16 %v234
  %v2579 = vunpack.c.h.b16 %v234
  %v2580 = vunpack.c.l.b16 %v235
  %v2581 = vunpack.c.h.b16 %v235
  %v2582 = vunpack.c.l.b16 %v236
  %v2583 = vunpack.c.h.b16 %v236
  %v2584 = vunpack.c.l.b16 %v237
  %v2585 = vunpack.c.h.b16 %v237
  %v2586 = vunpack.c.l.b16 %v238
  %v2587 = vunpack.c.h.b16 %v238
  %v2588 = vunpack.c.l.b16 %v239
  %v2589 = vunpack.c.h.b16 %v239
  %v2590 = vunpack.c.l.b16 %v240
  %v2591 = vunpack.c.h.b16 %v240
  %v2592 = vunpack.c.l.b16 %v241
  %v2593 = vunpack.c.h.b16 %v241
  %v2594 = vunpack.c.l.b16 %v242
  %v2595 = vunpack.c.h.b16 %v242
  %v2596 = vunpack.c.l.b16 %v243
  %v2597 = vunpack.c.h.b16 %v243
  %v2598 = vunpack.c.l.b16 %v244
  %v2599 = vunpack.c.h.b16 %v244
  %v2600 = vunpack.c.l.b16 %v245
  %v2601 = vunpack.c.h.b16 %v245
  %v2602 = vunpack.c.l.b16 %v246
  %v2603 = vunpack.c.h.b16 %v246
  %v2604 = vunpack.c.l.b16 %v247
  %v2605 = vunpack.c.h.b16 %v247
  %v2606 = vunpack.c.l.b16 %v248
  %v2607 = vunpack.c.h.b16 %v248
  %v2608 = vunpack.c.l.b16 %v249
  %v2609 = vunpack.c.h.b16 %v249
  %v2610 = vunpack.c.l.b16 %v250
  %v2611 = vunpack.c.h.b16 %v250
  %v2612 = vunpack.c.l.b16 %v251
  %v2613 = vunpack.c.h.b16 %v251
  %v2614 = vunpack.c.l.b16 %v252
  %v2615 = vunpack.c.h.b16 %v252
  %v2616 = vunpack.c.l.b16 %v253
  %v2617 = vunpack.c.h.b16 %v253
  %v2618 = vunpack.c.l.b16 %v254
  %v2619 = vunpack.c.h.b16 %v254
  %v2620 = vunpack.c.l.b16 %v255
  %v2621 = vunpack.c.h.b16 %v255
  %v2622 = vunpack.c.l.b16 %v256
  %v2623 = vunpack.c.h.b16 %v256
  %v2624 = vunpack.c.l.b16 %v257
  %v2625 = vunpack.c.h.b16 %v257
  %v2626 = vunpack.c.l.b16 %v258
  %v2627 = vunpack.c.h.b16 %v258
  %v2628 = vunpack.c.l.b16 %v259
  %v2629 = vunpack.c.h.b16 %v259
  %v2630 = vunpack.c.l.b16 %v260
  %v2631 = vunpack.c.h.b16 %v260
  %v2632 = vunpack.c.l.b16 %v261
  %v2633 = vunpack.c.h.b16 %v261
  %v2634 = vunpack.c.l.b16 %v262
  %v2635 = vunpack.c.h.b16 %v262
  %v2636 = vunpack.c.l.b16 %v263
  %v2637 = vunpack.c.h.b16 %v263
  %v2638 = vunpack.c.l.b16 %v264
  %v2639 = vunpack.c.h.b16 %v264
  %v2640 = vunpack.c.l.b16 %v265
  %v2641 = vunpack.c.h.b16 %v265
  %v2642 = vunpack.c.l.b16 %v266
  %v2643 = vunpack.c.h.b16 %v266
  %v2644 = vunpack.c.l.b16 %v267
  %v2645 = vunpack.c.h.b16 %v267
  %v2646 = vunpack.c.l.b16 %v268
  %v2647 = vunpack.c.h.b16 %v268
  %v2648 = vunpack.c.l.b16 %v269
  %v2649 = vunpack.c.h.b16 %v269
  %v2650 = vunpack.c.l.b16 %v270
  %v2651 = vunpack.c.h.b16 %v270
  %v2652 = vunpack.c.l.b16 %v271
  %v2653 = vunpack.c.h.b16 %v271
  %v2654 = vunpack.c.l.b16 %v272
  %v2655 = vunpack.c.h.b16 %v272
  %v2656 = vunpack.c.l.b16 %v273
  %v2657 = vunpack.c.h.b16 %v273
  %v2658 = vunpack.c.l.b16 %v274
  %v2659 = vunpack.c.h.b16 %v274
  %v2660 = vunpack.c.l.b16 %v275
  %v2661 = vunpack.c.h.b16 %v275
  %v2662 = vunpack.c.l.b16 %v276
  %v2663 = vunpack.c.h.b16 %v276
  %v2664 = vunpack.c.l.b16 %v277
  %v2665 = vunpack.c.h.b16 %v277
  %v2666 = vunpack.c.l.b16 %v278
  %v2667 = vunpack.c.h.b16 %v278
  %v2668 = vunpack.c.l.b16 %v279
  %v2669 = vunpack.c.h.b16 %v279
  %v2670 = vunpack.c.l.b16 %v280
  %v2671 = vunpack.c.h.b16 %v280
  %v2672 = vunpack.c.l.b16 %v281
  %v2673 = vunpack.c.h.b16 %v281
  %v2674 = vunpack.c.l.b16 %v282
  %v2675 = vunpack.c.h.b16 %v282
  %v2676 = vunpack.c.l.b16 %v283
  %v2677 = vunpack.c.h.b16 %v283
  %v2678 = vunpack.c.l.b16 %v284
  %v2679 = vunpack.c.h.b16 %v284
  %v2680 = vunpack.c.l.b16 %v285
  %v2681 = vunpack.c.h.b16 %v285
  %v2682 = vunpack.c.l.b16 %v286
  %v2683 = vunpack.c.h.b16 %v286
  %v2684 = vunpack.c.l.b16 %v287
  %v2685 = vunpack.c.h.b16 %v287
  %v2686 = vunpack.c.l.b16 %v288
  %v2687 = vunpack.c.h.b16 %v288
  %v2688 = vunpack.c.l.b16 %v289
  %v2689 = vunpack.c.h.b16 %v289
  %v2690 = vunpack.c.l.b16 %v290
  %v2691 = vunpack.c.h.b16 %v290
  %v2692 = vunpack.c.l.b16 %v291
  %v2693 = vunpack.c.h.b16 %v291
  %v2694 = vunpack.c.l.b16 %v292
  %v2695 = vunpack.c.h.b16 %v292
  %v2696 = vunpack.c.l.b16 %v293
  %v2697 = vunpack.c.h.b16 %v293
  %v2698 = vunpack.c.l.b16 %v294
  %v2699 = vunpack.c.h.b16 %v294
  %v2700 = vunpack.c.l.b16 %v295
  %v2701 = vunpack.c.h.b16 %v295
  %v2702 = vunpack.c.l.b16 %v296
  %v2703 = vunpack.c.h.b16 %v296
  %v2704 = vunpack.c.l.b16 %v297
  %v2705 = vunpack.c.h.b16 %v297
  %v2706 = vunpack.c.l.b16 %v298
  %v2707 = vunpack.c.h.b16 %v298
  %v2708 = vunpack.c.l.b16 %v299
  %v2709 = vunpack.c.h.b16 %v299
  %v2710 = vunpack.c.l.b16 %v300
  %v2711 = vunpack.c.h.b16 %v300
  %v2712 = vunpack.c.l.b16 %v301
  %v2713 = vunpack.c.h.b16 %v301
  %v2714 = vunpack.c.l.b16 %v302
  %v2715 = vunpack.c.h.b16 %v302
  %v2716 = vunpack.c.l.b16 %v303
  %v2717 = vunpack.c.h.b16 %v303
  %v2718 = vunpack.c.l.b16 %v304
  %v2719 = vunpack.c.h.b16 %v304
  %v2720 = vunpack.c.l.b16 %v305
  %v2721 = vunpack.c.h.b16 %v305
  %v2722 = vunpack.c.l.b16 %v306
  %v2723 = vunpack.c.h.b16 %v306
  %v2724 = vunpack.c.l.b16 %v307
  %v2725 = vunpack.c.h.b16 %v307
  %v2726 = vunpack.c.l.b16 %v308
  %v2727 = vunpack.c.h.b16 %v308
  %v2728 = vunpack.c.l.b16 %v309
  %v2729 = vunpack.c.h.b16 %v309
  %v2730 = vunpack.c.l.b16 %v310
  %v2731 = vunpack.c.h.b16 %v310
  %v2732 = vunpack.c.l.b16 %v311
  %v2733 = vunpack.c.h.b16 %v311
  %v2734 = vunpack.c.l.b16 %v312
  %v2735 = vunpack.c.h.b16 %v312
  %v2736 = vunpack.c.l.b16 %v313
  %v2737 = vunpack.c.h.b16 %v313
  %v2738 = vunpack.c.l.b16 %v314
  %v2739 = vunpack.c.h.b16 %v314
  %v2740 = vunpack.c.l.b16 %v315
  %v2741 = vunpack.c.h.b16 %v315
  %v2742 = vunpack.c.l.b16 %v316
  %v2743 = vunpack.c.h.b16 %v316
  %v2744 = vunpack.c.l.b16 %v317
  %v2745 = vunpack.c.h.b16 %v317
  %v2746 = vunpack.c.l.b16 %v318
  %v2747 = vunpack.c.h.b16 %v318
  %v2748 = vunpack.c.l.b16 %v319
  %v2749 = vunpack.c.h.b16 %v319
  %v2750 = vunpack.c.l.b16 %v320
  %v2751 = vunpack.c.h.b16 %v320
  %v2752 = vunpack.c.l.b16 %v321
  %v2753 = vunpack.c.h.b16 %v321
  %v2754 = vunpack.c.l.b16 %v322
  %v2755 = vunpack.c.h.b16 %v322
  %v2756 = vunpack.c.l.b16 %v323
  %v2757 = vunpack.c.h.b16 %v323
  %v2758 = vunpack.c.l.b16 %v324
  %v2759 = vunpack.c.h.b16 %v324
  %v2760 = vunpack.c.l.b16 %v325
  %v2761 = vunpack.c.h.b16 %v325
  %v2762 = vunpack.c.l.b16 %v326
  %v2763 = vunpack.c.h.b16 %v326
  %v2764 = vunpack.c.l.b16 %v327
  %v2765 = vunpack.c.h.b16 %v327
  %v2766 = vunpack.c.l.b16 %v328
  %v2767 = vunpack.c.h.b16 %v328
  %v2768 = vunpack.c.l.b16 %v329
  %v2769 = vunpack.c.h.b16 %v329
  %v2770 = vunpack.c.l.b16 %v330
  %v2771 = vunpack.c.h.b16 %v330
  %v2772 = vunpack.c.l.b16 %v331
  %v2773 = vunpack.c.h.b16 %v331
  %v2774 = vunpack.c.l.b16 %v332
  %v2775 = vunpack.c.h.b16 %v332
  %v2776 = vunpack.c.l.b16 %v333
  %v2777 = vunpack.c.h.b16 %v333
  %v2778 = vunpack.c.l.b16 %v334
  %v2779 = vunpack.c.h.b16 %v334
  %v2780 = vunpack.c.l.b16 %v335
  %v2781 = vunpack.c.h.b16 %v335
  %v2782 = vunpack.c.l.b16 %v336
  %v2783 = vunpack.c.h.b16 %v336
  %v2784 = vunpack.c.l.b16 %v337
  %v2785 = vunpack.c.h.b16 %v337
  %v2786 = vunpack.c.l.b16 %v338
  %v2787 = vunpack.c.h.b16 %v338
  %v2788 = vunpack.c.l.b16 %v339
  %v2789 = vunpack.c.h.b16 %v339
  %v2790 = vunpack.c.l.b16 %v340
  %v2791 = vunpack.c.h.b16 %v340
  %v2792 = vunpack.c.l.b16 %v341
  %v2793 = vunpack.c.h.b16 %v341
  %v2794 = vunpack.c.l.b16 %v342
  %v2795 = vunpack.c.h.b16 %v342
  %v2796 = vunpack.c.l.b16 %v343
  %v2797 = vunpack.c.h.b16 %v343
  %v2798 = vunpack.c.l.b16 %v344
  %v2799 = vunpack.c.h.b16 %v344
  %v2800 = vunpack.c.l.b16 %v345
  %v2801 = vunpack.c.h.b16 %v345
  %v2802 = vunpack.c.l.b16 %v346
  %v2803 = vunpack.c.h.b16 %v346
  %v2804 = vunpack.c.l.b16 %v347
  %v2805 = vunpack.c.h.b16 %v347
  %v2806 = vunpack.c.l.b16 %v348
  %v2807 = vunpack.c.h.b16 %v348
  %v2808 = vunpack.c.l.b16 %v349
  %v2809 = vunpack.c.h.b16 %v349
  %v2810 = vunpack.c.l.b16 %v350
  %v2811 = vunpack.c.h.b16 %v350
  %v2812 = vunpack.c.l.b16 %v351
  %v2813 = vunpack.c.h.b16 %v351
  %v2814 = vunpack.c.l.b16 %v352
  %v2815 = vunpack.c.h.b16 %v352
  %v2816 = vunpack.c.l.b16 %v353
  %v2817 = vunpack.c.h.b16 %v353
  %v2818 = vunpack.c.l.b16 %v354
  %v2819 = vunpack.c.h.b16 %v354
  %v2820 = vunpack.c.l.b16 %v355
  %v2821 = vunpack.c.h.b16 %v355
  %v2822 = vunpack.c.l.b16 %v356
  %v2823 = vunpack.c.h.b16 %v356
  %v2824 = vunpack.c.l.b16 %v357
  %v2825 = vunpack.c.h.b16 %v357
  %v2826 = vunpack.c.l.b16 %v358
  %v2827 = vunpack.c.h.b16 %v358
  %v2828 = vunpack.c.l.b16 %v359
  %v2829 = vunpack.c.h.b16 %v359
  %v2830 = vunpack.c.l.b16 %v360
  %v2831 = vunpack.c.h.b16 %v360
  %v2832 = vunpack.c.l.b16 %v361
  %v2833 = vunpack.c.h.b16 %v361
  %v2834 = vunpack.c.l.b16 %v362
  %v2835 = vunpack.c.h.b16 %v362
  %v2836 = vunpack.c.l.b16 %v363
  %v2837 = vunpack.c.h.b16 %v363
  %v2838 = vunpack.c.l.b16 %v364
  %v2839 = vunpack.c.h.b16 %v364
  %v2840 = vunpack.c.l.b16 %v365
  %v2841 = vunpack.c.h.b16 %v365
  %v2842 = vunpack.c.l.b16 %v366
  %v2843 = vunpack.c.h.b16 %v366
  %v2844 = vunpack.c.l.b16 %v367
  %v2845 = vunpack.c.h.b16 %v367
  %v2846 = vunpack.c.l.b16 %v368
  %v2847 = vunpack.c.h.b16 %v368
  %v2848 = vunpack.c.l.b16 %v369
  %v2849 = vunpack.c.h.b16 %v369
  %v2850 = vunpack.c.l.b16 %v370
  %v2851 = vunpack.c.h.b16 %v370
  %v2852 = vunpack.c.l.b16 %v371
  %v2853 = vunpack.c.h.b16 %v371
  %v2854 = vunpack.c.l.b16 %v372
  %v2855 = vunpack.c.h.b16 %v372
  %v2856 = vunpack.c.l.b16 %v373
  %v2857 = vunpack.c.h.b16 %v373
  %v2858 = vunpack.c.l.b16 %v374
  %v2859 = vunpack.c.h.b16 %v374
  %v2860 = vunpack.c.l.b16 %v375
  %v2861 = vunpack.c.h.b16 %v375
  %v2862 = vunpack.c.l.b16 %v376
  %v2863 = vunpack.c.h.b16 %v376
  %v2864 = vunpack.c.l.b16 %v377
  %v2865 = vunpack.c.h.b16 %v377
  %v2866 = vunpack.c.l.b16 %v378
  %v2867 = vunpack.c.h.b16 %v378
  %v2868 = vunpack.c.l.b16 %v379
  %v2869 = vunpack.c.h.b16 %v379
  %v2870 = vunpack.c.l.b16 %v380
  %v2871 = vunpack.c.h.b16 %v380
  %v2872 = vunpack.c.l.b16 %v381
  %v2873 = vunpack.c.h.b16 %v381
  %v2874 = vunpack.c.l.b16 %v382
  %v2875 = vunpack.c.h.b16 %v382
  %v2876 = vunpack.c.l.b16 %v383
  %v2877 = vunpack.c.h.b16 %v383
  %v2878 = vunpack.c.l.b16 %v384
  %v2879 = vunpack.c.h.b16 %v384
  %v2880 = vunpack.c.l.b16 %v385
  %v2881 = vunpack.c.h.b16 %v385
  %v2882 = vunpack.c.l.b16 %v386
  %v2883 = vunpack.c.h.b16 %v386
  %v2884 = vunpack.c.l.b16 %v387
  %v2885 = vunpack.c.h.b16 %v387
  %v2886 = vunpack.c.l.b16 %v388
  %v2887 = vunpack.c.h.b16 %v388
  %v2888 = vunpack.c.l.b16 %v389
  %v2889 = vunpack.c.h.b16 %v389
  %v2890 = vunpack.c.l.b16 %v390
  %v2891 = vunpack.c.h.b16 %v390
  %v2892 = vunpack.c.l.b16 %v391
  %v2893 = vunpack.c.h.b16 %v391
  %v2894 = vunpack.c.l.b16 %v392
  %v2895 = vunpack.c.h.b16 %v392
  %v2896 = vunpack.c.l.b16 %v393
  %v2897 = vunpack.c.h.b16 %v393
  %v2898 = vunpack.c.l.b16 %v394
  %v2899 = vunpack.c.h.b16 %v394
  %v2900 = vunpack.c.l.b16 %v395
  %v2901 = vunpack.c.h.b16 %v395
  %v2902 = vunpack.c.l.b16 %v396
  %v2903 = vunpack.c.h.b16 %v396
  %v2904 = vunpack.c.l.b16 %v397
  %v2905 = vunpack.c.h.b16 %v397
  %v2906 = vunpack.c.l.b16 %v398
  %v2907 = vunpack.c.h.b16 %v398
  %v2908 = vunpack.c.l.b16 %v399
  %v2909 = vunpack.c.h.b16 %v399
  %v2910 = vunpack.c.l.b16 %v400
  %v2911 = vunpack.c.h.b16 %v400
  %v2912 = vunpack.c.l.b16 %v401
  %v2913 = vunpack.c.h.b16 %v401
  %v2914 = vunpack.c.l.b16 %v402
  %v2915 = vunpack.c.h.b16 %v402
  %v2916 = vunpack.c.l.b16 %v403
  %v2917 = vunpack.c.h.b16 %v403
  %v2918 = vunpack.c.l.b16 %v404
  %v2919 = vunpack.c.h.b16 %v404
  %v2920 = vunpack.c.l.b16 %v405
  %v2921 = vunpack.c.h.b16 %v405
  %v2922 = vunpack.c.l.b16 %v406
  %v2923 = vunpack.c.h.b16 %v406
  %v2924 = vunpack.c.l.b16 %v407
  %v2925 = vunpack.c.h.b16 %v407
  %v2926 = vunpack.c.l.b16 %v408
  %v2927 = vunpack.c.h.b16 %v408
  %v2928 = vunpack.c.l.b16 %v409
  %v2929 = vunpack.c.h.b16 %v409
  %v2930 = vunpack.c.l.b16 %v410
  %v2931 = vunpack.c.h.b16 %v410
  %v2932 = vunpack.c.l.b16 %v411
  %v2933 = vunpack.c.h.b16 %v411
  %v2934 = vunpack.c.l.b16 %v412
  %v2935 = vunpack.c.h.b16 %v412
  %v2936 = vunpack.c.l.b16 %v413
  %v2937 = vunpack.c.h.b16 %v413
  %v2938 = vunpack.c.l.b16 %v414
  %v2939 = vunpack.c.h.b16 %v414
  %v2940 = vunpack.c.l.b16 %v415
  %v2941 = vunpack.c.h.b16 %v415
  %v2942 = vunpack.c.l.b16 %v416
  %v2943 = vunpack.c.h.b16 %v416
  %v2944 = vunpack.c.l.b16 %v417
  %v2945 = vunpack.c.h.b16 %v417
  %v2946 = vunpack.c.l.b16 %v418
  %v2947 = vunpack.c.h.b16 %v418
  %v2948 = vunpack.c.l.b16 %v419
  %v2949 = vunpack.c.h.b16 %v419
  %v2950 = vunpack.c.l.b16 %v420
  %v2951 = vunpack.c.h.b16 %v420
  %v2952 = vunpack.c.l.b16 %v421
  %v2953 = vunpack.c.h.b16 %v421
  %v2954 = vunpack.c.l.b16 %v422
  %v2955 = vunpack.c.h.b16 %v422
  %v2956 = vunpack.c.l.b16 %v423
  %v2957 = vunpack.c.h.b16 %v423
  %v2958 = vunpack.c.l.b16 %v424
  %v2959 = vunpack.c.h.b16 %v424
  %v2960 = vunpack.c.l.b16 %v425
  %v2961 = vunpack.c.h.b16 %v425
  %v2962 = vunpack.c.l.b16 %v426
  %v2963 = vunpack.c.h.b16 %v426
  %v2964 = vunpack.c.l.b16 %v427
  %v2965 = vunpack.c.h.b16 %v427
  %v2966 = vunpack.c.l.b16 %v428
  %v2967 = vunpack.c.h.b16 %v428
  %v2968 = vunpack.c.l.b16 %v429
  %v2969 = vunpack.c.h.b16 %v429
  %v2970 = vunpack.c.l.b16 %v430
  %v2971 = vunpack.c.h.b16 %v430
  %v2972 = vunpack.c.l.b16 %v431
  %v2973 = vunpack.c.h.b16 %v431
  %v2974 = vunpack.c.l.b16 %v432
  %v2975 = vunpack.c.h.b16 %v432
  %v2976 = vunpack.c.l.b16 %v433
  %v2977 = vunpack.c.h.b16 %v433
  %v2978 = vunpack.c.l.b16 %v434
  %v2979 = vunpack.c.h.b16 %v434
  %v2980 = vunpack.c.l.b16 %v435
  %v2981 = vunpack.c.h.b16 %v435
  %v2982 = vunpack.c.l.b16 %v436
  %v2983 = vunpack.c.h.b16 %v436
  %v2984 = vunpack.c.l.b16 %v437
  %v2985 = vunpack.c.h.b16 %v437
  %v2986 = vunpack.c.l.b16 %v438
  %v2987 = vunpack.c.h.b16 %v438
  %v2988 = vunpack.c.l.b16 %v439
  %v2989 = vunpack.c.h.b16 %v439
  %v2990 = vunpack.c.l.b16 %v440
  %v2991 = vunpack.c.h.b16 %v440
  %v2992 = vunpack.c.l.b16 %v441
  %v2993 = vunpack.c.h.b16 %v441
  %v2994 = vunpack.c.l.b16 %v442
  %v2995 = vunpack.c.h.b16 %v442
  %v2996 = vunpack.c.l.b16 %v443
  %v2997 = vunpack.c.h.b16 %v443
  %v2998 = vunpack.c.l.b16 %v444
  %v2999 = vunpack.c.h.b16 %v444
  %v3000 = vunpack.c.l.b16 %v445
  %v3001 = vunpack.c.h.b16 %v445
  %v3002 = vunpack.c.l.b16 %v446
  %v3003 = vunpack.c.h.b16 %v446
  %v3004 = vunpack.c.l.b16 %v447
  %v3005 = vunpack.c.h.b16 %v447
  %v3006 = vunpack.c.l.b16 %v448
  %v3007 = vunpack.c.h.b16 %v448
  %v3008 = vunpack.c.l.b16 %v449
  %v3009 = vunpack.c.h.b16 %v449
  %v3010 = vunpack.c.l.b16 %v450
  %v3011 = vunpack.c.h.b16 %v450
  %v3012 = vunpack.c.l.b16 %v451
  %v3013 = vunpack.c.h.b16 %v451
  %v3014 = vunpack.c.l.b16 %v452
  %v3015 = vunpack.c.h.b16 %v452
  %v3016 = vunpack.c.l.b16 %v453
  %v3017 = vunpack.c.h.b16 %v453
  %v3018 = vunpack.c.l.b16 %v454
  %v3019 = vunpack.c.h.b16 %v454
  %v3020 = vunpack.c.l.b16 %v455
  %v3021 = vunpack.c.h.b16 %v455
  %v3022 = vunpack.c.l.b16 %v456
  %v3023 = vunpack.c.h.b16 %v456
  %v3024 = vunpack.c.l.b16 %v457
  %v3025 = vunpack.c.h.b16 %v457
  %v3026 = vunpack.c.l.b16 %v458
  %v3027 = vunpack.c.h.b16 %v458
  %v3028 = vunpack.c.l.b16 %v459
  %v3029 = vunpack.c.h.b16 %v459
  %v3030 = vunpack.c.l.b16 %v460
  %v3031 = vunpack.c.h.b16 %v460
  %v3032 = vunpack.c.l.b16 %v461
  %v3033 = vunpack.c.h.b16 %v461
  %v3034 = vunpack.c.l.b16 %v462
  %v3035 = vunpack.c.h.b16 %v462
  %v3036 = vunpack.c.l.b16 %v463
  %v3037 = vunpack.c.h.b16 %v463
  %v3038 = vunpack.c.l.b16 %v464
  %v3039 = vunpack.c.h.b16 %v464
  %v3040 = vunpack.c.l.b16 %v465
  %v3041 = vunpack.c.h.b16 %v465
  %v3042 = vunpack.c.l.b16 %v466
  %v3043 = vunpack.c.h.b16 %v466
  %v3044 = vunpack.c.l.b16 %v467
  %v3045 = vunpack.c.h.b16 %v467
  %v3046 = vunpack.c.l.b16 %v468
  %v3047 = vunpack.c.h.b16 %v468
  %v3048 = vunpack.c.l.b16 %v469
  %v3049 = vunpack.c.h.b16 %v469
  %v3050 = vunpack.c.l.b16 %v470
  %v3051 = vunpack.c.h.b16 %v470
  %v3052 = vunpack.c.l.b16 %v471
  %v3053 = vunpack.c.h.b16 %v471
  %v3054 = vunpack.c.l.b16 %v472
  %v3055 = vunpack.c.h.b16 %v472
  %v3056 = vunpack.c.l.b16 %v473
  %v3057 = vunpack.c.h.b16 %v473
  %v3058 = vunpack.c.l.b16 %v474
  %v3059 = vunpack.c.h.b16 %v474
  %v3060 = vunpack.c.l.b16 %v475
  %v3061 = vunpack.c.h.b16 %v475
  %v3062 = vunpack.c.l.b16 %v476
  %v3063 = vunpack.c.h.b16 %v476
  %v3064 = vunpack.c.l.b16 %v477
  %v3065 = vunpack.c.h.b16 %v477
  %v3066 = vunpack.c.l.b16 %v478
  %v3067 = vunpack.c.h.b16 %v478
  %v3068 = vunpack.c.l.b16 %v479
  %v3069 = vunpack.c.h.b16 %v479
  %v3070 = vunpack.c.l.b16 %v480
  %v3071 = vunpack.c.h.b16 %v480
  %v3072 = vunpack.c.l.b16 %v481
  %v3073 = vunpack.c.h.b16 %v481
  %v3074 = vunpack.c.l.b16 %v482
  %v3075 = vunpack.c.h.b16 %v482
  %v3076 = vunpack.c.l.b16 %v483
  %v3077 = vunpack.c.h.b16 %v483
  %v3078 = vunpack.c.l.b16 %v484
  %v3079 = vunpack.c.h.b16 %v484
  %v3080 = vunpack.c.l.b16 %v485
  %v3081 = vunpack.c.h.b16 %v485
  %v3082 = vunpack.c.l.b16 %v486
  %v3083 = vunpack.c.h.b16 %v486
  %v3084 = vunpack.c.l.b16 %v487
  %v3085 = vunpack.c.h.b16 %v487
  %v3086 = vunpack.c.l.b16 %v488
  %v3087 = vunpack.c.h.b16 %v488
  %v3088 = vunpack.c.l.b16 %v489
  %v3089 = vunpack.c.h.b16 %v489
  %v3090 = vunpack.c.l.b16 %v490
  %v3091 = vunpack.c.h.b16 %v490
  %v3092 = vunpack.c.l.b16 %v491
  %v3093 = vunpack.c.h.b16 %v491
  %v3094 = vunpack.c.l.b16 %v492
  %v3095 = vunpack.c.h.b16 %v492
  %v3096 = vunpack.c.l.b16 %v493
  %v3097 = vunpack.c.h.b16 %v493
  %v3098 = vunpack.c.l.b16 %v494
  %v3099 = vunpack.c.h.b16 %v494
  %v3100 = vunpack.c.l.b16 %v495
  %v3101 = vunpack.c.h.b16 %v495
  %v3102 = vunpack.c.l.b16 %v496
  %v3103 = vunpack.c.h.b16 %v496
  %v3104 = vunpack.c.l.b16 %v497
  %v3105 = vunpack.c.h.b16 %v497
  %v3106 = vunpack.c.l.b16 %v498
  %v3107 = vunpack.c.h.b16 %v498
  %v3108 = vunpack.c.l.b16 %v499
  %v3109 = vunpack.c.h.b16 %v499
  %v3110 = vunpack.c.l.b16 %v500
  %v3111 = vunpack.c.h.b16 %v500
  %v3112 = vunpack.c.l.b16 %v501
  %v3113 = vunpack.c.h.b16 %v501
  %v3114 = vunpack.c.l.b16 %v502
  %v3115 = vunpack.c.h.b16 %v502
  %v3116 = vunpack.c.l.b16 %v503
  %v3117 = vunpack.c.h.b16 %v503
  %v3118 = vunpack.c.l.b16 %v504
  %v3119 = vunpack.c.h.b16 %v504
  %v3120 = vunpack.c.l.b16 %v505
  %v3121 = vunpack.c.h.b16 %v505
  %v3122 = vunpack.c.l.b16 %v506
  %v3123 = vunpack.c.h.b16 %v506
  %v3124 = vunpack.c.l.b16 %v507
  %v3125 = vunpack.c.h.b16 %v507
  %v3126 = vunpack.c.l.b16 %v508
  %v3127 = vunpack.c.h.b16 %v508
  %v3128 = vunpack.c.l.b16 %v509
  %v3129 = vunpack.c.h.b16 %v509
  %v3130 = vunpack.c.l.b16 %v510
  %v3131 = vunpack.c.h.b16 %v510
  %v3132 = vunpack.c.l.b16 %v511
  %v3133 = vunpack.c.h.b16 %v511
  %v3134 = vunpack.c.l.b16 %v512
  %v3135 = vunpack.c.h.b16 %v512
  %v3136 = vunpack.c.l.b16 %v513
  %v3137 = vunpack.c.h.b16 %v513
  %v3138 = vunpack.c.l.b16 %v514
  %v3139 = vunpack.c.h.b16 %v514
  %v3140 = vunpack.c.l.b16 %v515
  %v3141 = vunpack.c.h.b16 %v515
  %v3142 = vunpack.c.l.b16 %v516
  %v3143 = vunpack.c.h.b16 %v516
  %v3144 = vunpack.c.l.b16 %v517
  %v3145 = vunpack.c.h.b16 %v517
  %v3146 = vunpack.c.l.b16 %v518
  %v3147 = vunpack.c.h.b16 %v518
  %v3148 = vunpack.c.l.b16 %v519
  %v3149 = vunpack.c.h.b16 %v519
  %v3150 = vunpack.c.l.b16 %v520
  %v3151 = vunpack.c.h.b16 %v520
  %v3152 = vunpack.c.l.b16 %v521
  %v3153 = vunpack.c.h.b16 %v521
  %v3154 = vunpack.c.l.b16 %v522
  %v3155 = vunpack.c.h.b16 %v522
  %v3156 = vunpack.c.l.b16 %v523
  %v3157 = vunpack.c.h.b16 %v523
  %v3158 = vunpack.c.l.b16 %v524
  %v3159 = vunpack.c.h.b16 %v524
  %v3160 = vunpack.c.l.b16 %v525
  %v3161 = vunpack.c.h.b16 %v525
  %v3162 = vunpack.c.l.b16 %v526
  %v3163 = vunpack.c.h.b16 %v526
  %v3164 = vunpack.c.l.b16 %v527
  %v3165 = vunpack.c.h.b16 %v527
  %v3166 = vunpack.c.l.b16 %v528
  %v3167 = vunpack.c.h.b16 %v528
  %v3168 = vunpack.c.l.b16 %v529
  %v3169 = vunpack.c.h.b16 %v529
  %v3170 = vunpack.c.l.b16 %v530
  %v3171 = vunpack.c.h.b16 %v530
  %v3172 = vunpack.c.l.b16 %v531
  %v3173 = vunpack.c.h.b16 %v531
  %v3174 = vunpack.c.l.b16 %v532
  %v3175 = vunpack.c.h.b16 %v532
  %v3176 = vunpack.c.l.b16 %v533
  %v3177 = vunpack.c.h.b16 %v533
  %v3178 = vunpack.c.l.b16 %v534
  %v3179 = vunpack.c.h.b16 %v534
  %v3180 = vunpack.c.l.b16 %v535
  %v3181 = vunpack.c.h.b16 %v535
  %v3182 = vunpack.c.l.b16 %v536
  %v3183 = vunpack.c.h.b16 %v536
  %v3184 = vunpack.c.l.b16 %v537
  %v3185 = vunpack.c.h.b16 %v537
  %v3186 = vunpack.c.l.b16 %v538
  %v3187 = vunpack.c.h.b16 %v538
  %v3188 = vunpack.c.l.b16 %v539
  %v3189 = vunpack.c.h.b16 %v539
  %v3190 = vunpack.c.l.b16 %v540
  %v3191 = vunpack.c.h.b16 %v540
  %v3192 = vunpack.c.l.b16 %v541
  %v3193 = vunpack.c.h.b16 %v541
  %v3194 = vunpack.c.l.b16 %v542
  %v3195 = vunpack.c.h.b16 %v542
  %v3196 = vunpack.c.l.b16 %v543
  %v3197 = vunpack.c.h.b16 %v543
  %v3198 = vunpack.c.l.b16 %v544
  %v3199 = vunpack.c.h.b16 %v544
  %v3200 = vunpack.c.l.b16 %v545
  %v3201 = vunpack.c.h.b16 %v545
  %v3202 = vunpack.c.l.b16 %v546
  %v3203 = vunpack.c.h.b16 %v546
  %v3204 = vunpack.c.l.b16 %v547
  %v3205 = vunpack.c.h.b16 %v547
  %v3206 = vunpack.c.l.b16 %v548
  %v3207 = vunpack.c.h.b16 %v548
  %v3208 = vunpack.c.l.b16 %v549
  %v3209 = vunpack.c.h.b16 %v549
  %v3210 = vunpack.c.l.b16 %v550
  %v3211 = vunpack.c.h.b16 %v550
  %v3212 = vunpack.c.l.b16 %v551
  %v3213 = vunpack.c.h.b16 %v551
  %v3214 = vunpack.c.l.b16 %v552
  %v3215 = vunpack.c.h.b16 %v552
  %v3216 = vunpack.c.l.b16 %v553
  %v3217 = vunpack.c.h.b16 %v553
  %v3218 = vunpack.c.l.b16 %v554
  %v3219 = vunpack.c.h.b16 %v554
  %v3220 = vunpack.c.l.b16 %v555
  %v3221 = vunpack.c.h.b16 %v555
  %v3222 = vunpack.c.l.b16 %v556
  %v3223 = vunpack.c.h.b16 %v556
  %v3224 = vunpack.c.l.b16 %v557
  %v3225 = vunpack.c.h.b16 %v557
  %v3226 = vunpack.c.l.b16 %v558
  %v3227 = vunpack.c.h.b16 %v558
  %v3228 = vunpack.c.l.b16 %v559
  %v3229 = vunpack.c.h.b16 %v559
  %v3230 = vunpack.c.l.b16 %v560
  %v3231 = vunpack.c.h.b16 %v560
  %v3232 = vunpack.c.l.b16 %v561
  %v3233 = vunpack.c.h.b16 %v561
  %v3234 = vunpack.c.l.b16 %v562
  %v3235 = vunpack.c.h.b16 %v562
  %v3236 = vunpack.c.l.b16 %v563
  %v3237 = vunpack.c.h.b16 %v563
  %v3238 = vunpack.c.l.b16 %v564
  %v3239 = vunpack.c.h.b16 %v564
  %v3240 = vunpack.c.l.b16 %v565
  %v3241 = vunpack.c.h.b16 %v565
  %v3242 = vunpack.c.l.b16 %v566
  %v3243 = vunpack.c.h.b16 %v566
  %v3244 = vunpack.c.l.b16 %v567
  %v3245 = vunpack.c.h.b16 %v567
  %v3246 = vunpack.c.l.b16 %v568
  %v3247 = vunpack.c.h.b16 %v568
  %v3248 = vunpack.c.l.b16 %v569
  %v3249 = vunpack.c.h.b16 %v569
  %v3250 = vunpack.c.l.b16 %v570
  %v3251 = vunpack.c.h.b16 %v570
  %v3252 = vunpack.c.l.b16 %v571
  %v3253 = vunpack.c.h.b16 %v571
  %v3254 = vunpack.c.l.b16 %v572
  %v3255 = vunpack.c.h.b16 %v572
  %v3256 = vunpack.c.l.b16 %v573
  %v3257 = vunpack.c.h.b16 %v573
  %v3258 = vunpack.c.l.b16 %v574
  %v3259 = vunpack.c.h.b16 %v574
  %v3260 = vunpack.c.l.b16 %v575
  %v3261 = vunpack.c.h.b16 %v575
  %v3262 = vunpack.c.l.b16 %v576
  %v3263 = vunpack.c.h.b16 %v576
  %v3264 = vunpack.c.l.b16 %v577
  %v3265 = vunpack.c.h.b16 %v577
  %v3266 = vunpack.c.l.b16 %v578
  %v3267 = vunpack.c.h.b16 %v578
  %v3268 = vunpack.c.l.b16 %v579
  %v3269 = vunpack.c.h.b16 %v579
  %v3270 = vunpack.c.l.b16 %v580
  %v3271 = vunpack.c.h.b16 %v580
  %v3272 = vunpack.c.l.b16 %v581
  %v3273 = vunpack.c.h.b16 %v581
  %v3274 = vunpack.c.l.b16 %v582
  %v3275 = vunpack.c.h.b16 %v582
  %v3276 = vunpack.c.l.b16 %v583
  %v3277 = vunpack.c.h.b16 %v583
  %v3278 = vunpack.c.l.b16 %v584
  %v3279 = vunpack.c.h.b16 %v584
  %v3280 = vunpack.c.l.b16 %v585
  %v3281 = vunpack.c.h.b16 %v585
  %v3282 = vunpack.c.l.b16 %v586
  %v3283 = vunpack.c.h.b16 %v586
  %v3284 = vunpack.c.l.b16 %v587
  %v3285 = vunpack.c.h.b16 %v587
  %v3286 = vunpack.c.l.b16 %v588
  %v3287 = vunpack.c.h.b16 %v588
  %v3288 = vunpack.c.l.b16 %v589
  %v3289 = vunpack.c.h.b16 %v589
  %v3290 = vunpack.c.l.b16 %v590
  %v3291 = vunpack.c.h.b16 %v590
  %v3292 = vunpack.c.l.b16 %v591
  %v3293 = vunpack.c.h.b16 %v591
  %v3294 = vunpack.c.l.b16 %v592
  %v3295 = vunpack.c.h.b16 %v592
  %v3296 = vunpack.c.l.b16 %v593
  %v3297 = vunpack.c.h.b16 %v593
  %v3298 = vunpack.c.l.b16 %v594
  %v3299 = vunpack.c.h.b16 %v594
  %v3300 = vunpack.c.l.b16 %v595
  %v3301 = vunpack.c.h.b16 %v595
  %v3302 = vunpack.c.l.b16 %v596
  %v3303 = vunpack.c.h.b16 %v596
  %v3304 = vunpack.c.l.b16 %v597
  %v3305 = vunpack.c.h.b16 %v597
  %v3306 = vunpack.c.l.b16 %v598
  %v3307 = vunpack.c.h.b16 %v598
  %v3308 = vunpack.c.l.b16 %v599
  %v3309 = vunpack.c.h.b16 %v599
  %v3310 = vunpack.c.l.b16 %v600
  %v3311 = vunpack.c.h.b16 %v600
  %v3312 = vunpack.c.l.b16 %v601
  %v3313 = vunpack.c.h.b16 %v601
  %v3314 = vunpack.c.l.b16 %v602
  %v3315 = vunpack.c.h.b16 %v602
  %v3316 = vunpack.c.l.b16 %v603
  %v3317 = vunpack.c.h.b16 %v603
  %v3318 = vunpack.c.l.b16 %v604
  %v3319 = vunpack.c.h.b16 %v604
  %v3320 = vunpack.c.l.b16 %v605
  %v3321 = vunpack.c.h.b16 %v605
  %v3322 = vunpack.c.l.b16 %v606
  %v3323 = vunpack.c.h.b16 %v606
  %v3324 = vunpack.c.l.b16 %v607
  %v3325 = vunpack.c.h.b16 %v607
  %v3326 = vunpack.c.l.b16 %v608
  %v3327 = vunpack.c.h.b16 %v608
  %v3328 = vunpack.c.l.b16 %v609
  %v3329 = vunpack.c.h.b16 %v609
  %v3330 = vunpack.c.l.b16 %v610
  %v3331 = vunpack.c.h.b16 %v610
  %v3332 = vunpack.c.l.b16 %v611
  %v3333 = vunpack.c.h.b16 %v611
  %v3334 = vunpack.c.l.b16 %v612
  %v3335 = vunpack.c.h.b16 %v612
  %v3336 = vunpack.c.l.b16 %v613
  %v3337 = vunpack.c.h.b16 %v613
  %v3338 = vunpack.c.l.b16 %v614
  %v3339 = vunpack.c.h.b16 %v614
  %v3340 = vunpack.c.l.b16 %v615
  %v3341 = vunpack.c.h.b16 %v615
  %v3342 = vunpack.c.l.b16 %v616
  %v3343 = vunpack.c.h.b16 %v616
  %v3344 = vunpack.c.l.b16 %v617
  %v3345 = vunpack.c.h.b16 %v617
  %v3346 = vunpack.c.l.b16 %v618
  %v3347 = vunpack.c.h.b16 %v618
  %v3348 = vunpack.c.l.b16 %v619
  %v3349 = vunpack.c.h.b16 %v619
  %v3350 = vunpack.c.l.b16 %v620
  %v3351 = vunpack.c.h.b16 %v620
  %v3352 = vunpack.c.l.b16 %v621
  %v3353 = vunpack.c.h.b16 %v621
  %v3354 = vunpack.c.l.b16 %v622
  %v3355 = vunpack.c.h.b16 %v622
  %v3356 = vunpack.c.l.b16 %v623
  %v3357 = vunpack.c.h.b16 %v623
  %v3358 = vunpack.c.l.b16 %v624
  %v3359 = vunpack.c.h.b16 %v624
  %v3360 = vunpack.c.l.b16 %v625
  %v3361 = vunpack.c.h.b16 %v625
  %v3362 = vunpack.c.l.b16 %v626
  %v3363 = vunpack.c.h.b16 %v626
  %v3364 = vunpack.c.l.b16 %v627
  %v3365 = vunpack.c.h.b16 %v627
  %v3366 = vunpack.c.l.b16 %v628
  %v3367 = vunpack.c.h.b16 %v628
  %v3368 = vunpack.c.l.b16 %v629
  %v3369 = vunpack.c.h.b16 %v629
  %v3370 = vunpack.c.l.b16 %v630
  %v3371 = vunpack.c.h.b16 %v630
  %v3372 = vunpack.c.l.b16 %v631
  %v3373 = vunpack.c.h.b16 %v631
  %v3374 = vunpack.c.l.b16 %v632
  %v3375 = vunpack.c.h.b16 %v632
  %v3376 = vunpack.c.l.b16 %v633
  %v3377 = vunpack.c.h.b16 %v633
  %v3378 = vunpack.c.l.b16 %v634
  %v3379 = vunpack.c.h.b16 %v634
  %v3380 = vunpack.c.l.b16 %v635
  %v3381 = vunpack.c.h.b16 %v635
  %v3382 = vunpack.c.l.b16 %v636
  %v3383 = vunpack.c.h.b16 %v636
  %v3384 = vunpack.c.l.b16 %v637
  %v3385 = vunpack.c.h.b16 %v637
  %v3386 = vunpack.c.l.b16 %v638
  %v3387 = vunpack.c.h.b16 %v638
  %v3388 = vunpack.c.l.b16 %v639
  %v3389 = vunpack.c.h.b16 %v639
  %v3390 = vunpack.c.l.b16 %v640
  %v3391 = vunpack.c.h.b16 %v640
  %v3392 = vunpack.c.l.b16 %v641
  %v3393 = vunpack.c.h.b16 %v641
  %v3394 = vunpack.c.l.b16 %v642
  %v3395 = vunpack.c.h.b16 %v642
  %v3396 = vunpack.c.l.b16 %v643
  %v3397 = vunpack.c.h.b16 %v643
  %v3398 = vunpack.c.l.b16 %v644
  %v3399 = vunpack.c.h.b16 %v644
  %v3400 = vunpack.c.l.b16 %v645
  %v3401 = vunpack.c.h.b16 %v645
  %v3402 = vunpack.c.l.b16 %v646
  %v3403 = vunpack.c.h.b16 %v646
  %v3404 = vunpack.c.l.b16 %v647
  %v3405 = vunpack.c.h.b16 %v647
  %v3406 = vunpack.c.l.b16 %v648
  %v3407 = vunpack.c.h.b16 %v648
  %v3408 = vunpack.c.l.b16 %v649
  %v3409 = vunpack.c.h.b16 %v649
  %v3410 = vunpack.c.l.b16 %v650
  %v3411 = vunpack.c.h.b16 %v650
  %v3412 = vunpack.c.l.b16 %v651
  %v3413 = vunpack.c.h.b16 %v651
  %v3414 = vunpack.c.l.b16 %v652
  %v3415 = vunpack.c.h.b16 %v652
  %v3416 = vunpack.c.l.b16 %v653
  %v3417 = vunpack.c.h.b16 %v653
  %v3418 = vunpack.c.l.b16 %v654
  %v3419 = vunpack.c.h.b16 %v654
  %v3420 = vunpack.c.l.b16 %v655
  %v3421 = vunpack.c.h.b16 %v655
  %v3422 = vunpack.c.l.b16 %v656
  %v3423 = vunpack.c.h.b16 %v656
  %v3424 = vunpack.c.l.b16 %v657
  %v3425 = vunpack.c.h.b16 %v657
  %v3426 = vunpack.c.l.b16 %v658
  %v3427 = vunpack.c.h.b16 %v658
  %v3428 = vunpack.c.l.b16 %v659
  %v3429 = vunpack.c.h.b16 %v659
  %v3430 = vunpack.c.l.b16 %v660
  %v3431 = vunpack.c.h.b16 %v660
  %v3432 = vunpack.c.l.b16 %v661
  %v3433 = vunpack.c.h.b16 %v661
  %v3434 = vunpack.c.l.b16 %v662
  %v3435 = vunpack.c.h.b16 %v662
  %v3436 = vunpack.c.l.b16 %v663
  %v3437 = vunpack.c.h.b16 %v663
  %v3438 = vunpack.c.l.b16 %v664
  %v3439 = vunpack.c.h.b16 %v664
  %v3440 = vunpack.c.l.b16 %v665
  %v3441 = vunpack.c.h.b16 %v665
  %v3442 = vunpack.c.l.b16 %v666
  %v3443 = vunpack.c.h.b16 %v666
  %v3444 = vunpack.c.l.b16 %v667
  %v3445 = vunpack.c.h.b16 %v667
  %v3446 = vunpack.c.l.b16 %v668
  %v3447 = vunpack.c.h.b16 %v668
  %v3448 = vunpack.c.l.b16 %v669
  %v3449 = vunpack.c.h.b16 %v669
  %v3450 = vunpack.c.l.b16 %v670
  %v3451 = vunpack.c.h.b16 %v670
  %v3452 = vunpack.c.l.b16 %v671
  %v3453 = vunpack.c.h.b16 %v671
  %v3454 = vunpack.c.l.b16 %v672
  %v3455 = vunpack.c.h.b16 %v672
  %v3456 = vunpack.c.l.b16 %v673
  %v3457 = vunpack.c.h.b16 %v673
  %v3458 = vunpack.c.l.b16 %v674
  %v3459 = vunpack.c.h.b16 %v674
  %v3460 = vunpack.c.l.b16 %v675
  %v3461 = vunpack.c.h.b16 %v675
  %v3462 = vunpack.c.l.b16 %v676
  %v3463 = vunpack.c.h.b16 %v676
  %v3464 = vunpack.c.l.b16 %v677
  %v3465 = vunpack.c.h.b16 %v677
  %v3466 = vunpack.c.l.b16 %v678
  %v3467 = vunpack.c.h.b16 %v678
  %v3468 = vunpack.c.l.b16 %v679
  %v3469 = vunpack.c.h.b16 %v679
  %v3470 = vunpack.c.l.b16 %v680
  %v3471 = vunpack.c.h.b16 %v680
  %v3472 = vunpack.c.l.b16 %v681
  %v3473 = vunpack.c.h.b16 %v681
  %v3474 = vunpack.c.l.b16 %v682
  %v3475 = vunpack.c.h.b16 %v682
  %v3476 = vunpack.c.l.b16 %v683
  %v3477 = vunpack.c.h.b16 %v683
  %v3478 = vunpack.c.l.b16 %v684
  %v3479 = vunpack.c.h.b16 %v684
  %v3480 = vunpack.c.l.b16 %v685
  %v3481 = vunpack.c.h.b16 %v685
  %v3482 = vunpack.c.l.b16 %v686
  %v3483 = vunpack.c.h.b16 %v686
  %v3484 = vunpack.c.l.b16 %v687
  %v3485 = vunpack.c.h.b16 %v687
  %v3486 = vunpack.c.l.b16 %v688
  %v3487 = vunpack.c.h.b16 %v688
  %v3488 = vunpack.c.l.b16 %v689
  %v3489 = vunpack.c.h.b16 %v689
  %v3490 = vunpack.c.l.b16 %v690
  %v3491 = vunpack.c.h.b16 %v690
  %v3492 = vunpack.c.l.b16 %v691
  %v3493 = vunpack.c.h.b16 %v691
  %v3494 = vunpack.c.l.b16 %v692
  %v3495 = vunpack.c.h.b16 %v692
  %v3496 = vunpack.c.l.b16 %v693
  %v3497 = vunpack.c.h.b16 %v693
  %v3498 = vunpack.c.l.b16 %v694
  %v3499 = vunpack.c.h.b16 %v694
  %v3500 = vunpack.c.l.b16 %v695
  %v3501 = vunpack.c.h.b16 %v695
  %v3502 = vunpack.c.l.b16 %v696
  %v3503 = vunpack.c.h.b16 %v696
  %v3504 = vunpack.c.l.b16 %v697
  %v3505 = vunpack.c.h.b16 %v697
  %v3506 = vunpack.c.l.b16 %v698
  %v3507 = vunpack.c.h.b16 %v698
  %v3508 = vunpack.c.l.b16 %v699
  %v3509 = vunpack.c.h.b16 %v699
  %v3510 = vunpack.c.l.b16 %v700
  %v3511 = vunpack.c.h.b16 %v700
  %v3512 = vunpack.c.l.b16 %v701
  %v3513 = vunpack.c.h.b16 %v701
  %v3514 = vunpack.c.l.b16 %v702
  %v3515 = vunpack.c.h.b16 %v702
  %v3516 = vunpack.c.l.b16 %v703
  %v3517 = vunpack.c.h.b16 %v703
  %v3518 = vunpack.c.l.b16 %v704
  %v3519 = vunpack.c.h.b16 %v704
  %v3520 = vunpack.c.l.b16 %v705
  %v3521 = vunpack.c.h.b16 %v705
  %v3522 = vunpack.c.l.b16 %v706
  %v3523 = vunpack.c.h.b16 %v706
  %v3524 = vunpack.c.l.b16 %v707
  %v3525 = vunpack.c.h.b16 %v707
  %v3526 = vunpack.c.l.b16 %v708
  %v3527 = vunpack.c.h.b16 %v708
  %v3528 = vunpack.c.l.b16 %v709
  %v3529 = vunpack.c.h.b16 %v709
  %v3530 = vunpack.c.l.b16 %v710
  %v3531 = vunpack.c.h.b16 %v710
  %v3532 = vunpack.c.l.b16 %v711
  %v3533 = vunpack.c.h.b16 %v711
  %v3534 = vunpack.c.l.b16 %v712
  %v3535 = vunpack.c.h.b16 %v712
  %v3536 = vunpack.c.l.b16 %v713
  %v3537 = vunpack.c.h.b16 %v713
  %v3538 = vunpack.c.l.b16 %v714
  %v3539 = vunpack.c.h.b16 %v714
  %v3540 = vunpack.c.l.b16 %v715
  %v3541 = vunpack.c.h.b16 %v715
  %v3542 = vunpack.c.l.b16 %v716
  %v3543 = vunpack.c.h.b16 %v716
  %v3544 = vunpack.c.l.b16 %v717
  %v3545 = vunpack.c.h.b16 %v717
  %v3546 = vunpack.c.l.b16 %v718
  %v3547 = vunpack.c.h.b16 %v718
  %v3548 = vunpack.c.l.b16 %v719
  %v3549 = vunpack.c.h.b16 %v719
  %v3550 = vunpack.c.l.b16 %v720
  %v3551 = vunpack.c.h.b16 %v720
  %v3552 = vunpack.c.l.b16 %v721
  %v3553 = vunpack.c.h.b16 %v721
  %v3554 = vunpack.c.l.b16 %v722
  %v3555 = vunpack.c.h.b16 %v722
  %v3556 = vunpack.c.l.b16 %v723
  %v3557 = vunpack.c.h.b16 %v723
  %v3558 = vunpack.c.l.b16 %v724
  %v3559 = vunpack.c.h.b16 %v724
  %v3560 = vunpack.c.l.b16 %v725
  %v3561 = vunpack.c.h.b16 %v725
  %v3562 = vunpack.c.l.b16 %v726
  %v3563 = vunpack.c.h.b16 %v726
  %v3564 = vunpack.c.l.b16 %v727
  %v3565 = vunpack.c.h.b16 %v727
  %v3566 = vunpack.c.l.b16 %v728
  %v3567 = vunpack.c.h.b16 %v728
  %v3568 = vunpack.c.l.b16 %v729
  %v3569 = vunpack.c.h.b16 %v729
  %v3570 = vunpack.c.l.b16 %v730
  %v3571 = vunpack.c.h.b16 %v730
  %v3572 = vunpack.c.l.b16 %v731
  %v3573 = vunpack.c.h.b16 %v731
  %v3574 = vunpack.c.l.b16 %v732
  %v3575 = vunpack.c.h.b16 %v732
  %v3576 = vunpack.c.l.b16 %v733
  %v3577 = vunpack.c.h.b16 %v733
  %v3578 = vunpack.c.l.b16 %v734
  %v3579 = vunpack.c.h.b16 %v734
  %v3580 = vunpack.c.l.b16 %v735
  %v3581 = vunpack.c.h.b16 %v735
  %v3582 = vunpack.c.l.b16 %v736
  %v3583 = vunpack.c.h.b16 %v736
  %v3584 = vunpack.c.l.b16 %v737
  %v3585 = vunpack.c.h.b16 %v737
  %v3586 = vunpack.c.l.b16 %v738
  %v3587 = vunpack.c.h.b16 %v738
  %v3588 = vunpack.c.l.b16 %v739
  %v3589 = vunpack.c.h.b16 %v739
  %v3590 = vunpack.c.l.b16 %v740
  %v3591 = vunpack.c.h.b16 %v740
  %v3592 = vunpack.c.l.b16 %v741
  %v3593 = vunpack.c.h.b16 %v741
  %v3594 = vunpack.c.l.b16 %v742
  %v3595 = vunpack.c.h.b16 %v742
  %v3596 = vunpack.c.l.b16 %v743
  %v3597 = vunpack.c.h.b16 %v743
  %v3598 = vunpack.c.l.b16 %v744
  %v3599 = vunpack.c.h.b16 %v744
  %v3600 = vunpack.c.l.b16 %v745
  %v3601 = vunpack.c.h.b16 %v745
  %v3602 = vunpack.c.l.b16 %v746
  %v3603 = vunpack.c.h.b16 %v746
  %v3604 = vunpack.c.l.b16 %v747
  %v3605 = vunpack.c.h.b16 %v747
  %v3606 = vunpack.c.l.b16 %v748
  %v3607 = vunpack.c.h.b16 %v748
  %v3608 = vunpack.c.l.b16 %v749
  %v3609 = vunpack.c.h.b16 %v749
  %v3610 = vunpack.c.l.b16 %v750
  %v3611 = vunpack.c.h.b16 %v750
  %v3612 = vunpack.c.l.b16 %v751
  %v3613 = vunpack.c.h.b16 %v751
  %v3614 = vunpack.c.l.b16 %v752
  %v3615 = vunpack.c.h.b16 %v752
  %v3616 = vunpack.c.l.b16 %v753
  %v3617 = vunpack.c.h.b16 %v753
  %v3618 = vunpack.c.l.b16 %v754
  %v3619 = vunpack.c.h.b16 %v754
  %v3620 = vunpack.c.l.b16 %v755
  %v3621 = vunpack.c.h.b16 %v755
  %v3622 = vunpack.c.l.b16 %v756
  %v3623 = vunpack.c.h.b16 %v756
  %v3624 = vunpack.c.l.b16 %v757
  %v3625 = vunpack.c.h.b16 %v757
  %v3626 = vunpack.c.l.b16 %v758
  %v3627 = vunpack.c.h.b16 %v758
  %v3628 = vunpack.c.l.b16 %v759
  %v3629 = vunpack.c.h.b16 %v759
  %v3630 = vunpack.c.l.b16 %v760
  %v3631 = vunpack.c.h.b16 %v760
  %v3632 = vunpack.c.l.b16 %v761
  %v3633 = vunpack.c.h.b16 %v761
  %v3634 = vunpack.c.l.b16 %v762
  %v3635 = vunpack.c.h.b16 %v762
  %v3636 = vunpack.c.l.b16 %v763
  %v3637 = vunpack.c.h.b16 %v763
  %v3638 = vunpack.c.l.b16 %v764
  %v3639 = vunpack.c.h.b16 %v764
  %v3640 = vunpack.c.l.b16 %v765
  %v3641 = vunpack.c.h.b16 %v765
  %v3642 = vunpack.c.l.b16 %v766
  %v3643 = vunpack.c.h.b16 %v766
  %v3644 = vunpack.c.l.b16 %v767
  %v3645 = vunpack.c.h.b16 %v767
  %v3646 = vunpack.c.l.b16 %v768
  %v3647 = vunpack.c.h.b16 %v768
  %v3648 = vunpack.c.l.b16 %v769
  %v3649 = vunpack.c.h.b16 %v769
  %v3650 = vunpack.c.l.b16 %v770
  %v3651 = vunpack.c.h.b16 %v770
  %v3652 = vunpack.c.l.b16 %v771
  %v3653 = vunpack.c.h.b16 %v771
  %v3654 = vunpack.c.l.b16 %v772
  %v3655 = vunpack.c.h.b16 %v772
  %v3656 = vunpack.c.l.b16 %v773
  %v3657 = vunpack.c.h.b16 %v773
  %v3658 = vunpack.c.l.b16 %v774
  %v3659 = vunpack.c.h.b16 %v774
  %v3660 = vunpack.c.l.b16 %v775
  %v3661 = vunpack.c.h.b16 %v775
  %v3662 = vunpack.c.l.b16 %v776
  %v3663 = vunpack.c.h.b16 %v776
  %v3664 = vunpack.c.l.b16 %v777
  %v3665 = vunpack.c.h.b16 %v777
  %v3666 = vunpack.c.l.b16 %v778
  %v3667 = vunpack.c.h.b16 %v778
  %v3668 = vunpack.c.l.b16 %v779
  %v3669 = vunpack.c.h.b16 %v779
  %v3670 = vunpack.c.l.b16 %v780
  %v3671 = vunpack.c.h.b16 %v780
  %v3672 = vunpack.c.l.b16 %v781
  %v3673 = vunpack.c.h.b16 %v781
  %v3674 = vunpack.c.l.b16 %v782
  %v3675 = vunpack.c.h.b16 %v782
  %v3676 = vunpack.c.l.b16 %v783
  %v3677 = vunpack.c.h.b16 %v783
  %v3678 = vunpack.c.l.b16 %v784
  %v3679 = vunpack.c.h.b16 %v784
  %v3680 = vunpack.c.l.b16 %v785
  %v3681 = vunpack.c.h.b16 %v785
  %v3682 = vunpack.c.l.b16 %v786
  %v3683 = vunpack.c.h.b16 %v786
  %v3684 = vunpack.c.l.b16 %v787
  %v3685 = vunpack.c.h.b16 %v787
  %v3686 = vunpack.c.l.b16 %v788
  %v3687 = vunpack.c.h.b16 %v788
  %v3688 = vunpack.c.l.b16 %v789
  %v3689 = vunpack.c.h.b16 %v789
  %v3690 = vunpack.c.l.b16 %v790
  %v3691 = vunpack.c.h.b16 %v790
  %v3692 = vunpack.c.l.b16 %v791
  %v3693 = vunpack.c.h.b16 %v791
  %v3694 = vunpack.c.l.b16 %v792
  %v3695 = vunpack.c.h.b16 %v792
  %v3696 = vunpack.c.l.b16 %v793
  %v3697 = vunpack.c.h.b16 %v793
  %v3698 = vunpack.c.l.b16 %v794
  %v3699 = vunpack.c.h.b16 %v794
  %v3700 = vunpack.c.l.b16 %v795
  %v3701 = vunpack.c.h.b16 %v795
  %v3702 = vunpack.c.l.b16 %v796
  %v3703 = vunpack.c.h.b16 %v796
  %v3704 = vunpack.c.l.b16 %v797
  %v3705 = vunpack.c.h.b16 %v797
  %v3706 = vunpack.c.l.b16 %v798
  %v3707 = vunpack.c.h.b16 %v798
  %v3708 = vunpack.c.l.b16 %v799
  %v3709 = vunpack.c.h.b16 %v799
  %v3710 = vunpack.c.l.b16 %v800
  %v3711 = vunpack.c.h.b16 %v800
  %v3712 = vunpack.c.l.b16 %v801
  %v3713 = vunpack.c.h.b16 %v801
  %v3714 = vunpack.c.l.b16 %v802
  %v3715 = vunpack.c.h.b16 %v802
  %v3716 = vunpack.c.l.b16 %v803
  %v3717 = vunpack.c.h.b16 %v803
  %v3718 = vunpack.c.l.b16 %v804
  %v3719 = vunpack.c.h.b16 %v804
  %v3720 = vunpack.c.l.b16 %v805
  %v3721 = vunpack.c.h.b16 %v805
  %v3722 = vunpack.c.l.b16 %v806
  %v3723 = vunpack.c.h.b16 %v806
  %v3724 = vunpack.c.l.b16 %v807
  %v3725 = vunpack.c.h.b16 %v807
  %v3726 = vunpack.c.l.b16 %v808
  %v3727 = vunpack.c.h.b16 %v808
  %v3728 = vunpack.c.l.b16 %v809
  %v3729 = vunpack.c.h.b16 %v809
  %v3730 = vunpack.c.l.b16 %v810
  %v3731 = vunpack.c.h.b16 %v810
  %v3732 = vunpack.c.l.b16 %v811
  %v3733 = vunpack.c.h.b16 %v811
  %v3734 = vunpack.c.l.b16 %v812
  %v3735 = vunpack.c.h.b16 %v812
  %v3736 = vunpack.c.l.b16 %v813
  %v3737 = vunpack.c.h.b16 %v813
  %v3738 = vunpack.c.l.b16 %v814
  %v3739 = vunpack.c.h.b16 %v814
  %v3740 = vunpack.c.l.b16 %v815
  %v3741 = vunpack.c.h.b16 %v815
  %v3742 = vunpack.c.l.b16 %v816
  %v3743 = vunpack.c.h.b16 %v816
  %v3744 = vunpack.c.l.b16 %v817
  %v3745 = vunpack.c.h.b16 %v817
  %v3746 = vunpack.c.l.b16 %v818
  %v3747 = vunpack.c.h.b16 %v818
  %v3748 = vunpack.c.l.b16 %v819
  %v3749 = vunpack.c.h.b16 %v819
  %v3750 = vunpack.c.l.b16 %v820
  %v3751 = vunpack.c.h.b16 %v820
  %v3752 = vunpack.c.l.b16 %v821
  %v3753 = vunpack.c.h.b16 %v821
  %v3754 = vunpack.c.l.b16 %v822
  %v3755 = vunpack.c.h.b16 %v822
  %v3756 = vunpack.c.l.b16 %v823
  %v3757 = vunpack.c.h.b16 %v823
  %v3758 = vunpack.c.l.b16 %v824
  %v3759 = vunpack.c.h.b16 %v824
  %v3760 = vunpack.c.l.b16 %v825
  %v3761 = vunpack.c.h.b16 %v825
  %v3762 = vunpack.c.l.b16 %v826
  %v3763 = vunpack.c.h.b16 %v826
  %v3764 = vunpack.c.l.b16 %v827
  %v3765 = vunpack.c.h.b16 %v827
  %v3766 = vunpack.c.l.b16 %v828
  %v3767 = vunpack.c.h.b16 %v828
  %v3768 = vunpack.c.l.b16 %v829
  %v3769 = vunpack.c.h.b16 %v829
  %v3770 = vunpack.c.l.b16 %v830
  %v3771 = vunpack.c.h.b16 %v830
  %v3772 = vunpack.c.l.b16 %v831
  %v3773 = vunpack.c.h.b16 %v831
  %v3774 = vunpack.c.l.b16 %v832
  %v3775 = vunpack.c.h.b16 %v832
  %v3776 = vunpack.c.l.b16 %v833
  %v3777 = vunpack.c.h.b16 %v833
  %v3778 = vunpack.c.l.b16 %v834
  %v3779 = vunpack.c.h.b16 %v834
  %v3780 = vunpack.c.l.b16 %v835
  %v3781 = vunpack.c.h.b16 %v835
  %v3782 = vunpack.c.l.b16 %v836
  %v3783 = vunpack.c.h.b16 %v836
  %v3784 = vunpack.c.l.b16 %v837
  %v3785 = vunpack.c.h.b16 %v837
  %v3786 = vunpack.c.l.b16 %v838
  %v3787 = vunpack.c.h.b16 %v838
  %v3788 = vunpack.c.l.b16 %v839
  %v3789 = vunpack.c.h.b16 %v839
  %v3790 = vunpack.c.l.b16 %v840
  %v3791 = vunpack.c.h.b16 %v840
  %v3792 = vunpack.c.l.b16 %v841
  %v3793 = vunpack.c.h.b16 %v841
  %v3794 = vunpack.c.l.b16 %v842
  %v3795 = vunpack.c.h.b16 %v842
  %v3796 = vunpack.c.l.b16 %v843
  %v3797 = vunpack.c.h.b16 %v843
  %v3798 = vunpack.c.l.b16 %v844
  %v3799 = vunpack.c.h.b16 %v844
  %v3800 = vunpack.c.l.b16 %v845
  %v3801 = vunpack.c.h.b16 %v845
  %v3802 = vunpack.c.l.b16 %v846
  %v3803 = vunpack.c.h.b16 %v846
  %v3804 = vunpack.c.l.b16 %v847
  %v3805 = vunpack.c.h.b16 %v847
  %v3806 = vunpack.c.l.b16 %v848
  %v3807 = vunpack.c.h.b16 %v848
  %v3808 = vunpack.c.l.b16 %v849
  %v3809 = vunpack.c.h.b16 %v849
  %v3810 = vunpack.c.l.b16 %v850
  %v3811 = vunpack.c.h.b16 %v850
  %v3812 = vunpack.c.l.b16 %v851
  %v3813 = vunpack.c.h.b16 %v851
  %v3814 = vunpack.c.l.b16 %v852
  %v3815 = vunpack.c.h.b16 %v852
  %v3816 = vunpack.c.l.b16 %v853
  %v3817 = vunpack.c.h.b16 %v853
  %v3818 = vunpack.c.l.b16 %v854
  %v3819 = vunpack.c.h.b16 %v854
  %v3820 = vunpack.c.l.b16 %v855
  %v3821 = vunpack.c.h.b16 %v855
  %v3822 = vunpack.c.l.b16 %v856
  %v3823 = vunpack.c.h.b16 %v856
  %v3824 = vunpack.c.l.b16 %v857
  %v3825 = vunpack.c.h.b16 %v857
  %v3826 = vunpack.c.l.b16 %v858
  %v3827 = vunpack.c.h.b16 %v858
  %v3828 = vunpack.c.l.b16 %v859
  %v3829 = vunpack.c.h.b16 %v859
  %v3830 = vunpack.c.l.b16 %v860
  %v3831 = vunpack.c.h.b16 %v860
  %v3832 = vunpack.c.l.b16 %v861
  %v3833 = vunpack.c.h.b16 %v861
  %v3834 = vunpack.c.l.b16 %v862
  %v3835 = vunpack.c.h.b16 %v862
  %v3836 = vunpack.c.l.b16 %v863
  %v3837 = vunpack.c.h.b16 %v863
  %v3838 = vunpack.c.l.b16 %v864
  %v3839 = vunpack.c.h.b16 %v864
  %v3840 = vunpack.c.l.b16 %v865
  %v3841 = vunpack.c.h.b16 %v865
  %v3842 = vunpack.c.l.b16 %v866
  %v3843 = vunpack.c.h.b16 %v866
  %v3844 = vunpack.c.l.b16 %v867
  %v3845 = vunpack.c.h.b16 %v867
  %v3846 = vunpack.c.l.b16 %v868
  %v3847 = vunpack.c.h.b16 %v868
  %v3848 = vunpack.c.l.b16 %v869
  %v3849 = vunpack.c.h.b16 %v869
  %v3850 = vunpack.c.l.b16 %v870
  %v3851 = vunpack.c.h.b16 %v870
  %v3852 = vunpack.c.l.b16 %v871
  %v3853 = vunpack.c.h.b16 %v871
  %v3854 = vunpack.c.l.b16 %v872
  %v3855 = vunpack.c.h.b16 %v872
  %v3856 = vunpack.c.l.b16 %v873
  %v3857 = vunpack.c.h.b16 %v873
  %v3858 = vunpack.c.l.b16 %v874
  %v3859 = vunpack.c.h.b16 %v874
  %v3860 = vunpack.c.l.b16 %v875
  %v3861 = vunpack.c.h.b16 %v875
  %v3862 = vunpack.c.l.b16 %v876
  %v3863 = vunpack.c.h.b16 %v876
  %v3864 = vunpack.c.l.b16 %v877
  %v3865 = vunpack.c.h.b16 %v877
  %v3866 = vunpack.c.l.b16 %v878
  %v3867 = vunpack.c.h.b16 %v878
  %v3868 = vunpack.c.l.b16 %v879
  %v3869 = vunpack.c.h.b16 %v879
  %v3870 = vunpack.c.l.b16 %v880
  %v3871 = vunpack.c.h.b16 %v880
  %v3872 = vunpack.c.l.b16 %v881
  %v3873 = vunpack.c.h.b16 %v881
  %v3874 = vunpack.c.l.b16 %v882
  %v3875 = vunpack.c.h.b16 %v882
  %v3876 = vunpack.c.l.b16 %v883
  %v3877 = vunpack.c.h.b16 %v883
  %v3878 = vunpack.c.l.b16 %v884
  %v3879 = vunpack.c.h.b16 %v884
  %v3880 = vunpack.c.l.b16 %v885
  %v3881 = vunpack.c.h.b16 %v885
  %v3882 = vunpack.c.l.b16 %v886
  %v3883 = vunpack.c.h.b16 %v886
  %v3884 = vunpack.c.l.b16 %v887
  %v3885 = vunpack.c.h.b16 %v887
  %v3886 = vunpack.c.l.b16 %v888
  %v3887 = vunpack.c.h.b16 %v888
  %v3888 = vunpack.c.l.b16 %v889
  %v3889 = vunpack.c.h.b16 %v889
  %v3890 = vunpack.c.l.b16 %v890
  %v3891 = vunpack.c.h.b16 %v890
  %v3892 = vunpack.c.l.b16 %v891
  %v3893 = vunpack.c.h.b16 %v891
  %v3894 = vunpack.c.l.b16 %v892
  %v3895 = vunpack.c.h.b16 %v892
  %v3896 = vunpack.c.l.b16 %v893
  %v3897 = vunpack.c.h.b16 %v893
  %v3898 = vunpack.c.l.b16 %v894
  %v3899 = vunpack.c.h.b16 %v894
  %v3900 = vunpack.c.l.b16 %v895
  %v3901 = vunpack.c.h.b16 %v895
  %v3902 = vunpack.c.l.b16 %v896
  %v3903 = vunpack.c.h.b16 %v896
  %v3904 = vunpack.c.l.b16 %v897
  %v3905 = vunpack.c.h.b16 %v897
  %v3906 = vunpack.c.l.b16 %v898
  %v3907 = vunpack.c.h.b16 %v898
  %v3908 = vunpack.c.l.b16 %v899
  %v3909 = vunpack.c.h.b16 %v899
  %v3910 = vunpack.c.l.b16 %v900
  %v3911 = vunpack.c.h.b16 %v900
  %v3912 = vunpack.c.l.b16 %v901
  %v3913 = vunpack.c.h.b16 %v901
  %v3914 = vunpack.c.l.b16 %v902
  %v3915 = vunpack.c.h.b16 %v902
  %v3916 = vunpack.c.l.b16 %v903
  %v3917 = vunpack.c.h.b16 %v903
  %v3918 = vunpack.c.l.b16 %v904
  %v3919 = vunpack.c.h.b16 %v904
  %v3920 = vunpack.c.l.b16 %v905
  %v3921 = vunpack.c.h.b16 %v905
  %v3922 = vunpack.c.l.b16 %v906
  %v3923 = vunpack.c.h.b16 %v906
  %v3924 = vunpack.c.l.b16 %v907
  %v3925 = vunpack.c.h.b16 %v907
  %v3926 = vunpack.c.l.b16 %v908
  %v3927 = vunpack.c.h.b16 %v908
  %v3928 = vunpack.c.l.b16 %v909
  %v3929 = vunpack.c.h.b16 %v909
  %v3930 = vunpack.c.l.b16 %v910
  %v3931 = vunpack.c.h.b16 %v910
  %v3932 = vunpack.c.l.b16 %v911
  %v3933 = vunpack.c.h.b16 %v911
  %v3934 = vunpack.c.l.b16 %v912
  %v3935 = vunpack.c.h.b16 %v912
  %v3936 = vunpack.c.l.b16 %v913
  %v3937 = vunpack.c.h.b16 %v913
  %v3938 = vunpack.c.l.b16 %v914
  %v3939 = vunpack.c.h.b16 %v914
  %v3940 = vunpack.c.l.b16 %v915
  %v3941 = vunpack.c.h.b16 %v915
  %v3942 = vunpack.c.l.b16 %v916
  %v3943 = vunpack.c.h.b16 %v916
  %v3944 = vunpack.c.l.b16 %v917
  %v3945 = vunpack.c.h.b16 %v917
  %v3946 = vunpack.c.l.b16 %v918
  %v3947 = vunpack.c.h.b16 %v918
  %v3948 = vunpack.c.l.b16 %v919
  %v3949 = vunpack.c.h.b16 %v919
  %v3950 = vunpack.c.l.b16 %v920
  %v3951 = vunpack.c.h.b16 %v920
  %v3952 = vunpack.c.l.b16 %v921
  %v3953 = vunpack.c.h.b16 %v921
  %v3954 = vunpack.c.l.b16 %v922
  %v3955 = vunpack.c.h.b16 %v922
  %v3956 = vunpack.c.l.b16 %v923
  %v3957 = vunpack.c.h.b16 %v923
  %v3958 = vunpack.c.l.b16 %v924
  %v3959 = vunpack.c.h.b16 %v924
  %v3960 = vunpack.c.l.b16 %v925
  %v3961 = vunpack.c.h.b16 %v925
  %v3962 = vunpack.c.l.b16 %v926
  %v3963 = vunpack.c.h.b16 %v926
  %v3964 = vunpack.c.l.b16 %v927
  %v3965 = vunpack.c.h.b16 %v927
  %v3966 = vunpack.c.l.b16 %v928
  %v3967 = vunpack.c.h.b16 %v928
  %v3968 = vunpack.c.l.b16 %v929
  %v3969 = vunpack.c.h.b16 %v929
  %v3970 = vunpack.c.l.b16 %v930
  %v3971 = vunpack.c.h.b16 %v930
  %v3972 = vunpack.c.l.b16 %v931
  %v3973 = vunpack.c.h.b16 %v931
  %v3974 = vunpack.c.l.b16 %v932
  %v3975 = vunpack.c.h.b16 %v932
  %v3976 = vunpack.c.l.b16 %v933
  %v3977 = vunpack.c.h.b16 %v933
  %v3978 = vunpack.c.l.b16 %v934
  %v3979 = vunpack.c.h.b16 %v934
  %v3980 = vunpack.c.l.b16 %v935
  %v3981 = vunpack.c.h.b16 %v935
  %v3982 = vunpack.c.l.b16 %v936
  %v3983 = vunpack.c.h.b16 %v936
  %v3984 = vunpack.c.l.b16 %v937
  %v3985 = vunpack.c.h.b16 %v937
  %v3986 = vunpack.c.l.b16 %v938
  %v3987 = vunpack.c.h.b16 %v938
  %v3988 = vunpack.c.l.b16 %v939
  %v3989 = vunpack.c.h.b16 %v939
  %v3990 = vunpack.c.l.b16 %v940
  %v3991 = vunpack.c.h.b16 %v940
  %v3992 = vunpack.c.l.b16 %v941
  %v3993 = vunpack.c.h.b16 %v941
  %v3994 = vunpack.c.l.b16 %v942
  %v3995 = vunpack.c.h.b16 %v942
  %v3996 = vunpack.c.l.b16 %v943
  %v3997 = vunpack.c.h.b16 %v943
  %v3998 = vunpack.c.l.b16 %v944
  %v3999 = vunpack.c.h.b16 %v944
  %v4000 = vunpack.c.l.b16 %v945
  %v4001 = vunpack.c.h.b16 %v945
  %v4002 = vunpack.c.l.b16 %v946
  %v4003 = vunpack.c.h.b16 %v946
  %v4004 = vunpack.c.l.b16 %v947
  %v4005 = vunpack.c.h.b16 %v947
  %v4006 = vunpack.c.l.b16 %v948
  %v4007 = vunpack.c.h.b16 %v948
  %v4008 = vunpack.c.l.b16 %v949
  %v4009 = vunpack.c.h.b16 %v949
  %v4010 = vunpack.c.l.b16 %v950
  %v4011 = vunpack.c.h.b16 %v950
  %v4012 = vunpack.c.l.b16 %v951
  %v4013 = vunpack.c.h.b16 %v951
  %v4014 = vunpack.c.l.b16 %v952
  %v4015 = vunpack.c.h.b16 %v952
  %v4016 = vunpack.c.l.b16 %v953
  %v4017 = vunpack.c.h.b16 %v953
  %v4018 = vunpack.c.l.b16 %v954
  %v4019 = vunpack.c.h.b16 %v954
  %v4020 = vunpack.c.l.b16 %v955
  %v4021 = vunpack.c.h.b16 %v955
  %v4022 = vunpack.c.l.b16 %v956
  %v4023 = vunpack.c.h.b16 %v956
  %v4024 = vunpack.c.l.b16 %v957
  %v4025 = vunpack.c.h.b16 %v957
  %v4026 = vunpack.c.l.b16 %v958
  %v4027 = vunpack.c.h.b16 %v958
  %v4028 = vunpack.c.l.b16 %v959
  %v4029 = vunpack.c.h.b16 %v959
  %v4030 = vunpack.c.l.b16 %v960
  %v4031 = vunpack.c.h.b16 %v960
  %v4032 = vunpack.c.l.b16 %v961
  %v4033 = vunpack.c.h.b16 %v961
  %v4034 = vunpack.c.l.b16 %v962
  %v4035 = vunpack.c.h.b16 %v962
  %v4036 = vunpack.c.l.b16 %v963
  %v4037 = vunpack.c.h.b16 %v963
  %v4038 = vunpack.c.l.b16 %v964
  %v4039 = vunpack.c.h.b16 %v964
  %v4040 = vunpack.c.l.b16 %v965
  %v4041 = vunpack.c.h.b16 %v965
  %v4042 = vunpack.c.l.b16 %v966
  %v4043 = vunpack.c.h.b16 %v966
  %v4044 = vunpack.c.l.b16 %v967
  %v4045 = vunpack.c.h.b16 %v967
  %v4046 = vunpack.c.l.b16 %v968
  %v4047 = vunpack.c.h.b16 %v968
  %v4048 = vunpack.c.l.b16 %v969
  %v4049 = vunpack.c.h.b16 %v969
  %v4050 = vunpack.c.l.b16 %v970
  %v4051 = vunpack.c.h.b16 %v970
  %v4052 = vunpack.c.l.b16 %v971
  %v4053 = vunpack.c.h.b16 %v971
  %v4054 = vunpack.c.l.b16 %v972
  %v4055 = vunpack.c.h.b16 %v972
  %v4056 = vunpack.c.l.b16 %v973
  %v4057 = vunpack.c.h.b16 %v973
  %v4058 = vunpack.c.l.b16 %v974
  %v4059 = vunpack.c.h.b16 %v974
  %v4060 = vunpack.c.l.b16 %v975
  %v4061 = vunpack.c.h.b16 %v975
  %v4062 = vunpack.c.l.b16 %v976
  %v4063 = vunpack.c.h.b16 %v976
  %v4064 = vunpack.c.l.b16 %v977
  %v4065 = vunpack.c.h.b16 %v977
  %v4066 = vunpack.c.l.b16 %v978
  %v4067 = vunpack.c.h.b16 %v978
  %v4068 = vunpack.c.l.b16 %v979
  %v4069 = vunpack.c.h.b16 %v979
  %v4070 = vunpack.c.l.b16 %v980
  %v4071 = vunpack.c.h.b16 %v980
  %v4072 = vunpack.c.l.b16 %v981
  %v4073 = vunpack.c.h.b16 %v981
  %v4074 = vunpack.c.l.b16 %v982
  %v4075 = vunpack.c.h.b16 %v982
  %v4076 = vunpack.c.l.b16 %v983
  %v4077 = vunpack.c.h.b16 %v983
  %v4078 = vunpack.c.l.b16 %v984
  %v4079 = vunpack.c.h.b16 %v984
  %v4080 = vunpack.c.l.b16 %v985
  %v4081 = vunpack.c.h.b16 %v985
  %v4082 = vunpack.c.l.b16 %v986
  %v4083 = vunpack.c.h.b16 %v986
  %v4084 = vunpack.c.l.b16 %v987
  %v4085 = vunpack.c.h.b16 %v987
  %v4086 = vunpack.c.l.b16 %v988
  %v4087 = vunpack.c.h.b16 %v988
  %v4088 = vunpack.c.l.b16 %v989
  %v4089 = vunpack.c.h.b16 %v989
  %v4090 = vunpack.c.l.b16 %v990
  %v4091 = vunpack.c.h.b16 %v990
  %v4092 = vunpack.c.l.b16 %v991
  %v4093 = vunpack.c.h.b16 %v991
  %v4094 = vunpack.c.l.b16 %v992
  %v4095 = vunpack.c.h.b16 %v992
  %v4096 = vunpack.c.l.b16 %v993
  %v4097 = vunpack.c.h.b16 %v993
  %v4098 = vunpack.c.l.b16 %v994
  %v4099 = vunpack.c.h.b16 %v994
  %v4100 = vunpack.c.l.b16 %v995
  %v4101 = vunpack.c.h.b16 %v995
  %v4102 = vunpack.c.l.b16 %v996
  %v4103 = vunpack.c.h.b16 %v996
  %v4104 = vunpack.c.l.b16 %v997
  %v4105 = vunpack.c.h.b16 %v997
  %v4106 = vunpack.c.l.b16 %v998
  %v4107 = vunpack.c.h.b16 %v998
  %v4108 = vunpack.c.l.b16 %v999
  %v4109 = vunpack.c.h.b16 %v999
  %v4110 = vunpack.c.l.b16 %v1000
  %v4111 = vunpack.c.h.b16 %v1000
  %v4112 = vunpack.c.l.b16 %v1001
  %v4113 = vunpack.c.h.b16 %v1001
  %v4114 = vunpack.c.l.b16 %v1002
  %v4115 = vunpack.c.h.b16 %v1002
  %v4116 = vunpack.c.l.b16 %v1003
  %v4117 = vunpack.c.h.b16 %v1003
  %v4118 = vunpack.c.l.b16 %v1004
  %v4119 = vunpack.c.h.b16 %v1004
  %v4120 = vunpack.c.l.b16 %v1005
  %v4121 = vunpack.c.h.b16 %v1005
  %v4122 = vunpack.c.l.b16 %v1006
  %v4123 = vunpack.c.h.b16 %v1006
  %v4124 = vunpack.c.l.b16 %v1007
  %v4125 = vunpack.c.h.b16 %v1007
  %v4126 = vunpack.c.l.b16 %v1008
  %v4127 = vunpack.c.h.b16 %v1008
  %v4128 = vunpack.c.l.b16 %v1009
  %v4129 = vunpack.c.h.b16 %v1009
  %v4130 = vunpack.c.l.b16 %v1010
  %v4131 = vunpack.c.h.b16 %v1010
  %v4132 = vunpack.c.l.b16 %v1011
  %v4133 = vunpack.c.h.b16 %v1011
  %v4134 = vunpack.c.l.b16 %v1012
  %v4135 = vunpack.c.h.b16 %v1012
  %v4136 = vunpack.c.l.b16 %v1013
  %v4137 = vunpack.c.h.b16 %v1013
  %v4138 = vunpack.c.l.b16 %v1014
  %v4139 = vunpack.c.h.b16 %v1014
  %v4140 = vunpack.c.l.b16 %v1015
  %v4141 = vunpack.c.h.b16 %v1015
  %v4142 = vunpack.c.l.b16 %v1016
  %v4143 = vunpack.c.h.b16 %v1016
  %v4144 = vunpack.c.l.b16 %v1017
  %v4145 = vunpack.c.h.b16 %v1017
  %v4146 = vunpack.c.l.b16 %v1018
  %v4147 = vunpack.c.h.b16 %v1018
  %v4148 = vunpack.c.l.b16 %v1019
  %v4149 = vunpack.c.h.b16 %v1019
  %v4150 = vunpack.c.l.b16 %v1020
  %v4151 = vunpack.c.h.b16 %v1020
  %v4152 = vunpack.c.l.b16 %v1021
  %v4153 = vunpack.c.h.b16 %v1021
  %v4154 = vunpack.c.l.b16 %v1022
  %v4155 = vunpack.c.h.b16 %v1022
  %v4156 = vunpack.c.l.b16 %v1023
  %v4157 = vunpack.c.h.b16 %v1023
  %v4158 = vunpack.c.l.b16 %v1024
  %v4159 = vunpack.c.h.b16 %v1024
  %v4160 = vunpack.c.l.b16 %v1025
  %v4161 = vunpack.c.h.b16 %v1025
  %v4162 = vunpack.c.l.b16 %v1026
  %v4163 = vunpack.c.h.b16 %v1026
  %v4164 = vunpack.c.l.b16 %v1027
  %v4165 = vunpack.c.h.b16 %v1027
  %v4166 = vunpack.c.l.b16 %v1028
  %v4167 = vunpack.c.h.b16 %v1028
  %v4168 = vunpack.c.l.b16 %v1029
  %v4169 = vunpack.c.h.b16 %v1029
  %v4170 = vunpack.c.l.b16 %v1030
  %v4171 = vunpack.c.h.b16 %v1030
  %v4172 = vunpack.c.l.b16 %v1031
  %v4173 = vunpack.c.h.b16 %v1031
  %v4174 = vunpack.c.l.b16 %v1032
  %v4175 = vunpack.c.h.b16 %v1032
  %v4176 = vunpack.c.l.b16 %v1033
  %v4177 = vunpack.c.h.b16 %v1033
  %v4178 = vunpack.c.l.b16 %v1034
  %v4179 = vunpack.c.h.b16 %v1034
  %v4180 = vunpack.c.l.b16 %v1035
  %v4181 = vunpack.c.h.b16 %v1035
  %v4182 = vunpack.c.l.b16 %v1036
  %v4183 = vunpack.c.h.b16 %v1036
  %v4184 = vunpack.c.l.b16 %v1037
  %v4185 = vunpack.c.h.b16 %v1037
  %v4186 = vunpack.c.l.b16 %v1038
  %v4187 = vunpack.c.h.b16 %v1038
  %v4188 = vunpack.c.l.b16 %v1039
  %v4189 = vunpack.c.h.b16 %v1039
  %v4190 = vunpack.c.l.b16 %v1040
  %v4191 = vunpack.c.h.b16 %v1040
  %v4192 = vunpack.c.l.b16 %v1041
  %v4193 = vunpack.c.h.b16 %v1041
  %v4194 = vunpack.c.l.b16 %v1042
  %v4195 = vunpack.c.h.b16 %v1042
  %v4196 = vunpack.c.l.b16 %v1043
  %v4197 = vunpack.c.h.b16 %v1043
  %v4198 = vunpack.c.l.b16 %v1044
  %v4199 = vunpack.c.h.b16 %v1044
  %v4200 = vunpack.c.l.b16 %v1045
  %v4201 = vunpack.c.h.b16 %v1045
  %v4202 = vunpack.c.l.b16 %v1046
  %v4203 = vunpack.c.h.b16 %v1046
  %v4204 = vunpack.c.l.b16 %v1047
  %v4205 = vunpack.c.h.b16 %v1047
  %v4206 = vunpack.c.l.b16 %v1048
  %v4207 = vunpack.c.h.b16 %v1048
  %v4208 = vunpack.c.l.b16 %v1049
  %v4209 = vunpack.c.h.b16 %v1049
  %v4210 = vunpack.c.l.b16 %v1050
  %v4211 = vunpack.c.h.b16 %v1050
  %v4212 = vunpack.c.l.b16 %v1051
  %v4213 = vunpack.c.h.b16 %v1051
  %v4214 = vunpack.c.l.b16 %v1052
  %v4215 = vunpack.c.h.b16 %v1052
  %v4216 = vunpack.c.l.b16 %v1053
  %v4217 = vunpack.c.h.b16 %v1053
  %v4218 = vunpack.c.l.b16 %v1054
  %v4219 = vunpack.c.h.b16 %v1054
  %v4220 = vunpack.c.l.b16 %v1055
  %v4221 = vunpack.c.h.b16 %v1055
  %v4222 = vunpack.c.l.b16 %v1056
  %v4223 = vunpack.c.h.b16 %v1056
  %v4224 = vunpack.c.l.b16 %v1057
  %v4225 = vunpack.c.h.b16 %v1057
  %v4226 = vunpack.c.l.b16 %v1058
  %v4227 = vunpack.c.h.b16 %v1058
  %v4228 = vunpack.c.l.b16 %v1059
  %v4229 = vunpack.c.h.b16 %v1059
  %v4230 = vunpack.c.l.b16 %v1060
  %v4231 = vunpack.c.h.b16 %v1060
  %v4232 = vunpack.c.l.b16 %v1061
  %v4233 = vunpack.c.h.b16 %v1061
  %v4234 = vunpack.c.l.b16 %v1062
  %v4235 = vunpack.c.h.b16 %v1062
  %v4236 = vunpack.c.l.b16 %v1063
  %v4237 = vunpack.c.h.b16 %v1063
  %v4238 = vunpack.c.l.b16 %v1064
  %v4239 = vunpack.c.h.b16 %v1064
  %v4240 = vunpack.c.l.b16 %v1065
  %v4241 = vunpack.c.h.b16 %v1065
  %v4242 = vunpack.c.l.b16 %v1066
  %v4243 = vunpack.c.h.b16 %v1066
  %v4244 = vunpack.c.l.b16 %v1067
  %v4245 = vunpack.c.h.b16 %v1067
  %v4246 = vunpack.c.l.b16 %v1068
  %v4247 = vunpack.c.h.b16 %v1068
  %v4248 = vunpack.c.l.b16 %v1069
  %v4249 = vunpack.c.h.b16 %v1069
  %v4250 = vunpack.c.l.b16 %v1070
  %v4251 = vunpack.c.h.b16 %v1070
  %v4252 = vunpack.c.l.b16 %v1071
  %v4253 = vunpack.c.h.b16 %v1071
  %v4254 = vunpack.c.l.b16 %v1072
  %v4255 = vunpack.c.h.b16 %v1072
  %v4256 = vunpack.c.l.b16 %v1073
  %v4257 = vunpack.c.h.b16 %v1073
  %v4258 = vpack.c.b16 %v2214, %v2210
  %v4259 = vpack.c.b16 %v2215, %v2211
  %v4260 = vpack.c.b16 %v2216, %v2212
  %v4261 = vpack.c.b16 %v2217, %v2213
  %v4262 = vpack.c.b16 %v2222, %v2218
  %v4263 = vpack.c.b16 %v2223, %v2219
  %v4264 = vpack.c.b16 %v2224, %v2220
  %v4265 = vpack.c.b16 %v2225, %v2221
  %v4266 = vpack.c.b16 %v2230, %v2226
  %v4267 = vpack.c.b16 %v2231, %v2227
  %v4268 = vpack.c.b16 %v2232, %v2228
  %v4269 = vpack.c.b16 %v2233, %v2229
  %v4270 = vpack.c.b16 %v2238, %v2234
  %v4271 = vpack.c.b16 %v2239, %v2235
  %v4272 = vpack.c.b16 %v2240, %v2236
  %v4273 = vpack.c.b16 %v2241, %v2237
  %v4274 = vpack.c.b16 %v2246, %v2242
  %v4275 = vpack.c.b16 %v2247, %v2243
  %v4276 = vpack.c.b16 %v2248, %v2244
  %v4277 = vpack.c.b16 %v2249, %v2245
  %v4278 = vpack.c.b16 %v2254, %v2250
  %v4279 = vpack.c.b16 %v2255, %v2251
  %v4280 = vpack.c.b16 %v2256, %v2252
  %v4281 = vpack.c.b16 %v2257, %v2253
  %v4282 = vpack.c.b16 %v2262, %v2258
  %v4283 = vpack.c.b16 %v2263, %v2259
  %v4284 = vpack.c.b16 %v2264, %v2260
  %v4285 = vpack.c.b16 %v2265, %v2261
  %v4286 = vpack.c.b16 %v2270, %v2266
  %v4287 = vpack.c.b16 %v2271, %v2267
  %v4288 = vpack.c.b16 %v2272, %v2268
  %v4289 = vpack.c.b16 %v2273, %v2269
  %v4290 = vpack.c.b16 %v2278, %v2274
  %v4291 = vpack.c.b16 %v2279, %v2275
  %v4292 = vpack.c.b16 %v2280, %v2276
  %v4293 = vpack.c.b16 %v2281, %v2277
  %v4294 = vpack.c.b16 %v2286, %v2282
  %v4295 = vpack.c.b16 %v2287, %v2283
  %v4296 = vpack.c.b16 %v2288, %v2284
  %v4297 = vpack.c.b16 %v2289, %v2285
  %v4298 = vpack.c.b16 %v2294, %v2290
  %v4299 = vpack.c.b16 %v2295, %v2291
  %v4300 = vpack.c.b16 %v2296, %v2292
  %v4301 = vpack.c.b16 %v2297, %v2293
  %v4302 = vpack.c.b16 %v2302, %v2298
  %v4303 = vpack.c.b16 %v2303, %v2299
  %v4304 = vpack.c.b16 %v2304, %v2300
  %v4305 = vpack.c.b16 %v2305, %v2301
  %v4306 = vpack.c.b16 %v2310, %v2306
  %v4307 = vpack.c.b16 %v2311, %v2307
  %v4308 = vpack.c.b16 %v2312, %v2308
  %v4309 = vpack.c.b16 %v2313, %v2309
  %v4310 = vpack.c.b16 %v2318, %v2314
  %v4311 = vpack.c.b16 %v2319, %v2315
  %v4312 = vpack.c.b16 %v2320, %v2316
  %v4313 = vpack.c.b16 %v2321, %v2317
  %v4314 = vpack.c.b16 %v2326, %v2322
  %v4315 = vpack.c.b16 %v2327, %v2323
  %v4316 = vpack.c.b16 %v2328, %v2324
  %v4317 = vpack.c.b16 %v2329, %v2325
  %v4318 = vpack.c.b16 %v2334, %v2330
  %v4319 = vpack.c.b16 %v2335, %v2331
  %v4320 = vpack.c.b16 %v2336, %v2332
  %v4321 = vpack.c.b16 %v2337, %v2333
  %v4322 = vpack.c.b16 %v2342, %v2338
  %v4323 = vpack.c.b16 %v2343, %v2339
  %v4324 = vpack.c.b16 %v2344, %v2340
  %v4325 = vpack.c.b16 %v2345, %v2341
  %v4326 = vpack.c.b16 %v2350, %v2346
  %v4327 = vpack.c.b16 %v2351, %v2347
  %v4328 = vpack.c.b16 %v2352, %v2348
  %v4329 = vpack.c.b16 %v2353, %v2349
  %v4330 = vpack.c.b16 %v2358, %v2354
  %v4331 = vpack.c.b16 %v2359, %v2355
  %v4332 = vpack.c.b16 %v2360, %v2356
  %v4333 = vpack.c.b16 %v2361, %v2357
  %v4334 = vpack.c.b16 %v2366, %v2362
  %v4335 = vpack.c.b16 %v2367, %v2363
  %v4336 = vpack.c.b16 %v2368, %v2364
  %v4337 = vpack.c.b16 %v2369, %v2365
  %v4338 = vpack.c.b16 %v2374, %v2370
  %v4339 = vpack.c.b16 %v2375, %v2371
  %v4340 = vpack.c.b16 %v2376, %v2372
  %v4341 = vpack.c.b16 %v2377, %v2373
  %v4342 = vpack.c.b16 %v2382, %v2378
  %v4343 = vpack.c.b16 %v2383, %v2379
  %v4344 = vpack.c.b16 %v2384, %v2380
  %v4345 = vpack.c.b16 %v2385, %v2381
  %v4346 = vpack.c.b16 %v2390, %v2386
  %v4347 = vpack.c.b16 %v2391, %v2387
  %v4348 = vpack.c.b16 %v2392, %v2388
  %v4349 = vpack.c.b16 %v2393, %v2389
  %v4350 = vpack.c.b16 %v2398, %v2394
  %v4351 = vpack.c.b16 %v2399, %v2395
  %v4352 = vpack.c.b16 %v2400, %v2396
  %v4353 = vpack.c.b16 %v2401, %v2397
  %v4354 = vpack.c.b16 %v2406, %v2402
  %v4355 = vpack.c.b16 %v2407, %v2403
  %v4356 = vpack.c.b16 %v2408, %v2404
  %v4357 = vpack.c.b16 %v2409, %v2405
  %v4358 = vpack.c.b16 %v2414, %v2410
  %v4359 = vpack.c.b16 %v2415, %v2411
  %v4360 = vpack.c.b16 %v2416, %v2412
  %v4361 = vpack.c.b16 %v2417, %v2413
  %v4362 = vpack.c.b16 %v2422, %v2418
  %v4363 = vpack.c.b16 %v2423, %v2419
  %v4364 = vpack.c.b16 %v2424, %v2420
  %v4365 = vpack.c.b16 %v2425, %v2421
  %v4366 = vpack.c.b16 %v2430, %v2426
  %v4367 = vpack.c.b16 %v2431, %v2427
  %v4368 = vpack.c.b16 %v2432, %v2428
  %v4369 = vpack.c.b16 %v2433, %v2429
  %v4370 = vpack.c.b16 %v2438, %v2434
  %v4371 = vpack.c.b16 %v2439, %v2435
  %v4372 = vpack.c.b16 %v2440, %v2436
  %v4373 = vpack.c.b16 %v2441, %v2437
  %v4374 = vpack.c.b16 %v2446, %v2442
  %v4375 = vpack.c.b16 %v2447, %v2443
  %v4376 = vpack.c.b16 %v2448, %v2444
  %v4377 = vpack.c.b16 %v2449, %v2445
  %v4378 = vpack.c.b16 %v2454, %v2450
  %v4379 = vpack.c.b16 %v2455, %v2451
  %v4380 = vpack.c.b16 %v2456, %v2452
  %v4381 = vpack.c.b16 %v2457, %v2453
  %v4382 = vpack.c.b16 %v2462, %v2458
  %v4383 = vpack.c.b16 %v2463, %v2459
  %v4384 = vpack.c.b16 %v2464, %v2460
  %v4385 = vpack.c.b16 %v2465, %v2461
  %v4386 = vpack.c.b16 %v2470, %v2466
  %v4387 = vpack.c.b16 %v2471, %v2467
  %v4388 = vpack.c.b16 %v2472, %v2468
  %v4389 = vpack.c.b16 %v2473, %v2469
  %v4390 = vpack.c.b16 %v2478, %v2474
  %v4391 = vpack.c.b16 %v2479, %v2475
  %v4392 = vpack.c.b16 %v2480, %v2476
  %v4393 = vpack.c.b16 %v2481, %v2477
  %v4394 = vpack.c.b16 %v2486, %v2482
  %v4395 = vpack.c.b16 %v2487, %v2483
  %v4396 = vpack.c.b16 %v2488, %v2484
  %v4397 = vpack.c.b16 %v2489, %v2485
  %v4398 = vpack.c.b16 %v2494, %v2490
  %v4399 = vpack.c.b16 %v2495, %v2491
  %v4400 = vpack.c.b16 %v2496, %v2492
  %v4401 = vpack.c.b16 %v2497, %v2493
  %v4402 = vpack.c.b16 %v2502, %v2498
  %v4403 = vpack.c.b16 %v2503, %v2499
  %v4404 = vpack.c.b16 %v2504, %v2500
  %v4405 = vpack.c.b16 %v2505, %v2501
  %v4406 = vpack.c.b16 %v2510, %v2506
  %v4407 = vpack.c.b16 %v2511, %v2507
  %v4408 = vpack.c.b16 %v2512, %v2508
  %v4409 = vpack.c.b16 %v2513, %v2509
  %v4410 = vpack.c.b16 %v2518, %v2514
  %v4411 = vpack.c.b16 %v2519, %v2515
  %v4412 = vpack.c.b16 %v2520, %v2516
  %v4413 = vpack.c.b16 %v2521, %v2517
  %v4414 = vpack.c.b16 %v2526, %v2522
  %v4415 = vpack.c.b16 %v2527, %v2523
  %v4416 = vpack.c.b16 %v2528, %v2524
  %v4417 = vpack.c.b16 %v2529, %v2525
  %v4418 = vpack.c.b16 %v2534, %v2530
  %v4419 = vpack.c.b16 %v2535, %v2531
  %v4420 = vpack.c.b16 %v2536, %v2532
  %v4421 = vpack.c.b16 %v2537, %v2533
  %v4422 = vpack.c.b16 %v2542, %v2538
  %v4423 = vpack.c.b16 %v2543, %v2539
  %v4424 = vpack.c.b16 %v2544, %v2540
  %v4425 = vpack.c.b16 %v2545, %v2541
  %v4426 = vpack.c.b16 %v2550, %v2546
  %v4427 = vpack.c.b16 %v2551, %v2547
  %v4428 = vpack.c.b16 %v2552, %v2548
  %v4429 = vpack.c.b16 %v2553, %v2549
  %v4430 = vpack.c.b16 %v2558, %v2554
  %v4431 = vpack.c.b16 %v2559, %v2555
  %v4432 = vpack.c.b16 %v2560, %v2556
  %v4433 = vpack.c.b16 %v2561, %v2557
  %v4434 = vpack.c.b16 %v2566, %v2562
  %v4435 = vpack.c.b16 %v2567, %v2563
  %v4436 = vpack.c.b16 %v2568, %v2564
  %v4437 = vpack.c.b16 %v2569, %v2565
  %v4438 = vpack.c.b16 %v2574, %v2570
  %v4439 = vpack.c.b16 %v2575, %v2571
  %v4440 = vpack.c.b16 %v2576, %v2572
  %v4441 = vpack.c.b16 %v2577, %v2573
  %v4442 = vpack.c.b16 %v2582, %v2578
  %v4443 = vpack.c.b16 %v2583, %v2579
  %v4444 = vpack.c.b16 %v2584, %v2580
  %v4445 = vpack.c.b16 %v2585, %v2581
  %v4446 = vpack.c.b16 %v2590, %v2586
  %v4447 = vpack.c.b16 %v2591, %v2587
  %v4448 = vpack.c.b16 %v2592, %v2588
  %v4449 = vpack.c.b16 %v2593, %v2589
  %v4450 = vpack.c.b16 %v2598, %v2594
  %v4451 = vpack.c.b16 %v2599, %v2595
  %v4452 = vpack.c.b16 %v2600, %v2596
  %v4453 = vpack.c.b16 %v2601, %v2597
  %v4454 = vpack.c.b16 %v2606, %v2602
  %v4455 = vpack.c.b16 %v2607, %v2603
  %v4456 = vpack.c.b16 %v2608, %v2604
  %v4457 = vpack.c.b16 %v2609, %v2605
  %v4458 = vpack.c.b16 %v2614, %v2610
  %v4459 = vpack.c.b16 %v2615, %v2611
  %v4460 = vpack.c.b16 %v2616, %v2612
  %v4461 = vpack.c.b16 %v2617, %v2613
  %v4462 = vpack.c.b16 %v2622, %v2618
  %v4463 = vpack.c.b16 %v2623, %v2619
  %v4464 = vpack.c.b16 %v2624, %v2620
  %v4465 = vpack.c.b16 %v2625, %v2621
  %v4466 = vpack.c.b16 %v2630, %v2626
  %v4467 = vpack.c.b16 %v2631, %v2627
  %v4468 = vpack.c.b16 %v2632, %v2628
  %v4469 = vpack.c.b16 %v2633, %v2629
  %v4470 = vpack.c.b16 %v2638, %v2634
  %v4471 = vpack.c.b16 %v2639, %v2635
  %v4472 = vpack.c.b16 %v2640, %v2636
  %v4473 = vpack.c.b16 %v2641, %v2637
  %v4474 = vpack.c.b16 %v2646, %v2642
  %v4475 = vpack.c.b16 %v2647, %v2643
  %v4476 = vpack.c.b16 %v2648, %v2644
  %v4477 = vpack.c.b16 %v2649, %v2645
  %v4478 = vpack.c.b16 %v2654, %v2650
  %v4479 = vpack.c.b16 %v2655, %v2651
  %v4480 = vpack.c.b16 %v2656, %v2652
  %v4481 = vpack.c.b16 %v2657, %v2653
  %v4482 = vpack.c.b16 %v2662, %v2658
  %v4483 = vpack.c.b16 %v2663, %v2659
  %v4484 = vpack.c.b16 %v2664, %v2660
  %v4485 = vpack.c.b16 %v2665, %v2661
  %v4486 = vpack.c.b16 %v2670, %v2666
  %v4487 = vpack.c.b16 %v2671, %v2667
  %v4488 = vpack.c.b16 %v2672, %v2668
  %v4489 = vpack.c.b16 %v2673, %v2669
  %v4490 = vpack.c.b16 %v2678, %v2674
  %v4491 = vpack.c.b16 %v2679, %v2675
  %v4492 = vpack.c.b16 %v2680, %v2676
  %v4493 = vpack.c.b16 %v2681, %v2677
  %v4494 = vpack.c.b16 %v2686, %v2682
  %v4495 = vpack.c.b16 %v2687, %v2683
  %v4496 = vpack.c.b16 %v2688, %v2684
  %v4497 = vpack.c.b16 %v2689, %v2685
  %v4498 = vpack.c.b16 %v2694, %v2690
  %v4499 = vpack.c.b16 %v2695, %v2691
  %v4500 = vpack.c.b16 %v2696, %v2692
  %v4501 = vpack.c.b16 %v2697, %v2693
  %v4502 = vpack.c.b16 %v2702, %v2698
  %v4503 = vpack.c.b16 %v2703, %v2699
  %v4504 = vpack.c.b16 %v2704, %v2700
  %v4505 = vpack.c.b16 %v2705, %v2701
  %v4506 = vpack.c.b16 %v2710, %v2706
  %v4507 = vpack.c.b16 %v2711, %v2707
  %v4508 = vpack.c.b16 %v2712, %v2708
  %v4509 = vpack.c.b16 %v2713, %v2709
  %v4510 = vpack.c.b16 %v2718, %v2714
  %v4511 = vpack.c.b16 %v2719, %v2715
  %v4512 = vpack.c.b16 %v2720, %v2716
  %v4513 = vpack.c.b16 %v2721, %v2717
  %v4514 = vpack.c.b16 %v2726, %v2722
  %v4515 = vpack.c.b16 %v2727, %v2723
  %v4516 = vpack.c.b16 %v2728, %v2724
  %v4517 = vpack.c.b16 %v2729, %v2725
  %v4518 = vpack.c.b16 %v2734, %v2730
  %v4519 = vpack.c.b16 %v2735, %v2731
  %v4520 = vpack.c.b16 %v2736, %v2732
  %v4521 = vpack.c.b16 %v2737, %v2733
  %v4522 = vpack.c.b16 %v2742, %v2738
  %v4523 = vpack.c.b16 %v2743, %v2739
  %v4524 = vpack.c.b16 %v2744, %v2740
  %v4525 = vpack.c.b16 %v2745, %v2741
  %v4526 = vpack.c.b16 %v2750, %v2746
  %v4527 = vpack.c.b16 %v2751, %v2747
  %v4528 = vpack.c.b16 %v2752, %v2748
  %v4529 = vpack.c.b16 %v2753, %v2749
  %v4530 = vpack.c.b16 %v2758, %v2754
  %v4531 = vpack.c.b16 %v2759, %v2755
  %v4532 = vpack.c.b16 %v2760, %v2756
  %v4533 = vpack.c.b16 %v2761, %v2757
  %v4534 = vpack.c.b16 %v2766, %v2762
  %v4535 = vpack.c.b16 %v2767, %v2763
  %v4536 = vpack.c.b16 %v2768, %v2764
  %v4537 = vpack.c.b16 %v2769, %v2765
  %v4538 = vpack.c.b16 %v2774, %v2770
  %v4539 = vpack.c.b16 %v2775, %v2771
  %v4540 = vpack.c.b16 %v2776, %v2772
  %v4541 = vpack.c.b16 %v2777, %v2773
  %v4542 = vpack.c.b16 %v2782, %v2778
  %v4543 = vpack.c.b16 %v2783, %v2779
  %v4544 = vpack.c.b16 %v2784, %v2780
  %v4545 = vpack.c.b16 %v2785, %v2781
  %v4546 = vpack.c.b16 %v2790, %v2786
  %v4547 = vpack.c.b16 %v2791, %v2787
  %v4548 = vpack.c.b16 %v2792, %v2788
  %v4549 = vpack.c.b16 %v2793, %v2789
  %v4550 = vpack.c.b16 %v2798, %v2794
  %v4551 = vpack.c.b16 %v2799, %v2795
  %v4552 = vpack.c.b16 %v2800, %v2796
  %v4553 = vpack.c.b16 %v2801, %v2797
  %v4554 = vpack.c.b16 %v2806, %v2802
  %v4555 = vpack.c.b16 %v2807, %v2803
  %v4556 = vpack.c.b16 %v2808, %v2804
  %v4557 = vpack.c.b16 %v2809, %v2805
  %v4558 = vpack.c.b16 %v2814, %v2810
  %v4559 = vpack.c.b16 %v2815, %v2811
  %v4560 = vpack.c.b16 %v2816, %v2812
  %v4561 = vpack.c.b16 %v2817, %v2813
  %v4562 = vpack.c.b16 %v2822, %v2818
  %v4563 = vpack.c.b16 %v2823, %v2819
  %v4564 = vpack.c.b16 %v2824, %v2820
  %v4565 = vpack.c.b16 %v2825, %v2821
  %v4566 = vpack.c.b16 %v2830, %v2826
  %v4567 = vpack.c.b16 %v2831, %v2827
  %v4568 = vpack.c.b16 %v2832, %v2828
  %v4569 = vpack.c.b16 %v2833, %v2829
  %v4570 = vpack.c.b16 %v2838, %v2834
  %v4571 = vpack.c.b16 %v2839, %v2835
  %v4572 = vpack.c.b16 %v2840, %v2836
  %v4573 = vpack.c.b16 %v2841, %v2837
  %v4574 = vpack.c.b16 %v2846, %v2842
  %v4575 = vpack.c.b16 %v2847, %v2843
  %v4576 = vpack.c.b16 %v2848, %v2844
  %v4577 = vpack.c.b16 %v2849, %v2845
  %v4578 = vpack.c.b16 %v2854, %v2850
  %v4579 = vpack.c.b16 %v2855, %v2851
  %v4580 = vpack.c.b16 %v2856, %v2852
  %v4581 = vpack.c.b16 %v2857, %v2853
  %v4582 = vpack.c.b16 %v2862, %v2858
  %v4583 = vpack.c.b16 %v2863, %v2859
  %v4584 = vpack.c.b16 %v2864, %v2860
  %v4585 = vpack.c.b16 %v2865, %v2861
  %v4586 = vpack.c.b16 %v2870, %v2866
  %v4587 = vpack.c.b16 %v2871, %v2867
  %v4588 = vpack.c.b16 %v2872, %v2868
  %v4589 = vpack.c.b16 %v2873, %v2869
  %v4590 = vpack.c.b16 %v2878, %v2874
  %v4591 = vpack.c.b16 %v2879, %v2875
  %v4592 = vpack.c.b16 %v2880, %v2876
  %v4593 = vpack.c.b16 %v2881, %v2877
  %v4594 = vpack.c.b16 %v2886, %v2882
  %v4595 = vpack.c.b16 %v2887, %v2883
  %v4596 = vpack.c.b16 %v2888, %v2884
  %v4597 = vpack.c.b16 %v2889, %v2885
  %v4598 = vpack.c.b16 %v2894, %v2890
  %v4599 = vpack.c.b16 %v2895, %v2891
  %v4600 = vpack.c.b16 %v2896, %v2892
  %v4601 = vpack.c.b16 %v2897, %v2893
  %v4602 = vpack.c.b16 %v2902, %v2898
  %v4603 = vpack.c.b16 %v2903, %v2899
  %v4604 = vpack.c.b16 %v2904, %v2900
  %v4605 = vpack.c.b16 %v2905, %v2901
  %v4606 = vpack.c.b16 %v2910, %v2906
  %v4607 = vpack.c.b16 %v2911, %v2907
  %v4608 = vpack.c.b16 %v2912, %v2908
  %v4609 = vpack.c.b16 %v2913, %v2909
  %v4610 = vpack.c.b16 %v2918, %v2914
  %v4611 = vpack.c.b16 %v2919, %v2915
  %v4612 = vpack.c.b16 %v2920, %v2916
  %v4613 = vpack.c.b16 %v2921, %v2917
  %v4614 = vpack.c.b16 %v2926, %v2922
  %v4615 = vpack.c.b16 %v2927, %v2923
  %v4616 = vpack.c.b16 %v2928, %v2924
  %v4617 = vpack.c.b16 %v2929, %v2925
  %v4618 = vpack.c.b16 %v2934, %v2930
  %v4619 = vpack.c.b16 %v2935, %v2931
  %v4620 = vpack.c.b16 %v2936, %v2932
  %v4621 = vpack.c.b16 %v2937, %v2933
  %v4622 = vpack.c.b16 %v2942, %v2938
  %v4623 = vpack.c.b16 %v2943, %v2939
  %v4624 = vpack.c.b16 %v2944, %v2940
  %v4625 = vpack.c.b16 %v2945, %v2941
  %v4626 = vpack.c.b16 %v2950, %v2946
  %v4627 = vpack.c.b16 %v2951, %v2947
  %v4628 = vpack.c.b16 %v2952, %v2948
  %v4629 = vpack.c.b16 %v2953, %v2949
  %v4630 = vpack.c.b16 %v2958, %v2954
  %v4631 = vpack.c.b16 %v2959, %v2955
  %v4632 = vpack.c.b16 %v2960, %v2956
  %v4633 = vpack.c.b16 %v2961, %v2957
  %v4634 = vpack.c.b16 %v2966, %v2962
  %v4635 = vpack.c.b16 %v2967, %v2963
  %v4636 = vpack.c.b16 %v2968, %v2964
  %v4637 = vpack.c.b16 %v2969, %v2965
  %v4638 = vpack.c.b16 %v2974, %v2970
  %v4639 = vpack.c.b16 %v2975, %v2971
  %v4640 = vpack.c.b16 %v2976, %v2972
  %v4641 = vpack.c.b16 %v2977, %v2973
  %v4642 = vpack.c.b16 %v2982, %v2978
  %v4643 = vpack.c.b16 %v2983, %v2979
  %v4644 = vpack.c.b16 %v2984, %v2980
  %v4645 = vpack.c.b16 %v2985, %v2981
  %v4646 = vpack.c.b16 %v2990, %v2986
  %v4647 = vpack.c.b16 %v2991, %v2987
  %v4648 = vpack.c.b16 %v2992, %v2988
  %v4649 = vpack.c.b16 %v2993, %v2989
  %v4650 = vpack.c.b16 %v2998, %v2994
  %v4651 = vpack.c.b16 %v2999, %v2995
  %v4652 = vpack.c.b16 %v3000, %v2996
  %v4653 = vpack.c.b16 %v3001, %v2997
  %v4654 = vpack.c.b16 %v3006, %v3002
  %v4655 = vpack.c.b16 %v3007, %v3003
  %v4656 = vpack.c.b16 %v3008, %v3004
  %v4657 = vpack.c.b16 %v3009, %v3005
  %v4658 = vpack.c.b16 %v3014, %v3010
  %v4659 = vpack.c.b16 %v3015, %v3011
  %v4660 = vpack.c.b16 %v3016, %v3012
  %v4661 = vpack.c.b16 %v3017, %v3013
  %v4662 = vpack.c.b16 %v3022, %v3018
  %v4663 = vpack.c.b16 %v3023, %v3019
  %v4664 = vpack.c.b16 %v3024, %v3020
  %v4665 = vpack.c.b16 %v3025, %v3021
  %v4666 = vpack.c.b16 %v3030, %v3026
  %v4667 = vpack.c.b16 %v3031, %v3027
  %v4668 = vpack.c.b16 %v3032, %v3028
  %v4669 = vpack.c.b16 %v3033, %v3029
  %v4670 = vpack.c.b16 %v3038, %v3034
  %v4671 = vpack.c.b16 %v3039, %v3035
  %v4672 = vpack.c.b16 %v3040, %v3036
  %v4673 = vpack.c.b16 %v3041, %v3037
  %v4674 = vpack.c.b16 %v3046, %v3042
  %v4675 = vpack.c.b16 %v3047, %v3043
  %v4676 = vpack.c.b16 %v3048, %v3044
  %v4677 = vpack.c.b16 %v3049, %v3045
  %v4678 = vpack.c.b16 %v3054, %v3050
  %v4679 = vpack.c.b16 %v3055, %v3051
  %v4680 = vpack.c.b16 %v3056, %v3052
  %v4681 = vpack.c.b16 %v3057, %v3053
  %v4682 = vpack.c.b16 %v3062, %v3058
  %v4683 = vpack.c.b16 %v3063, %v3059
  %v4684 = vpack.c.b16 %v3064, %v3060
  %v4685 = vpack.c.b16 %v3065, %v3061
  %v4686 = vpack.c.b16 %v3070, %v3066
  %v4687 = vpack.c.b16 %v3071, %v3067
  %v4688 = vpack.c.b16 %v3072, %v3068
  %v4689 = vpack.c.b16 %v3073, %v3069
  %v4690 = vpack.c.b16 %v3078, %v3074
  %v4691 = vpack.c.b16 %v3079, %v3075
  %v4692 = vpack.c.b16 %v3080, %v3076
  %v4693 = vpack.c.b16 %v3081, %v3077
  %v4694 = vpack.c.b16 %v3086, %v3082
  %v4695 = vpack.c.b16 %v3087, %v3083
  %v4696 = vpack.c.b16 %v3088, %v3084
  %v4697 = vpack.c.b16 %v3089, %v3085
  %v4698 = vpack.c.b16 %v3094, %v3090
  %v4699 = vpack.c.b16 %v3095, %v3091
  %v4700 = vpack.c.b16 %v3096, %v3092
  %v4701 = vpack.c.b16 %v3097, %v3093
  %v4702 = vpack.c.b16 %v3102, %v3098
  %v4703 = vpack.c.b16 %v3103, %v3099
  %v4704 = vpack.c.b16 %v3104, %v3100
  %v4705 = vpack.c.b16 %v3105, %v3101
  %v4706 = vpack.c.b16 %v3110, %v3106
  %v4707 = vpack.c.b16 %v3111, %v3107
  %v4708 = vpack.c.b16 %v3112, %v3108
  %v4709 = vpack.c.b16 %v3113, %v3109
  %v4710 = vpack.c.b16 %v3118, %v3114
  %v4711 = vpack.c.b16 %v3119, %v3115
  %v4712 = vpack.c.b16 %v3120, %v3116
  %v4713 = vpack.c.b16 %v3121, %v3117
  %v4714 = vpack.c.b16 %v3126, %v3122
  %v4715 = vpack.c.b16 %v3127, %v3123
  %v4716 = vpack.c.b16 %v3128, %v3124
  %v4717 = vpack.c.b16 %v3129, %v3125
  %v4718 = vpack.c.b16 %v3134, %v3130
  %v4719 = vpack.c.b16 %v3135, %v3131
  %v4720 = vpack.c.b16 %v3136, %v3132
  %v4721 = vpack.c.b16 %v3137, %v3133
  %v4722 = vpack.c.b16 %v3142, %v3138
  %v4723 = vpack.c.b16 %v3143, %v3139
  %v4724 = vpack.c.b16 %v3144, %v3140
  %v4725 = vpack.c.b16 %v3145, %v3141
  %v4726 = vpack.c.b16 %v3150, %v3146
  %v4727 = vpack.c.b16 %v3151, %v3147
  %v4728 = vpack.c.b16 %v3152, %v3148
  %v4729 = vpack.c.b16 %v3153, %v3149
  %v4730 = vpack.c.b16 %v3158, %v3154
  %v4731 = vpack.c.b16 %v3159, %v3155
  %v4732 = vpack.c.b16 %v3160, %v3156
  %v4733 = vpack.c.b16 %v3161, %v3157
  %v4734 = vpack.c.b16 %v3166, %v3162
  %v4735 = vpack.c.b16 %v3167, %v3163
  %v4736 = vpack.c.b16 %v3168, %v3164
  %v4737 = vpack.c.b16 %v3169, %v3165
  %v4738 = vpack.c.b16 %v3174, %v3170
  %v4739 = vpack.c.b16 %v3175, %v3171
  %v4740 = vpack.c.b16 %v3176, %v3172
  %v4741 = vpack.c.b16 %v3177, %v3173
  %v4742 = vpack.c.b16 %v3182, %v3178
  %v4743 = vpack.c.b16 %v3183, %v3179
  %v4744 = vpack.c.b16 %v3184, %v3180
  %v4745 = vpack.c.b16 %v3185, %v3181
  %v4746 = vpack.c.b16 %v3190, %v3186
  %v4747 = vpack.c.b16 %v3191, %v3187
  %v4748 = vpack.c.b16 %v3192, %v3188
  %v4749 = vpack.c.b16 %v3193, %v3189
  %v4750 = vpack.c.b16 %v3198, %v3194
  %v4751 = vpack.c.b16 %v3199, %v3195
  %v4752 = vpack.c.b16 %v3200, %v3196
  %v4753 = vpack.c.b16 %v3201, %v3197
  %v4754 = vpack.c.b16 %v3206, %v3202
  %v4755 = vpack.c.b16 %v3207, %v3203
  %v4756 = vpack.c.b16 %v3208, %v3204
  %v4757 = vpack.c.b16 %v3209, %v3205
  %v4758 = vpack.c.b16 %v3214, %v3210
  %v4759 = vpack.c.b16 %v3215, %v3211
  %v4760 = vpack.c.b16 %v3216, %v3212
  %v4761 = vpack.c.b16 %v3217, %v3213
  %v4762 = vpack.c.b16 %v3222, %v3218
  %v4763 = vpack.c.b16 %v3223, %v3219
  %v4764 = vpack.c.b16 %v3224, %v3220
  %v4765 = vpack.c.b16 %v3225, %v3221
  %v4766 = vpack.c.b16 %v3230, %v3226
  %v4767 = vpack.c.b16 %v3231, %v3227
  %v4768 = vpack.c.b16 %v3232, %v3228
  %v4769 = vpack.c.b16 %v3233, %v3229
  %v4770 = vpack.c.b16 %v3238, %v3234
  %v4771 = vpack.c.b16 %v3239, %v3235
  %v4772 = vpack.c.b16 %v3240, %v3236
  %v4773 = vpack.c.b16 %v3241, %v3237
  %v4774 = vpack.c.b16 %v3246, %v3242
  %v4775 = vpack.c.b16 %v3247, %v3243
  %v4776 = vpack.c.b16 %v3248, %v3244
  %v4777 = vpack.c.b16 %v3249, %v3245
  %v4778 = vpack.c.b16 %v3254, %v3250
  %v4779 = vpack.c.b16 %v3255, %v3251
  %v4780 = vpack.c.b16 %v3256, %v3252
  %v4781 = vpack.c.b16 %v3257, %v3253
  %v4782 = vpack.c.b16 %v3262, %v3258
  %v4783 = vpack.c.b16 %v3263, %v3259
  %v4784 = vpack.c.b16 %v3264, %v3260
  %v4785 = vpack.c.b16 %v3265, %v3261
  %v4786 = vpack.c.b16 %v3270, %v3266
  %v4787 = vpack.c.b16 %v3271, %v3267
  %v4788 = vpack.c.b16 %v3272, %v3268
  %v4789 = vpack.c.b16 %v3273, %v3269
  %v4790 = vpack.c.b16 %v3278, %v3274
  %v4791 = vpack.c.b16 %v3279, %v3275
  %v4792 = vpack.c.b16 %v3280, %v3276
  %v4793 = vpack.c.b16 %v3281, %v3277
  %v4794 = vpack.c.b16 %v3286, %v3282
  %v4795 = vpack.c.b16 %v3287, %v3283
  %v4796 = vpack.c.b16 %v3288, %v3284
  %v4797 = vpack.c.b16 %v3289, %v3285
  %v4798 = vpack.c.b16 %v3294, %v3290
  %v4799 = vpack.c.b16 %v3295, %v3291
  %v4800 = vpack.c.b16 %v3296, %v3292
  %v4801 = vpack.c.b16 %v3297, %v3293
  %v4802 = vpack.c.b16 %v3302, %v3298
  %v4803 = vpack.c.b16 %v3303, %v3299
  %v4804 = vpack.c.b16 %v3304, %v3300
  %v4805 = vpack.c.b16 %v3305, %v3301
  %v4806 = vpack.c.b16 %v3310, %v3306
  %v4807 = vpack.c.b16 %v3311, %v3307
  %v4808 = vpack.c.b16 %v3312, %v3308
  %v4809 = vpack.c.b16 %v3313, %v3309
  %v4810 = vpack.c.b16 %v3318, %v3314
  %v4811 = vpack.c.b16 %v3319, %v3315
  %v4812 = vpack.c.b16 %v3320, %v3316
  %v4813 = vpack.c.b16 %v3321, %v3317
  %v4814 = vpack.c.b16 %v3326, %v3322
  %v4815 = vpack.c.b16 %v3327, %v3323
  %v4816 = vpack.c.b16 %v3328, %v3324
  %v4817 = vpack.c.b16 %v3329, %v3325
  %v4818 = vpack.c.b16 %v3334, %v3330
  %v4819 = vpack.c.b16 %v3335, %v3331
  %v4820 = vpack.c.b16 %v3336, %v3332
  %v4821 = vpack.c.b16 %v3337, %v3333
  %v4822 = vpack.c.b16 %v3342, %v3338
  %v4823 = vpack.c.b16 %v3343, %v3339
  %v4824 = vpack.c.b16 %v3344, %v3340
  %v4825 = vpack.c.b16 %v3345, %v3341
  %v4826 = vpack.c.b16 %v3350, %v3346
  %v4827 = vpack.c.b16 %v3351, %v3347
  %v4828 = vpack.c.b16 %v3352, %v3348
  %v4829 = vpack.c.b16 %v3353, %v3349
  %v4830 = vpack.c.b16 %v3358, %v3354
  %v4831 = vpack.c.b16 %v3359, %v3355
  %v4832 = vpack.c.b16 %v3360, %v3356
  %v4833 = vpack.c.b16 %v3361, %v3357
  %v4834 = vpack.c.b16 %v3366, %v3362
  %v4835 = vpack.c.b16 %v3367, %v3363
  %v4836 = vpack.c.b16 %v3368, %v3364
  %v4837 = vpack.c.b16 %v3369, %v3365
  %v4838 = vpack.c.b16 %v3374, %v3370
  %v4839 = vpack.c.b16 %v3375, %v3371
  %v4840 = vpack.c.b16 %v3376, %v3372
  %v4841 = vpack.c.b16 %v3377, %v3373
  %v4842 = vpack.c.b16 %v3382, %v3378
  %v4843 = vpack.c.b16 %v3383, %v3379
  %v4844 = vpack.c.b16 %v3384, %v3380
  %v4845 = vpack.c.b16 %v3385, %v3381
  %v4846 = vpack.c.b16 %v3390, %v3386
  %v4847 = vpack.c.b16 %v3391, %v3387
  %v4848 = vpack.c.b16 %v3392, %v3388
  %v4849 = vpack.c.b16 %v3393, %v3389
  %v4850 = vpack.c.b16 %v3398, %v3394
  %v4851 = vpack.c.b16 %v3399, %v3395
  %v4852 = vpack.c.b16 %v3400, %v3396
  %v4853 = vpack.c.b16 %v3401, %v3397
  %v4854 = vpack.c.b16 %v3406, %v3402
  %v4855 = vpack.c.b16 %v3407, %v3403
  %v4856 = vpack.c.b16 %v3408, %v3404
  %v4857 = vpack.c.b16 %v3409, %v3405
  %v4858 = vpack.c.b16 %v3414, %v3410
  %v4859 = vpack.c.b16 %v3415, %v3411
  %v4860 = vpack.c.b16 %v3416, %v3412
  %v4861 = vpack.c.b16 %v3417, %v3413
  %v4862 = vpack.c.b16 %v3422, %v3418
  %v4863 = vpack.c.b16 %v3423, %v3419
  %v4864 = vpack.c.b16 %v3424, %v3420
  %v4865 = vpack.c.b16 %v3425, %v3421
  %v4866 = vpack.c.b16 %v3430, %v3426
  %v4867 = vpack.c.b16 %v3431, %v3427
  %v4868 = vpack.c.b16 %v3432, %v3428
  %v4869 = vpack.c.b16 %v3433, %v3429
  %v4870 = vpack.c.b16 %v3438, %v3434
  %v4871 = vpack.c.b16 %v3439, %v3435
  %v4872 = vpack.c.b16 %v3440, %v3436
  %v4873 = vpack.c.b16 %v3441, %v3437
  %v4874 = vpack.c.b16 %v3446, %v3442
  %v4875 = vpack.c.b16 %v3447, %v3443
  %v4876 = vpack.c.b16 %v3448, %v3444
  %v4877 = vpack.c.b16 %v3449, %v3445
  %v4878 = vpack.c.b16 %v3454, %v3450
  %v4879 = vpack.c.b16 %v3455, %v3451
  %v4880 = vpack.c.b16 %v3456, %v3452
  %v4881 = vpack.c.b16 %v3457, %v3453
  %v4882 = vpack.c.b16 %v3462, %v3458
  %v4883 = vpack.c.b16 %v3463, %v3459
  %v4884 = vpack.c.b16 %v3464, %v3460
  %v4885 = vpack.c.b16 %v3465, %v3461
  %v4886 = vpack.c.b16 %v3470, %v3466
  %v4887 = vpack.c.b16 %v3471, %v3467
  %v4888 = vpack.c.b16 %v3472, %v3468
  %v4889 = vpack.c.b16 %v3473, %v3469
  %v4890 = vpack.c.b16 %v3478, %v3474
  %v4891 = vpack.c.b16 %v3479, %v3475
  %v4892 = vpack.c.b16 %v3480, %v3476
  %v4893 = vpack.c.b16 %v3481, %v3477
  %v4894 = vpack.c.b16 %v3486, %v3482
  %v4895 = vpack.c.b16 %v3487, %v3483
  %v4896 = vpack.c.b16 %v3488, %v3484
  %v4897 = vpack.c.b16 %v3489, %v3485
  %v4898 = vpack.c.b16 %v3494, %v3490
  %v4899 = vpack.c.b16 %v3495, %v3491
  %v4900 = vpack.c.b16 %v3496, %v3492
  %v4901 = vpack.c.b16 %v3497, %v3493
  %v4902 = vpack.c.b16 %v3502, %v3498
  %v4903 = vpack.c.b16 %v3503, %v3499
  %v4904 = vpack.c.b16 %v3504, %v3500
  %v4905 = vpack.c.b16 %v3505, %v3501
  %v4906 = vpack.c.b16 %v3510, %v3506
  %v4907 = vpack.c.b16 %v3511, %v3507
  %v4908 = vpack.c.b16 %v3512, %v3508
  %v4909 = vpack.c.b16 %v3513, %v3509
  %v4910 = vpack.c.b16 %v3518, %v3514
  %v4911 = vpack.c.b16 %v3519, %v3515
  %v4912 = vpack.c.b16 %v3520, %v3516
  %v4913 = vpack.c.b16 %v3521, %v3517
  %v4914 = vpack.c.b16 %v3526, %v3522
  %v4915 = vpack.c.b16 %v3527, %v3523
  %v4916 = vpack.c.b16 %v3528, %v3524
  %v4917 = vpack.c.b16 %v3529, %v3525
  %v4918 = vpack.c.b16 %v3534, %v3530
  %v4919 = vpack.c.b16 %v3535, %v3531
  %v4920 = vpack.c.b16 %v3536, %v3532
  %v4921 = vpack.c.b16 %v3537, %v3533
  %v4922 = vpack.c.b16 %v3542, %v3538
  %v4923 = vpack.c.b16 %v3543, %v3539
  %v4924 = vpack.c.b16 %v3544, %v3540
  %v4925 = vpack.c.b16 %v3545, %v3541
  %v4926 = vpack.c.b16 %v3550, %v3546
  %v4927 = vpack.c.b16 %v3551, %v3547
  %v4928 = vpack.c.b16 %v3552, %v3548
  %v4929 = vpack.c.b16 %v3553, %v3549
  %v4930 = vpack.c.b16 %v3558, %v3554
  %v4931 = vpack.c.b16 %v3559, %v3555
  %v4932 = vpack.c.b16 %v3560, %v3556
  %v4933 = vpack.c.b16 %v3561, %v3557
  %v4934 = vpack.c.b16 %v3566, %v3562
  %v4935 = vpack.c.b16 %v3567, %v3563
  %v4936 = vpack.c.b16 %v3568, %v3564
  %v4937 = vpack.c.b16 %v3569, %v3565
  %v4938 = vpack.c.b16 %v3574, %v3570
  %v4939 = vpack.c.b16 %v3575, %v3571
  %v4940 = vpack.c.b16 %v3576, %v3572
  %v4941 = vpack.c.b16 %v3577, %v3573
  %v4942 = vpack.c.b16 %v3582, %v3578
  %v4943 = vpack.c.b16 %v3583, %v3579
  %v4944 = vpack.c.b16 %v3584, %v3580
  %v4945 = vpack.c.b16 %v3585, %v3581
  %v4946 = vpack.c.b16 %v3590, %v3586
  %v4947 = vpack.c.b16 %v3591, %v3587
  %v4948 = vpack.c.b16 %v3592, %v3588
  %v4949 = vpack.c.b16 %v3593, %v3589
  %v4950 = vpack.c.b16 %v3598, %v3594
  %v4951 = vpack.c.b16 %v3599, %v3595
  %v4952 = vpack.c.b16 %v3600, %v3596
  %v4953 = vpack.c.b16 %v3601, %v3597
  %v4954 = vpack.c.b16 %v3606, %v3602
  %v4955 = vpack.c.b16 %v3607, %v3603
  %v4956 = vpack.c.b16 %v3608, %v3604
  %v4957 = vpack.c.b16 %v3609, %v3605
  %v4958 = vpack.c.b16 %v3614, %v3610
  %v4959 = vpack.c.b16 %v3615, %v3611
  %v4960 = vpack.c.b16 %v3616, %v3612
  %v4961 = vpack.c.b16 %v3617, %v3613
  %v4962 = vpack.c.b16 %v3622, %v3618
  %v4963 = vpack.c.b16 %v3623, %v3619
  %v4964 = vpack.c.b16 %v3624, %v3620
  %v4965 = vpack.c.b16 %v3625, %v3621
  %v4966 = vpack.c.b16 %v3630, %v3626
  %v4967 = vpack.c.b16 %v3631, %v3627
  %v4968 = vpack.c.b16 %v3632, %v3628
  %v4969 = vpack.c.b16 %v3633, %v3629
  %v4970 = vpack.c.b16 %v3638, %v3634
  %v4971 = vpack.c.b16 %v3639, %v3635
  %v4972 = vpack.c.b16 %v3640, %v3636
  %v4973 = vpack.c.b16 %v3641, %v3637
  %v4974 = vpack.c.b16 %v3646, %v3642
  %v4975 = vpack.c.b16 %v3647, %v3643
  %v4976 = vpack.c.b16 %v3648, %v3644
  %v4977 = vpack.c.b16 %v3649, %v3645
  %v4978 = vpack.c.b16 %v3654, %v3650
  %v4979 = vpack.c.b16 %v3655, %v3651
  %v4980 = vpack.c.b16 %v3656, %v3652
  %v4981 = vpack.c.b16 %v3657, %v3653
  %v4982 = vpack.c.b16 %v3662, %v3658
  %v4983 = vpack.c.b16 %v3663, %v3659
  %v4984 = vpack.c.b16 %v3664, %v3660
  %v4985 = vpack.c.b16 %v3665, %v3661
  %v4986 = vpack.c.b16 %v3670, %v3666
  %v4987 = vpack.c.b16 %v3671, %v3667
  %v4988 = vpack.c.b16 %v3672, %v3668
  %v4989 = vpack.c.b16 %v3673, %v3669
  %v4990 = vpack.c.b16 %v3678, %v3674
  %v4991 = vpack.c.b16 %v3679, %v3675
  %v4992 = vpack.c.b16 %v3680, %v3676
  %v4993 = vpack.c.b16 %v3681, %v3677
  %v4994 = vpack.c.b16 %v3686, %v3682
  %v4995 = vpack.c.b16 %v3687, %v3683
  %v4996 = vpack.c.b16 %v3688, %v3684
  %v4997 = vpack.c.b16 %v3689, %v3685
  %v4998 = vpack.c.b16 %v3694, %v3690
  %v4999 = vpack.c.b16 %v3695, %v3691
  %v5000 = vpack.c.b16 %v3696, %v3692
  %v5001 = vpack.c.b16 %v3697, %v3693
  %v5002 = vpack.c.b16 %v3702, %v3698
  %v5003 = vpack.c.b16 %v3703, %v3699
  %v5004 = vpack.c.b16 %v3704, %v3700
  %v5005 = vpack.c.b16 %v3705, %v3701
  %v5006 = vpack.c.b16 %v3710, %v3706
  %v5007 = vpack.c.b16 %v3711, %v3707
  %v5008 = vpack.c.b16 %v3712, %v3708
  %v5009 = vpack.c.b16 %v3713, %v3709
  %v5010 = vpack.c.b16 %v3718, %v3714
  %v5011 = vpack.c.b16 %v3719, %v3715
  %v5012 = vpack.c.b16 %v3720, %v3716
  %v5013 = vpack.c.b16 %v3721, %v3717
  %v5014 = vpack.c.b16 %v3726, %v3722
  %v5015 = vpack.c.b16 %v3727, %v3723
  %v5016 = vpack.c.b16 %v3728, %v3724
  %v5017 = vpack.c.b16 %v3729, %v3725
  %v5018 = vpack.c.b16 %v3734, %v3730
  %v5019 = vpack.c.b16 %v3735, %v3731
  %v5020 = vpack.c.b16 %v3736, %v3732
  %v5021 = vpack.c.b16 %v3737, %v3733
  %v5022 = vpack.c.b16 %v3742, %v3738
  %v5023 = vpack.c.b16 %v3743, %v3739
  %v5024 = vpack.c.b16 %v3744, %v3740
  %v5025 = vpack.c.b16 %v3745, %v3741
  %v5026 = vpack.c.b16 %v3750, %v3746
  %v5027 = vpack.c.b16 %v3751, %v3747
  %v5028 = vpack.c.b16 %v3752, %v3748
  %v5029 = vpack.c.b16 %v3753, %v3749
  %v5030 = vpack.c.b16 %v3758, %v3754
  %v5031 = vpack.c.b16 %v3759, %v3755
  %v5032 = vpack.c.b16 %v3760, %v3756
  %v5033 = vpack.c.b16 %v3761, %v3757
  %v5034 = vpack.c.b16 %v3766, %v3762
  %v5035 = vpack.c.b16 %v3767, %v3763
  %v5036 = vpack.c.b16 %v3768, %v3764
  %v5037 = vpack.c.b16 %v3769, %v3765
  %v5038 = vpack.c.b16 %v3774, %v3770
  %v5039 = vpack.c.b16 %v3775, %v3771
  %v5040 = vpack.c.b16 %v3776, %v3772
  %v5041 = vpack.c.b16 %v3777, %v3773
  %v5042 = vpack.c.b16 %v3782, %v3778
  %v5043 = vpack.c.b16 %v3783, %v3779
  %v5044 = vpack.c.b16 %v3784, %v3780
  %v5045 = vpack.c.b16 %v3785, %v3781
  %v5046 = vpack.c.b16 %v3790, %v3786
  %v5047 = vpack.c.b16 %v3791, %v3787
  %v5048 = vpack.c.b16 %v3792, %v3788
  %v5049 = vpack.c.b16 %v3793, %v3789
  %v5050 = vpack.c.b16 %v3798, %v3794
  %v5051 = vpack.c.b16 %v3799, %v3795
  %v5052 = vpack.c.b16 %v3800, %v3796
  %v5053 = vpack.c.b16 %v3801, %v3797
  %v5054 = vpack.c.b16 %v3806, %v3802
  %v5055 = vpack.c.b16 %v3807, %v3803
  %v5056 = vpack.c.b16 %v3808, %v3804
  %v5057 = vpack.c.b16 %v3809, %v3805
  %v5058 = vpack.c.b16 %v3814, %v3810
  %v5059 = vpack.c.b16 %v3815, %v3811
  %v5060 = vpack.c.b16 %v3816, %v3812
  %v5061 = vpack.c.b16 %v3817, %v3813
  %v5062 = vpack.c.b16 %v3822, %v3818
  %v5063 = vpack.c.b16 %v3823, %v3819
  %v5064 = vpack.c.b16 %v3824, %v3820
  %v5065 = vpack.c.b16 %v3825, %v3821
  %v5066 = vpack.c.b16 %v3830, %v3826
  %v5067 = vpack.c.b16 %v3831, %v3827
  %v5068 = vpack.c.b16 %v3832, %v3828
  %v5069 = vpack.c.b16 %v3833, %v3829
  %v5070 = vpack.c.b16 %v3838, %v3834
  %v5071 = vpack.c.b16 %v3839, %v3835
  %v5072 = vpack.c.b16 %v3840, %v3836
  %v5073 = vpack.c.b16 %v3841, %v3837
  %v5074 = vpack.c.b16 %v3846, %v3842
  %v5075 = vpack.c.b16 %v3847, %v3843
  %v5076 = vpack.c.b16 %v3848, %v3844
  %v5077 = vpack.c.b16 %v3849, %v3845
  %v5078 = vpack.c.b16 %v3854, %v3850
  %v5079 = vpack.c.b16 %v3855, %v3851
  %v5080 = vpack.c.b16 %v3856, %v3852
  %v5081 = vpack.c.b16 %v3857, %v3853
  %v5082 = vpack.c.b16 %v3862, %v3858
  %v5083 = vpack.c.b16 %v3863, %v3859
  %v5084 = vpack.c.b16 %v3864, %v3860
  %v5085 = vpack.c.b16 %v3865, %v3861
  %v5086 = vpack.c.b16 %v3870, %v3866
  %v5087 = vpack.c.b16 %v3871, %v3867
  %v5088 = vpack.c.b16 %v3872, %v3868
  %v5089 = vpack.c.b16 %v3873, %v3869
  %v5090 = vpack.c.b16 %v3878, %v3874
  %v5091 = vpack.c.b16 %v3879, %v3875
  %v5092 = vpack.c.b16 %v3880, %v3876
  %v5093 = vpack.c.b16 %v3881, %v3877
  %v5094 = vpack.c.b16 %v3886, %v3882
  %v5095 = vpack.c.b16 %v3887, %v3883
  %v5096 = vpack.c.b16 %v3888, %v3884
  %v5097 = vpack.c.b16 %v3889, %v3885
  %v5098 = vpack.c.b16 %v3894, %v3890
  %v5099 = vpack.c.b16 %v3895, %v3891
  %v5100 = vpack.c.b16 %v3896, %v3892
  %v5101 = vpack.c.b16 %v3897, %v3893
  %v5102 = vpack.c.b16 %v3902, %v3898
  %v5103 = vpack.c.b16 %v3903, %v3899
  %v5104 = vpack.c.b16 %v3904, %v3900
  %v5105 = vpack.c.b16 %v3905, %v3901
  %v5106 = vpack.c.b16 %v3910, %v3906
  %v5107 = vpack.c.b16 %v3911, %v3907
  %v5108 = vpack.c.b16 %v3912, %v3908
  %v5109 = vpack.c.b16 %v3913, %v3909
  %v5110 = vpack.c.b16 %v3918, %v3914
  %v5111 = vpack.c.b16 %v3919, %v3915
  %v5112 = vpack.c.b16 %v3920, %v3916
  %v5113 = vpack.c.b16 %v3921, %v3917
  %v5114 = vpack.c.b16 %v3926, %v3922
  %v5115 = vpack.c.b16 %v3927, %v3923
  %v5116 = vpack.c.b16 %v3928, %v3924
  %v5117 = vpack.c.b16 %v3929, %v3925
  %v5118 = vpack.c.b16 %v3934, %v3930
  %v5119 = vpack.c.b16 %v3935, %v3931
  %v5120 = vpack.c.b16 %v3936, %v3932
  %v5121 = vpack.c.b16 %v3937, %v3933
  %v5122 = vpack.c.b16 %v3942, %v3938
  %v5123 = vpack.c.b16 %v3943, %v3939
  %v5124 = vpack.c.b16 %v3944, %v3940
  %v5125 = vpack.c.b16 %v3945, %v3941
  %v5126 = vpack.c.b16 %v3950, %v3946
  %v5127 = vpack.c.b16 %v3951, %v3947
  %v5128 = vpack.c.b16 %v3952, %v3948
  %v5129 = vpack.c.b16 %v3953, %v3949
  %v5130 = vpack.c.b16 %v3958, %v3954
  %v5131 = vpack.c.b16 %v3959, %v3955
  %v5132 = vpack.c.b16 %v3960, %v3956
  %v5133 = vpack.c.b16 %v3961, %v3957
  %v5134 = vpack.c.b16 %v3966, %v3962
  %v5135 = vpack.c.b16 %v3967, %v3963
  %v5136 = vpack.c.b16 %v3968, %v3964
  %v5137 = vpack.c.b16 %v3969, %v3965
  %v5138 = vpack.c.b16 %v3974, %v3970
  %v5139 = vpack.c.b16 %v3975, %v3971
  %v5140 = vpack.c.b16 %v3976, %v3972
  %v5141 = vpack.c.b16 %v3977, %v3973
  %v5142 = vpack.c.b16 %v3982, %v3978
  %v5143 = vpack.c.b16 %v3983, %v3979
  %v5144 = vpack.c.b16 %v3984, %v3980
  %v5145 = vpack.c.b16 %v3985, %v3981
  %v5146 = vpack.c.b16 %v3990, %v3986
  %v5147 = vpack.c.b16 %v3991, %v3987
  %v5148 = vpack.c.b16 %v3992, %v3988
  %v5149 = vpack.c.b16 %v3993, %v3989
  %v5150 = vpack.c.b16 %v3998, %v3994
  %v5151 = vpack.c.b16 %v3999, %v3995
  %v5152 = vpack.c.b16 %v4000, %v3996
  %v5153 = vpack.c.b16 %v4001, %v3997
  %v5154 = vpack.c.b16 %v4006, %v4002
  %v5155 = vpack.c.b16 %v4007, %v4003
  %v5156 = vpack.c.b16 %v4008, %v4004
  %v5157 = vpack.c.b16 %v4009, %v4005
  %v5158 = vpack.c.b16 %v4014, %v4010
  %v5159 = vpack.c.b16 %v4015, %v4011
  %v5160 = vpack.c.b16 %v4016, %v4012
  %v5161 = vpack.c.b16 %v4017, %v4013
  %v5162 = vpack.c.b16 %v4022, %v4018
  %v5163 = vpack.c.b16 %v4023, %v4019
  %v5164 = vpack.c.b16 %v4024, %v4020
  %v5165 = vpack.c.b16 %v4025, %v4021
  %v5166 = vpack.c.b16 %v4030, %v4026
  %v5167 = vpack.c.b16 %v4031, %v4027
  %v5168 = vpack.c.b16 %v4032, %v4028
  %v5169 = vpack.c.b16 %v4033, %v4029
  %v5170 = vpack.c.b16 %v4038, %v4034
  %v5171 = vpack.c.b16 %v4039, %v4035
  %v5172 = vpack.c.b16 %v4040, %v4036
  %v5173 = vpack.c.b16 %v4041, %v4037
  %v5174 = vpack.c.b16 %v4046, %v4042
  %v5175 = vpack.c.b16 %v4047, %v4043
  %v5176 = vpack.c.b16 %v4048, %v4044
  %v5177 = vpack.c.b16 %v4049, %v4045
  %v5178 = vpack.c.b16 %v4054, %v4050
  %v5179 = vpack.c.b16 %v4055, %v4051
  %v5180 = vpack.c.b16 %v4056, %v4052
  %v5181 = vpack.c.b16 %v4057, %v4053
  %v5182 = vpack.c.b16 %v4062, %v4058
  %v5183 = vpack.c.b16 %v4063, %v4059
  %v5184 = vpack.c.b16 %v4064, %v4060
  %v5185 = vpack.c.b16 %v4065, %v4061
  %v5186 = vpack.c.b16 %v4070, %v4066
  %v5187 = vpack.c.b16 %v4071, %v4067
  %v5188 = vpack.c.b16 %v4072, %v4068
  %v5189 = vpack.c.b16 %v4073, %v4069
  %v5190 = vpack.c.b16 %v4078, %v4074
  %v5191 = vpack.c.b16 %v4079, %v4075
  %v5192 = vpack.c.b16 %v4080, %v4076
  %v5193 = vpack.c.b16 %v4081, %v4077
  %v5194 = vpack.c.b16 %v4086, %v4082
  %v5195 = vpack.c.b16 %v4087, %v4083
  %v5196 = vpack.c.b16 %v4088, %v4084
  %v5197 = vpack.c.b16 %v4089, %v4085
  %v5198 = vpack.c.b16 %v4094, %v4090
  %v5199 = vpack.c.b16 %v4095, %v4091
  %v5200 = vpack.c.b16 %v4096, %v4092
  %v5201 = vpack.c.b16 %v4097, %v4093
  %v5202 = vpack.c.b16 %v4102, %v4098
  %v5203 = vpack.c.b16 %v4103, %v4099
  %v5204 = vpack.c.b16 %v4104, %v4100
  %v5205 = vpack.c.b16 %v4105, %v4101
  %v5206 = vpack.c.b16 %v4110, %v4106
  %v5207 = vpack.c.b16 %v4111, %v4107
  %v5208 = vpack.c.b16 %v4112, %v4108
  %v5209 = vpack.c.b16 %v4113, %v4109
  %v5210 = vpack.c.b16 %v4118, %v4114
  %v5211 = vpack.c.b16 %v4119, %v4115
  %v5212 = vpack.c.b16 %v4120, %v4116
  %v5213 = vpack.c.b16 %v4121, %v4117
  %v5214 = vpack.c.b16 %v4126, %v4122
  %v5215 = vpack.c.b16 %v4127, %v4123
  %v5216 = vpack.c.b16 %v4128, %v4124
  %v5217 = vpack.c.b16 %v4129, %v4125
  %v5218 = vpack.c.b16 %v4134, %v4130
  %v5219 = vpack.c.b16 %v4135, %v4131
  %v5220 = vpack.c.b16 %v4136, %v4132
  %v5221 = vpack.c.b16 %v4137, %v4133
  %v5222 = vpack.c.b16 %v4142, %v4138
  %v5223 = vpack.c.b16 %v4143, %v4139
  %v5224 = vpack.c.b16 %v4144, %v4140
  %v5225 = vpack.c.b16 %v4145, %v4141
  %v5226 = vpack.c.b16 %v4150, %v4146
  %v5227 = vpack.c.b16 %v4151, %v4147
  %v5228 = vpack.c.b16 %v4152, %v4148
  %v5229 = vpack.c.b16 %v4153, %v4149
  %v5230 = vpack.c.b16 %v4158, %v4154
  %v5231 = vpack.c.b16 %v4159, %v4155
  %v5232 = vpack.c.b16 %v4160, %v4156
  %v5233 = vpack.c.b16 %v4161, %v4157
  %v5234 = vpack.c.b16 %v4166, %v4162
  %v5235 = vpack.c.b16 %v4167, %v4163
  %v5236 = vpack.c.b16 %v4168, %v4164
  %v5237 = vpack.c.b16 %v4169, %v4165
  %v5238 = vpack.c.b16 %v4174, %v4170
  %v5239 = vpack.c.b16 %v4175, %v4171
  %v5240 = vpack.c.b16 %v4176, %v4172
  %v5241 = vpack.c.b16 %v4177, %v4173
  %v5242 = vpack.c.b16 %v4182, %v4178
  %v5243 = vpack.c.b16 %v4183, %v4179
  %v5244 = vpack.c.b16 %v4184, %v4180
  %v5245 = vpack.c.b16 %v4185, %v4181
  %v5246 = vpack.c.b16 %v4190, %v4186
  %v5247 = vpack.c.b16 %v4191, %v4187
  %v5248 = vpack.c.b16 %v4192, %v4188
  %v5249 = vpack.c.b16 %v4193, %v4189
  %v5250 = vpack.c.b16 %v4198, %v4194
  %v5251 = vpack.c.b16 %v4199, %v4195
  %v5252 = vpack.c.b16 %v4200, %v4196
  %v5253 = vpack.c.b16 %v4201, %v4197
  %v5254 = vpack.c.b16 %v4206, %v4202
  %v5255 = vpack.c.b16 %v4207, %v4203
  %v5256 = vpack.c.b16 %v4208, %v4204
  %v5257 = vpack.c.b16 %v4209, %v4205
  %v5258 = vpack.c.b16 %v4214, %v4210
  %v5259 = vpack.c.b16 %v4215, %v4211
  %v5260 = vpack.c.b16 %v4216, %v4212
  %v5261 = vpack.c.b16 %v4217, %v4213
  %v5262 = vpack.c.b16 %v4222, %v4218
  %v5263 = vpack.c.b16 %v4223, %v4219
  %v5264 = vpack.c.b16 %v4224, %v4220
  %v5265 = vpack.c.b16 %v4225, %v4221
  %v5266 = vpack.c.b16 %v4230, %v4226
  %v5267 = vpack.c.b16 %v4231, %v4227
  %v5268 = vpack.c.b16 %v4232, %v4228
  %v5269 = vpack.c.b16 %v4233, %v4229
  %v5270 = vpack.c.b16 %v4238, %v4234
  %v5271 = vpack.c.b16 %v4239, %v4235
  %v5272 = vpack.c.b16 %v4240, %v4236
  %v5273 = vpack.c.b16 %v4241, %v4237
  %v5274 = vpack.c.b16 %v4246, %v4242
  %v5275 = vpack.c.b16 %v4247, %v4243
  %v5276 = vpack.c.b16 %v4248, %v4244
  %v5277 = vpack.c.b16 %v4249, %v4245
  %v5278 = vpack.c.b16 %v4254, %v4250
  %v5279 = vpack.c.b16 %v4255, %v4251
  %v5280 = vpack.c.b16 %v4256, %v4252
  %v5281 = vpack.c.b16 %v4257, %v4253
  %6306 = vmatprep.subr.bf16.mxu0 %v4287
  %6307 = vmatpush1.bf16.msra.mxu0 %v4286
  %6308 = vmatprep.subr.bf16.mxu0 %v4283
  %6309 = vmatpush1.bf16.msra.mxu0 %v4282
  %6310 = vmatprep.subr.bf16.mxu0 %v4279
  %6311 = vmatpush1.bf16.msra.mxu0 %v4278
  %6312 = vmatprep.subr.bf16.mxu0 %v4275
  %6313 = vmatpush1.bf16.msra.mxu0 %v4274
  %6314 = vmatprep.subr.bf16.mxu0 %v4271
  %6315 = vmatpush1.bf16.msra.mxu0 %v4270
  %6316 = vmatprep.subr.bf16.mxu0 %v4267
  %6317 = vmatpush1.bf16.msra.mxu0 %v4266
  %6318 = vmatprep.subr.bf16.mxu0 %v4263
  %6319 = vmatpush1.bf16.msra.mxu0 %v4262
  %6320 = vmatprep.subr.bf16.mxu0 %v4259
  %6321 = vmatpush1.bf16.msra.mxu0 %v4258
  %6322 = vmatprep.subr.bf16.mxu0 %v4319
  %6323 = vmatpush2.bf16.msra.mxu0 %v4318
  %6324 = vmatprep.subr.bf16.mxu0 %v4315
  %6325 = vmatpush2.bf16.msra.mxu0 %v4314
  %6326 = vmatprep.subr.bf16.mxu0 %v4311
  %6327 = vmatpush2.bf16.msra.mxu0 %v4310
  %6328 = vmatprep.subr.bf16.mxu0 %v4307
  %6329 = vmatpush2.bf16.msra.mxu0 %v4306
  %6330 = vmatprep.subr.bf16.mxu0 %v4303
  %6331 = vmatpush2.bf16.msra.mxu0 %v4302
  %6332 = vmatprep.subr.bf16.mxu0 %v4299
  %6333 = vmatpush2.bf16.msra.mxu0 %v4298
  %6334 = vmatprep.subr.bf16.mxu0 %v4295
  %6335 = vmatpush2.bf16.msra.mxu0 %v4294
  %6336 = vmatprep.subr.bf16.mxu0 %v4291
  %6337 = vmatpush2.bf16.msra.mxu0 %v4290
  %6338 = vmatprep.mubr.bf16.mxu0 %v1123
  %6339 = vmatmul.mubr.bf16.gmra.mxu0 %v1122
  %v6340 = vpop.f32.mrf.mxu0
  %v6341 = vadd.f32 0.0, %v6340
  %v6342 = vpop.f32.mrf.mxu0
  %v6343 = vadd.f32 0.0, %v6342
  %v6344 = vpop.f32.mrf.mxu0
  %v6345 = vpop.f32.mrf.mxu0
  %6346 = vdwg.mxu0
  %6347 = vmatprep.subr.bf16.mxu0 %v4351
  %6348 = vmatpush1.bf16.msra.mxu0 %v4350
  %6349 = vmatprep.subr.bf16.mxu0 %v4347
  %6350 = vmatpush1.bf16.msra.mxu0 %v4346
  %6351 = vmatprep.subr.bf16.mxu0 %v4343
  %6352 = vmatpush1.bf16.msra.mxu0 %v4342
  %6353 = vmatprep.subr.bf16.mxu0 %v4339
  %6354 = vmatpush1.bf16.msra.mxu0 %v4338
  %6355 = vmatprep.subr.bf16.mxu0 %v4335
  %6356 = vmatpush1.bf16.msra.mxu0 %v4334
  %6357 = vmatprep.subr.bf16.mxu0 %v4331
  %6358 = vmatpush1.bf16.msra.mxu0 %v4330
  %6359 = vmatprep.subr.bf16.mxu0 %v4327
  %6360 = vmatpush1.bf16.msra.mxu0 %v4326
  %6361 = vmatprep.subr.bf16.mxu0 %v4323
  %6362 = vmatpush1.bf16.msra.mxu0 %v4322
  %6363 = vmatprep.subr.bf16.mxu0 %v4383
  %6364 = vmatpush2.bf16.msra.mxu0 %v4382
  %6365 = vmatprep.subr.bf16.mxu0 %v4379
  %6366 = vmatpush2.bf16.msra.mxu0 %v4378
  %6367 = vmatprep.subr.bf16.mxu0 %v4375
  %6368 = vmatpush2.bf16.msra.mxu0 %v4374
  %6369 = vmatprep.subr.bf16.mxu0 %v4371
  %6370 = vmatpush2.bf16.msra.mxu0 %v4370
  %6371 = vmatprep.subr.bf16.mxu0 %v4367
  %6372 = vmatpush2.bf16.msra.mxu0 %v4366
  %6373 = vmatprep.subr.bf16.mxu0 %v4363
  %6374 = vmatpush2.bf16.msra.mxu0 %v4362
  %6375 = vmatprep.subr.bf16.mxu0 %v4359
  %6376 = vmatpush2.bf16.msra.mxu0 %v4358
  %6377 = vmatprep.subr.bf16.mxu0 %v4355
  %6378 = vmatpush2.bf16.msra.mxu0 %v4354
  %6379 = vmatprep.mubr.bf16.mxu0 %v1125
  %6380 = vmatmul.mubr.bf16.gmra.mxu0 %v1124
  %v6381 = vpop.f32.mrf.mxu0
  %v6382 = vadd.f32 %v6341, %v6381
  %v6383 = vpop.f32.mrf.mxu0
  %v6384 = vadd.f32 %v6343, %v6383
  %v6385 = vpop.f32.mrf.mxu0
  %v6386 = vpop.f32.mrf.mxu0
  %6387 = vdwg.mxu0
  %6388 = vmatprep.subr.bf16.mxu0 %v4415
  %6389 = vmatpush1.bf16.msra.mxu0 %v4414
  %6390 = vmatprep.subr.bf16.mxu0 %v4411
  %6391 = vmatpush1.bf16.msra.mxu0 %v4410
  %6392 = vmatprep.subr.bf16.mxu0 %v4407
  %6393 = vmatpush1.bf16.msra.mxu0 %v4406
  %6394 = vmatprep.subr.bf16.mxu0 %v4403
  %6395 = vmatpush1.bf16.msra.mxu0 %v4402
  %6396 = vmatprep.subr.bf16.mxu0 %v4399
  %6397 = vmatpush1.bf16.msra.mxu0 %v4398
  %6398 = vmatprep.subr.bf16.mxu0 %v4395
  %6399 = vmatpush1.bf16.msra.mxu0 %v4394
  %6400 = vmatprep.subr.bf16.mxu0 %v4391
  %6401 = vmatpush1.bf16.msra.mxu0 %v4390
  %6402 = vmatprep.subr.bf16.mxu0 %v4387
  %6403 = vmatpush1.bf16.msra.mxu0 %v4386
  %6404 = vmatprep.subr.bf16.mxu0 %v4447
  %6405 = vmatpush2.bf16.msra.mxu0 %v4446
  %6406 = vmatprep.subr.bf16.mxu0 %v4443
  %6407 = vmatpush2.bf16.msra.mxu0 %v4442
  %6408 = vmatprep.subr.bf16.mxu0 %v4439
  %6409 = vmatpush2.bf16.msra.mxu0 %v4438
  %6410 = vmatprep.subr.bf16.mxu0 %v4435
  %6411 = vmatpush2.bf16.msra.mxu0 %v4434
  %6412 = vmatprep.subr.bf16.mxu0 %v4431
  %6413 = vmatpush2.bf16.msra.mxu0 %v4430
  %6414 = vmatprep.subr.bf16.mxu0 %v4427
  %6415 = vmatpush2.bf16.msra.mxu0 %v4426
  %6416 = vmatprep.subr.bf16.mxu0 %v4423
  %6417 = vmatpush2.bf16.msra.mxu0 %v4422
  %6418 = vmatprep.subr.bf16.mxu0 %v4419
  %6419 = vmatpush2.bf16.msra.mxu0 %v4418
  %6420 = vmatprep.mubr.bf16.mxu0 %v1127
  %6421 = vmatmul.mubr.bf16.gmra.mxu0 %v1126
  %v6422 = vpop.f32.mrf.mxu0
  %v6423 = vadd.f32 %v6382, %v6422
  %v6424 = vpop.f32.mrf.mxu0
  %v6425 = vadd.f32 %v6384, %v6424
  %v6426 = vpop.f32.mrf.mxu0
  %v6427 = vpop.f32.mrf.mxu0
  %6428 = vdwg.mxu0
  %6429 = vmatprep.subr.bf16.mxu0 %v4479
  %6430 = vmatpush1.bf16.msra.mxu0 %v4478
  %6431 = vmatprep.subr.bf16.mxu0 %v4475
  %6432 = vmatpush1.bf16.msra.mxu0 %v4474
  %6433 = vmatprep.subr.bf16.mxu0 %v4471
  %6434 = vmatpush1.bf16.msra.mxu0 %v4470
  %6435 = vmatprep.subr.bf16.mxu0 %v4467
  %6436 = vmatpush1.bf16.msra.mxu0 %v4466
  %6437 = vmatprep.subr.bf16.mxu0 %v4463
  %6438 = vmatpush1.bf16.msra.mxu0 %v4462
  %6439 = vmatprep.subr.bf16.mxu0 %v4459
  %6440 = vmatpush1.bf16.msra.mxu0 %v4458
  %6441 = vmatprep.subr.bf16.mxu0 %v4455
  %6442 = vmatpush1.bf16.msra.mxu0 %v4454
  %6443 = vmatprep.subr.bf16.mxu0 %v4451
  %6444 = vmatpush1.bf16.msra.mxu0 %v4450
  %6445 = vmatprep.subr.bf16.mxu0 %v4511
  %6446 = vmatpush2.bf16.msra.mxu0 %v4510
  %6447 = vmatprep.subr.bf16.mxu0 %v4507
  %6448 = vmatpush2.bf16.msra.mxu0 %v4506
  %6449 = vmatprep.subr.bf16.mxu0 %v4503
  %6450 = vmatpush2.bf16.msra.mxu0 %v4502
  %6451 = vmatprep.subr.bf16.mxu0 %v4499
  %6452 = vmatpush2.bf16.msra.mxu0 %v4498
  %6453 = vmatprep.subr.bf16.mxu0 %v4495
  %6454 = vmatpush2.bf16.msra.mxu0 %v4494
  %6455 = vmatprep.subr.bf16.mxu0 %v4491
  %6456 = vmatpush2.bf16.msra.mxu0 %v4490
  %6457 = vmatprep.subr.bf16.mxu0 %v4487
  %6458 = vmatpush2.bf16.msra.mxu0 %v4486
  %6459 = vmatprep.subr.bf16.mxu0 %v4483
  %6460 = vmatpush2.bf16.msra.mxu0 %v4482
  %6461 = vmatprep.mubr.bf16.mxu0 %v1129
  %6462 = vmatmul.mubr.bf16.gmra.mxu0 %v1128
  %v6463 = vpop.f32.mrf.mxu0
  %v6464 = vadd.f32 %v6423, %v6463
  %v6465 = vpop.f32.mrf.mxu0
  %v6466 = vadd.f32 %v6425, %v6465
  %v6467 = vpop.f32.mrf.mxu0
  %v6468 = vpop.f32.mrf.mxu0
  %6469 = vdwg.mxu0
  %6470 = vmatprep.subr.bf16.mxu0 %v4543
  %6471 = vmatpush1.bf16.msra.mxu0 %v4542
  %6472 = vmatprep.subr.bf16.mxu0 %v4539
  %6473 = vmatpush1.bf16.msra.mxu0 %v4538
  %6474 = vmatprep.subr.bf16.mxu0 %v4535
  %6475 = vmatpush1.bf16.msra.mxu0 %v4534
  %6476 = vmatprep.subr.bf16.mxu0 %v4531
  %6477 = vmatpush1.bf16.msra.mxu0 %v4530
  %6478 = vmatprep.subr.bf16.mxu0 %v4527
  %6479 = vmatpush1.bf16.msra.mxu0 %v4526
  %6480 = vmatprep.subr.bf16.mxu0 %v4523
  %6481 = vmatpush1.bf16.msra.mxu0 %v4522
  %6482 = vmatprep.subr.bf16.mxu0 %v4519
  %6483 = vmatpush1.bf16.msra.mxu0 %v4518
  %6484 = vmatprep.subr.bf16.mxu0 %v4515
  %6485 = vmatpush1.bf16.msra.mxu0 %v4514
  %6486 = vmatprep.subr.bf16.mxu0 %v4575
  %6487 = vmatpush2.bf16.msra.mxu0 %v4574
  %6488 = vmatprep.subr.bf16.mxu0 %v4571
  %6489 = vmatpush2.bf16.msra.mxu0 %v4570
  %6490 = vmatprep.subr.bf16.mxu0 %v4567
  %6491 = vmatpush2.bf16.msra.mxu0 %v4566
  %6492 = vmatprep.subr.bf16.mxu0 %v4563
  %6493 = vmatpush2.bf16.msra.mxu0 %v4562
  %6494 = vmatprep.subr.bf16.mxu0 %v4559
  %6495 = vmatpush2.bf16.msra.mxu0 %v4558
  %6496 = vmatprep.subr.bf16.mxu0 %v4555
  %6497 = vmatpush2.bf16.msra.mxu0 %v4554
  %6498 = vmatprep.subr.bf16.mxu0 %v4551
  %6499 = vmatpush2.bf16.msra.mxu0 %v4550
  %6500 = vmatprep.subr.bf16.mxu0 %v4547
  %6501 = vmatpush2.bf16.msra.mxu0 %v4546
  %6502 = vmatprep.mubr.bf16.mxu0 %v1131
  %6503 = vmatmul.mubr.bf16.gmra.mxu0 %v1130
  %v6504 = vpop.f32.mrf.mxu0
  %v6505 = vadd.f32 %v6464, %v6504
  %v6506 = vpop.f32.mrf.mxu0
  %v6507 = vadd.f32 %v6466, %v6506
  %v6508 = vpop.f32.mrf.mxu0
  %v6509 = vpop.f32.mrf.mxu0
  %6510 = vdwg.mxu0
  %6511 = vmatprep.subr.bf16.mxu0 %v4607
  %6512 = vmatpush1.bf16.msra.mxu0 %v4606
  %6513 = vmatprep.subr.bf16.mxu0 %v4603
  %6514 = vmatpush1.bf16.msra.mxu0 %v4602
  %6515 = vmatprep.subr.bf16.mxu0 %v4599
  %6516 = vmatpush1.bf16.msra.mxu0 %v4598
  %6517 = vmatprep.subr.bf16.mxu0 %v4595
  %6518 = vmatpush1.bf16.msra.mxu0 %v4594
  %6519 = vmatprep.subr.bf16.mxu0 %v4591
  %6520 = vmatpush1.bf16.msra.mxu0 %v4590
  %6521 = vmatprep.subr.bf16.mxu0 %v4587
  %6522 = vmatpush1.bf16.msra.mxu0 %v4586
  %6523 = vmatprep.subr.bf16.mxu0 %v4583
  %6524 = vmatpush1.bf16.msra.mxu0 %v4582
  %6525 = vmatprep.subr.bf16.mxu0 %v4579
  %6526 = vmatpush1.bf16.msra.mxu0 %v4578
  %6527 = vmatprep.subr.bf16.mxu0 %v4639
  %6528 = vmatpush2.bf16.msra.mxu0 %v4638
  %6529 = vmatprep.subr.bf16.mxu0 %v4635
  %6530 = vmatpush2.bf16.msra.mxu0 %v4634
  %6531 = vmatprep.subr.bf16.mxu0 %v4631
  %6532 = vmatpush2.bf16.msra.mxu0 %v4630
  %6533 = vmatprep.subr.bf16.mxu0 %v4627
  %6534 = vmatpush2.bf16.msra.mxu0 %v4626
  %6535 = vmatprep.subr.bf16.mxu0 %v4623
  %6536 = vmatpush2.bf16.msra.mxu0 %v4622
  %6537 = vmatprep.subr.bf16.mxu0 %v4619
  %6538 = vmatpush2.bf16.msra.mxu0 %v4618
  %6539 = vmatprep.subr.bf16.mxu0 %v4615
  %6540 = vmatpush2.bf16.msra.mxu0 %v4614
  %6541 = vmatprep.subr.bf16.mxu0 %v4611
  %6542 = vmatpush2.bf16.msra.mxu0 %v4610
  %6543 = vmatprep.mubr.bf16.mxu0 %v1133
  %6544 = vmatmul.mubr.bf16.gmra.mxu0 %v1132
  %v6545 = vpop.f32.mrf.mxu0
  %v6546 = vadd.f32 %v6505, %v6545
  %v6547 = vpop.f32.mrf.mxu0
  %v6548 = vadd.f32 %v6507, %v6547
  %v6549 = vpop.f32.mrf.mxu0
  %v6550 = vpop.f32.mrf.mxu0
  %6551 = vdwg.mxu0
  %6552 = vmatprep.subr.bf16.mxu0 %v4671
  %6553 = vmatpush1.bf16.msra.mxu0 %v4670
  %6554 = vmatprep.subr.bf16.mxu0 %v4667
  %6555 = vmatpush1.bf16.msra.mxu0 %v4666
  %6556 = vmatprep.subr.bf16.mxu0 %v4663
  %6557 = vmatpush1.bf16.msra.mxu0 %v4662
  %6558 = vmatprep.subr.bf16.mxu0 %v4659
  %6559 = vmatpush1.bf16.msra.mxu0 %v4658
  %6560 = vmatprep.subr.bf16.mxu0 %v4655
  %6561 = vmatpush1.bf16.msra.mxu0 %v4654
  %6562 = vmatprep.subr.bf16.mxu0 %v4651
  %6563 = vmatpush1.bf16.msra.mxu0 %v4650
  %6564 = vmatprep.subr.bf16.mxu0 %v4647
  %6565 = vmatpush1.bf16.msra.mxu0 %v4646
  %6566 = vmatprep.subr.bf16.mxu0 %v4643
  %6567 = vmatpush1.bf16.msra.mxu0 %v4642
  %6568 = vmatprep.subr.bf16.mxu0 %v4703
  %6569 = vmatpush2.bf16.msra.mxu0 %v4702
  %6570 = vmatprep.subr.bf16.mxu0 %v4699
  %6571 = vmatpush2.bf16.msra.mxu0 %v4698
  %6572 = vmatprep.subr.bf16.mxu0 %v4695
  %6573 = vmatpush2.bf16.msra.mxu0 %v4694
  %6574 = vmatprep.subr.bf16.mxu0 %v4691
  %6575 = vmatpush2.bf16.msra.mxu0 %v4690
  %6576 = vmatprep.subr.bf16.mxu0 %v4687
  %6577 = vmatpush2.bf16.msra.mxu0 %v4686
  %6578 = vmatprep.subr.bf16.mxu0 %v4683
  %6579 = vmatpush2.bf16.msra.mxu0 %v4682
  %6580 = vmatprep.subr.bf16.mxu0 %v4679
  %6581 = vmatpush2.bf16.msra.mxu0 %v4678
  %6582 = vmatprep.subr.bf16.mxu0 %v4675
  %6583 = vmatpush2.bf16.msra.mxu0 %v4674
  %6584 = vmatprep.mubr.bf16.mxu0 %v1135
  %6585 = vmatmul.mubr.bf16.gmra.mxu0 %v1134
  %v6586 = vpop.f32.mrf.mxu0
  %v6587 = vadd.f32 %v6546, %v6586
  %v6588 = vpop.f32.mrf.mxu0
  %v6589 = vadd.f32 %v6548, %v6588
  %v6590 = vpop.f32.mrf.mxu0
  %v6591 = vpop.f32.mrf.mxu0
  %6592 = vdwg.mxu0
  %6593 = vmatprep.subr.bf16.mxu0 %v4735
  %6594 = vmatpush1.bf16.msra.mxu0 %v4734
  %6595 = vmatprep.subr.bf16.mxu0 %v4731
  %6596 = vmatpush1.bf16.msra.mxu0 %v4730
  %6597 = vmatprep.subr.bf16.mxu0 %v4727
  %6598 = vmatpush1.bf16.msra.mxu0 %v4726
  %6599 = vmatprep.subr.bf16.mxu0 %v4723
  %6600 = vmatpush1.bf16.msra.mxu0 %v4722
  %6601 = vmatprep.subr.bf16.mxu0 %v4719
  %6602 = vmatpush1.bf16.msra.mxu0 %v4718
  %6603 = vmatprep.subr.bf16.mxu0 %v4715
  %6604 = vmatpush1.bf16.msra.mxu0 %v4714
  %6605 = vmatprep.subr.bf16.mxu0 %v4711
  %6606 = vmatpush1.bf16.msra.mxu0 %v4710
  %6607 = vmatprep.subr.bf16.mxu0 %v4707
  %6608 = vmatpush1.bf16.msra.mxu0 %v4706
  %6609 = vmatprep.subr.bf16.mxu0 %v4767
  %6610 = vmatpush2.bf16.msra.mxu0 %v4766
  %6611 = vmatprep.subr.bf16.mxu0 %v4763
  %6612 = vmatpush2.bf16.msra.mxu0 %v4762
  %6613 = vmatprep.subr.bf16.mxu0 %v4759
  %6614 = vmatpush2.bf16.msra.mxu0 %v4758
  %6615 = vmatprep.subr.bf16.mxu0 %v4755
  %6616 = vmatpush2.bf16.msra.mxu0 %v4754
  %6617 = vmatprep.subr.bf16.mxu0 %v4751
  %6618 = vmatpush2.bf16.msra.mxu0 %v4750
  %6619 = vmatprep.subr.bf16.mxu0 %v4747
  %6620 = vmatpush2.bf16.msra.mxu0 %v4746
  %6621 = vmatprep.subr.bf16.mxu0 %v4743
  %6622 = vmatpush2.bf16.msra.mxu0 %v4742
  %6623 = vmatprep.subr.bf16.mxu0 %v4739
  %6624 = vmatpush2.bf16.msra.mxu0 %v4738
  %6625 = vmatprep.mubr.bf16.mxu0 %v1137
  %6626 = vmatmul.mubr.bf16.gmra.mxu0 %v1136
  %v6627 = vpop.f32.mrf.mxu0
  %v6628 = vadd.f32 %v6587, %v6627
  %v6629 = vpop.f32.mrf.mxu0
  %v6630 = vadd.f32 %v6589, %v6629
  %v6631 = vpop.f32.mrf.mxu0
  %v6632 = vpop.f32.mrf.mxu0
  %6633 = vdwg.mxu0
  %6634 = vmatprep.subr.bf16.mxu0 %v4799
  %6635 = vmatpush1.bf16.msra.mxu0 %v4798
  %6636 = vmatprep.subr.bf16.mxu0 %v4795
  %6637 = vmatpush1.bf16.msra.mxu0 %v4794
  %6638 = vmatprep.subr.bf16.mxu0 %v4791
  %6639 = vmatpush1.bf16.msra.mxu0 %v4790
  %6640 = vmatprep.subr.bf16.mxu0 %v4787
  %6641 = vmatpush1.bf16.msra.mxu0 %v4786
  %6642 = vmatprep.subr.bf16.mxu0 %v4783
  %6643 = vmatpush1.bf16.msra.mxu0 %v4782
  %6644 = vmatprep.subr.bf16.mxu0 %v4779
  %6645 = vmatpush1.bf16.msra.mxu0 %v4778
  %6646 = vmatprep.subr.bf16.mxu0 %v4775
  %6647 = vmatpush1.bf16.msra.mxu0 %v4774
  %6648 = vmatprep.subr.bf16.mxu0 %v4771
  %6649 = vmatpush1.bf16.msra.mxu0 %v4770
  %6650 = vmatprep.subr.bf16.mxu0 %v4831
  %6651 = vmatpush2.bf16.msra.mxu0 %v4830
  %6652 = vmatprep.subr.bf16.mxu0 %v4827
  %6653 = vmatpush2.bf16.msra.mxu0 %v4826
  %6654 = vmatprep.subr.bf16.mxu0 %v4823
  %6655 = vmatpush2.bf16.msra.mxu0 %v4822
  %6656 = vmatprep.subr.bf16.mxu0 %v4819
  %6657 = vmatpush2.bf16.msra.mxu0 %v4818
  %6658 = vmatprep.subr.bf16.mxu0 %v4815
  %6659 = vmatpush2.bf16.msra.mxu0 %v4814
  %6660 = vmatprep.subr.bf16.mxu0 %v4811
  %6661 = vmatpush2.bf16.msra.mxu0 %v4810
  %6662 = vmatprep.subr.bf16.mxu0 %v4807
  %6663 = vmatpush2.bf16.msra.mxu0 %v4806
  %6664 = vmatprep.subr.bf16.mxu0 %v4803
  %6665 = vmatpush2.bf16.msra.mxu0 %v4802
  %6666 = vmatprep.mubr.bf16.mxu0 %v1139
  %6667 = vmatmul.mubr.bf16.gmra.mxu0 %v1138
  %v6668 = vpop.f32.mrf.mxu0
  %v6669 = vadd.f32 %v6628, %v6668
  %v6670 = vpop.f32.mrf.mxu0
  %v6671 = vadd.f32 %v6630, %v6670
  %v6672 = vpop.f32.mrf.mxu0
  %v6673 = vpop.f32.mrf.mxu0
  %6674 = vdwg.mxu0
  %6675 = vmatprep.subr.bf16.mxu0 %v4863
  %6676 = vmatpush1.bf16.msra.mxu0 %v4862
  %6677 = vmatprep.subr.bf16.mxu0 %v4859
  %6678 = vmatpush1.bf16.msra.mxu0 %v4858
  %6679 = vmatprep.subr.bf16.mxu0 %v4855
  %6680 = vmatpush1.bf16.msra.mxu0 %v4854
  %6681 = vmatprep.subr.bf16.mxu0 %v4851
  %6682 = vmatpush1.bf16.msra.mxu0 %v4850
  %6683 = vmatprep.subr.bf16.mxu0 %v4847
  %6684 = vmatpush1.bf16.msra.mxu0 %v4846
  %6685 = vmatprep.subr.bf16.mxu0 %v4843
  %6686 = vmatpush1.bf16.msra.mxu0 %v4842
  %6687 = vmatprep.subr.bf16.mxu0 %v4839
  %6688 = vmatpush1.bf16.msra.mxu0 %v4838
  %6689 = vmatprep.subr.bf16.mxu0 %v4835
  %6690 = vmatpush1.bf16.msra.mxu0 %v4834
  %6691 = vmatprep.subr.bf16.mxu0 %v4895
  %6692 = vmatpush2.bf16.msra.mxu0 %v4894
  %6693 = vmatprep.subr.bf16.mxu0 %v4891
  %6694 = vmatpush2.bf16.msra.mxu0 %v4890
  %6695 = vmatprep.subr.bf16.mxu0 %v4887
  %6696 = vmatpush2.bf16.msra.mxu0 %v4886
  %6697 = vmatprep.subr.bf16.mxu0 %v4883
  %6698 = vmatpush2.bf16.msra.mxu0 %v4882
  %6699 = vmatprep.subr.bf16.mxu0 %v4879
  %6700 = vmatpush2.bf16.msra.mxu0 %v4878
  %6701 = vmatprep.subr.bf16.mxu0 %v4875
  %6702 = vmatpush2.bf16.msra.mxu0 %v4874
  %6703 = vmatprep.subr.bf16.mxu0 %v4871
  %6704 = vmatpush2.bf16.msra.mxu0 %v4870
  %6705 = vmatprep.subr.bf16.mxu0 %v4867
  %6706 = vmatpush2.bf16.msra.mxu0 %v4866
  %6707 = vmatprep.mubr.bf16.mxu0 %v1141
  %6708 = vmatmul.mubr.bf16.gmra.mxu0 %v1140
  %v6709 = vpop.f32.mrf.mxu0
  %v6710 = vadd.f32 %v6669, %v6709
  %v6711 = vpop.f32.mrf.mxu0
  %v6712 = vadd.f32 %v6671, %v6711
  %v6713 = vpop.f32.mrf.mxu0
  %v6714 = vpop.f32.mrf.mxu0
  %6715 = vdwg.mxu0
  %6716 = vmatprep.subr.bf16.mxu0 %v4927
  %6717 = vmatpush1.bf16.msra.mxu0 %v4926
  %6718 = vmatprep.subr.bf16.mxu0 %v4923
  %6719 = vmatpush1.bf16.msra.mxu0 %v4922
  %6720 = vmatprep.subr.bf16.mxu0 %v4919
  %6721 = vmatpush1.bf16.msra.mxu0 %v4918
  %6722 = vmatprep.subr.bf16.mxu0 %v4915
  %6723 = vmatpush1.bf16.msra.mxu0 %v4914
  %6724 = vmatprep.subr.bf16.mxu0 %v4911
  %6725 = vmatpush1.bf16.msra.mxu0 %v4910
  %6726 = vmatprep.subr.bf16.mxu0 %v4907
  %6727 = vmatpush1.bf16.msra.mxu0 %v4906
  %6728 = vmatprep.subr.bf16.mxu0 %v4903
  %6729 = vmatpush1.bf16.msra.mxu0 %v4902
  %6730 = vmatprep.subr.bf16.mxu0 %v4899
  %6731 = vmatpush1.bf16.msra.mxu0 %v4898
  %6732 = vmatprep.subr.bf16.mxu0 %v4959
  %6733 = vmatpush2.bf16.msra.mxu0 %v4958
  %6734 = vmatprep.subr.bf16.mxu0 %v4955
  %6735 = vmatpush2.bf16.msra.mxu0 %v4954
  %6736 = vmatprep.subr.bf16.mxu0 %v4951
  %6737 = vmatpush2.bf16.msra.mxu0 %v4950
  %6738 = vmatprep.subr.bf16.mxu0 %v4947
  %6739 = vmatpush2.bf16.msra.mxu0 %v4946
  %6740 = vmatprep.subr.bf16.mxu0 %v4943
  %6741 = vmatpush2.bf16.msra.mxu0 %v4942
  %6742 = vmatprep.subr.bf16.mxu0 %v4939
  %6743 = vmatpush2.bf16.msra.mxu0 %v4938
  %6744 = vmatprep.subr.bf16.mxu0 %v4935
  %6745 = vmatpush2.bf16.msra.mxu0 %v4934
  %6746 = vmatprep.subr.bf16.mxu0 %v4931
  %6747 = vmatpush2.bf16.msra.mxu0 %v4930
  %6748 = vmatprep.mubr.bf16.mxu0 %v1143
  %6749 = vmatmul.mubr.bf16.gmra.mxu0 %v1142
  %v6750 = vpop.f32.mrf.mxu0
  %v6751 = vadd.f32 %v6710, %v6750
  %v6752 = vpop.f32.mrf.mxu0
  %v6753 = vadd.f32 %v6712, %v6752
  %v6754 = vpop.f32.mrf.mxu0
  %v6755 = vpop.f32.mrf.mxu0
  %6756 = vdwg.mxu0
  %6757 = vmatprep.subr.bf16.mxu0 %v4991
  %6758 = vmatpush1.bf16.msra.mxu0 %v4990
  %6759 = vmatprep.subr.bf16.mxu0 %v4987
  %6760 = vmatpush1.bf16.msra.mxu0 %v4986
  %6761 = vmatprep.subr.bf16.mxu0 %v4983
  %6762 = vmatpush1.bf16.msra.mxu0 %v4982
  %6763 = vmatprep.subr.bf16.mxu0 %v4979
  %6764 = vmatpush1.bf16.msra.mxu0 %v4978
  %6765 = vmatprep.subr.bf16.mxu0 %v4975
  %6766 = vmatpush1.bf16.msra.mxu0 %v4974
  %6767 = vmatprep.subr.bf16.mxu0 %v4971
  %6768 = vmatpush1.bf16.msra.mxu0 %v4970
  %6769 = vmatprep.subr.bf16.mxu0 %v4967
  %6770 = vmatpush1.bf16.msra.mxu0 %v4966
  %6771 = vmatprep.subr.bf16.mxu0 %v4963
  %6772 = vmatpush1.bf16.msra.mxu0 %v4962
  %6773 = vmatprep.subr.bf16.mxu0 %v5023
  %6774 = vmatpush2.bf16.msra.mxu0 %v5022
  %6775 = vmatprep.subr.bf16.mxu0 %v5019
  %6776 = vmatpush2.bf16.msra.mxu0 %v5018
  %6777 = vmatprep.subr.bf16.mxu0 %v5015
  %6778 = vmatpush2.bf16.msra.mxu0 %v5014
  %6779 = vmatprep.subr.bf16.mxu0 %v5011
  %6780 = vmatpush2.bf16.msra.mxu0 %v5010
  %6781 = vmatprep.subr.bf16.mxu0 %v5007
  %6782 = vmatpush2.bf16.msra.mxu0 %v5006
  %6783 = vmatprep.subr.bf16.mxu0 %v5003
  %6784 = vmatpush2.bf16.msra.mxu0 %v5002
  %6785 = vmatprep.subr.bf16.mxu0 %v4999
  %6786 = vmatpush2.bf16.msra.mxu0 %v4998
  %6787 = vmatprep.subr.bf16.mxu0 %v4995
  %6788 = vmatpush2.bf16.msra.mxu0 %v4994
  %6789 = vmatprep.mubr.bf16.mxu0 %v1145
  %6790 = vmatmul.mubr.bf16.gmra.mxu0 %v1144
  %v6791 = vpop.f32.mrf.mxu0
  %v6792 = vadd.f32 %v6751, %v6791
  %v6793 = vpop.f32.mrf.mxu0
  %v6794 = vadd.f32 %v6753, %v6793
  %v6795 = vpop.f32.mrf.mxu0
  %v6796 = vpop.f32.mrf.mxu0
  %6797 = vdwg.mxu0
  %6798 = vmatprep.subr.bf16.mxu0 %v5055
  %6799 = vmatpush1.bf16.msra.mxu0 %v5054
  %6800 = vmatprep.subr.bf16.mxu0 %v5051
  %6801 = vmatpush1.bf16.msra.mxu0 %v5050
  %6802 = vmatprep.subr.bf16.mxu0 %v5047
  %6803 = vmatpush1.bf16.msra.mxu0 %v5046
  %6804 = vmatprep.subr.bf16.mxu0 %v5043
  %6805 = vmatpush1.bf16.msra.mxu0 %v5042
  %6806 = vmatprep.subr.bf16.mxu0 %v5039
  %6807 = vmatpush1.bf16.msra.mxu0 %v5038
  %6808 = vmatprep.subr.bf16.mxu0 %v5035
  %6809 = vmatpush1.bf16.msra.mxu0 %v5034
  %6810 = vmatprep.subr.bf16.mxu0 %v5031
  %6811 = vmatpush1.bf16.msra.mxu0 %v5030
  %6812 = vmatprep.subr.bf16.mxu0 %v5027
  %6813 = vmatpush1.bf16.msra.mxu0 %v5026
  %6814 = vmatprep.subr.bf16.mxu0 %v5087
  %6815 = vmatpush2.bf16.msra.mxu0 %v5086
  %6816 = vmatprep.subr.bf16.mxu0 %v5083
  %6817 = vmatpush2.bf16.msra.mxu0 %v5082
  %6818 = vmatprep.subr.bf16.mxu0 %v5079
  %6819 = vmatpush2.bf16.msra.mxu0 %v5078
  %6820 = vmatprep.subr.bf16.mxu0 %v5075
  %6821 = vmatpush2.bf16.msra.mxu0 %v5074
  %6822 = vmatprep.subr.bf16.mxu0 %v5071
  %6823 = vmatpush2.bf16.msra.mxu0 %v5070
  %6824 = vmatprep.subr.bf16.mxu0 %v5067
  %6825 = vmatpush2.bf16.msra.mxu0 %v5066
  %6826 = vmatprep.subr.bf16.mxu0 %v5063
  %6827 = vmatpush2.bf16.msra.mxu0 %v5062
  %6828 = vmatprep.subr.bf16.mxu0 %v5059
  %6829 = vmatpush2.bf16.msra.mxu0 %v5058
  %6830 = vmatprep.mubr.bf16.mxu0 %v1147
  %6831 = vmatmul.mubr.bf16.gmra.mxu0 %v1146
  %v6832 = vpop.f32.mrf.mxu0
  %v6833 = vadd.f32 %v6792, %v6832
  %v6834 = vpop.f32.mrf.mxu0
  %v6835 = vadd.f32 %v6794, %v6834
  %v6836 = vpop.f32.mrf.mxu0
  %v6837 = vpop.f32.mrf.mxu0
  %6838 = vdwg.mxu0
  %6839 = vmatprep.subr.bf16.mxu0 %v5119
  %6840 = vmatpush1.bf16.msra.mxu0 %v5118
  %6841 = vmatprep.subr.bf16.mxu0 %v5115
  %6842 = vmatpush1.bf16.msra.mxu0 %v5114
  %6843 = vmatprep.subr.bf16.mxu0 %v5111
  %6844 = vmatpush1.bf16.msra.mxu0 %v5110
  %6845 = vmatprep.subr.bf16.mxu0 %v5107
  %6846 = vmatpush1.bf16.msra.mxu0 %v5106
  %6847 = vmatprep.subr.bf16.mxu0 %v5103
  %6848 = vmatpush1.bf16.msra.mxu0 %v5102
  %6849 = vmatprep.subr.bf16.mxu0 %v5099
  %6850 = vmatpush1.bf16.msra.mxu0 %v5098
  %6851 = vmatprep.subr.bf16.mxu0 %v5095
  %6852 = vmatpush1.bf16.msra.mxu0 %v5094
  %6853 = vmatprep.subr.bf16.mxu0 %v5091
  %6854 = vmatpush1.bf16.msra.mxu0 %v5090
  %6855 = vmatprep.subr.bf16.mxu0 %v5151
  %6856 = vmatpush2.bf16.msra.mxu0 %v5150
  %6857 = vmatprep.subr.bf16.mxu0 %v5147
  %6858 = vmatpush2.bf16.msra.mxu0 %v5146
  %6859 = vmatprep.subr.bf16.mxu0 %v5143
  %6860 = vmatpush2.bf16.msra.mxu0 %v5142
  %6861 = vmatprep.subr.bf16.mxu0 %v5139
  %6862 = vmatpush2.bf16.msra.mxu0 %v5138
  %6863 = vmatprep.subr.bf16.mxu0 %v5135
  %6864 = vmatpush2.bf16.msra.mxu0 %v5134
  %6865 = vmatprep.subr.bf16.mxu0 %v5131
  %6866 = vmatpush2.bf16.msra.mxu0 %v5130
  %6867 = vmatprep.subr.bf16.mxu0 %v5127
  %6868 = vmatpush2.bf16.msra.mxu0 %v5126
  %6869 = vmatprep.subr.bf16.mxu0 %v5123
  %6870 = vmatpush2.bf16.msra.mxu0 %v5122
  %6871 = vmatprep.mubr.bf16.mxu0 %v1149
  %6872 = vmatmul.mubr.bf16.gmra.mxu0 %v1148
  %v6873 = vpop.f32.mrf.mxu0
  %v6874 = vadd.f32 %v6833, %v6873
  %v6875 = vpop.f32.mrf.mxu0
  %v6876 = vadd.f32 %v6835, %v6875
  %v6877 = vpop.f32.mrf.mxu0
  %v6878 = vpop.f32.mrf.mxu0
  %6879 = vdwg.mxu0
  %6880 = vmatprep.subr.bf16.mxu0 %v5183
  %6881 = vmatpush1.bf16.msra.mxu0 %v5182
  %6882 = vmatprep.subr.bf16.mxu0 %v5179
  %6883 = vmatpush1.bf16.msra.mxu0 %v5178
  %6884 = vmatprep.subr.bf16.mxu0 %v5175
  %6885 = vmatpush1.bf16.msra.mxu0 %v5174
  %6886 = vmatprep.subr.bf16.mxu0 %v5171
  %6887 = vmatpush1.bf16.msra.mxu0 %v5170
  %6888 = vmatprep.subr.bf16.mxu0 %v5167
  %6889 = vmatpush1.bf16.msra.mxu0 %v5166
  %6890 = vmatprep.subr.bf16.mxu0 %v5163
  %6891 = vmatpush1.bf16.msra.mxu0 %v5162
  %6892 = vmatprep.subr.bf16.mxu0 %v5159
  %6893 = vmatpush1.bf16.msra.mxu0 %v5158
  %6894 = vmatprep.subr.bf16.mxu0 %v5155
  %6895 = vmatpush1.bf16.msra.mxu0 %v5154
  %6896 = vmatprep.subr.bf16.mxu0 %v5215
  %6897 = vmatpush2.bf16.msra.mxu0 %v5214
  %6898 = vmatprep.subr.bf16.mxu0 %v5211
  %6899 = vmatpush2.bf16.msra.mxu0 %v5210
  %6900 = vmatprep.subr.bf16.mxu0 %v5207
  %6901 = vmatpush2.bf16.msra.mxu0 %v5206
  %6902 = vmatprep.subr.bf16.mxu0 %v5203
  %6903 = vmatpush2.bf16.msra.mxu0 %v5202
  %6904 = vmatprep.subr.bf16.mxu0 %v5199
  %6905 = vmatpush2.bf16.msra.mxu0 %v5198
  %6906 = vmatprep.subr.bf16.mxu0 %v5195
  %6907 = vmatpush2.bf16.msra.mxu0 %v5194
  %6908 = vmatprep.subr.bf16.mxu0 %v5191
  %6909 = vmatpush2.bf16.msra.mxu0 %v5190
  %6910 = vmatprep.subr.bf16.mxu0 %v5187
  %6911 = vmatpush2.bf16.msra.mxu0 %v5186
  %6912 = vmatprep.mubr.bf16.mxu0 %v1151
  %6913 = vmatmul.mubr.bf16.gmra.mxu0 %v1150
  %v6914 = vpop.f32.mrf.mxu0
  %v6915 = vadd.f32 %v6874, %v6914
  %v6916 = vpop.f32.mrf.mxu0
  %v6917 = vadd.f32 %v6876, %v6916
  %v6918 = vpop.f32.mrf.mxu0
  %v6919 = vpop.f32.mrf.mxu0
  %6920 = vdwg.mxu0
  %6921 = vmatprep.subr.bf16.mxu0 %v5247
  %6922 = vmatpush1.bf16.msra.mxu0 %v5246
  %6923 = vmatprep.subr.bf16.mxu0 %v5243
  %6924 = vmatpush1.bf16.msra.mxu0 %v5242
  %6925 = vmatprep.subr.bf16.mxu0 %v5239
  %6926 = vmatpush1.bf16.msra.mxu0 %v5238
  %6927 = vmatprep.subr.bf16.mxu0 %v5235
  %6928 = vmatpush1.bf16.msra.mxu0 %v5234
  %6929 = vmatprep.subr.bf16.mxu0 %v5231
  %6930 = vmatpush1.bf16.msra.mxu0 %v5230
  %6931 = vmatprep.subr.bf16.mxu0 %v5227
  %6932 = vmatpush1.bf16.msra.mxu0 %v5226
  %6933 = vmatprep.subr.bf16.mxu0 %v5223
  %6934 = vmatpush1.bf16.msra.mxu0 %v5222
  %6935 = vmatprep.subr.bf16.mxu0 %v5219
  %6936 = vmatpush1.bf16.msra.mxu0 %v5218
  %6937 = vmatprep.subr.bf16.mxu0 %v5279
  %6938 = vmatpush2.bf16.msra.mxu0 %v5278
  %6939 = vmatprep.subr.bf16.mxu0 %v5275
  %6940 = vmatpush2.bf16.msra.mxu0 %v5274
  %6941 = vmatprep.subr.bf16.mxu0 %v5271
  %6942 = vmatpush2.bf16.msra.mxu0 %v5270
  %6943 = vmatprep.subr.bf16.mxu0 %v5267
  %6944 = vmatpush2.bf16.msra.mxu0 %v5266
  %6945 = vmatprep.subr.bf16.mxu0 %v5263
  %6946 = vmatpush2.bf16.msra.mxu0 %v5262
  %6947 = vmatprep.subr.bf16.mxu0 %v5259
  %6948 = vmatpush2.bf16.msra.mxu0 %v5258
  %6949 = vmatprep.subr.bf16.mxu0 %v5255
  %6950 = vmatpush2.bf16.msra.mxu0 %v5254
  %6951 = vmatprep.subr.bf16.mxu0 %v5251
  %6952 = vmatpush2.bf16.msra.mxu0 %v5250
  %6953 = vmatprep.mubr.bf16.mxu0 %v1153
  %6954 = vmatmul.mubr.bf16.gmra.mxu0 %v1152
  %v6955 = vpop.f32.mrf.mxu0
  %v6956 = vadd.f32 %v6915, %v6955
  %v6957 = vpop.f32.mrf.mxu0
  %v6958 = vadd.f32 %v6917, %v6957
  %v6959 = vpop.f32.mrf.mxu0
  %v6960 = vpop.f32.mrf.mxu0
  %6961 = vdwg.mxu0
  %6962 = vmatprep.subr.bf16.mxu0 %v4289
  %6963 = vmatpush1.bf16.msra.mxu0 %v4288
  %6964 = vmatprep.subr.bf16.mxu0 %v4285
  %6965 = vmatpush1.bf16.msra.mxu0 %v4284
  %6966 = vmatprep.subr.bf16.mxu0 %v4281
  %6967 = vmatpush1.bf16.msra.mxu0 %v4280
  %6968 = vmatprep.subr.bf16.mxu0 %v4277
  %6969 = vmatpush1.bf16.msra.mxu0 %v4276
  %6970 = vmatprep.subr.bf16.mxu0 %v4273
  %6971 = vmatpush1.bf16.msra.mxu0 %v4272
  %6972 = vmatprep.subr.bf16.mxu0 %v4269
  %6973 = vmatpush1.bf16.msra.mxu0 %v4268
  %6974 = vmatprep.subr.bf16.mxu0 %v4265
  %6975 = vmatpush1.bf16.msra.mxu0 %v4264
  %6976 = vmatprep.subr.bf16.mxu0 %v4261
  %6977 = vmatpush1.bf16.msra.mxu0 %v4260
  %6978 = vmatprep.subr.bf16.mxu0 %v4321
  %6979 = vmatpush2.bf16.msra.mxu0 %v4320
  %6980 = vmatprep.subr.bf16.mxu0 %v4317
  %6981 = vmatpush2.bf16.msra.mxu0 %v4316
  %6982 = vmatprep.subr.bf16.mxu0 %v4313
  %6983 = vmatpush2.bf16.msra.mxu0 %v4312
  %6984 = vmatprep.subr.bf16.mxu0 %v4309
  %6985 = vmatpush2.bf16.msra.mxu0 %v4308
  %6986 = vmatprep.subr.bf16.mxu0 %v4305
  %6987 = vmatpush2.bf16.msra.mxu0 %v4304
  %6988 = vmatprep.subr.bf16.mxu0 %v4301
  %6989 = vmatpush2.bf16.msra.mxu0 %v4300
  %6990 = vmatprep.subr.bf16.mxu0 %v4297
  %6991 = vmatpush2.bf16.msra.mxu0 %v4296
  %6992 = vmatprep.subr.bf16.mxu0 %v4293
  %6993 = vmatpush2.bf16.msra.mxu0 %v4292
  %6994 = vmatprep.mubr.bf16.mxu0 %v1123
  %6995 = vmatmul.mubr.bf16.gmra.mxu0 %v1122
  %v6996 = vpop.f32.mrf.mxu0
  %v6997 = vadd.f32 0.0, %v6996
  %v6998 = vpop.f32.mrf.mxu0
  %v6999 = vadd.f32 0.0, %v6998
  %v7000 = vpop.f32.mrf.mxu0
  %v7001 = vpop.f32.mrf.mxu0
  %7002 = vdwg.mxu0
  %7003 = vmatprep.subr.bf16.mxu0 %v4353
  %7004 = vmatpush1.bf16.msra.mxu0 %v4352
  %7005 = vmatprep.subr.bf16.mxu0 %v4349
  %7006 = vmatpush1.bf16.msra.mxu0 %v4348
  %7007 = vmatprep.subr.bf16.mxu0 %v4345
  %7008 = vmatpush1.bf16.msra.mxu0 %v4344
  %7009 = vmatprep.subr.bf16.mxu0 %v4341
  %7010 = vmatpush1.bf16.msra.mxu0 %v4340
  %7011 = vmatprep.subr.bf16.mxu0 %v4337
  %7012 = vmatpush1.bf16.msra.mxu0 %v4336
  %7013 = vmatprep.subr.bf16.mxu0 %v4333
  %7014 = vmatpush1.bf16.msra.mxu0 %v4332
  %7015 = vmatprep.subr.bf16.mxu0 %v4329
  %7016 = vmatpush1.bf16.msra.mxu0 %v4328
  %7017 = vmatprep.subr.bf16.mxu0 %v4325
  %7018 = vmatpush1.bf16.msra.mxu0 %v4324
  %7019 = vmatprep.subr.bf16.mxu0 %v4385
  %7020 = vmatpush2.bf16.msra.mxu0 %v4384
  %7021 = vmatprep.subr.bf16.mxu0 %v4381
  %7022 = vmatpush2.bf16.msra.mxu0 %v4380
  %7023 = vmatprep.subr.bf16.mxu0 %v4377
  %7024 = vmatpush2.bf16.msra.mxu0 %v4376
  %7025 = vmatprep.subr.bf16.mxu0 %v4373
  %7026 = vmatpush2.bf16.msra.mxu0 %v4372
  %7027 = vmatprep.subr.bf16.mxu0 %v4369
  %7028 = vmatpush2.bf16.msra.mxu0 %v4368
  %7029 = vmatprep.subr.bf16.mxu0 %v4365
  %7030 = vmatpush2.bf16.msra.mxu0 %v4364
  %7031 = vmatprep.subr.bf16.mxu0 %v4361
  %7032 = vmatpush2.bf16.msra.mxu0 %v4360
  %7033 = vmatprep.subr.bf16.mxu0 %v4357
  %7034 = vmatpush2.bf16.msra.mxu0 %v4356
  %7035 = vmatprep.mubr.bf16.mxu0 %v1125
  %7036 = vmatmul.mubr.bf16.gmra.mxu0 %v1124
  %v7037 = vpop.f32.mrf.mxu0
  %v7038 = vadd.f32 %v6997, %v7037
  %v7039 = vpop.f32.mrf.mxu0
  %v7040 = vadd.f32 %v6999, %v7039
  %v7041 = vpop.f32.mrf.mxu0
  %v7042 = vpop.f32.mrf.mxu0
  %7043 = vdwg.mxu0
  %7044 = vmatprep.subr.bf16.mxu0 %v4417
  %7045 = vmatpush1.bf16.msra.mxu0 %v4416
  %7046 = vmatprep.subr.bf16.mxu0 %v4413
  %7047 = vmatpush1.bf16.msra.mxu0 %v4412
  %7048 = vmatprep.subr.bf16.mxu0 %v4409
  %7049 = vmatpush1.bf16.msra.mxu0 %v4408
  %7050 = vmatprep.subr.bf16.mxu0 %v4405
  %7051 = vmatpush1.bf16.msra.mxu0 %v4404
  %7052 = vmatprep.subr.bf16.mxu0 %v4401
  %7053 = vmatpush1.bf16.msra.mxu0 %v4400
  %7054 = vmatprep.subr.bf16.mxu0 %v4397
  %7055 = vmatpush1.bf16.msra.mxu0 %v4396
  %7056 = vmatprep.subr.bf16.mxu0 %v4393
  %7057 = vmatpush1.bf16.msra.mxu0 %v4392
  %7058 = vmatprep.subr.bf16.mxu0 %v4389
  %7059 = vmatpush1.bf16.msra.mxu0 %v4388
  %7060 = vmatprep.subr.bf16.mxu0 %v4449
  %7061 = vmatpush2.bf16.msra.mxu0 %v4448
  %7062 = vmatprep.subr.bf16.mxu0 %v4445
  %7063 = vmatpush2.bf16.msra.mxu0 %v4444
  %7064 = vmatprep.subr.bf16.mxu0 %v4441
  %7065 = vmatpush2.bf16.msra.mxu0 %v4440
  %7066 = vmatprep.subr.bf16.mxu0 %v4437
  %7067 = vmatpush2.bf16.msra.mxu0 %v4436
  %7068 = vmatprep.subr.bf16.mxu0 %v4433
  %7069 = vmatpush2.bf16.msra.mxu0 %v4432
  %7070 = vmatprep.subr.bf16.mxu0 %v4429
  %7071 = vmatpush2.bf16.msra.mxu0 %v4428
  %7072 = vmatprep.subr.bf16.mxu0 %v4425
  %7073 = vmatpush2.bf16.msra.mxu0 %v4424
  %7074 = vmatprep.subr.bf16.mxu0 %v4421
  %7075 = vmatpush2.bf16.msra.mxu0 %v4420
  %7076 = vmatprep.mubr.bf16.mxu0 %v1127
  %7077 = vmatmul.mubr.bf16.gmra.mxu0 %v1126
  %v7078 = vpop.f32.mrf.mxu0
  %v7079 = vadd.f32 %v7038, %v7078
  %v7080 = vpop.f32.mrf.mxu0
  %v7081 = vadd.f32 %v7040, %v7080
  %v7082 = vpop.f32.mrf.mxu0
  %v7083 = vpop.f32.mrf.mxu0
  %7084 = vdwg.mxu0
  %7085 = vmatprep.subr.bf16.mxu0 %v4481
  %7086 = vmatpush1.bf16.msra.mxu0 %v4480
  %7087 = vmatprep.subr.bf16.mxu0 %v4477
  %7088 = vmatpush1.bf16.msra.mxu0 %v4476
  %7089 = vmatprep.subr.bf16.mxu0 %v4473
  %7090 = vmatpush1.bf16.msra.mxu0 %v4472
  %7091 = vmatprep.subr.bf16.mxu0 %v4469
  %7092 = vmatpush1.bf16.msra.mxu0 %v4468
  %7093 = vmatprep.subr.bf16.mxu0 %v4465
  %7094 = vmatpush1.bf16.msra.mxu0 %v4464
  %7095 = vmatprep.subr.bf16.mxu0 %v4461
  %7096 = vmatpush1.bf16.msra.mxu0 %v4460
  %7097 = vmatprep.subr.bf16.mxu0 %v4457
  %7098 = vmatpush1.bf16.msra.mxu0 %v4456
  %7099 = vmatprep.subr.bf16.mxu0 %v4453
  %7100 = vmatpush1.bf16.msra.mxu0 %v4452
  %7101 = vmatprep.subr.bf16.mxu0 %v4513
  %7102 = vmatpush2.bf16.msra.mxu0 %v4512
  %7103 = vmatprep.subr.bf16.mxu0 %v4509
  %7104 = vmatpush2.bf16.msra.mxu0 %v4508
  %7105 = vmatprep.subr.bf16.mxu0 %v4505
  %7106 = vmatpush2.bf16.msra.mxu0 %v4504
  %7107 = vmatprep.subr.bf16.mxu0 %v4501
  %7108 = vmatpush2.bf16.msra.mxu0 %v4500
  %7109 = vmatprep.subr.bf16.mxu0 %v4497
  %7110 = vmatpush2.bf16.msra.mxu0 %v4496
  %7111 = vmatprep.subr.bf16.mxu0 %v4493
  %7112 = vmatpush2.bf16.msra.mxu0 %v4492
  %7113 = vmatprep.subr.bf16.mxu0 %v4489
  %7114 = vmatpush2.bf16.msra.mxu0 %v4488
  %7115 = vmatprep.subr.bf16.mxu0 %v4485
  %7116 = vmatpush2.bf16.msra.mxu0 %v4484
  %7117 = vmatprep.mubr.bf16.mxu0 %v1129
  %7118 = vmatmul.mubr.bf16.gmra.mxu0 %v1128
  %v7119 = vpop.f32.mrf.mxu0
  %v7120 = vadd.f32 %v7079, %v7119
  %v7121 = vpop.f32.mrf.mxu0
  %v7122 = vadd.f32 %v7081, %v7121
  %v7123 = vpop.f32.mrf.mxu0
  %v7124 = vpop.f32.mrf.mxu0
  %7125 = vdwg.mxu0
  %7126 = vmatprep.subr.bf16.mxu0 %v4545
  %7127 = vmatpush1.bf16.msra.mxu0 %v4544
  %7128 = vmatprep.subr.bf16.mxu0 %v4541
  %7129 = vmatpush1.bf16.msra.mxu0 %v4540
  %7130 = vmatprep.subr.bf16.mxu0 %v4537
  %7131 = vmatpush1.bf16.msra.mxu0 %v4536
  %7132 = vmatprep.subr.bf16.mxu0 %v4533
  %7133 = vmatpush1.bf16.msra.mxu0 %v4532
  %7134 = vmatprep.subr.bf16.mxu0 %v4529
  %7135 = vmatpush1.bf16.msra.mxu0 %v4528
  %7136 = vmatprep.subr.bf16.mxu0 %v4525
  %7137 = vmatpush1.bf16.msra.mxu0 %v4524
  %7138 = vmatprep.subr.bf16.mxu0 %v4521
  %7139 = vmatpush1.bf16.msra.mxu0 %v4520
  %7140 = vmatprep.subr.bf16.mxu0 %v4517
  %7141 = vmatpush1.bf16.msra.mxu0 %v4516
  %7142 = vmatprep.subr.bf16.mxu0 %v4577
  %7143 = vmatpush2.bf16.msra.mxu0 %v4576
  %7144 = vmatprep.subr.bf16.mxu0 %v4573
  %7145 = vmatpush2.bf16.msra.mxu0 %v4572
  %7146 = vmatprep.subr.bf16.mxu0 %v4569
  %7147 = vmatpush2.bf16.msra.mxu0 %v4568
  %7148 = vmatprep.subr.bf16.mxu0 %v4565
  %7149 = vmatpush2.bf16.msra.mxu0 %v4564
  %7150 = vmatprep.subr.bf16.mxu0 %v4561
  %7151 = vmatpush2.bf16.msra.mxu0 %v4560
  %7152 = vmatprep.subr.bf16.mxu0 %v4557
  %7153 = vmatpush2.bf16.msra.mxu0 %v4556
  %7154 = vmatprep.subr.bf16.mxu0 %v4553
  %7155 = vmatpush2.bf16.msra.mxu0 %v4552
  %7156 = vmatprep.subr.bf16.mxu0 %v4549
  %7157 = vmatpush2.bf16.msra.mxu0 %v4548
  %7158 = vmatprep.mubr.bf16.mxu0 %v1131
  %7159 = vmatmul.mubr.bf16.gmra.mxu0 %v1130
  %v7160 = vpop.f32.mrf.mxu0
  %v7161 = vadd.f32 %v7120, %v7160
  %v7162 = vpop.f32.mrf.mxu0
  %v7163 = vadd.f32 %v7122, %v7162
  %v7164 = vpop.f32.mrf.mxu0
  %v7165 = vpop.f32.mrf.mxu0
  %7166 = vdwg.mxu0
  %7167 = vmatprep.subr.bf16.mxu0 %v4609
  %7168 = vmatpush1.bf16.msra.mxu0 %v4608
  %7169 = vmatprep.subr.bf16.mxu0 %v4605
  %7170 = vmatpush1.bf16.msra.mxu0 %v4604
  %7171 = vmatprep.subr.bf16.mxu0 %v4601
  %7172 = vmatpush1.bf16.msra.mxu0 %v4600
  %7173 = vmatprep.subr.bf16.mxu0 %v4597
  %7174 = vmatpush1.bf16.msra.mxu0 %v4596
  %7175 = vmatprep.subr.bf16.mxu0 %v4593
  %7176 = vmatpush1.bf16.msra.mxu0 %v4592
  %7177 = vmatprep.subr.bf16.mxu0 %v4589
  %7178 = vmatpush1.bf16.msra.mxu0 %v4588
  %7179 = vmatprep.subr.bf16.mxu0 %v4585
  %7180 = vmatpush1.bf16.msra.mxu0 %v4584
  %7181 = vmatprep.subr.bf16.mxu0 %v4581
  %7182 = vmatpush1.bf16.msra.mxu0 %v4580
  %7183 = vmatprep.subr.bf16.mxu0 %v4641
  %7184 = vmatpush2.bf16.msra.mxu0 %v4640
  %7185 = vmatprep.subr.bf16.mxu0 %v4637
  %7186 = vmatpush2.bf16.msra.mxu0 %v4636
  %7187 = vmatprep.subr.bf16.mxu0 %v4633
  %7188 = vmatpush2.bf16.msra.mxu0 %v4632
  %7189 = vmatprep.subr.bf16.mxu0 %v4629
  %7190 = vmatpush2.bf16.msra.mxu0 %v4628
  %7191 = vmatprep.subr.bf16.mxu0 %v4625
  %7192 = vmatpush2.bf16.msra.mxu0 %v4624
  %7193 = vmatprep.subr.bf16.mxu0 %v4621
  %7194 = vmatpush2.bf16.msra.mxu0 %v4620
  %7195 = vmatprep.subr.bf16.mxu0 %v4617
  %7196 = vmatpush2.bf16.msra.mxu0 %v4616
  %7197 = vmatprep.subr.bf16.mxu0 %v4613
  %7198 = vmatpush2.bf16.msra.mxu0 %v4612
  %7199 = vmatprep.mubr.bf16.mxu0 %v1133
  %7200 = vmatmul.mubr.bf16.gmra.mxu0 %v1132
  %v7201 = vpop.f32.mrf.mxu0
  %v7202 = vadd.f32 %v7161, %v7201
  %v7203 = vpop.f32.mrf.mxu0
  %v7204 = vadd.f32 %v7163, %v7203
  %v7205 = vpop.f32.mrf.mxu0
  %v7206 = vpop.f32.mrf.mxu0
  %7207 = vdwg.mxu0
  %7208 = vmatprep.subr.bf16.mxu0 %v4673
  %7209 = vmatpush1.bf16.msra.mxu0 %v4672
  %7210 = vmatprep.subr.bf16.mxu0 %v4669
  %7211 = vmatpush1.bf16.msra.mxu0 %v4668
  %7212 = vmatprep.subr.bf16.mxu0 %v4665
  %7213 = vmatpush1.bf16.msra.mxu0 %v4664
  %7214 = vmatprep.subr.bf16.mxu0 %v4661
  %7215 = vmatpush1.bf16.msra.mxu0 %v4660
  %7216 = vmatprep.subr.bf16.mxu0 %v4657
  %7217 = vmatpush1.bf16.msra.mxu0 %v4656
  %7218 = vmatprep.subr.bf16.mxu0 %v4653
  %7219 = vmatpush1.bf16.msra.mxu0 %v4652
  %7220 = vmatprep.subr.bf16.mxu0 %v4649
  %7221 = vmatpush1.bf16.msra.mxu0 %v4648
  %7222 = vmatprep.subr.bf16.mxu0 %v4645
  %7223 = vmatpush1.bf16.msra.mxu0 %v4644
  %7224 = vmatprep.subr.bf16.mxu0 %v4705
  %7225 = vmatpush2.bf16.msra.mxu0 %v4704
  %7226 = vmatprep.subr.bf16.mxu0 %v4701
  %7227 = vmatpush2.bf16.msra.mxu0 %v4700
  %7228 = vmatprep.subr.bf16.mxu0 %v4697
  %7229 = vmatpush2.bf16.msra.mxu0 %v4696
  %7230 = vmatprep.subr.bf16.mxu0 %v4693
  %7231 = vmatpush2.bf16.msra.mxu0 %v4692
  %7232 = vmatprep.subr.bf16.mxu0 %v4689
  %7233 = vmatpush2.bf16.msra.mxu0 %v4688
  %7234 = vmatprep.subr.bf16.mxu0 %v4685
  %7235 = vmatpush2.bf16.msra.mxu0 %v4684
  %7236 = vmatprep.subr.bf16.mxu0 %v4681
  %7237 = vmatpush2.bf16.msra.mxu0 %v4680
  %7238 = vmatprep.subr.bf16.mxu0 %v4677
  %7239 = vmatpush2.bf16.msra.mxu0 %v4676
  %7240 = vmatprep.mubr.bf16.mxu0 %v1135
  %7241 = vmatmul.mubr.bf16.gmra.mxu0 %v1134
  %v7242 = vpop.f32.mrf.mxu0
  %v7243 = vadd.f32 %v7202, %v7242
  %v7244 = vpop.f32.mrf.mxu0
  %v7245 = vadd.f32 %v7204, %v7244
  %v7246 = vpop.f32.mrf.mxu0
  %v7247 = vpop.f32.mrf.mxu0
  %7248 = vdwg.mxu0
  %7249 = vmatprep.subr.bf16.mxu0 %v4737
  %7250 = vmatpush1.bf16.msra.mxu0 %v4736
  %7251 = vmatprep.subr.bf16.mxu0 %v4733
  %7252 = vmatpush1.bf16.msra.mxu0 %v4732
  %7253 = vmatprep.subr.bf16.mxu0 %v4729
  %7254 = vmatpush1.bf16.msra.mxu0 %v4728
  %7255 = vmatprep.subr.bf16.mxu0 %v4725
  %7256 = vmatpush1.bf16.msra.mxu0 %v4724
  %7257 = vmatprep.subr.bf16.mxu0 %v4721
  %7258 = vmatpush1.bf16.msra.mxu0 %v4720
  %7259 = vmatprep.subr.bf16.mxu0 %v4717
  %7260 = vmatpush1.bf16.msra.mxu0 %v4716
  %7261 = vmatprep.subr.bf16.mxu0 %v4713
  %7262 = vmatpush1.bf16.msra.mxu0 %v4712
  %7263 = vmatprep.subr.bf16.mxu0 %v4709
  %7264 = vmatpush1.bf16.msra.mxu0 %v4708
  %7265 = vmatprep.subr.bf16.mxu0 %v4769
  %7266 = vmatpush2.bf16.msra.mxu0 %v4768
  %7267 = vmatprep.subr.bf16.mxu0 %v4765
  %7268 = vmatpush2.bf16.msra.mxu0 %v4764
  %7269 = vmatprep.subr.bf16.mxu0 %v4761
  %7270 = vmatpush2.bf16.msra.mxu0 %v4760
  %7271 = vmatprep.subr.bf16.mxu0 %v4757
  %7272 = vmatpush2.bf16.msra.mxu0 %v4756
  %7273 = vmatprep.subr.bf16.mxu0 %v4753
  %7274 = vmatpush2.bf16.msra.mxu0 %v4752
  %7275 = vmatprep.subr.bf16.mxu0 %v4749
  %7276 = vmatpush2.bf16.msra.mxu0 %v4748
  %7277 = vmatprep.subr.bf16.mxu0 %v4745
  %7278 = vmatpush2.bf16.msra.mxu0 %v4744
  %7279 = vmatprep.subr.bf16.mxu0 %v4741
  %7280 = vmatpush2.bf16.msra.mxu0 %v4740
  %7281 = vmatprep.mubr.bf16.mxu0 %v1137
  %7282 = vmatmul.mubr.bf16.gmra.mxu0 %v1136
  %v7283 = vpop.f32.mrf.mxu0
  %v7284 = vadd.f32 %v7243, %v7283
  %v7285 = vpop.f32.mrf.mxu0
  %v7286 = vadd.f32 %v7245, %v7285
  %v7287 = vpop.f32.mrf.mxu0
  %v7288 = vpop.f32.mrf.mxu0
  %7289 = vdwg.mxu0
  %7290 = vmatprep.subr.bf16.mxu0 %v4801
  %7291 = vmatpush1.bf16.msra.mxu0 %v4800
  %7292 = vmatprep.subr.bf16.mxu0 %v4797
  %7293 = vmatpush1.bf16.msra.mxu0 %v4796
  %7294 = vmatprep.subr.bf16.mxu0 %v4793
  %7295 = vmatpush1.bf16.msra.mxu0 %v4792
  %7296 = vmatprep.subr.bf16.mxu0 %v4789
  %7297 = vmatpush1.bf16.msra.mxu0 %v4788
  %7298 = vmatprep.subr.bf16.mxu0 %v4785
  %7299 = vmatpush1.bf16.msra.mxu0 %v4784
  %7300 = vmatprep.subr.bf16.mxu0 %v4781
  %7301 = vmatpush1.bf16.msra.mxu0 %v4780
  %7302 = vmatprep.subr.bf16.mxu0 %v4777
  %7303 = vmatpush1.bf16.msra.mxu0 %v4776
  %7304 = vmatprep.subr.bf16.mxu0 %v4773
  %7305 = vmatpush1.bf16.msra.mxu0 %v4772
  %7306 = vmatprep.subr.bf16.mxu0 %v4833
  %7307 = vmatpush2.bf16.msra.mxu0 %v4832
  %7308 = vmatprep.subr.bf16.mxu0 %v4829
  %7309 = vmatpush2.bf16.msra.mxu0 %v4828
  %7310 = vmatprep.subr.bf16.mxu0 %v4825
  %7311 = vmatpush2.bf16.msra.mxu0 %v4824
  %7312 = vmatprep.subr.bf16.mxu0 %v4821
  %7313 = vmatpush2.bf16.msra.mxu0 %v4820
  %7314 = vmatprep.subr.bf16.mxu0 %v4817
  %7315 = vmatpush2.bf16.msra.mxu0 %v4816
  %7316 = vmatprep.subr.bf16.mxu0 %v4813
  %7317 = vmatpush2.bf16.msra.mxu0 %v4812
  %7318 = vmatprep.subr.bf16.mxu0 %v4809
  %7319 = vmatpush2.bf16.msra.mxu0 %v4808
  %7320 = vmatprep.subr.bf16.mxu0 %v4805
  %7321 = vmatpush2.bf16.msra.mxu0 %v4804
  %7322 = vmatprep.mubr.bf16.mxu0 %v1139
  %7323 = vmatmul.mubr.bf16.gmra.mxu0 %v1138
  %v7324 = vpop.f32.mrf.mxu0
  %v7325 = vadd.f32 %v7284, %v7324
  %v7326 = vpop.f32.mrf.mxu0
  %v7327 = vadd.f32 %v7286, %v7326
  %v7328 = vpop.f32.mrf.mxu0
  %v7329 = vpop.f32.mrf.mxu0
  %7330 = vdwg.mxu0
  %7331 = vmatprep.subr.bf16.mxu0 %v4865
  %7332 = vmatpush1.bf16.msra.mxu0 %v4864
  %7333 = vmatprep.subr.bf16.mxu0 %v4861
  %7334 = vmatpush1.bf16.msra.mxu0 %v4860
  %7335 = vmatprep.subr.bf16.mxu0 %v4857
  %7336 = vmatpush1.bf16.msra.mxu0 %v4856
  %7337 = vmatprep.subr.bf16.mxu0 %v4853
  %7338 = vmatpush1.bf16.msra.mxu0 %v4852
  %7339 = vmatprep.subr.bf16.mxu0 %v4849
  %7340 = vmatpush1.bf16.msra.mxu0 %v4848
  %7341 = vmatprep.subr.bf16.mxu0 %v4845
  %7342 = vmatpush1.bf16.msra.mxu0 %v4844
  %7343 = vmatprep.subr.bf16.mxu0 %v4841
  %7344 = vmatpush1.bf16.msra.mxu0 %v4840
  %7345 = vmatprep.subr.bf16.mxu0 %v4837
  %7346 = vmatpush1.bf16.msra.mxu0 %v4836
  %7347 = vmatprep.subr.bf16.mxu0 %v4897
  %7348 = vmatpush2.bf16.msra.mxu0 %v4896
  %7349 = vmatprep.subr.bf16.mxu0 %v4893
  %7350 = vmatpush2.bf16.msra.mxu0 %v4892
  %7351 = vmatprep.subr.bf16.mxu0 %v4889
  %7352 = vmatpush2.bf16.msra.mxu0 %v4888
  %7353 = vmatprep.subr.bf16.mxu0 %v4885
  %7354 = vmatpush2.bf16.msra.mxu0 %v4884
  %7355 = vmatprep.subr.bf16.mxu0 %v4881
  %7356 = vmatpush2.bf16.msra.mxu0 %v4880
  %7357 = vmatprep.subr.bf16.mxu0 %v4877
  %7358 = vmatpush2.bf16.msra.mxu0 %v4876
  %7359 = vmatprep.subr.bf16.mxu0 %v4873
  %7360 = vmatpush2.bf16.msra.mxu0 %v4872
  %7361 = vmatprep.subr.bf16.mxu0 %v4869
  %7362 = vmatpush2.bf16.msra.mxu0 %v4868
  %7363 = vmatprep.mubr.bf16.mxu0 %v1141
  %7364 = vmatmul.mubr.bf16.gmra.mxu0 %v1140
  %v7365 = vpop.f32.mrf.mxu0
  %v7366 = vadd.f32 %v7325, %v7365
  %v7367 = vpop.f32.mrf.mxu0
  %v7368 = vadd.f32 %v7327, %v7367
  %v7369 = vpop.f32.mrf.mxu0
  %v7370 = vpop.f32.mrf.mxu0
  %7371 = vdwg.mxu0
  %7372 = vmatprep.subr.bf16.mxu0 %v4929
  %7373 = vmatpush1.bf16.msra.mxu0 %v4928
  %7374 = vmatprep.subr.bf16.mxu0 %v4925
  %7375 = vmatpush1.bf16.msra.mxu0 %v4924
  %7376 = vmatprep.subr.bf16.mxu0 %v4921
  %7377 = vmatpush1.bf16.msra.mxu0 %v4920
  %7378 = vmatprep.subr.bf16.mxu0 %v4917
  %7379 = vmatpush1.bf16.msra.mxu0 %v4916
  %7380 = vmatprep.subr.bf16.mxu0 %v4913
  %7381 = vmatpush1.bf16.msra.mxu0 %v4912
  %7382 = vmatprep.subr.bf16.mxu0 %v4909
  %7383 = vmatpush1.bf16.msra.mxu0 %v4908
  %7384 = vmatprep.subr.bf16.mxu0 %v4905
  %7385 = vmatpush1.bf16.msra.mxu0 %v4904
  %7386 = vmatprep.subr.bf16.mxu0 %v4901
  %7387 = vmatpush1.bf16.msra.mxu0 %v4900
  %7388 = vmatprep.subr.bf16.mxu0 %v4961
  %7389 = vmatpush2.bf16.msra.mxu0 %v4960
  %7390 = vmatprep.subr.bf16.mxu0 %v4957
  %7391 = vmatpush2.bf16.msra.mxu0 %v4956
  %7392 = vmatprep.subr.bf16.mxu0 %v4953
  %7393 = vmatpush2.bf16.msra.mxu0 %v4952
  %7394 = vmatprep.subr.bf16.mxu0 %v4949
  %7395 = vmatpush2.bf16.msra.mxu0 %v4948
  %7396 = vmatprep.subr.bf16.mxu0 %v4945
  %7397 = vmatpush2.bf16.msra.mxu0 %v4944
  %7398 = vmatprep.subr.bf16.mxu0 %v4941
  %7399 = vmatpush2.bf16.msra.mxu0 %v4940
  %7400 = vmatprep.subr.bf16.mxu0 %v4937
  %7401 = vmatpush2.bf16.msra.mxu0 %v4936
  %7402 = vmatprep.subr.bf16.mxu0 %v4933
  %7403 = vmatpush2.bf16.msra.mxu0 %v4932
  %7404 = vmatprep.mubr.bf16.mxu0 %v1143
  %7405 = vmatmul.mubr.bf16.gmra.mxu0 %v1142
  %v7406 = vpop.f32.mrf.mxu0
  %v7407 = vadd.f32 %v7366, %v7406
  %v7408 = vpop.f32.mrf.mxu0
  %v7409 = vadd.f32 %v7368, %v7408
  %v7410 = vpop.f32.mrf.mxu0
  %v7411 = vpop.f32.mrf.mxu0
  %7412 = vdwg.mxu0
  %7413 = vmatprep.subr.bf16.mxu0 %v4993
  %7414 = vmatpush1.bf16.msra.mxu0 %v4992
  %7415 = vmatprep.subr.bf16.mxu0 %v4989
  %7416 = vmatpush1.bf16.msra.mxu0 %v4988
  %7417 = vmatprep.subr.bf16.mxu0 %v4985
  %7418 = vmatpush1.bf16.msra.mxu0 %v4984
  %7419 = vmatprep.subr.bf16.mxu0 %v4981
  %7420 = vmatpush1.bf16.msra.mxu0 %v4980
  %7421 = vmatprep.subr.bf16.mxu0 %v4977
  %7422 = vmatpush1.bf16.msra.mxu0 %v4976
  %7423 = vmatprep.subr.bf16.mxu0 %v4973
  %7424 = vmatpush1.bf16.msra.mxu0 %v4972
  %7425 = vmatprep.subr.bf16.mxu0 %v4969
  %7426 = vmatpush1.bf16.msra.mxu0 %v4968
  %7427 = vmatprep.subr.bf16.mxu0 %v4965
  %7428 = vmatpush1.bf16.msra.mxu0 %v4964
  %7429 = vmatprep.subr.bf16.mxu0 %v5025
  %7430 = vmatpush2.bf16.msra.mxu0 %v5024
  %7431 = vmatprep.subr.bf16.mxu0 %v5021
  %7432 = vmatpush2.bf16.msra.mxu0 %v5020
  %7433 = vmatprep.subr.bf16.mxu0 %v5017
  %7434 = vmatpush2.bf16.msra.mxu0 %v5016
  %7435 = vmatprep.subr.bf16.mxu0 %v5013
  %7436 = vmatpush2.bf16.msra.mxu0 %v5012
  %7437 = vmatprep.subr.bf16.mxu0 %v5009
  %7438 = vmatpush2.bf16.msra.mxu0 %v5008
  %7439 = vmatprep.subr.bf16.mxu0 %v5005
  %7440 = vmatpush2.bf16.msra.mxu0 %v5004
  %7441 = vmatprep.subr.bf16.mxu0 %v5001
  %7442 = vmatpush2.bf16.msra.mxu0 %v5000
  %7443 = vmatprep.subr.bf16.mxu0 %v4997
  %7444 = vmatpush2.bf16.msra.mxu0 %v4996
  %7445 = vmatprep.mubr.bf16.mxu0 %v1145
  %7446 = vmatmul.mubr.bf16.gmra.mxu0 %v1144
  %v7447 = vpop.f32.mrf.mxu0
  %v7448 = vadd.f32 %v7407, %v7447
  %v7449 = vpop.f32.mrf.mxu0
  %v7450 = vadd.f32 %v7409, %v7449
  %v7451 = vpop.f32.mrf.mxu0
  %v7452 = vpop.f32.mrf.mxu0
  %7453 = vdwg.mxu0
  %7454 = vmatprep.subr.bf16.mxu0 %v5057
  %7455 = vmatpush1.bf16.msra.mxu0 %v5056
  %7456 = vmatprep.subr.bf16.mxu0 %v5053
  %7457 = vmatpush1.bf16.msra.mxu0 %v5052
  %7458 = vmatprep.subr.bf16.mxu0 %v5049
  %7459 = vmatpush1.bf16.msra.mxu0 %v5048
  %7460 = vmatprep.subr.bf16.mxu0 %v5045
  %7461 = vmatpush1.bf16.msra.mxu0 %v5044
  %7462 = vmatprep.subr.bf16.mxu0 %v5041
  %7463 = vmatpush1.bf16.msra.mxu0 %v5040
  %7464 = vmatprep.subr.bf16.mxu0 %v5037
  %7465 = vmatpush1.bf16.msra.mxu0 %v5036
  %7466 = vmatprep.subr.bf16.mxu0 %v5033
  %7467 = vmatpush1.bf16.msra.mxu0 %v5032
  %7468 = vmatprep.subr.bf16.mxu0 %v5029
  %7469 = vmatpush1.bf16.msra.mxu0 %v5028
  %7470 = vmatprep.subr.bf16.mxu0 %v5089
  %7471 = vmatpush2.bf16.msra.mxu0 %v5088
  %7472 = vmatprep.subr.bf16.mxu0 %v5085
  %7473 = vmatpush2.bf16.msra.mxu0 %v5084
  %7474 = vmatprep.subr.bf16.mxu0 %v5081
  %7475 = vmatpush2.bf16.msra.mxu0 %v5080
  %7476 = vmatprep.subr.bf16.mxu0 %v5077
  %7477 = vmatpush2.bf16.msra.mxu0 %v5076
  %7478 = vmatprep.subr.bf16.mxu0 %v5073
  %7479 = vmatpush2.bf16.msra.mxu0 %v5072
  %7480 = vmatprep.subr.bf16.mxu0 %v5069
  %7481 = vmatpush2.bf16.msra.mxu0 %v5068
  %7482 = vmatprep.subr.bf16.mxu0 %v5065
  %7483 = vmatpush2.bf16.msra.mxu0 %v5064
  %7484 = vmatprep.subr.bf16.mxu0 %v5061
  %7485 = vmatpush2.bf16.msra.mxu0 %v5060
  %7486 = vmatprep.mubr.bf16.mxu0 %v1147
  %7487 = vmatmul.mubr.bf16.gmra.mxu0 %v1146
  %v7488 = vpop.f32.mrf.mxu0
  %v7489 = vadd.f32 %v7448, %v7488
  %v7490 = vpop.f32.mrf.mxu0
  %v7491 = vadd.f32 %v7450, %v7490
  %v7492 = vpop.f32.mrf.mxu0
  %v7493 = vpop.f32.mrf.mxu0
  %7494 = vdwg.mxu0
  %7495 = vmatprep.subr.bf16.mxu0 %v5121
  %7496 = vmatpush1.bf16.msra.mxu0 %v5120
  %7497 = vmatprep.subr.bf16.mxu0 %v5117
  %7498 = vmatpush1.bf16.msra.mxu0 %v5116
  %7499 = vmatprep.subr.bf16.mxu0 %v5113
  %7500 = vmatpush1.bf16.msra.mxu0 %v5112
  %7501 = vmatprep.subr.bf16.mxu0 %v5109
  %7502 = vmatpush1.bf16.msra.mxu0 %v5108
  %7503 = vmatprep.subr.bf16.mxu0 %v5105
  %7504 = vmatpush1.bf16.msra.mxu0 %v5104
  %7505 = vmatprep.subr.bf16.mxu0 %v5101
  %7506 = vmatpush1.bf16.msra.mxu0 %v5100
  %7507 = vmatprep.subr.bf16.mxu0 %v5097
  %7508 = vmatpush1.bf16.msra.mxu0 %v5096
  %7509 = vmatprep.subr.bf16.mxu0 %v5093
  %7510 = vmatpush1.bf16.msra.mxu0 %v5092
  %7511 = vmatprep.subr.bf16.mxu0 %v5153
  %7512 = vmatpush2.bf16.msra.mxu0 %v5152
  %7513 = vmatprep.subr.bf16.mxu0 %v5149
  %7514 = vmatpush2.bf16.msra.mxu0 %v5148
  %7515 = vmatprep.subr.bf16.mxu0 %v5145
  %7516 = vmatpush2.bf16.msra.mxu0 %v5144
  %7517 = vmatprep.subr.bf16.mxu0 %v5141
  %7518 = vmatpush2.bf16.msra.mxu0 %v5140
  %7519 = vmatprep.subr.bf16.mxu0 %v5137
  %7520 = vmatpush2.bf16.msra.mxu0 %v5136
  %7521 = vmatprep.subr.bf16.mxu0 %v5133
  %7522 = vmatpush2.bf16.msra.mxu0 %v5132
  %7523 = vmatprep.subr.bf16.mxu0 %v5129
  %7524 = vmatpush2.bf16.msra.mxu0 %v5128
  %7525 = vmatprep.subr.bf16.mxu0 %v5125
  %7526 = vmatpush2.bf16.msra.mxu0 %v5124
  %7527 = vmatprep.mubr.bf16.mxu0 %v1149
  %7528 = vmatmul.mubr.bf16.gmra.mxu0 %v1148
  %v7529 = vpop.f32.mrf.mxu0
  %v7530 = vadd.f32 %v7489, %v7529
  %v7531 = vpop.f32.mrf.mxu0
  %v7532 = vadd.f32 %v7491, %v7531
  %v7533 = vpop.f32.mrf.mxu0
  %v7534 = vpop.f32.mrf.mxu0
  %7535 = vdwg.mxu0
  %7536 = vmatprep.subr.bf16.mxu0 %v5185
  %7537 = vmatpush1.bf16.msra.mxu0 %v5184
  %7538 = vmatprep.subr.bf16.mxu0 %v5181
  %7539 = vmatpush1.bf16.msra.mxu0 %v5180
  %7540 = vmatprep.subr.bf16.mxu0 %v5177
  %7541 = vmatpush1.bf16.msra.mxu0 %v5176
  %7542 = vmatprep.subr.bf16.mxu0 %v5173
  %7543 = vmatpush1.bf16.msra.mxu0 %v5172
  %7544 = vmatprep.subr.bf16.mxu0 %v5169
  %7545 = vmatpush1.bf16.msra.mxu0 %v5168
  %7546 = vmatprep.subr.bf16.mxu0 %v5165
  %7547 = vmatpush1.bf16.msra.mxu0 %v5164
  %7548 = vmatprep.subr.bf16.mxu0 %v5161
  %7549 = vmatpush1.bf16.msra.mxu0 %v5160
  %7550 = vmatprep.subr.bf16.mxu0 %v5157
  %7551 = vmatpush1.bf16.msra.mxu0 %v5156
  %7552 = vmatprep.subr.bf16.mxu0 %v5217
  %7553 = vmatpush2.bf16.msra.mxu0 %v5216
  %7554 = vmatprep.subr.bf16.mxu0 %v5213
  %7555 = vmatpush2.bf16.msra.mxu0 %v5212
  %7556 = vmatprep.subr.bf16.mxu0 %v5209
  %7557 = vmatpush2.bf16.msra.mxu0 %v5208
  %7558 = vmatprep.subr.bf16.mxu0 %v5205
  %7559 = vmatpush2.bf16.msra.mxu0 %v5204
  %7560 = vmatprep.subr.bf16.mxu0 %v5201
  %7561 = vmatpush2.bf16.msra.mxu0 %v5200
  %7562 = vmatprep.subr.bf16.mxu0 %v5197
  %7563 = vmatpush2.bf16.msra.mxu0 %v5196
  %7564 = vmatprep.subr.bf16.mxu0 %v5193
  %7565 = vmatpush2.bf16.msra.mxu0 %v5192
  %7566 = vmatprep.subr.bf16.mxu0 %v5189
  %7567 = vmatpush2.bf16.msra.mxu0 %v5188
  %7568 = vmatprep.mubr.bf16.mxu0 %v1151
  %7569 = vmatmul.mubr.bf16.gmra.mxu0 %v1150
  %v7570 = vpop.f32.mrf.mxu0
  %v7571 = vadd.f32 %v7530, %v7570
  %v7572 = vpop.f32.mrf.mxu0
  %v7573 = vadd.f32 %v7532, %v7572
  %v7574 = vpop.f32.mrf.mxu0
  %v7575 = vpop.f32.mrf.mxu0
  %7576 = vdwg.mxu0
  %7577 = vmatprep.subr.bf16.mxu0 %v5249
  %7578 = vmatpush1.bf16.msra.mxu0 %v5248
  %7579 = vmatprep.subr.bf16.mxu0 %v5245
  %7580 = vmatpush1.bf16.msra.mxu0 %v5244
  %7581 = vmatprep.subr.bf16.mxu0 %v5241
  %7582 = vmatpush1.bf16.msra.mxu0 %v5240
  %7583 = vmatprep.subr.bf16.mxu0 %v5237
  %7584 = vmatpush1.bf16.msra.mxu0 %v5236
  %7585 = vmatprep.subr.bf16.mxu0 %v5233
  %7586 = vmatpush1.bf16.msra.mxu0 %v5232
  %7587 = vmatprep.subr.bf16.mxu0 %v5229
  %7588 = vmatpush1.bf16.msra.mxu0 %v5228
  %7589 = vmatprep.subr.bf16.mxu0 %v5225
  %7590 = vmatpush1.bf16.msra.mxu0 %v5224
  %7591 = vmatprep.subr.bf16.mxu0 %v5221
  %7592 = vmatpush1.bf16.msra.mxu0 %v5220
  %7593 = vmatprep.subr.bf16.mxu0 %v5281
  %7594 = vmatpush2.bf16.msra.mxu0 %v5280
  %7595 = vmatprep.subr.bf16.mxu0 %v5277
  %7596 = vmatpush2.bf16.msra.mxu0 %v5276
  %7597 = vmatprep.subr.bf16.mxu0 %v5273
  %7598 = vmatpush2.bf16.msra.mxu0 %v5272
  %7599 = vmatprep.subr.bf16.mxu0 %v5269
  %7600 = vmatpush2.bf16.msra.mxu0 %v5268
  %7601 = vmatprep.subr.bf16.mxu0 %v5265
  %7602 = vmatpush2.bf16.msra.mxu0 %v5264
  %7603 = vmatprep.subr.bf16.mxu0 %v5261
  %7604 = vmatpush2.bf16.msra.mxu0 %v5260
  %7605 = vmatprep.subr.bf16.mxu0 %v5257
  %7606 = vmatpush2.bf16.msra.mxu0 %v5256
  %7607 = vmatprep.subr.bf16.mxu0 %v5253
  %7608 = vmatpush2.bf16.msra.mxu0 %v5252
  %7609 = vmatprep.mubr.bf16.mxu0 %v1153
  %7610 = vmatmul.mubr.bf16.gmra.mxu0 %v1152
  %v7611 = vpop.f32.mrf.mxu0
  %v7612 = vadd.f32 %v7571, %v7611
  %v7613 = vpop.f32.mrf.mxu0
  %v7614 = vadd.f32 %v7573, %v7613
  %v7615 = vpop.f32.mrf.mxu0
  %v7616 = vpop.f32.mrf.mxu0
  %7617 = vdwg.mxu0
  %p7618 = scmp.eq.s32.totalorder 0, 0
  // Predicated region
  $region38: #{discriminator_forward.7} parent=0 // pred_check
    %p7619 = pneg %p7618
  $region39: #{discriminator_forward.7} parent=0 // pred_check_branch
    %7621 = sbr.rel (%p7619) target = $region41
  $region40: #{discriminator_forward.7} parent=0 // pred_region
    %7622 = vst [vmem:[#allocation2] sm:$0xff] %v6956
    %7623 = vst [vmem:[#allocation2 + $0x8] sm:$0xff] %v6958
    %7624 = vst [vmem:[#allocation2 + $0x10] sm:$0xff] %v7612
    %7625 = vst [vmem:[#allocation2 + $0x18] sm:$0xff] %v7614
  $region41: #{discriminator_forward.7} parent=0 // pred_fallthru
    _
  %p7626 = scmp.gt.s32.totalorder 0, 0
  // Predicated region
  $region42: #{discriminator_forward.7} parent=0 // pred_check
    %p7627 = pneg %p7626
  $region43: #{discriminator_forward.7} parent=0 // pred_check_branch
    %7629 = sbr.rel (%p7627) target = $region45
  $region44: #{discriminator_forward.7} parent=0 // pred_region
    %v7630 = vld [vmem:[#allocation2] sm:$0xff]
    %v7631 = vld [vmem:[#allocation2 + $0x8] sm:$0xff]
    %v7632 = vld [vmem:[#allocation2 + $0x10] sm:$0xff]
    %v7633 = vld [vmem:[#allocation2 + $0x18] sm:$0xff]
    %v7634 = vadd.f32 %v7630, %v6956
    %v7635 = vadd.f32 %v7631, %v6958
    %v7636 = vadd.f32 %v7632, %v7612
    %v7637 = vadd.f32 %v7633, %v7614
    %7638 = vst [vmem:[#allocation2] sm:$0xff] %v7634
    %7639 = vst [vmem:[#allocation2 + $0x8] sm:$0xff] %v7635
    %7640 = vst [vmem:[#allocation2 + $0x10] sm:$0xff] %v7636
    %7641 = vst [vmem:[#allocation2 + $0x18] sm:$0xff] %v7637
  $region45: #{discriminator_forward.7} parent=0 // pred_fallthru
    _
  // Predicated region
  $region46: #{discriminator_forward.7} parent=0 // pred_check
    %p7642 = pneg %p7618
  $region47: #{discriminator_forward.7} parent=0 // pred_check_branch
    %7644 = sbr.rel (%p7642) target = $region49
  $region48: #{discriminator_forward.7} parent=0 // pred_region
    %v7645 = vld [vmem:[#allocation2] sm:$0xff]
    %v7646 = vld [vmem:[#allocation2 + $0x8] sm:$0xff]
    %v7647 = vld [vmem:[#allocation2 + $0x10] sm:$0xff]
    %v7648 = vld [vmem:[#allocation2 + $0x18] sm:$0xff]
    %v7649 = vld [vmem:[%s2] sm:$0xf]
    %v7651 = vlaneseq
    %v7652 = vshrl.u32 %v7651, 7
    %v7653 = vsub.s32 0, %v7652
    %v7654 = vrot.slane %v7649, %v7653
    %v7655 = vlaneseq
    %v7656 = vshrl.u32 %v7655, 7
    %v7657 = vsub.s32 1, %v7656
    %v7658 = vrot.slane %v7649, %v7657
    %v7659 = vlaneseq
    %v7660 = vshrl.u32 %v7659, 7
    %v7661 = vsub.s32 2, %v7660
    %v7662 = vrot.slane %v7649, %v7661
    %v7663 = vlaneseq
    %v7664 = vshrl.u32 %v7663, 7
    %v7665 = vsub.s32 3, %v7664
    %v7666 = vrot.slane %v7649, %v7665
    %v7671 = vmul.f32 %v7645, %v7654
    %v7672 = vmul.f32 %v7646, %v7658
    %v7673 = vmul.f32 %v7647, %v7662
    %v7674 = vmul.f32 %v7648, %v7666
    %v7675 = vld [vmem:[%s3] sm:$0xf]
    %v7677 = vlaneseq
    %v7678 = vshrl.u32 %v7677, 7
    %v7679 = vsub.s32 0, %v7678
    %v7680 = vrot.slane %v7675, %v7679
    %v7681 = vlaneseq
    %v7682 = vshrl.u32 %v7681, 7
    %v7683 = vsub.s32 1, %v7682
    %v7684 = vrot.slane %v7675, %v7683
    %v7685 = vlaneseq
    %v7686 = vshrl.u32 %v7685, 7
    %v7687 = vsub.s32 2, %v7686
    %v7688 = vrot.slane %v7675, %v7687
    %v7689 = vlaneseq
    %v7690 = vshrl.u32 %v7689, 7
    %v7691 = vsub.s32 3, %v7690
    %v7692 = vrot.slane %v7675, %v7691
    %v7697 = vadd.f32 %v7671, %v7680
    %v7698 = vadd.f32 %v7672, %v7684
    %v7699 = vadd.f32 %v7673, %v7688
    %v7700 = vadd.f32 %v7674, %v7692
    %v7701 = vmul.f32 %v7697, 0.2
    %v7702 = vmul.f32 %v7698, 0.2
    %v7703 = vmul.f32 %v7699, 0.2
    %v7704 = vmul.f32 %v7700, 0.2
    %v7705 = vmax.f32 %v7697, %v7701
    %v7706 = vmax.f32 %v7698, %v7702
    %v7707 = vmax.f32 %v7699, %v7703
    %v7708 = vmax.f32 %v7700, %v7704
    %v7709 = vld [vmem:[%s4] sm:$0xff]
    %v7710 = vld [vmem:[%s4 + $0x8] sm:$0xff]
    %v7711 = vld [vmem:[%s4 + $0x10] sm:$0xff]
    %v7712 = vld [vmem:[%s4 + $0x18] sm:$0xff]
    %v7713 = vld [vmem:[%s4 + $0x20] sm:$0xff]
    %v7714 = vld [vmem:[%s4 + $0x28] sm:$0xff]
    %v7715 = vld [vmem:[%s4 + $0x30] sm:$0xff]
    %v7716 = vld [vmem:[%s4 + $0x38] sm:$0xff]
    %v7717 = vld [vmem:[%s4 + $0x40] sm:$0xff]
    %v7718 = vld [vmem:[%s4 + $0x48] sm:$0xff]
    %v7719 = vld [vmem:[%s4 + $0x50] sm:$0xff]
    %v7720 = vld [vmem:[%s4 + $0x58] sm:$0xff]
    %v7721 = vld [vmem:[%s4 + $0x60] sm:$0xff]
    %v7722 = vld [vmem:[%s4 + $0x68] sm:$0xff]
    %v7723 = vld [vmem:[%s4 + $0x70] sm:$0xff]
    %v7724 = vld [vmem:[%s4 + $0x78] sm:$0xff]
    %v7725 = vld [vmem:[%s4 + $0x80] sm:$0xff]
    %v7726 = vld [vmem:[%s4 + $0x88] sm:$0xff]
    %v7727 = vld [vmem:[%s4 + $0x90] sm:$0xff]
    %v7728 = vld [vmem:[%s4 + $0x98] sm:$0xff]
    %v7729 = vld [vmem:[%s4 + $0xa0] sm:$0xff]
    %v7730 = vld [vmem:[%s4 + $0xa8] sm:$0xff]
    %v7731 = vld [vmem:[%s4 + $0xb0] sm:$0xff]
    %v7732 = vld [vmem:[%s4 + $0xb8] sm:$0xff]
    %v7733 = vld [vmem:[%s4 + $0xc0] sm:$0xff]
    %v7734 = vld [vmem:[%s4 + $0xc8] sm:$0xff]
    %v7735 = vld [vmem:[%s4 + $0xd0] sm:$0xff]
    %v7736 = vld [vmem:[%s4 + $0xd8] sm:$0xff]
    %v7737 = vld [vmem:[%s4 + $0xe0] sm:$0xff]
    %v7738 = vld [vmem:[%s4 + $0xe8] sm:$0xff]
    %v7739 = vld [vmem:[%s4 + $0xf0] sm:$0xff]
    %v7740 = vld [vmem:[%s4 + $0xf8] sm:$0xff]
    %v7741 = vld [vmem:[%s4 + $0x100] sm:$0xff]
    %v7742 = vld [vmem:[%s4 + $0x108] sm:$0xff]
    %v7743 = vld [vmem:[%s4 + $0x110] sm:$0xff]
    %v7744 = vld [vmem:[%s4 + $0x118] sm:$0xff]
    %v7745 = vld [vmem:[%s4 + $0x120] sm:$0xff]
    %v7746 = vld [vmem:[%s4 + $0x128] sm:$0xff]
    %v7747 = vld [vmem:[%s4 + $0x130] sm:$0xff]
    %v7748 = vld [vmem:[%s4 + $0x138] sm:$0xff]
    %v7749 = vld [vmem:[%s4 + $0x140] sm:$0xff]
    %v7750 = vld [vmem:[%s4 + $0x148] sm:$0xff]
    %v7751 = vld [vmem:[%s4 + $0x150] sm:$0xff]
    %v7752 = vld [vmem:[%s4 + $0x158] sm:$0xff]
    %v7753 = vld [vmem:[%s4 + $0x160] sm:$0xff]
    %v7754 = vld [vmem:[%s4 + $0x168] sm:$0xff]
    %v7755 = vld [vmem:[%s4 + $0x170] sm:$0xff]
    %v7756 = vld [vmem:[%s4 + $0x178] sm:$0xff]
    %v7757 = vld [vmem:[%s4 + $0x180] sm:$0xff]
    %v7758 = vld [vmem:[%s4 + $0x188] sm:$0xff]
    %v7759 = vld [vmem:[%s4 + $0x190] sm:$0xff]
    %v7760 = vld [vmem:[%s4 + $0x198] sm:$0xff]
    %v7761 = vld [vmem:[%s4 + $0x1a0] sm:$0xff]
    %v7762 = vld [vmem:[%s4 + $0x1a8] sm:$0xff]
    %v7763 = vld [vmem:[%s4 + $0x1b0] sm:$0xff]
    %v7764 = vld [vmem:[%s4 + $0x1b8] sm:$0xff]
    %v7765 = vld [vmem:[%s4 + $0x1c0] sm:$0xff]
    %v7766 = vld [vmem:[%s4 + $0x1c8] sm:$0xff]
    %v7767 = vld [vmem:[%s4 + $0x1d0] sm:$0xff]
    %v7768 = vld [vmem:[%s4 + $0x1d8] sm:$0xff]
    %v7769 = vld [vmem:[%s4 + $0x1e0] sm:$0xff]
    %v7770 = vld [vmem:[%s4 + $0x1e8] sm:$0xff]
    %v7771 = vld [vmem:[%s4 + $0x1f0] sm:$0xff]
    %v7772 = vld [vmem:[%s4 + $0x1f8] sm:$0xff]
    %v7773 = vld [vmem:[%s5] sm:$0x1]
    %v7775 = vlaneseq
    %v7776 = vshrl.u32 %v7775, 7
    %v7777 = vsub.s32 0, %v7776
    %v7778 = vrot.slane %v7773, %v7777
    %7780 = vmatprep.subr.mxu0 0.0
    %7781 = vmatpush1.msra.mxu0 %v7724
    %7782 = vmatprep.subr.mxu0 0.0
    %7783 = vmatpush1.msra.mxu0 %v7723
    %7784 = vmatprep.subr.mxu0 0.0
    %7785 = vmatpush1.msra.mxu0 %v7722
    %7786 = vmatprep.subr.mxu0 0.0
    %7787 = vmatpush1.msra.mxu0 %v7721
    %7788 = vmatprep.subr.mxu0 0.0
    %7789 = vmatpush1.msra.mxu0 %v7720
    %7790 = vmatprep.subr.mxu0 0.0
    %7791 = vmatpush1.msra.mxu0 %v7719
    %7792 = vmatprep.subr.mxu0 0.0
    %7793 = vmatpush1.msra.mxu0 %v7718
    %7794 = vmatprep.subr.mxu0 0.0
    %7795 = vmatpush1.msra.mxu0 %v7717
    %7796 = vmatprep.subr.mxu0 0.0
    %7797 = vmatpush1.msra.mxu0 %v7716
    %7798 = vmatprep.subr.mxu0 0.0
    %7799 = vmatpush1.msra.mxu0 %v7715
    %7800 = vmatprep.subr.mxu0 0.0
    %7801 = vmatpush1.msra.mxu0 %v7714
    %7802 = vmatprep.subr.mxu0 0.0
    %7803 = vmatpush1.msra.mxu0 %v7713
    %7804 = vmatprep.subr.mxu0 0.0
    %7805 = vmatpush1.msra.mxu0 %v7712
    %7806 = vmatprep.subr.mxu0 0.0
    %7807 = vmatpush1.msra.mxu0 %v7711
    %7808 = vmatprep.subr.mxu0 0.0
    %7809 = vmatpush1.msra.mxu0 %v7710
    %7810 = vmatprep.subr.mxu0 0.0
    %7811 = vmatpush1.msra.mxu0 %v7709
    %7812 = vmatprep.subr.mxu0 0.0
    %7813 = vmatpush2.msra.mxu0 %v7740
    %7814 = vmatprep.subr.mxu0 0.0
    %7815 = vmatpush2.msra.mxu0 %v7739
    %7816 = vmatprep.subr.mxu0 0.0
    %7817 = vmatpush2.msra.mxu0 %v7738
    %7818 = vmatprep.subr.mxu0 0.0
    %7819 = vmatpush2.msra.mxu0 %v7737
    %7820 = vmatprep.subr.mxu0 0.0
    %7821 = vmatpush2.msra.mxu0 %v7736
    %7822 = vmatprep.subr.mxu0 0.0
    %7823 = vmatpush2.msra.mxu0 %v7735
    %7824 = vmatprep.subr.mxu0 0.0
    %7825 = vmatpush2.msra.mxu0 %v7734
    %7826 = vmatprep.subr.mxu0 0.0
    %7827 = vmatpush2.msra.mxu0 %v7733
    %7828 = vmatprep.subr.mxu0 0.0
    %7829 = vmatpush2.msra.mxu0 %v7732
    %7830 = vmatprep.subr.mxu0 0.0
    %7831 = vmatpush2.msra.mxu0 %v7731
    %7832 = vmatprep.subr.mxu0 0.0
    %7833 = vmatpush2.msra.mxu0 %v7730
    %7834 = vmatprep.subr.mxu0 0.0
    %7835 = vmatpush2.msra.mxu0 %v7729
    %7836 = vmatprep.subr.mxu0 0.0
    %7837 = vmatpush2.msra.mxu0 %v7728
    %7838 = vmatprep.subr.mxu0 0.0
    %7839 = vmatpush2.msra.mxu0 %v7727
    %7840 = vmatprep.subr.mxu0 0.0
    %7841 = vmatpush2.msra.mxu0 %v7726
    %7842 = vmatprep.subr.mxu0 0.0
    %7843 = vmatpush2.msra.mxu0 %v7725
    %7844 = vmatprep.mubr.f32.mxu0 %v7706
    %7845 = vmatmul.mubr.f32.gmra.mxu0 %v7705
    %v7846 = vpop.f32.mrf.mxu0
    %v7847 = vadd.f32 %v7778, %v7846
    %v7848 = vpop.f32.mrf.mxu0
    %7849 = vdwg.mxu0
    %7850 = vmatprep.subr.mxu0 0.0
    %7851 = vmatpush1.msra.mxu0 %v7756
    %7852 = vmatprep.subr.mxu0 0.0
    %7853 = vmatpush1.msra.mxu0 %v7755
    %7854 = vmatprep.subr.mxu0 0.0
    %7855 = vmatpush1.msra.mxu0 %v7754
    %7856 = vmatprep.subr.mxu0 0.0
    %7857 = vmatpush1.msra.mxu0 %v7753
    %7858 = vmatprep.subr.mxu0 0.0
    %7859 = vmatpush1.msra.mxu0 %v7752
    %7860 = vmatprep.subr.mxu0 0.0
    %7861 = vmatpush1.msra.mxu0 %v7751
    %7862 = vmatprep.subr.mxu0 0.0
    %7863 = vmatpush1.msra.mxu0 %v7750
    %7864 = vmatprep.subr.mxu0 0.0
    %7865 = vmatpush1.msra.mxu0 %v7749
    %7866 = vmatprep.subr.mxu0 0.0
    %7867 = vmatpush1.msra.mxu0 %v7748
    %7868 = vmatprep.subr.mxu0 0.0
    %7869 = vmatpush1.msra.mxu0 %v7747
    %7870 = vmatprep.subr.mxu0 0.0
    %7871 = vmatpush1.msra.mxu0 %v7746
    %7872 = vmatprep.subr.mxu0 0.0
    %7873 = vmatpush1.msra.mxu0 %v7745
    %7874 = vmatprep.subr.mxu0 0.0
    %7875 = vmatpush1.msra.mxu0 %v7744
    %7876 = vmatprep.subr.mxu0 0.0
    %7877 = vmatpush1.msra.mxu0 %v7743
    %7878 = vmatprep.subr.mxu0 0.0
    %7879 = vmatpush1.msra.mxu0 %v7742
    %7880 = vmatprep.subr.mxu0 0.0
    %7881 = vmatpush1.msra.mxu0 %v7741
    %7882 = vmatprep.subr.mxu0 0.0
    %7883 = vmatpush2.msra.mxu0 %v7772
    %7884 = vmatprep.subr.mxu0 0.0
    %7885 = vmatpush2.msra.mxu0 %v7771
    %7886 = vmatprep.subr.mxu0 0.0
    %7887 = vmatpush2.msra.mxu0 %v7770
    %7888 = vmatprep.subr.mxu0 0.0
    %7889 = vmatpush2.msra.mxu0 %v7769
    %7890 = vmatprep.subr.mxu0 0.0
    %7891 = vmatpush2.msra.mxu0 %v7768
    %7892 = vmatprep.subr.mxu0 0.0
    %7893 = vmatpush2.msra.mxu0 %v7767
    %7894 = vmatprep.subr.mxu0 0.0
    %7895 = vmatpush2.msra.mxu0 %v7766
    %7896 = vmatprep.subr.mxu0 0.0
    %7897 = vmatpush2.msra.mxu0 %v7765
    %7898 = vmatprep.subr.mxu0 0.0
    %7899 = vmatpush2.msra.mxu0 %v7764
    %7900 = vmatprep.subr.mxu0 0.0
    %7901 = vmatpush2.msra.mxu0 %v7763
    %7902 = vmatprep.subr.mxu0 0.0
    %7903 = vmatpush2.msra.mxu0 %v7762
    %7904 = vmatprep.subr.mxu0 0.0
    %7905 = vmatpush2.msra.mxu0 %v7761
    %7906 = vmatprep.subr.mxu0 0.0
    %7907 = vmatpush2.msra.mxu0 %v7760
    %7908 = vmatprep.subr.mxu0 0.0
    %7909 = vmatpush2.msra.mxu0 %v7759
    %7910 = vmatprep.subr.mxu0 0.0
    %7911 = vmatpush2.msra.mxu0 %v7758
    %7912 = vmatprep.subr.mxu0 0.0
    %7913 = vmatpush2.msra.mxu0 %v7757
    %7914 = vmatprep.mubr.f32.mxu0 %v7708
    %7915 = vmatmul.mubr.f32.gmra.mxu0 %v7707
    %v7916 = vpop.f32.mrf.mxu0
    %v7917 = vadd.f32 %v7847, %v7916
    %v7918 = vpop.f32.mrf.mxu0
    %7919 = vdwg.mxu0
    %7920 = vst [vmem:[%s9] sm:$0xff] %v7917
    %v7921 = vld [vmem:[%s6] sm:$0xff]
    %vm7922 = vcmask 64512
    %v7924 = vsel %vm7922, %v7921, 0
    %7926 = vmatprep.subr.mxu0 0.0
    %7927 = vmatpush1.msra.mxu0 0.0
    %7928 = vmatprep.subr.mxu0 0.0
    %7929 = vmatpush1.msra.mxu0 0.0
    %7930 = vmatprep.subr.mxu0 0.0
    %7931 = vmatpush1.msra.mxu0 0.0
    %7932 = vmatprep.subr.mxu0 0.0
    %7933 = vmatpush1.msra.mxu0 0.0
    %7934 = vmatprep.subr.mxu0 0.0
    %7935 = vmatpush1.msra.mxu0 0.0
    %7936 = vmatprep.subr.mxu0 0.0
    %7937 = vmatpush1.msra.mxu0 0.0
    %7938 = vmatprep.subr.mxu0 0.0
    %7939 = vmatpush1.msra.mxu0 0.0
    %7940 = vmatprep.subr.mxu0 0.0
    %7941 = vmatpush1.msra.mxu0 0.0
    %7942 = vmatprep.subr.mxu0 0.0
    %7943 = vmatpush1.msra.mxu0 0.0
    %7944 = vmatprep.subr.mxu0 0.0
    %7945 = vmatpush1.msra.mxu0 0.0
    %7946 = vmatprep.subr.mxu0 0.0
    %7947 = vmatpush1.msra.mxu0 0.0
    %7948 = vmatprep.subr.mxu0 0.0
    %7949 = vmatpush1.msra.mxu0 0.0
    %7950 = vmatprep.subr.mxu0 0.0
    %7951 = vmatpush1.msra.mxu0 0.0
    %7952 = vmatprep.subr.mxu0 0.0
    %7953 = vmatpush1.msra.mxu0 0.0
    %7954 = vmatprep.subr.mxu0 0.0
    %7955 = vmatpush1.msra.mxu0 0.0
    %7956 = vmatprep.subr.mxu0 %v7706
    %7957 = vmatpush1.msra.mxu0 %v7705
    %7958 = vmatprep.subr.mxu0 0.0
    %7959 = vmatpush2.msra.mxu0 0.0
    %7960 = vmatprep.subr.mxu0 0.0
    %7961 = vmatpush2.msra.mxu0 0.0
    %7962 = vmatprep.subr.mxu0 0.0
    %7963 = vmatpush2.msra.mxu0 0.0
    %7964 = vmatprep.subr.mxu0 0.0
    %7965 = vmatpush2.msra.mxu0 0.0
    %7966 = vmatprep.subr.mxu0 0.0
    %7967 = vmatpush2.msra.mxu0 0.0
    %7968 = vmatprep.subr.mxu0 0.0
    %7969 = vmatpush2.msra.mxu0 0.0
    %7970 = vmatprep.subr.mxu0 0.0
    %7971 = vmatpush2.msra.mxu0 0.0
    %7972 = vmatprep.subr.mxu0 0.0
    %7973 = vmatpush2.msra.mxu0 0.0
    %7974 = vmatprep.subr.mxu0 0.0
    %7975 = vmatpush2.msra.mxu0 0.0
    %7976 = vmatprep.subr.mxu0 0.0
    %7977 = vmatpush2.msra.mxu0 0.0
    %7978 = vmatprep.subr.mxu0 0.0
    %7979 = vmatpush2.msra.mxu0 0.0
    %7980 = vmatprep.subr.mxu0 0.0
    %7981 = vmatpush2.msra.mxu0 0.0
    %7982 = vmatprep.subr.mxu0 0.0
    %7983 = vmatpush2.msra.mxu0 0.0
    %7984 = vmatprep.subr.mxu0 0.0
    %7985 = vmatpush2.msra.mxu0 0.0
    %7986 = vmatprep.subr.mxu0 0.0
    %7987 = vmatpush2.msra.mxu0 0.0
    %7988 = vmatprep.subr.mxu0 0.0
    %7989 = vmatpush2.msra.mxu0 0.0
    %7990 = vmatprep.mubr.f32.mxu0 0.0
    %7991 = vmatmul.mubr.f32.gmra.mxu0 %v7924
    %v7992 = vpop.f32.mrf.mxu0
    %v7993 = vadd.f32 0.0, %v7992
    %v7994 = vpop.f32.mrf.mxu0
    %v7995 = vadd.f32 0.0, %v7994
    %7996 = vdwg.mxu0
    %7997 = vmatprep.subr.mxu0 0.0
    %7998 = vmatpush1.msra.mxu0 0.0
    %7999 = vmatprep.subr.mxu0 0.0
    %8000 = vmatpush1.msra.mxu0 0.0
    %8001 = vmatprep.subr.mxu0 0.0
    %8002 = vmatpush1.msra.mxu0 0.0
    %8003 = vmatprep.subr.mxu0 0.0
    %8004 = vmatpush1.msra.mxu0 0.0
    %8005 = vmatprep.subr.mxu0 0.0
    %8006 = vmatpush1.msra.mxu0 0.0
    %8007 = vmatprep.subr.mxu0 0.0
    %8008 = vmatpush1.msra.mxu0 0.0
    %8009 = vmatprep.subr.mxu0 0.0
    %8010 = vmatpush1.msra.mxu0 0.0
    %8011 = vmatprep.subr.mxu0 0.0
    %8012 = vmatpush1.msra.mxu0 0.0
    %8013 = vmatprep.subr.mxu0 0.0
    %8014 = vmatpush1.msra.mxu0 0.0
    %8015 = vmatprep.subr.mxu0 0.0
    %8016 = vmatpush1.msra.mxu0 0.0
    %8017 = vmatprep.subr.mxu0 0.0
    %8018 = vmatpush1.msra.mxu0 0.0
    %8019 = vmatprep.subr.mxu0 0.0
    %8020 = vmatpush1.msra.mxu0 0.0
    %8021 = vmatprep.subr.mxu0 0.0
    %8022 = vmatpush1.msra.mxu0 0.0
    %8023 = vmatprep.subr.mxu0 0.0
    %8024 = vmatpush1.msra.mxu0 0.0
    %8025 = vmatprep.subr.mxu0 0.0
    %8026 = vmatpush1.msra.mxu0 0.0
    %8027 = vmatprep.subr.mxu0 %v7708
    %8028 = vmatpush1.msra.mxu0 %v7707
    %8029 = vmatprep.subr.mxu0 0.0
    %8030 = vmatpush2.msra.mxu0 0.0
    %8031 = vmatprep.subr.mxu0 0.0
    %8032 = vmatpush2.msra.mxu0 0.0
    %8033 = vmatprep.subr.mxu0 0.0
    %8034 = vmatpush2.msra.mxu0 0.0
    %8035 = vmatprep.subr.mxu0 0.0
    %8036 = vmatpush2.msra.mxu0 0.0
    %8037 = vmatprep.subr.mxu0 0.0
    %8038 = vmatpush2.msra.mxu0 0.0
    %8039 = vmatprep.subr.mxu0 0.0
    %8040 = vmatpush2.msra.mxu0 0.0
    %8041 = vmatprep.subr.mxu0 0.0
    %8042 = vmatpush2.msra.mxu0 0.0
    %8043 = vmatprep.subr.mxu0 0.0
    %8044 = vmatpush2.msra.mxu0 0.0
    %8045 = vmatprep.subr.mxu0 0.0
    %8046 = vmatpush2.msra.mxu0 0.0
    %8047 = vmatprep.subr.mxu0 0.0
    %8048 = vmatpush2.msra.mxu0 0.0
    %8049 = vmatprep.subr.mxu0 0.0
    %8050 = vmatpush2.msra.mxu0 0.0
    %8051 = vmatprep.subr.mxu0 0.0
    %8052 = vmatpush2.msra.mxu0 0.0
    %8053 = vmatprep.subr.mxu0 0.0
    %8054 = vmatpush2.msra.mxu0 0.0
    %8055 = vmatprep.subr.mxu0 0.0
    %8056 = vmatpush2.msra.mxu0 0.0
    %8057 = vmatprep.subr.mxu0 0.0
    %8058 = vmatpush2.msra.mxu0 0.0
    %8059 = vmatprep.subr.mxu0 0.0
    %8060 = vmatpush2.msra.mxu0 0.0
    %8061 = vmatprep.mubr.f32.mxu0 0.0
    %8062 = vmatmul.mubr.f32.gmra.mxu0 %v7924
    %v8063 = vpop.f32.mrf.mxu0
    %v8064 = vadd.f32 0.0, %v8063
    %v8065 = vpop.f32.mrf.mxu0
    %v8066 = vadd.f32 0.0, %v8065
    %8067 = vdwg.mxu0
    %v8068 = vld [vmem:[%s7] sm:$0xff]
    %v8069 = vld [vmem:[%s7 + $0x8] sm:$0xff]
    %v8070 = vld [vmem:[%s7 + $0x10] sm:$0xff]
    %v8071 = vld [vmem:[%s7 + $0x18] sm:$0xff]
    %v8072 = vld [vmem:[%s7 + $0x20] sm:$0xff]
    %v8073 = vld [vmem:[%s7 + $0x28] sm:$0xff]
    %v8074 = vld [vmem:[%s7 + $0x30] sm:$0xff]
    %v8075 = vld [vmem:[%s7 + $0x38] sm:$0xff]
    %v8076 = vld [vmem:[%s7 + $0x40] sm:$0xff]
    %v8077 = vld [vmem:[%s7 + $0x48] sm:$0xff]
    %v8078 = vld [vmem:[%s7 + $0x50] sm:$0xff]
    %v8079 = vld [vmem:[%s7 + $0x58] sm:$0xff]
    %v8080 = vld [vmem:[%s7 + $0x60] sm:$0xff]
    %v8081 = vld [vmem:[%s7 + $0x68] sm:$0xff]
    %v8082 = vld [vmem:[%s7 + $0x70] sm:$0xff]
    %v8083 = vld [vmem:[%s7 + $0x78] sm:$0xff]
    %v8084 = vld [vmem:[%s7 + $0x80] sm:$0xff]
    %v8085 = vld [vmem:[%s7 + $0x88] sm:$0xff]
    %v8086 = vld [vmem:[%s7 + $0x90] sm:$0xff]
    %v8087 = vld [vmem:[%s7 + $0x98] sm:$0xff]
    %v8088 = vld [vmem:[%s7 + $0xa0] sm:$0xff]
    %v8089 = vld [vmem:[%s7 + $0xa8] sm:$0xff]
    %v8090 = vld [vmem:[%s7 + $0xb0] sm:$0xff]
    %v8091 = vld [vmem:[%s7 + $0xb8] sm:$0xff]
    %v8092 = vld [vmem:[%s7 + $0xc0] sm:$0xff]
    %v8093 = vld [vmem:[%s7 + $0xc8] sm:$0xff]
    %v8094 = vld [vmem:[%s7 + $0xd0] sm:$0xff]
    %v8095 = vld [vmem:[%s7 + $0xd8] sm:$0xff]
    %v8096 = vld [vmem:[%s7 + $0xe0] sm:$0xff]
    %v8097 = vld [vmem:[%s7 + $0xe8] sm:$0xff]
    %v8098 = vld [vmem:[%s7 + $0xf0] sm:$0xff]
    %v8099 = vld [vmem:[%s7 + $0xf8] sm:$0xff]
    %v8100 = vld [vmem:[%s7 + $0x100] sm:$0xff]
    %v8101 = vld [vmem:[%s7 + $0x108] sm:$0xff]
    %v8102 = vld [vmem:[%s7 + $0x110] sm:$0xff]
    %v8103 = vld [vmem:[%s7 + $0x118] sm:$0xff]
    %v8104 = vld [vmem:[%s7 + $0x120] sm:$0xff]
    %v8105 = vld [vmem:[%s7 + $0x128] sm:$0xff]
    %v8106 = vld [vmem:[%s7 + $0x130] sm:$0xff]
    %v8107 = vld [vmem:[%s7 + $0x138] sm:$0xff]
    %v8108 = vld [vmem:[%s7 + $0x140] sm:$0xff]
    %v8109 = vld [vmem:[%s7 + $0x148] sm:$0xff]
    %v8110 = vld [vmem:[%s7 + $0x150] sm:$0xff]
    %v8111 = vld [vmem:[%s7 + $0x158] sm:$0xff]
    %v8112 = vld [vmem:[%s7 + $0x160] sm:$0xff]
    %v8113 = vld [vmem:[%s7 + $0x168] sm:$0xff]
    %v8114 = vld [vmem:[%s7 + $0x170] sm:$0xff]
    %v8115 = vld [vmem:[%s7 + $0x178] sm:$0xff]
    %v8116 = vld [vmem:[%s7 + $0x180] sm:$0xff]
    %v8117 = vld [vmem:[%s7 + $0x188] sm:$0xff]
    %v8118 = vld [vmem:[%s7 + $0x190] sm:$0xff]
    %v8119 = vld [vmem:[%s7 + $0x198] sm:$0xff]
    %v8120 = vld [vmem:[%s7 + $0x1a0] sm:$0xff]
    %v8121 = vld [vmem:[%s7 + $0x1a8] sm:$0xff]
    %v8122 = vld [vmem:[%s7 + $0x1b0] sm:$0xff]
    %v8123 = vld [vmem:[%s7 + $0x1b8] sm:$0xff]
    %v8124 = vld [vmem:[%s7 + $0x1c0] sm:$0xff]
    %v8125 = vld [vmem:[%s7 + $0x1c8] sm:$0xff]
    %v8126 = vld [vmem:[%s7 + $0x1d0] sm:$0xff]
    %v8127 = vld [vmem:[%s7 + $0x1d8] sm:$0xff]
    %v8128 = vld [vmem:[%s7 + $0x1e0] sm:$0xff]
    %v8129 = vld [vmem:[%s7 + $0x1e8] sm:$0xff]
    %v8130 = vld [vmem:[%s7 + $0x1f0] sm:$0xff]
    %v8131 = vld [vmem:[%s7 + $0x1f8] sm:$0xff]
    %v8132 = vld [vmem:[%s8] sm:$0x1]
    %v8134 = vlaneseq
    %v8135 = vshrl.u32 %v8134, 7
    %v8136 = vsub.s32 0, %v8135
    %v8137 = vrot.slane %v8132, %v8136
    %8139 = vmatprep.subr.mxu0 0.0
    %8140 = vmatpush1.msra.mxu0 %v8083
    %8141 = vmatprep.subr.mxu0 0.0
    %8142 = vmatpush1.msra.mxu0 %v8082
    %8143 = vmatprep.subr.mxu0 0.0
    %8144 = vmatpush1.msra.mxu0 %v8081
    %8145 = vmatprep.subr.mxu0 0.0
    %8146 = vmatpush1.msra.mxu0 %v8080
    %8147 = vmatprep.subr.mxu0 0.0
    %8148 = vmatpush1.msra.mxu0 %v8079
    %8149 = vmatprep.subr.mxu0 0.0
    %8150 = vmatpush1.msra.mxu0 %v8078
    %8151 = vmatprep.subr.mxu0 0.0
    %8152 = vmatpush1.msra.mxu0 %v8077
    %8153 = vmatprep.subr.mxu0 0.0
    %8154 = vmatpush1.msra.mxu0 %v8076
    %8155 = vmatprep.subr.mxu0 0.0
    %8156 = vmatpush1.msra.mxu0 %v8075
    %8157 = vmatprep.subr.mxu0 0.0
    %8158 = vmatpush1.msra.mxu0 %v8074
    %8159 = vmatprep.subr.mxu0 0.0
    %8160 = vmatpush1.msra.mxu0 %v8073
    %8161 = vmatprep.subr.mxu0 0.0
    %8162 = vmatpush1.msra.mxu0 %v8072
    %8163 = vmatprep.subr.mxu0 0.0
    %8164 = vmatpush1.msra.mxu0 %v8071
    %8165 = vmatprep.subr.mxu0 0.0
    %8166 = vmatpush1.msra.mxu0 %v8070
    %8167 = vmatprep.subr.mxu0 0.0
    %8168 = vmatpush1.msra.mxu0 %v8069
    %8169 = vmatprep.subr.mxu0 0.0
    %8170 = vmatpush1.msra.mxu0 %v8068
    %8171 = vmatprep.subr.mxu0 0.0
    %8172 = vmatpush2.msra.mxu0 %v8099
    %8173 = vmatprep.subr.mxu0 0.0
    %8174 = vmatpush2.msra.mxu0 %v8098
    %8175 = vmatprep.subr.mxu0 0.0
    %8176 = vmatpush2.msra.mxu0 %v8097
    %8177 = vmatprep.subr.mxu0 0.0
    %8178 = vmatpush2.msra.mxu0 %v8096
    %8179 = vmatprep.subr.mxu0 0.0
    %8180 = vmatpush2.msra.mxu0 %v8095
    %8181 = vmatprep.subr.mxu0 0.0
    %8182 = vmatpush2.msra.mxu0 %v8094
    %8183 = vmatprep.subr.mxu0 0.0
    %8184 = vmatpush2.msra.mxu0 %v8093
    %8185 = vmatprep.subr.mxu0 0.0
    %8186 = vmatpush2.msra.mxu0 %v8092
    %8187 = vmatprep.subr.mxu0 0.0
    %8188 = vmatpush2.msra.mxu0 %v8091
    %8189 = vmatprep.subr.mxu0 0.0
    %8190 = vmatpush2.msra.mxu0 %v8090
    %8191 = vmatprep.subr.mxu0 0.0
    %8192 = vmatpush2.msra.mxu0 %v8089
    %8193 = vmatprep.subr.mxu0 0.0
    %8194 = vmatpush2.msra.mxu0 %v8088
    %8195 = vmatprep.subr.mxu0 0.0
    %8196 = vmatpush2.msra.mxu0 %v8087
    %8197 = vmatprep.subr.mxu0 0.0
    %8198 = vmatpush2.msra.mxu0 %v8086
    %8199 = vmatprep.subr.mxu0 0.0
    %8200 = vmatpush2.msra.mxu0 %v8085
    %8201 = vmatprep.subr.mxu0 0.0
    %8202 = vmatpush2.msra.mxu0 %v8084
    %8203 = vmatprep.mubr.f32.mxu0 %v7995
    %8204 = vmatmul.mubr.f32.gmra.mxu0 %v7993
    %v8205 = vpop.f32.mrf.mxu0
    %v8206 = vadd.f32 %v8137, %v8205
    %v8207 = vpop.f32.mrf.mxu0
    %8208 = vdwg.mxu0
    %8209 = vmatprep.subr.mxu0 0.0
    %8210 = vmatpush1.msra.mxu0 %v8115
    %8211 = vmatprep.subr.mxu0 0.0
    %8212 = vmatpush1.msra.mxu0 %v8114
    %8213 = vmatprep.subr.mxu0 0.0
    %8214 = vmatpush1.msra.mxu0 %v8113
    %8215 = vmatprep.subr.mxu0 0.0
    %8216 = vmatpush1.msra.mxu0 %v8112
    %8217 = vmatprep.subr.mxu0 0.0
    %8218 = vmatpush1.msra.mxu0 %v8111
    %8219 = vmatprep.subr.mxu0 0.0
    %8220 = vmatpush1.msra.mxu0 %v8110
    %8221 = vmatprep.subr.mxu0 0.0
    %8222 = vmatpush1.msra.mxu0 %v8109
    %8223 = vmatprep.subr.mxu0 0.0
    %8224 = vmatpush1.msra.mxu0 %v8108
    %8225 = vmatprep.subr.mxu0 0.0
    %8226 = vmatpush1.msra.mxu0 %v8107
    %8227 = vmatprep.subr.mxu0 0.0
    %8228 = vmatpush1.msra.mxu0 %v8106
    %8229 = vmatprep.subr.mxu0 0.0
    %8230 = vmatpush1.msra.mxu0 %v8105
    %8231 = vmatprep.subr.mxu0 0.0
    %8232 = vmatpush1.msra.mxu0 %v8104
    %8233 = vmatprep.subr.mxu0 0.0
    %8234 = vmatpush1.msra.mxu0 %v8103
    %8235 = vmatprep.subr.mxu0 0.0
    %8236 = vmatpush1.msra.mxu0 %v8102
    %8237 = vmatprep.subr.mxu0 0.0
    %8238 = vmatpush1.msra.mxu0 %v8101
    %8239 = vmatprep.subr.mxu0 0.0
    %8240 = vmatpush1.msra.mxu0 %v8100
    %8241 = vmatprep.subr.mxu0 0.0
    %8242 = vmatpush2.msra.mxu0 %v8131
    %8243 = vmatprep.subr.mxu0 0.0
    %8244 = vmatpush2.msra.mxu0 %v8130
    %8245 = vmatprep.subr.mxu0 0.0
    %8246 = vmatpush2.msra.mxu0 %v8129
    %8247 = vmatprep.subr.mxu0 0.0
    %8248 = vmatpush2.msra.mxu0 %v8128
    %8249 = vmatprep.subr.mxu0 0.0
    %8250 = vmatpush2.msra.mxu0 %v8127
    %8251 = vmatprep.subr.mxu0 0.0
    %8252 = vmatpush2.msra.mxu0 %v8126
    %8253 = vmatprep.subr.mxu0 0.0
    %8254 = vmatpush2.msra.mxu0 %v8125
    %8255 = vmatprep.subr.mxu0 0.0
    %8256 = vmatpush2.msra.mxu0 %v8124
    %8257 = vmatprep.subr.mxu0 0.0
    %8258 = vmatpush2.msra.mxu0 %v8123
    %8259 = vmatprep.subr.mxu0 0.0
    %8260 = vmatpush2.msra.mxu0 %v8122
    %8261 = vmatprep.subr.mxu0 0.0
    %8262 = vmatpush2.msra.mxu0 %v8121
    %8263 = vmatprep.subr.mxu0 0.0
    %8264 = vmatpush2.msra.mxu0 %v8120
    %8265 = vmatprep.subr.mxu0 0.0
    %8266 = vmatpush2.msra.mxu0 %v8119
    %8267 = vmatprep.subr.mxu0 0.0
    %8268 = vmatpush2.msra.mxu0 %v8118
    %8269 = vmatprep.subr.mxu0 0.0
    %8270 = vmatpush2.msra.mxu0 %v8117
    %8271 = vmatprep.subr.mxu0 0.0
    %8272 = vmatpush2.msra.mxu0 %v8116
    %8273 = vmatprep.mubr.f32.mxu0 %v8066
    %8274 = vmatmul.mubr.f32.gmra.mxu0 %v8064
    %v8275 = vpop.f32.mrf.mxu0
    %v8276 = vadd.f32 %v8206, %v8275
    %v8277 = vpop.f32.mrf.mxu0
    %8278 = vdwg.mxu0
    %8279 = vst [vmem:[%s10] sm:$0xff] %v8276
  $region49: #{discriminator_forward.7} parent=0 // pred_fallthru
    _
  // Predicated region
  $region50: #{discriminator_forward.7} parent=0 // pred_check
    _
  $region51: #{discriminator_forward.7} parent=0 // pred_check_branch
    %8281 = sbr.rel (0) target = $region53
  $region52: #{discriminator_forward.7} parent=0 // pred_region
    _
  $region53: #{discriminator_forward.7} parent=0 // pred_fallthru
    _
  // Predicated region
  $region54: #{discriminator_forward.7} parent=0 // pred_check
    _
  $region55: #{discriminator_forward.7} parent=0 // pred_check_branch
    %8283 = sbr.rel (0) target = $region57
  $region56: #{discriminator_forward.7} parent=0 // pred_region
    _
  $region57: #{discriminator_forward.7} parent=0 // pred_fallthru
    _
  // Predicated region
  $region58: #{discriminator_forward.7} parent=0 // pred_check
    _
  $region59: #{discriminator_forward.7} parent=0 // pred_check_branch
    %8285 = sbr.rel (0) target = $region61
  $region60: #{discriminator_forward.7} parent=0 // pred_region
    _
  $region61: #{discriminator_forward.7} parent=0 // pred_fallthru
    _
  // Predicated region
  $region62: #{discriminator_forward.7} parent=0 // pred_check
    _
  $region63: #{discriminator_forward.7} parent=0 // pred_check_branch
    %8287 = sbr.rel (0) target = $region65
  $region64: #{discriminator_forward.7} parent=0 // pred_region
    _
  $region65: #{discriminator_forward.7} parent=0 // pred_fallthru
    _

</llo_original>
